<compile_context>
chip_gen: v5e
topology: v5e:2x2
jax: 0.10.0
libtpu: 0.0.40
codegen_flags: <defaults>
</compile_context>

<pallas_src>
import functools
import math

import jax
import jax.numpy as jnp
from jax.experimental import pallas as pl
from jax.experimental.pallas import tpu as pltpu


# ----------------------------- Pallas kernels -----------------------------

def _make_conv_stats_kernel(k, stride, toh, ow, cin, cout_p, oh):
    """Conv via in-kernel im2col for one (image, row-block); per-tile BN sums."""
    m_blk = toh * ow

    def kernel(x_ref, w_ref, y_ref, st_ref):
        # x_ref block: (1, 1, TIH, WI, Cin) bf16; w_ref: (K*K, Cin, Cout_p) bf16.
        xt = x_ref[0, 0]                                    # (TIH, WI, Cin)
        acc = jnp.zeros((m_blk, cout_p), jnp.float32)
        for kh in range(k):                                 # static unroll: K*K taps
            for kw in range(k):
                xs = xt[kh:kh + toh * stride, kw:kw + ow * stride, :]
                if stride > 1:
                    # keep every stride-th row/col; the trailing (stride-1)
                    # rows/cols only pad the reshape and are dropped.
                    xs = xs.reshape(toh, stride, ow, stride, cin)[:, 0, :, 0, :]
                xs = xs.reshape(m_blk, cin)
                acc = acc + jnp.dot(xs, w_ref[kh * k + kw],
                                    preferred_element_type=jnp.float32)

        y_ref[0, 0] = acc.astype(y_ref.dtype)               # bf16 intermediate

        # Per-tile partial sum / sum-of-squares taken from the f32 accumulator.
        # Rows that belong to padded output rows (last block only) are masked.
        b = pl.program_id(1)
        nvalid = ow * jnp.minimum(oh - b * toh, toh)
        ridx = jax.lax.broadcasted_iota(jnp.int32, (m_blk, 1), 0)
        av = jnp.where(ridx < nvalid, acc, 0.0)
        ps = jnp.sum(av, axis=0, keepdims=True)             # (1, Cout_p)
        pq = jnp.sum(av * av, axis=0, keepdims=True)        # (1, Cout_p)
        row = jax.lax.broadcasted_iota(jnp.int32, (8, cout_p), 0)
        st_ref[0, 0] = jnp.where(row == 0, ps, jnp.where(row == 1, pq, 0.0))

    return kernel


def _make_bn_silu_nchw_kernel(cout_keep):
    """Folded-BN affine + SiLU; writes a lane-dense (Cout, TOH*OW) NCHW block."""
    def kernel(y_ref, scale_ref, shift_ref, o_ref):
        z = y_ref[0, 0].astype(jnp.float32) * scale_ref[...] + shift_ref[...]
        z = z * jax.nn.sigmoid(z)                           # SiLU
        zt = jnp.transpose(z, (1, 0))                       # (Cout_p, M) via XLU
        o_ref[0] = zt[:cout_keep, :]
    return kernel


def _bn_silu_rowmajor_kernel(y_ref, scale_ref, shift_ref, o_ref):
    """Fallback: folded-BN affine + SiLU, row-major (NHWC-flat) output."""
    z = y_ref[0, 0].astype(jnp.float32) * scale_ref[...] + shift_ref[...]
    o_ref[0, 0] = z * jax.nn.sigmoid(z)


# ------------------------------- wrapper ----------------------------------

def _round_up(a, b):
    return -(-a // b) * b


@functools.partial(jax.jit, static_argnames=("stride", "eps", "tile_rows_target",
                                             "fuse_nchw_output"))
def base_conv_forward(x, weight, gamma, beta, *, stride, eps=1e-3,
                      tile_rows_target=512, fuse_nchw_output=True):
    """x: [N, Cin, H, W]; weight: [Cout, Cin, K, K]; returns [N, Cout, OH, OW]."""
    n, cin, h, w = x.shape
    cout, cin_w, k, _ = weight.shape
    assert cin_w == cin, "groups != 1 is not supported"
    # TODO(synk): grouped conv (groups > 1) not implemented; BaseConv default is groups=1.
    p = (k - 1) // 2
    oh = (h + 2 * p - k) // stride + 1
    ow = (w + 2 * p - k) // stride + 1

    # ---- tiling: TOH output rows per grid step ----------------------------
    unit = 128 // math.gcd(ow, 128)        # smallest TOH with TOH*OW % 128 == 0
    if unit >= oh:
        toh = oh                           # one block per image (full spatial)
    else:
        target = max(1, tile_rows_target // ow)
        toh = max(unit, (target // unit) * unit)
        toh = min(toh, (oh // unit) * unit)
    nb = pl.cdiv(oh, toh)                  # row blocks per image
    m_blk = toh * ow                       # pixel rows per MXU tile

    tih = toh * stride + k - 1             # haloed input rows per block
    wi = ow * stride + k - 1               # padded input width
    hi = nb * toh * stride + k - 1         # padded input height

    cout_p = _round_up(cout, 128)          # lane-dense matmul N dim / y columns
    cout_o = _round_up(cout, 8)            # sublane-aligned channel dim of out

    # ---- host-side layout prep (cheap; ~1.1-1.3x of x, no 9x im2col) ------
    xh = jnp.transpose(x, (0, 2, 3, 1)).astype(jnp.float32)        # NHWC
    xp = jnp.pad(xh, ((0, 0), (p, hi - h - p), (p, wi - w - p), (0, 0)))
    xb = jnp.stack([xp[:, b * toh * stride: b * toh * stride + tih]
                    for b in range(nb)], axis=1)                   # (N,NB,TIH,WI,Cin)
    xb = xb.astype(jnp.bfloat16)

    wk = jnp.transpose(weight, (2, 3, 1, 0)).reshape(k * k, cin, cout)
    wk = jnp.pad(wk, ((0, 0), (0, 0), (0, cout_p - cout))).astype(jnp.bfloat16)

    grid = (n, nb)
    cparams = pltpu.CompilerParams(
        dimension_semantics=("parallel", "parallel"),   # megacore-friendly (v7x)
        vmem_limit_bytes=64 * 1024 * 1024)

    # ---- kernel 1: conv (in-kernel im2col) + per-tile BN sums --------------
    y, stats = pl.pallas_call(
        _make_conv_stats_kernel(k, stride, toh, ow, cin, cout_p, oh),
        out_shape=(
            jax.ShapeDtypeStruct((n, nb, m_blk, cout_p), jnp.bfloat16),
            jax.ShapeDtypeStruct((n, nb, 8, cout_p), jnp.float32),
        ),
        grid_spec=pltpu.PrefetchScalarGridSpec(
            num_scalar_prefetch=0, grid=grid,
            in_specs=[
                pl.BlockSpec((1, 1, tih, wi, cin), lambda i, b: (i, b, 0, 0, 0)),
                pl.BlockSpec((k * k, cin, cout_p), lambda i, b: (0, 0, 0)),
            ],
            out_specs=[
                pl.BlockSpec((1, 1, m_blk, cout_p), lambda i, b: (i, b, 0, 0)),
                pl.BlockSpec((1, 1, 8, cout_p), lambda i, b: (i, b, 0, 0)),
            ]),
        compiler_params=cparams,
    )(xb, wk)

    # ---- train-mode BatchNorm statistics (f32, from the MXU accumulator) ---
    m_true = n * oh * ow
    csum = jnp.sum(stats[:, :, 0, :], axis=(0, 1))       # (Cout_p,)
    csq = jnp.sum(stats[:, :, 1, :], axis=(0, 1))
    mean = csum / m_true
    var = jnp.maximum(csq / m_true - mean * mean, 0.0)   # biased var; clamp for safety
    gamma_p = jnp.pad(gamma.astype(jnp.float32), (0, cout_p - cout))
    beta_p = jnp.pad(beta.astype(jnp.float32), (0, cout_p - cout))
    inv = gamma_p * jax.lax.rsqrt(var + eps)
    scale = inv.reshape(1, cout_p)
    shift = (beta_p - mean * inv).reshape(1, cout_p)

    y_spec = pl.BlockSpec((1, 1, m_blk, cout_p), lambda i, b: (i, b, 0, 0))
    vec_spec = pl.BlockSpec((1, cout_p), lambda i, b: (0, 0))

    # ---- kernel 2: BN affine + SiLU ----------------------------------------
    fuse = fuse_nchw_output and (m_blk % 8 == 0)
    if fuse:
        # Lane-dense NCHW write: block = (Cout_o, TOH*OW), spatial on lanes.
        out_flat = pl.pallas_call(
            _make_bn_silu_nchw_kernel(cout_o),
            out_shape=jax.ShapeDtypeStruct((n, cout_o, nb * m_blk), jnp.float32),
            grid_spec=pltpu.PrefetchScalarGridSpec(
                num_scalar_prefetch=0, grid=grid,
                in_specs=[y_spec, vec_spec, vec_spec],
                out_specs=pl.BlockSpec((1, cout_o, m_blk),
                                       lambda i, b: (i, 0, b))),
            compiler_params=cparams,
        )(y, scale, shift)
        out = out_flat[:, :cout, :oh * ow].reshape(n, cout, oh, ow)
    else:
        z = pl.pallas_call(
            _bn_silu_rowmajor_kernel,
            out_shape=jax.ShapeDtypeStruct((n, nb, m_blk, cout_p), jnp.float32),
            grid_spec=pltpu.PrefetchScalarGridSpec(
                num_scalar_prefetch=0, grid=grid,
                in_specs=[y_spec, vec_spec, vec_spec],
                out_specs=pl.BlockSpec((1, 1, m_blk, cout_p),
                                       lambda i, b: (i, b, 0, 0))),
            compiler_params=cparams,
        )(y, scale, shift)
        z = z.reshape(n, nb * toh, ow, cout_p)[:, :oh, :, :cout]
        out = jnp.transpose(z, (0, 3, 1, 2))
    return out


# ------------------------------ reference ---------------------------------

def _reference(x, weight, gamma, beta, *, stride, eps=1e-3):
    """Pure-JAX reference (conv + train-mode BN + SiLU), NCHW, f32."""
    k = weight.shape[-1]
    p = (k - 1) // 2
    y = jax.lax.conv_general_dilated(
        x.astype(jnp.float32), weight.astype(jnp.float32),
        window_strides=(stride, stride),
        padding=((p, p), (p, p)),
        dimension_numbers=("NCHW", "OIHW", "NCHW"))
    mean = jnp.mean(y, axis=(0, 2, 3), keepdims=True)
    var = jnp.mean((y - mean) ** 2, axis=(0, 2, 3), keepdims=True)
    z = (y - mean) / jnp.sqrt(var + eps)
    z = z * gamma.reshape(1, -1, 1, 1) + beta.reshape(1, -1, 1, 1)
    return z * jax.nn.sigmoid(z)


# -------------------------------- main -------------------------------------

if __name__ == "__main__":
    key = jax.random.PRNGKey(0)
    k_x, k_w, k_g, k_b = jax.random.split(key, 4)

    # Module config: BaseConv(in_channels=4, out_channels=8, ksize=3, stride=1)
    N, CIN, H, W = 2, 4, 16, 16
    COUT, KSIZE, STRIDE = 8, 3, 1

    x = jax.random.normal(k_x, (N, CIN, H, W), dtype=jnp.float32)
    weight = 0.1 * jax.random.normal(k_w, (COUT, CIN, KSIZE, KSIZE),
                                     dtype=jnp.float32)
    gamma = 1.0 + 0.1 * jax.random.normal(k_g, (COUT,), dtype=jnp.float32)
    beta = 0.1 * jax.random.normal(k_b, (COUT,), dtype=jnp.float32)

    # The kernel feeds the MXU in bf16; pre-round the operands so the f32
    # reference sees the same effective inputs (isolates kernel correctness
    # from input quantization).
    x = x.astype(jnp.bfloat16).astype(jnp.float32)
    weight = weight.astype(jnp.bfloat16).astype(jnp.float32)

    try:
        out = jax.block_until_ready(
            base_conv_forward(x, weight, gamma, beta, stride=STRIDE))
    except Exception:
        # Conservative fallback (row-major BN/SiLU kernel + XLA layout change)
        # in case the fused in-kernel NCHW transpose does not lower on an
        # older toolchain.
        out = jax.block_until_ready(
            base_conv_forward(x, weight, gamma, beta, stride=STRIDE,
                              fuse_nchw_output=False))

    ref = _reference(x, weight, gamma, beta, stride=STRIDE)
    assert out.shape == ref.shape, (out.shape, ref.shape)
    # bf16 MXU inputs + bf16 intermediate y -> ~1e-2 level differences vs f32.
    assert jnp.allclose(out, ref, atol=2e-2, rtol=2e-2), (
        float(jnp.max(jnp.abs(out - ref))))

    print("KERNEL_OK")
</pallas_src>

<mosaic_0001>
module attributes {stable_mosaic.version = 11 : i64} {
  func.func @kernel(%arg0: i32, %arg1: i32, %arg2: memref<1x1x18x18x4xbf16, #tpu.memory_space<vmem>>, %arg3: memref<9x4x128xbf16, #tpu.memory_space<vmem>>, %arg4: memref<1x1x256x128xbf16, #tpu.memory_space<vmem>>, %arg5: memref<1x1x8x128xf32, #tpu.memory_space<vmem>>) attributes {dimension_semantics = [#tpu.dimension_semantics<parallel>, #tpu.dimension_semantics<parallel>], iteration_bounds = array<i64: 2, 1>, scalar_prefetch = 0 : i64, scratch_operands = 0 : i64, tpu.core_type = #tpu.core_type<tc>, window_params = [{transform_indices = @transform_0, window_bounds = array<i64: 1, 1, 18, 18, 4>}, {pipeline_mode = #tpu.pipeline_mode<synchronous>, transform_indices = @transform_1, window_bounds = array<i64: 9, 4, 128>}, {transform_indices = @transform_2, window_bounds = array<i64: 1, 1, 256, 128>}, {transform_indices = @transform_3, window_bounds = array<i64: 1, 1, 8, 128>}]} {
    %c0 = arith.constant 0 : index
    %c0_0 = arith.constant 0 : index
    %c0_1 = arith.constant 0 : index
    %c0_2 = arith.constant 0 : index
    %c0_3 = arith.constant 0 : index
    %0 = vector.load %arg2[%c0, %c0_0, %c0_1, %c0_2, %c0_3] : memref<1x1x18x18x4xbf16, #tpu.memory_space<vmem>>, vector<1x1x18x18x4xbf16>
    %1 = vector.shape_cast %0 : vector<1x1x18x18x4xbf16> to vector<18x18x4xbf16>
    %cst = arith.constant 0.000000e+00 : f32
    %2 = vector.broadcast %cst : f32 to vector<256x128xf32>
    %3 = vector.extract_strided_slice %1 {offsets = [0, 0, 0], sizes = [16, 16, 4], strides = [1, 1, 1]} : vector<18x18x4xbf16> to vector<16x16x4xbf16>
    %4 = vector.shape_cast %3 : vector<16x16x4xbf16> to vector<256x4xbf16>
    %c0_4 = arith.constant 0 : index
    %c0_5 = arith.constant 0 : index
    %c0_6 = arith.constant 0 : index
    %5 = vector.load %arg3[%c0_4, %c0_5, %c0_6] : memref<9x4x128xbf16, #tpu.memory_space<vmem>>, vector<1x4x128xbf16>
    %6 = vector.shape_cast %5 : vector<1x4x128xbf16> to vector<4x128xbf16>
    %cst_7 = arith.constant dense<0.000000e+00> : vector<256x128xf32>
    %7 = tpu.matmul %4, %6, %cst_7 {dimension_numbers = #tpu.dot_dimension_numbers<[1], [0], [0], [1], [0, 0, 1, 1], [], []>} : vector<256x4xbf16>, vector<4x128xbf16>, vector<256x128xf32> -> vector<256x128xf32>
    %8 = arith.addf %2, %7 : vector<256x128xf32>
    %9 = vector.extract_strided_slice %1 {offsets = [0, 1, 0], sizes = [16, 16, 4], strides = [1, 1, 1]} : vector<18x18x4xbf16> to vector<16x16x4xbf16>
    %10 = vector.shape_cast %9 : vector<16x16x4xbf16> to vector<256x4xbf16>
    %c1 = arith.constant 1 : index
    %c0_8 = arith.constant 0 : index
    %c0_9 = arith.constant 0 : index
    %11 = vector.load %arg3[%c1, %c0_8, %c0_9] : memref<9x4x128xbf16, #tpu.memory_space<vmem>>, vector<1x4x128xbf16>
    %12 = vector.shape_cast %11 : vector<1x4x128xbf16> to vector<4x128xbf16>
    %cst_10 = arith.constant dense<0.000000e+00> : vector<256x128xf32>
    %13 = tpu.matmul %10, %12, %cst_10 {dimension_numbers = #tpu.dot_dimension_numbers<[1], [0], [0], [1], [0, 0, 1, 1], [], []>} : vector<256x4xbf16>, vector<4x128xbf16>, vector<256x128xf32> -> vector<256x128xf32>
    %14 = arith.addf %8, %13 : vector<256x128xf32>
    %15 = vector.extract_strided_slice %1 {offsets = [0, 2, 0], sizes = [16, 16, 4], strides = [1, 1, 1]} : vector<18x18x4xbf16> to vector<16x16x4xbf16>
    %16 = vector.shape_cast %15 : vector<16x16x4xbf16> to vector<256x4xbf16>
    %c2 = arith.constant 2 : index
    %c0_11 = arith.constant 0 : index
    %c0_12 = arith.constant 0 : index
    %17 = vector.load %arg3[%c2, %c0_11, %c0_12] : memref<9x4x128xbf16, #tpu.memory_space<vmem>>, vector<1x4x128xbf16>
    %18 = vector.shape_cast %17 : vector<1x4x128xbf16> to vector<4x128xbf16>
    %cst_13 = arith.constant dense<0.000000e+00> : vector<256x128xf32>
    %19 = tpu.matmul %16, %18, %cst_13 {dimension_numbers = #tpu.dot_dimension_numbers<[1], [0], [0], [1], [0, 0, 1, 1], [], []>} : vector<256x4xbf16>, vector<4x128xbf16>, vector<256x128xf32> -> vector<256x128xf32>
    %20 = arith.addf %14, %19 : vector<256x128xf32>
    %21 = vector.extract_strided_slice %1 {offsets = [1, 0, 0], sizes = [16, 16, 4], strides = [1, 1, 1]} : vector<18x18x4xbf16> to vector<16x16x4xbf16>
    %22 = vector.shape_cast %21 : vector<16x16x4xbf16> to vector<256x4xbf16>
    %c3 = arith.constant 3 : index
    %c0_14 = arith.constant 0 : index
    %c0_15 = arith.constant 0 : index
    %23 = vector.load %arg3[%c3, %c0_14, %c0_15] : memref<9x4x128xbf16, #tpu.memory_space<vmem>>, vector<1x4x128xbf16>
    %24 = vector.shape_cast %23 : vector<1x4x128xbf16> to vector<4x128xbf16>
    %cst_16 = arith.constant dense<0.000000e+00> : vector<256x128xf32>
    %25 = tpu.matmul %22, %24, %cst_16 {dimension_numbers = #tpu.dot_dimension_numbers<[1], [0], [0], [1], [0, 0, 1, 1], [], []>} : vector<256x4xbf16>, vector<4x128xbf16>, vector<256x128xf32> -> vector<256x128xf32>
    %26 = arith.addf %20, %25 : vector<256x128xf32>
    %27 = vector.extract_strided_slice %1 {offsets = [1, 1, 0], sizes = [16, 16, 4], strides = [1, 1, 1]} : vector<18x18x4xbf16> to vector<16x16x4xbf16>
    %28 = vector.shape_cast %27 : vector<16x16x4xbf16> to vector<256x4xbf16>
    %c4 = arith.constant 4 : index
    %c0_17 = arith.constant 0 : index
    %c0_18 = arith.constant 0 : index
    %29 = vector.load %arg3[%c4, %c0_17, %c0_18] : memref<9x4x128xbf16, #tpu.memory_space<vmem>>, vector<1x4x128xbf16>
    %30 = vector.shape_cast %29 : vector<1x4x128xbf16> to vector<4x128xbf16>
    %cst_19 = arith.constant dense<0.000000e+00> : vector<256x128xf32>
    %31 = tpu.matmul %28, %30, %cst_19 {dimension_numbers = #tpu.dot_dimension_numbers<[1], [0], [0], [1], [0, 0, 1, 1], [], []>} : vector<256x4xbf16>, vector<4x128xbf16>, vector<256x128xf32> -> vector<256x128xf32>
    %32 = arith.addf %26, %31 : vector<256x128xf32>
    %33 = vector.extract_strided_slice %1 {offsets = [1, 2, 0], sizes = [16, 16, 4], strides = [1, 1, 1]} : vector<18x18x4xbf16> to vector<16x16x4xbf16>
    %34 = vector.shape_cast %33 : vector<16x16x4xbf16> to vector<256x4xbf16>
    %c5 = arith.constant 5 : index
    %c0_20 = arith.constant 0 : index
    %c0_21 = arith.constant 0 : index
    %35 = vector.load %arg3[%c5, %c0_20, %c0_21] : memref<9x4x128xbf16, #tpu.memory_space<vmem>>, vector<1x4x128xbf16>
    %36 = vector.shape_cast %35 : vector<1x4x128xbf16> to vector<4x128xbf16>
    %cst_22 = arith.constant dense<0.000000e+00> : vector<256x128xf32>
    %37 = tpu.matmul %34, %36, %cst_22 {dimension_numbers = #tpu.dot_dimension_numbers<[1], [0], [0], [1], [0, 0, 1, 1], [], []>} : vector<256x4xbf16>, vector<4x128xbf16>, vector<256x128xf32> -> vector<256x128xf32>
    %38 = arith.addf %32, %37 : vector<256x128xf32>
    %39 = vector.extract_strided_slice %1 {offsets = [2, 0, 0], sizes = [16, 16, 4], strides = [1, 1, 1]} : vector<18x18x4xbf16> to vector<16x16x4xbf16>
    %40 = vector.shape_cast %39 : vector<16x16x4xbf16> to vector<256x4xbf16>
    %c6 = arith.constant 6 : index
    %c0_23 = arith.constant 0 : index
    %c0_24 = arith.constant 0 : index
    %41 = vector.load %arg3[%c6, %c0_23, %c0_24] : memref<9x4x128xbf16, #tpu.memory_space<vmem>>, vector<1x4x128xbf16>
    %42 = vector.shape_cast %41 : vector<1x4x128xbf16> to vector<4x128xbf16>
    %cst_25 = arith.constant dense<0.000000e+00> : vector<256x128xf32>
    %43 = tpu.matmul %40, %42, %cst_25 {dimension_numbers = #tpu.dot_dimension_numbers<[1], [0], [0], [1], [0, 0, 1, 1], [], []>} : vector<256x4xbf16>, vector<4x128xbf16>, vector<256x128xf32> -> vector<256x128xf32>
    %44 = arith.addf %38, %43 : vector<256x128xf32>
    %45 = vector.extract_strided_slice %1 {offsets = [2, 1, 0], sizes = [16, 16, 4], strides = [1, 1, 1]} : vector<18x18x4xbf16> to vector<16x16x4xbf16>
    %46 = vector.shape_cast %45 : vector<16x16x4xbf16> to vector<256x4xbf16>
    %c7 = arith.constant 7 : index
    %c0_26 = arith.constant 0 : index
    %c0_27 = arith.constant 0 : index
    %47 = vector.load %arg3[%c7, %c0_26, %c0_27] : memref<9x4x128xbf16, #tpu.memory_space<vmem>>, vector<1x4x128xbf16>
    %48 = vector.shape_cast %47 : vector<1x4x128xbf16> to vector<4x128xbf16>
    %cst_28 = arith.constant dense<0.000000e+00> : vector<256x128xf32>
    %49 = tpu.matmul %46, %48, %cst_28 {dimension_numbers = #tpu.dot_dimension_numbers<[1], [0], [0], [1], [0, 0, 1, 1], [], []>} : vector<256x4xbf16>, vector<4x128xbf16>, vector<256x128xf32> -> vector<256x128xf32>
    %50 = arith.addf %44, %49 : vector<256x128xf32>
    %51 = vector.extract_strided_slice %1 {offsets = [2, 2, 0], sizes = [16, 16, 4], strides = [1, 1, 1]} : vector<18x18x4xbf16> to vector<16x16x4xbf16>
    %52 = vector.shape_cast %51 : vector<16x16x4xbf16> to vector<256x4xbf16>
    %c8 = arith.constant 8 : index
    %c0_29 = arith.constant 0 : index
    %c0_30 = arith.constant 0 : index
    %53 = vector.load %arg3[%c8, %c0_29, %c0_30] : memref<9x4x128xbf16, #tpu.memory_space<vmem>>, vector<1x4x128xbf16>
    %54 = vector.shape_cast %53 : vector<1x4x128xbf16> to vector<4x128xbf16>
    %cst_31 = arith.constant dense<0.000000e+00> : vector<256x128xf32>
    %55 = tpu.matmul %52, %54, %cst_31 {dimension_numbers = #tpu.dot_dimension_numbers<[1], [0], [0], [1], [0, 0, 1, 1], [], []>} : vector<256x4xbf16>, vector<4x128xbf16>, vector<256x128xf32> -> vector<256x128xf32>
    %56 = arith.addf %50, %55 : vector<256x128xf32>
    %57 = arith.truncf %56 : vector<256x128xf32> to vector<256x128xbf16>
    %c0_32 = arith.constant 0 : index
    %c0_33 = arith.constant 0 : index
    %c0_34 = arith.constant 0 : index
    %c0_35 = arith.constant 0 : index
    %58 = vector.load %arg4[%c0_32, %c0_33, %c0_34, %c0_35] : memref<1x1x256x128xbf16, #tpu.memory_space<vmem>>, vector<1x1x256x128xbf16>
    %59 = vector.shape_cast %58 : vector<1x1x256x128xbf16> to vector<256x128xbf16>
    %60 = vector.shape_cast %57 : vector<256x128xbf16> to vector<1x1x256x128xbf16>
    tpu.vector_store %arg4[%c0_32, %c0_33, %c0_34, %c0_35], %60 {strides = array<i32>} : memref<1x1x256x128xbf16, #tpu.memory_space<vmem>>, vector<1x1x256x128xbf16>,
    %c16_i32 = arith.constant 16 : i32
    %61 = arith.muli %arg1, %c16_i32 : i32
    %c16_i32_36 = arith.constant 16 : i32
    %62 = arith.subi %c16_i32_36, %61 : i32
    %c16_i32_37 = arith.constant 16 : i32
    %63 = arith.minsi %62, %c16_i32_37 : i32
    %c16_i32_38 = arith.constant 16 : i32
    %64 = arith.muli %c16_i32_38, %63 : i32
    %65 = tpu.iota {dimensions = array<i32: 0>} : vector<256x1xi32>
    %66 = vector.broadcast %64 : i32 to vector<256x1xi32>
    %67 = arith.cmpi slt, %65, %66 : vector<256x1xi32>
    %cst_39 = arith.constant 0.000000e+00 : f32
    %68 = vector.shape_cast %67 : vector<256x1xi1> to vector<256x1xi1>
    %69 = vector.broadcast %68 : vector<256x1xi1> to vector<256x128xi1>
    %70 = vector.broadcast %cst_39 : f32 to vector<256x128xf32>
    %71 = arith.select %69, %56, %70 : vector<256x128xi1>, vector<256x128xf32>
    %cst_40 = arith.constant dense<0.000000e+00> : vector<128xf32>
    %72 = vector.multi_reduction <add>, %71, %cst_40 [0] : vector<256x128xf32> to vector<128xf32>
    %73 = vector.shape_cast %72 : vector<128xf32> to vector<1x128xf32>
    %74 = arith.mulf %71, %71 : vector<256x128xf32>
    %cst_41 = arith.constant dense<0.000000e+00> : vector<128xf32>
    %75 = vector.multi_reduction <add>, %74, %cst_41 [0] : vector<256x128xf32> to vector<128xf32>
    %76 = vector.shape_cast %75 : vector<128xf32> to vector<1x128xf32>
    %77 = tpu.iota {dimensions = array<i32: 0>} : vector<8x128xi32>
    %c0_i32 = arith.constant 0 : i32
    %78 = vector.broadcast %c0_i32 : i32 to vector<8x128xi32>
    %79 = arith.cmpi eq, %77, %78 : vector<8x128xi32>
    %c1_i32 = arith.constant 1 : i32
    %80 = vector.broadcast %c1_i32 : i32 to vector<8x128xi32>
    %81 = arith.cmpi eq, %77, %80 : vector<8x128xi32>
    %cst_42 = arith.constant 0.000000e+00 : f32
    %82 = vector.shape_cast %76 : vector<1x128xf32> to vector<1x128xf32>
    %83 = vector.broadcast %82 : vector<1x128xf32> to vector<8x128xf32>
    %84 = vector.broadcast %cst_42 : f32 to vector<8x128xf32>
    %85 = arith.select %81, %83, %84 : vector<8x128xi1>, vector<8x128xf32>
    %86 = vector.shape_cast %73 : vector<1x128xf32> to vector<1x128xf32>
    %87 = vector.broadcast %86 : vector<1x128xf32> to vector<8x128xf32>
    %88 = arith.select %79, %87, %85 : vector<8x128xi1>, vector<8x128xf32>
    %c0_43 = arith.constant 0 : index
    %c0_44 = arith.constant 0 : index
    %c0_45 = arith.constant 0 : index
    %c0_46 = arith.constant 0 : index
    %89 = vector.load %arg5[%c0_43, %c0_44, %c0_45, %c0_46] : memref<1x1x8x128xf32, #tpu.memory_space<vmem>>, vector<1x1x8x128xf32>
    %90 = vector.shape_cast %89 : vector<1x1x8x128xf32> to vector<8x128xf32>
    %91 = vector.shape_cast %88 : vector<8x128xf32> to vector<1x1x8x128xf32>
    tpu.vector_store %arg5[%c0_43, %c0_44, %c0_45, %c0_46], %91 {strides = array<i32>} : memref<1x1x8x128xf32, #tpu.memory_space<vmem>>, vector<1x1x8x128xf32>,
    return
  }
  func.func @transform_0(%arg0: i32, %arg1: i32) -> (i32, i32, i32, i32, i32) {
    %c0_i32 = arith.constant 0 : i32
    %c0_i32_0 = arith.constant 0 : i32
    %c0_i32_1 = arith.constant 0 : i32
    %c0_i32_2 = arith.constant 0 : i32
    return %arg0, %arg1, %c0_i32, %c0_i32_0, %c0_i32_1 : i32, i32, i32, i32, i32
  }
  func.func @transform_1(%arg0: i32, %arg1: i32) -> (i32, i32, i32) {
    %c0_i32 = arith.constant 0 : i32
    %c0_i32_0 = arith.constant 0 : i32
    %c0_i32_1 = arith.constant 0 : i32
    %c0_i32_2 = arith.constant 0 : i32
    return %c0_i32, %c0_i32_0, %c0_i32_1 : i32, i32, i32
  }
  func.func @transform_2(%arg0: i32, %arg1: i32) -> (i32, i32, i32, i32) {
    %c0_i32 = arith.constant 0 : i32
    %c0_i32_0 = arith.constant 0 : i32
    %c0_i32_1 = arith.constant 0 : i32
    return %arg0, %arg1, %c0_i32, %c0_i32_0 : i32, i32, i32, i32
  }
  func.func @transform_3(%arg0: i32, %arg1: i32) -> (i32, i32, i32, i32) {
    %c0_i32 = arith.constant 0 : i32
    %c0_i32_0 = arith.constant 0 : i32
    %c0_i32_1 = arith.constant 0 : i32
    return %arg0, %arg1, %c0_i32, %c0_i32_0 : i32, i32, i32, i32
  }
}

module attributes {stable_mosaic.version = 11 : i64} {
  func.func @kernel(%arg0: i32, %arg1: i32, %arg2: memref<1x1x256x128xbf16, #tpu.memory_space<vmem>>, %arg3: memref<1x128xf32, #tpu.memory_space<vmem>>, %arg4: memref<1x128xf32, #tpu.memory_space<vmem>>, %arg5: memref<1x8x256xf32, #tpu.memory_space<vmem>>) attributes {dimension_semantics = [#tpu.dimension_semantics<parallel>, #tpu.dimension_semantics<parallel>], iteration_bounds = array<i64: 2, 1>, scalar_prefetch = 0 : i64, scratch_operands = 0 : i64, tpu.core_type = #tpu.core_type<tc>, window_params = [{transform_indices = @transform_0, window_bounds = array<i64: 1, 1, 256, 128>}, {pipeline_mode = #tpu.pipeline_mode<synchronous>, transform_indices = @transform_1, window_bounds = array<i64: 1, 128>}, {pipeline_mode = #tpu.pipeline_mode<synchronous>, transform_indices = @transform_2, window_bounds = array<i64: 1, 128>}, {transform_indices = @transform_3, window_bounds = array<i64: 1, 8, 256>}]} {
    %c0 = arith.constant 0 : index
    %c0_0 = arith.constant 0 : index
    %c0_1 = arith.constant 0 : index
    %c0_2 = arith.constant 0 : index
    %0 = vector.load %arg2[%c0, %c0_0, %c0_1, %c0_2] : memref<1x1x256x128xbf16, #tpu.memory_space<vmem>>, vector<1x1x256x128xbf16>
    %1 = vector.shape_cast %0 : vector<1x1x256x128xbf16> to vector<256x128xbf16>
    %2 = arith.extf %1 : vector<256x128xbf16> to vector<256x128xf32>
    %c0_3 = arith.constant 0 : index
    %c0_4 = arith.constant 0 : index
    %3 = vector.load %arg3[%c0_3, %c0_4] : memref<1x128xf32, #tpu.memory_space<vmem>>, vector<1x128xf32>
    %4 = vector.broadcast %3 : vector<1x128xf32> to vector<256x128xf32>
    %5 = arith.mulf %2, %4 : vector<256x128xf32>
    %c0_5 = arith.constant 0 : index
    %c0_6 = arith.constant 0 : index
    %6 = vector.load %arg4[%c0_5, %c0_6] : memref<1x128xf32, #tpu.memory_space<vmem>>, vector<1x128xf32>
    %7 = vector.broadcast %6 : vector<1x128xf32> to vector<256x128xf32>
    %8 = arith.addf %5, %7 : vector<256x128xf32>
    %9 = arith.negf %8 : vector<256x128xf32>
    %10 = math.exp %9 : vector<256x128xf32>
    %cst = arith.constant 1.000000e+00 : f32
    %11 = vector.broadcast %cst : f32 to vector<256x128xf32>
    %12 = arith.addf %11, %10 : vector<256x128xf32>
    %13 = arith.divf %11, %12 : vector<256x128xf32>
    %14 = arith.mulf %8, %13 : vector<256x128xf32>
    %15 = tpu.transpose %14, [1, 0] : vector<256x128xf32> -> vector<128x256xf32>
    %16 = vector.extract_strided_slice %15 {offsets = [0, 0], sizes = [8, 256], strides = [1, 1]} : vector<128x256xf32> to vector<8x256xf32>
    %c0_7 = arith.constant 0 : index
    %c0_8 = arith.constant 0 : index
    %c0_9 = arith.constant 0 : index
    %17 = vector.load %arg5[%c0_7, %c0_8, %c0_9] : memref<1x8x256xf32, #tpu.memory_space<vmem>>, vector<1x8x256xf32>
    %18 = vector.shape_cast %17 : vector<1x8x256xf32> to vector<8x256xf32>
    %19 = vector.shape_cast %16 : vector<8x256xf32> to vector<1x8x256xf32>
    tpu.vector_store %arg5[%c0_7, %c0_8, %c0_9], %19 {strides = array<i32>} : memref<1x8x256xf32, #tpu.memory_space<vmem>>, vector<1x8x256xf32>,
    return
  }
  func.func @transform_0(%arg0: i32, %arg1: i32) -> (i32, i32, i32, i32) {
    %c0_i32 = arith.constant 0 : i32
    %c0_i32_0 = arith.constant 0 : i32
    %c0_i32_1 = arith.constant 0 : i32
    return %arg0, %arg1, %c0_i32, %c0_i32_0 : i32, i32, i32, i32
  }
  func.func @transform_1(%arg0: i32, %arg1: i32) -> (i32, i32) {
    %c0_i32 = arith.constant 0 : i32
    %c0_i32_0 = arith.constant 0 : i32
    %c0_i32_1 = arith.constant 0 : i32
    return %c0_i32, %c0_i32_0 : i32, i32
  }
  func.func @transform_2(%arg0: i32, %arg1: i32) -> (i32, i32) {
    %c0_i32 = arith.constant 0 : i32
    %c0_i32_0 = arith.constant 0 : i32
    %c0_i32_1 = arith.constant 0 : i32
    return %c0_i32, %c0_i32_0 : i32, i32
  }
  func.func @transform_3(%arg0: i32, %arg1: i32) -> (i32, i32, i32) {
    %c0_i32 = arith.constant 0 : i32
    %c0_i32_0 = arith.constant 0 : i32
    return %arg0, %c0_i32, %arg1 : i32, i32, i32
  }
}

module attributes {stable_mosaic.version = 11 : i64} {
  func.func @_bn_silu_rowmajor_kernel(%arg0: i32, %arg1: i32, %arg2: memref<1x1x256x128xbf16, #tpu.memory_space<vmem>>, %arg3: memref<1x128xf32, #tpu.memory_space<vmem>>, %arg4: memref<1x128xf32, #tpu.memory_space<vmem>>, %arg5: memref<1x1x256x128xf32, #tpu.memory_space<vmem>>) attributes {dimension_semantics = [#tpu.dimension_semantics<parallel>, #tpu.dimension_semantics<parallel>], iteration_bounds = array<i64: 2, 1>, scalar_prefetch = 0 : i64, scratch_operands = 0 : i64, tpu.core_type = #tpu.core_type<tc>, window_params = [{transform_indices = @transform_0, window_bounds = array<i64: 1, 1, 256, 128>}, {pipeline_mode = #tpu.pipeline_mode<synchronous>, transform_indices = @transform_1, window_bounds = array<i64: 1, 128>}, {pipeline_mode = #tpu.pipeline_mode<synchronous>, transform_indices = @transform_2, window_bounds = array<i64: 1, 128>}, {transform_indices = @transform_3, window_bounds = array<i64: 1, 1, 256, 128>}]} {
    %c0 = arith.constant 0 : index
    %c0_0 = arith.constant 0 : index
    %c0_1 = arith.constant 0 : index
    %c0_2 = arith.constant 0 : index
    %0 = vector.load %arg2[%c0, %c0_0, %c0_1, %c0_2] : memref<1x1x256x128xbf16, #tpu.memory_space<vmem>>, vector<1x1x256x128xbf16>
    %1 = vector.shape_cast %0 : vector<1x1x256x128xbf16> to vector<256x128xbf16>
    %2 = arith.extf %1 : vector<256x128xbf16> to vector<256x128xf32>
    %c0_3 = arith.constant 0 : index
    %c0_4 = arith.constant 0 : index
    %3 = vector.load %arg3[%c0_3, %c0_4] : memref<1x128xf32, #tpu.memory_space<vmem>>, vector<1x128xf32>
    %4 = vector.broadcast %3 : vector<1x128xf32> to vector<256x128xf32>
    %5 = arith.mulf %2, %4 : vector<256x128xf32>
    %c0_5 = arith.constant 0 : index
    %c0_6 = arith.constant 0 : index
    %6 = vector.load %arg4[%c0_5, %c0_6] : memref<1x128xf32, #tpu.memory_space<vmem>>, vector<1x128xf32>
    %7 = vector.broadcast %6 : vector<1x128xf32> to vector<256x128xf32>
    %8 = arith.addf %5, %7 : vector<256x128xf32>
    %9 = arith.negf %8 : vector<256x128xf32>
    %10 = math.exp %9 : vector<256x128xf32>
    %cst = arith.constant 1.000000e+00 : f32
    %11 = vector.broadcast %cst : f32 to vector<256x128xf32>
    %12 = arith.addf %11, %10 : vector<256x128xf32>
    %13 = arith.divf %11, %12 : vector<256x128xf32>
    %14 = arith.mulf %8, %13 : vector<256x128xf32>
    %c0_7 = arith.constant 0 : index
    %c0_8 = arith.constant 0 : index
    %c0_9 = arith.constant 0 : index
    %c0_10 = arith.constant 0 : index
    %15 = vector.load %arg5[%c0_7, %c0_8, %c0_9, %c0_10] : memref<1x1x256x128xf32, #tpu.memory_space<vmem>>, vector<1x1x256x128xf32>
    %16 = vector.shape_cast %15 : vector<1x1x256x128xf32> to vector<256x128xf32>
    %17 = vector.shape_cast %14 : vector<256x128xf32> to vector<1x1x256x128xf32>
    tpu.vector_store %arg5[%c0_7, %c0_8, %c0_9, %c0_10], %17 {strides = array<i32>} : memref<1x1x256x128xf32, #tpu.memory_space<vmem>>, vector<1x1x256x128xf32>,
    return
  }
  func.func @transform_0(%arg0: i32, %arg1: i32) -> (i32, i32, i32, i32) {
    %c0_i32 = arith.constant 0 : i32
    %c0_i32_0 = arith.constant 0 : i32
    %c0_i32_1 = arith.constant 0 : i32
    return %arg0, %arg1, %c0_i32, %c0_i32_0 : i32, i32, i32, i32
  }
  func.func @transform_1(%arg0: i32, %arg1: i32) -> (i32, i32) {
    %c0_i32 = arith.constant 0 : i32
    %c0_i32_0 = arith.constant 0 : i32
    %c0_i32_1 = arith.constant 0 : i32
    return %c0_i32, %c0_i32_0 : i32, i32
  }
  func.func @transform_2(%arg0: i32, %arg1: i32) -> (i32, i32) {
    %c0_i32 = arith.constant 0 : i32
    %c0_i32_0 = arith.constant 0 : i32
    %c0_i32_1 = arith.constant 0 : i32
    return %c0_i32, %c0_i32_0 : i32, i32
  }
  func.func @transform_3(%arg0: i32, %arg1: i32) -> (i32, i32, i32, i32) {
    %c0_i32 = arith.constant 0 : i32
    %c0_i32_0 = arith.constant 0 : i32
    %c0_i32_1 = arith.constant 0 : i32
    return %arg0, %arg1, %c0_i32, %c0_i32_0 : i32, i32, i32, i32
  }
}

module attributes {stable_mosaic.version = 11 : i64} {
  func.func @kernel(%arg0: i32, %arg1: i32, %arg2: memref<1x1x18x18x4xbf16, #tpu.memory_space<vmem>>, %arg3: memref<9x4x128xbf16, #tpu.memory_space<vmem>>, %arg4: memref<1x1x256x128xbf16, #tpu.memory_space<vmem>>, %arg5: memref<1x1x8x128xf32, #tpu.memory_space<vmem>>) attributes {dimension_semantics = [#tpu.dimension_semantics<parallel>, #tpu.dimension_semantics<parallel>], iteration_bounds = array<i64: 2, 1>, scalar_prefetch = 0 : i64, scratch_operands = 0 : i64, tpu.core_type = #tpu.core_type<tc>, window_params = [{transform_indices = @transform_0, window_bounds = array<i64: 1, 1, 18, 18, 4>}, {pipeline_mode = #tpu.pipeline_mode<synchronous>, transform_indices = @transform_1, window_bounds = array<i64: 9, 4, 128>}, {transform_indices = @transform_2, window_bounds = array<i64: 1, 1, 256, 128>}, {transform_indices = @transform_3, window_bounds = array<i64: 1, 1, 8, 128>}]} {
    %c0 = arith.constant 0 : index
    %c0_0 = arith.constant 0 : index
    %c0_1 = arith.constant 0 : index
    %c0_2 = arith.constant 0 : index
    %c0_3 = arith.constant 0 : index
    %0 = vector.load %arg2[%c0, %c0_0, %c0_1, %c0_2, %c0_3] : memref<1x1x18x18x4xbf16, #tpu.memory_space<vmem>>, vector<1x1x18x18x4xbf16>
    %1 = vector.shape_cast %0 : vector<1x1x18x18x4xbf16> to vector<18x18x4xbf16>
    %cst = arith.constant 0.000000e+00 : f32
    %2 = vector.broadcast %cst : f32 to vector<256x128xf32>
    %3 = vector.extract_strided_slice %1 {offsets = [0, 0, 0], sizes = [16, 16, 4], strides = [1, 1, 1]} : vector<18x18x4xbf16> to vector<16x16x4xbf16>
    %4 = vector.shape_cast %3 : vector<16x16x4xbf16> to vector<256x4xbf16>
    %c0_4 = arith.constant 0 : index
    %c0_5 = arith.constant 0 : index
    %c0_6 = arith.constant 0 : index
    %5 = vector.load %arg3[%c0_4, %c0_5, %c0_6] : memref<9x4x128xbf16, #tpu.memory_space<vmem>>, vector<1x4x128xbf16>
    %6 = vector.shape_cast %5 : vector<1x4x128xbf16> to vector<4x128xbf16>
    %cst_7 = arith.constant dense<0.000000e+00> : vector<256x128xf32>
    %7 = tpu.matmul %4, %6, %cst_7 {dimension_numbers = #tpu.dot_dimension_numbers<[1], [0], [0], [1], [0, 0, 1, 1], [], []>} : vector<256x4xbf16>, vector<4x128xbf16>, vector<256x128xf32> -> vector<256x128xf32>
    %8 = arith.addf %2, %7 : vector<256x128xf32>
    %9 = vector.extract_strided_slice %1 {offsets = [0, 1, 0], sizes = [16, 16, 4], strides = [1, 1, 1]} : vector<18x18x4xbf16> to vector<16x16x4xbf16>
    %10 = vector.shape_cast %9 : vector<16x16x4xbf16> to vector<256x4xbf16>
    %c1 = arith.constant 1 : index
    %c0_8 = arith.constant 0 : index
    %c0_9 = arith.constant 0 : index
    %11 = vector.load %arg3[%c1, %c0_8, %c0_9] : memref<9x4x128xbf16, #tpu.memory_space<vmem>>, vector<1x4x128xbf16>
    %12 = vector.shape_cast %11 : vector<1x4x128xbf16> to vector<4x128xbf16>
    %cst_10 = arith.constant dense<0.000000e+00> : vector<256x128xf32>
    %13 = tpu.matmul %10, %12, %cst_10 {dimension_numbers = #tpu.dot_dimension_numbers<[1], [0], [0], [1], [0, 0, 1, 1], [], []>} : vector<256x4xbf16>, vector<4x128xbf16>, vector<256x128xf32> -> vector<256x128xf32>
    %14 = arith.addf %8, %13 : vector<256x128xf32>
    %15 = vector.extract_strided_slice %1 {offsets = [0, 2, 0], sizes = [16, 16, 4], strides = [1, 1, 1]} : vector<18x18x4xbf16> to vector<16x16x4xbf16>
    %16 = vector.shape_cast %15 : vector<16x16x4xbf16> to vector<256x4xbf16>
    %c2 = arith.constant 2 : index
    %c0_11 = arith.constant 0 : index
    %c0_12 = arith.constant 0 : index
    %17 = vector.load %arg3[%c2, %c0_11, %c0_12] : memref<9x4x128xbf16, #tpu.memory_space<vmem>>, vector<1x4x128xbf16>
    %18 = vector.shape_cast %17 : vector<1x4x128xbf16> to vector<4x128xbf16>
    %cst_13 = arith.constant dense<0.000000e+00> : vector<256x128xf32>
    %19 = tpu.matmul %16, %18, %cst_13 {dimension_numbers = #tpu.dot_dimension_numbers<[1], [0], [0], [1], [0, 0, 1, 1], [], []>} : vector<256x4xbf16>, vector<4x128xbf16>, vector<256x128xf32> -> vector<256x128xf32>
    %20 = arith.addf %14, %19 : vector<256x128xf32>
    %21 = vector.extract_strided_slice %1 {offsets = [1, 0, 0], sizes = [16, 16, 4], strides = [1, 1, 1]} : vector<18x18x4xbf16> to vector<16x16x4xbf16>
    %22 = vector.shape_cast %21 : vector<16x16x4xbf16> to vector<256x4xbf16>
    %c3 = arith.constant 3 : index
    %c0_14 = arith.constant 0 : index
    %c0_15 = arith.constant 0 : index
    %23 = vector.load %arg3[%c3, %c0_14, %c0_15] : memref<9x4x128xbf16, #tpu.memory_space<vmem>>, vector<1x4x128xbf16>
    %24 = vector.shape_cast %23 : vector<1x4x128xbf16> to vector<4x128xbf16>
    %cst_16 = arith.constant dense<0.000000e+00> : vector<256x128xf32>
    %25 = tpu.matmul %22, %24, %cst_16 {dimension_numbers = #tpu.dot_dimension_numbers<[1], [0], [0], [1], [0, 0, 1, 1], [], []>} : vector<256x4xbf16>, vector<4x128xbf16>, vector<256x128xf32> -> vector<256x128xf32>
    %26 = arith.addf %20, %25 : vector<256x128xf32>
    %27 = vector.extract_strided_slice %1 {offsets = [1, 1, 0], sizes = [16, 16, 4], strides = [1, 1, 1]} : vector<18x18x4xbf16> to vector<16x16x4xbf16>
    %28 = vector.shape_cast %27 : vector<16x16x4xbf16> to vector<256x4xbf16>
    %c4 = arith.constant 4 : index
    %c0_17 = arith.constant 0 : index
    %c0_18 = arith.constant 0 : index
    %29 = vector.load %arg3[%c4, %c0_17, %c0_18] : memref<9x4x128xbf16, #tpu.memory_space<vmem>>, vector<1x4x128xbf16>
    %30 = vector.shape_cast %29 : vector<1x4x128xbf16> to vector<4x128xbf16>
    %cst_19 = arith.constant dense<0.000000e+00> : vector<256x128xf32>
    %31 = tpu.matmul %28, %30, %cst_19 {dimension_numbers = #tpu.dot_dimension_numbers<[1], [0], [0], [1], [0, 0, 1, 1], [], []>} : vector<256x4xbf16>, vector<4x128xbf16>, vector<256x128xf32> -> vector<256x128xf32>
    %32 = arith.addf %26, %31 : vector<256x128xf32>
    %33 = vector.extract_strided_slice %1 {offsets = [1, 2, 0], sizes = [16, 16, 4], strides = [1, 1, 1]} : vector<18x18x4xbf16> to vector<16x16x4xbf16>
    %34 = vector.shape_cast %33 : vector<16x16x4xbf16> to vector<256x4xbf16>
    %c5 = arith.constant 5 : index
    %c0_20 = arith.constant 0 : index
    %c0_21 = arith.constant 0 : index
    %35 = vector.load %arg3[%c5, %c0_20, %c0_21] : memref<9x4x128xbf16, #tpu.memory_space<vmem>>, vector<1x4x128xbf16>
    %36 = vector.shape_cast %35 : vector<1x4x128xbf16> to vector<4x128xbf16>
    %cst_22 = arith.constant dense<0.000000e+00> : vector<256x128xf32>
    %37 = tpu.matmul %34, %36, %cst_22 {dimension_numbers = #tpu.dot_dimension_numbers<[1], [0], [0], [1], [0, 0, 1, 1], [], []>} : vector<256x4xbf16>, vector<4x128xbf16>, vector<256x128xf32> -> vector<256x128xf32>
    %38 = arith.addf %32, %37 : vector<256x128xf32>
    %39 = vector.extract_strided_slice %1 {offsets = [2, 0, 0], sizes = [16, 16, 4], strides = [1, 1, 1]} : vector<18x18x4xbf16> to vector<16x16x4xbf16>
    %40 = vector.shape_cast %39 : vector<16x16x4xbf16> to vector<256x4xbf16>
    %c6 = arith.constant 6 : index
    %c0_23 = arith.constant 0 : index
    %c0_24 = arith.constant 0 : index
    %41 = vector.load %arg3[%c6, %c0_23, %c0_24] : memref<9x4x128xbf16, #tpu.memory_space<vmem>>, vector<1x4x128xbf16>
    %42 = vector.shape_cast %41 : vector<1x4x128xbf16> to vector<4x128xbf16>
    %cst_25 = arith.constant dense<0.000000e+00> : vector<256x128xf32>
    %43 = tpu.matmul %40, %42, %cst_25 {dimension_numbers = #tpu.dot_dimension_numbers<[1], [0], [0], [1], [0, 0, 1, 1], [], []>} : vector<256x4xbf16>, vector<4x128xbf16>, vector<256x128xf32> -> vector<256x128xf32>
    %44 = arith.addf %38, %43 : vector<256x128xf32>
    %45 = vector.extract_strided_slice %1 {offsets = [2, 1, 0], sizes = [16, 16, 4], strides = [1, 1, 1]} : vector<18x18x4xbf16> to vector<16x16x4xbf16>
    %46 = vector.shape_cast %45 : vector<16x16x4xbf16> to vector<256x4xbf16>
    %c7 = arith.constant 7 : index
    %c0_26 = arith.constant 0 : index
    %c0_27 = arith.constant 0 : index
    %47 = vector.load %arg3[%c7, %c0_26, %c0_27] : memref<9x4x128xbf16, #tpu.memory_space<vmem>>, vector<1x4x128xbf16>
    %48 = vector.shape_cast %47 : vector<1x4x128xbf16> to vector<4x128xbf16>
    %cst_28 = arith.constant dense<0.000000e+00> : vector<256x128xf32>
    %49 = tpu.matmul %46, %48, %cst_28 {dimension_numbers = #tpu.dot_dimension_numbers<[1], [0], [0], [1], [0, 0, 1, 1], [], []>} : vector<256x4xbf16>, vector<4x128xbf16>, vector<256x128xf32> -> vector<256x128xf32>
    %50 = arith.addf %44, %49 : vector<256x128xf32>
    %51 = vector.extract_strided_slice %1 {offsets = [2, 2, 0], sizes = [16, 16, 4], strides = [1, 1, 1]} : vector<18x18x4xbf16> to vector<16x16x4xbf16>
    %52 = vector.shape_cast %51 : vector<16x16x4xbf16> to vector<256x4xbf16>
    %c8 = arith.constant 8 : index
    %c0_29 = arith.constant 0 : index
    %c0_30 = arith.constant 0 : index
    %53 = vector.load %arg3[%c8, %c0_29, %c0_30] : memref<9x4x128xbf16, #tpu.memory_space<vmem>>, vector<1x4x128xbf16>
    %54 = vector.shape_cast %53 : vector<1x4x128xbf16> to vector<4x128xbf16>
    %cst_31 = arith.constant dense<0.000000e+00> : vector<256x128xf32>
    %55 = tpu.matmul %52, %54, %cst_31 {dimension_numbers = #tpu.dot_dimension_numbers<[1], [0], [0], [1], [0, 0, 1, 1], [], []>} : vector<256x4xbf16>, vector<4x128xbf16>, vector<256x128xf32> -> vector<256x128xf32>
    %56 = arith.addf %50, %55 : vector<256x128xf32>
    %57 = arith.truncf %56 : vector<256x128xf32> to vector<256x128xbf16>
    %c0_32 = arith.constant 0 : index
    %c0_33 = arith.constant 0 : index
    %c0_34 = arith.constant 0 : index
    %c0_35 = arith.constant 0 : index
    %58 = vector.load %arg4[%c0_32, %c0_33, %c0_34, %c0_35] : memref<1x1x256x128xbf16, #tpu.memory_space<vmem>>, vector<1x1x256x128xbf16>
    %59 = vector.shape_cast %58 : vector<1x1x256x128xbf16> to vector<256x128xbf16>
    %60 = vector.shape_cast %57 : vector<256x128xbf16> to vector<1x1x256x128xbf16>
    tpu.vector_store %arg4[%c0_32, %c0_33, %c0_34, %c0_35], %60 {strides = array<i32>} : memref<1x1x256x128xbf16, #tpu.memory_space<vmem>>, vector<1x1x256x128xbf16>,
    %c16_i32 = arith.constant 16 : i32
    %61 = arith.muli %arg1, %c16_i32 : i32
    %c16_i32_36 = arith.constant 16 : i32
    %62 = arith.subi %c16_i32_36, %61 : i32
    %c16_i32_37 = arith.constant 16 : i32
    %63 = arith.minsi %62, %c16_i32_37 : i32
    %c16_i32_38 = arith.constant 16 : i32
    %64 = arith.muli %c16_i32_38, %63 : i32
    %65 = tpu.iota {dimensions = array<i32: 0>} : vector<256x1xi32>
    %66 = vector.broadcast %64 : i32 to vector<256x1xi32>
    %67 = arith.cmpi slt, %65, %66 : vector<256x1xi32>
    %cst_39 = arith.constant 0.000000e+00 : f32
    %68 = vector.shape_cast %67 : vector<256x1xi1> to vector<256x1xi1>
    %69 = vector.broadcast %68 : vector<256x1xi1> to vector<256x128xi1>
    %70 = vector.broadcast %cst_39 : f32 to vector<256x128xf32>
    %71 = arith.select %69, %56, %70 : vector<256x128xi1>, vector<256x128xf32>
    %cst_40 = arith.constant dense<0.000000e+00> : vector<128xf32>
    %72 = vector.multi_reduction <add>, %71, %cst_40 [0] : vector<256x128xf32> to vector<128xf32>
    %73 = vector.shape_cast %72 : vector<128xf32> to vector<1x128xf32>
    %74 = arith.mulf %71, %71 : vector<256x128xf32>
    %cst_41 = arith.constant dense<0.000000e+00> : vector<128xf32>
    %75 = vector.multi_reduction <add>, %74, %cst_41 [0] : vector<256x128xf32> to vector<128xf32>
    %76 = vector.shape_cast %75 : vector<128xf32> to vector<1x128xf32>
    %77 = tpu.iota {dimensions = array<i32: 0>} : vector<8x128xi32>
    %c0_i32 = arith.constant 0 : i32
    %78 = vector.broadcast %c0_i32 : i32 to vector<8x128xi32>
    %79 = arith.cmpi eq, %77, %78 : vector<8x128xi32>
    %c1_i32 = arith.constant 1 : i32
    %80 = vector.broadcast %c1_i32 : i32 to vector<8x128xi32>
    %81 = arith.cmpi eq, %77, %80 : vector<8x128xi32>
    %cst_42 = arith.constant 0.000000e+00 : f32
    %82 = vector.shape_cast %76 : vector<1x128xf32> to vector<1x128xf32>
    %83 = vector.broadcast %82 : vector<1x128xf32> to vector<8x128xf32>
    %84 = vector.broadcast %cst_42 : f32 to vector<8x128xf32>
    %85 = arith.select %81, %83, %84 : vector<8x128xi1>, vector<8x128xf32>
    %86 = vector.shape_cast %73 : vector<1x128xf32> to vector<1x128xf32>
    %87 = vector.broadcast %86 : vector<1x128xf32> to vector<8x128xf32>
    %88 = arith.select %79, %87, %85 : vector<8x128xi1>, vector<8x128xf32>
    %c0_43 = arith.constant 0 : index
    %c0_44 = arith.constant 0 : index
    %c0_45 = arith.constant 0 : index
    %c0_46 = arith.constant 0 : index
    %89 = vector.load %arg5[%c0_43, %c0_44, %c0_45, %c0_46] : memref<1x1x8x128xf32, #tpu.memory_space<vmem>>, vector<1x1x8x128xf32>
    %90 = vector.shape_cast %89 : vector<1x1x8x128xf32> to vector<8x128xf32>
    %91 = vector.shape_cast %88 : vector<8x128xf32> to vector<1x1x8x128xf32>
    tpu.vector_store %arg5[%c0_43, %c0_44, %c0_45, %c0_46], %91 {strides = array<i32>} : memref<1x1x8x128xf32, #tpu.memory_space<vmem>>, vector<1x1x8x128xf32>,
    return
  }
  func.func @transform_0(%arg0: i32, %arg1: i32) -> (i32, i32, i32, i32, i32) {
    %c0_i32 = arith.constant 0 : i32
    %c0_i32_0 = arith.constant 0 : i32
    %c0_i32_1 = arith.constant 0 : i32
    %c0_i32_2 = arith.constant 0 : i32
    return %arg0, %arg1, %c0_i32, %c0_i32_0, %c0_i32_1 : i32, i32, i32, i32, i32
  }
  func.func @transform_1(%arg0: i32, %arg1: i32) -> (i32, i32, i32) {
    %c0_i32 = arith.constant 0 : i32
    %c0_i32_0 = arith.constant 0 : i32
    %c0_i32_1 = arith.constant 0 : i32
    %c0_i32_2 = arith.constant 0 : i32
    return %c0_i32, %c0_i32_0, %c0_i32_1 : i32, i32, i32
  }
  func.func @transform_2(%arg0: i32, %arg1: i32) -> (i32, i32, i32, i32) {
    %c0_i32 = arith.constant 0 : i32
    %c0_i32_0 = arith.constant 0 : i32
    %c0_i32_1 = arith.constant 0 : i32
    return %arg0, %arg1, %c0_i32, %c0_i32_0 : i32, i32, i32, i32
  }
  func.func @transform_3(%arg0: i32, %arg1: i32) -> (i32, i32, i32, i32) {
    %c0_i32 = arith.constant 0 : i32
    %c0_i32_0 = arith.constant 0 : i32
    %c0_i32_1 = arith.constant 0 : i32
    return %arg0, %arg1, %c0_i32, %c0_i32_0 : i32, i32, i32, i32
  }
}

</mosaic_0001>

<llo_original>
// kernel: base_conv_forward.3
$region0: #{base_conv_forward.3}
  #allocation0 [shape = 'u32[]', space=smem, size = 0x4, offset = 0x4, fixed_abs, tag = 'smem constant byte address 0x4 - core index']
  #allocation1 [shape = 'u32[72,128]{1,0:T(1,128)}', space=vmem, size = 0x9000, scoped, tag = 'internal scratch']
  %s0 = inlined_call_operand.vmem [shape: bf16[2,1,256,128], index: 0, kind: input, shape index: {}]
  %s1 = inlined_call_operand.vmem [shape: f32[1,128], index: 1, kind: input, shape index: {}]
  %s2 = inlined_call_operand.vmem [shape: f32[1,128], index: 2, kind: input, shape index: {}]
  %s3 = inlined_call_operand.vmem [shape: f32[2,8,256], index: 3, kind: output, shape index: {}]
  %s4 = sld [smem:[#allocation0]]
  $region45: #{base_conv_forward.3} parent=0
    _
  %s6 = ssub.s32 1, %s4
  %s7 = scalar_select 0, %s6, %s4
  loop: start=0, step=1, limit=4
  $region2: #{base_conv_forward.3} parent=0 // loop_pre_header
    _
  $region3: #{base_conv_forward.3} parent=0 // loop_header
    %s9 = sphi 0, %s13
    %p10 = scmp.ge.s32.totalorder %s9, 4
    %s16 = sphi 0, %s28
    %s17 = sphi 0, %s24
    %s18 = sphi 0, %s16
    %s19 = sphi 0, %s17
    %s20 = sphi 0, %s18
    %s21 = sphi 0, %s19
    %s33 = sphi 0, %s35
    %s36 = sphi 0, %s33
    %s37 = sphi 0, %s36
    %s53 = sphi 0, %s37
    %s57 = sphi 0, %s57
    %s59 = sphi 0, %s57
    %s60 = sphi 0, %s59
    %s74 = sphi 0, %s60
    %s78 = sphi 0, %s78
    %s80 = sphi 0, %s78
    %s81 = sphi 0, %s80
    %s95 = sphi 0, %s81
    %s103 = sphi 0, %s105
    %s106 = sphi 0, %s103
    %s107 = sphi 0, %s106
    %s123 = sphi 0, %s107
  $region4: #{base_conv_forward.3} parent=0 // loop_header_branch
    %12 = sbr.rel (%p10) target = $region8
  $region5: #{base_conv_forward.3} parent=0 // loop_body
    %s14 = ssub.s32 %s9, 1
    %s15 = ssub.s32 %s9, 2
    %s22 = sadd.s32 1, %s17
    %p23 = scmp.ge.s32.totalorder %s22, 1
    %s24 = scalar_select %p23, 0, %s22
    %s25 = sadd.s32 1, %s16
    %s26 = scalar_select %p23, %s25, %s16
    %p27 = scmp.ge.s32.totalorder %s26, 2
    %s28 = scalar_select %p27, 0, %s26
    %s29 = ssub.s32 %s16, %s28
    %s30 = ssub.s32 %s17, %s24
    %s31 = sor.u32 %s29, %s30
    %p32 = scmp.eq.s32.totalorder %s31, 0
    %s34 = sadd.s32 %s33, 1
    %s35 = scalar_select %p32, %s33, %s34
    %p38 = pneg %p32
    %p39 = scmp.eq.s32.totalorder %s9, 1
    %p40 = por %p38, %p39
    %p41 = scmp.ne.s32.totalorder %s33, %s36
    %p42 = scmp.eq.s32.totalorder %s9, 0
    %p43 = por %p41, %p42
    %p44 = scmp.ne.s32.totalorder %s33, %s36
    %p45 = scmp.eq.s32.totalorder %s14, 1
    %p46 = por %p44, %p45
    %p47 = scmp.ne.s32.totalorder %s36, %s37
    %p48 = scmp.eq.s32.totalorder %s14, 0
    %p49 = por %p47, %p48
    %p50 = scmp.ne.s32.totalorder %s36, %s37
    %p51 = scmp.eq.s32.totalorder %s15, 1
    %p52 = por %p50, %p51
    %p54 = scmp.ne.s32.totalorder %s37, %s53
    %p55 = scmp.eq.s32.totalorder %s15, 0
    %p56 = por %p54, %p55
    %s58 = sadd.s32 %s57, 1
    %p61 = scmp.eq.s32.totalorder %s9, 1
    %p62 = scmp.ne.s32.totalorder %s57, %s59
    %p63 = scmp.eq.s32.totalorder %s9, 0
    %p64 = por %p62, %p63
    %p65 = scmp.ne.s32.totalorder %s57, %s59
    %p66 = scmp.eq.s32.totalorder %s14, 1
    %p67 = por %p65, %p66
    %p68 = scmp.ne.s32.totalorder %s59, %s60
    %p69 = scmp.eq.s32.totalorder %s14, 0
    %p70 = por %p68, %p69
    %p71 = scmp.ne.s32.totalorder %s59, %s60
    %p72 = scmp.eq.s32.totalorder %s15, 1
    %p73 = por %p71, %p72
    %p75 = scmp.ne.s32.totalorder %s60, %s74
    %p76 = scmp.eq.s32.totalorder %s15, 0
    %p77 = por %p75, %p76
    %s79 = sadd.s32 %s78, 1
    %p82 = scmp.eq.s32.totalorder %s9, 1
    %p83 = scmp.ne.s32.totalorder %s78, %s80
    %p84 = scmp.eq.s32.totalorder %s9, 0
    %p85 = por %p83, %p84
    %p86 = scmp.ne.s32.totalorder %s78, %s80
    %p87 = scmp.eq.s32.totalorder %s14, 1
    %p88 = por %p86, %p87
    %p89 = scmp.ne.s32.totalorder %s80, %s81
    %p90 = scmp.eq.s32.totalorder %s14, 0
    %p91 = por %p89, %p90
    %p92 = scmp.ne.s32.totalorder %s80, %s81
    %p93 = scmp.eq.s32.totalorder %s15, 1
    %p94 = por %p92, %p93
    %p96 = scmp.ne.s32.totalorder %s81, %s95
    %p97 = scmp.eq.s32.totalorder %s15, 0
    %p98 = por %p96, %p97
    %s99 = ssub.s32 %s16, %s28
    %s100 = ssub.s32 %s17, %s24
    %s101 = sor.u32 %s99, %s100
    %p102 = scmp.eq.s32.totalorder %s101, 0
    %s104 = sadd.s32 %s103, 1
    %s105 = scalar_select %p102, %s103, %s104
    %p108 = pneg %p102
    %p109 = scmp.eq.s32.totalorder %s9, 1
    %p110 = por %p108, %p109
    %p111 = scmp.ne.s32.totalorder %s103, %s106
    %p112 = scmp.eq.s32.totalorder %s9, 0
    %p113 = por %p111, %p112
    %p114 = scmp.ne.s32.totalorder %s103, %s106
    %p115 = scmp.eq.s32.totalorder %s14, 1
    %p116 = por %p114, %p115
    %p117 = scmp.ne.s32.totalorder %s106, %s107
    %p118 = scmp.eq.s32.totalorder %s14, 0
    %p119 = por %p117, %p118
    %p120 = scmp.ne.s32.totalorder %s106, %s107
    %p121 = scmp.eq.s32.totalorder %s15, 1
    %p122 = por %p120, %p121
    %p124 = scmp.ne.s32.totalorder %s107, %s123
    %p125 = scmp.eq.s32.totalorder %s15, 0
    %p126 = por %p124, %p125
    %p127 = scmp.le.s32.totalorder 1, %s9
    %p128 = scmp.lt.s32.totalorder %s9, 3
    %p129 = pnand %p127, %p128
    %p130 = pneg %p129
    // Predicated region
    $region9: #{base_conv_forward.3} parent=5 // pred_check
      _
    $region10: #{base_conv_forward.3} parent=5 // pred_check_branch
      %132 = sbr.rel (%p129) target = $region12
    $region11: #{base_conv_forward.3} parent=5 // pred_region
      %s133 = ssub.s32 %s9, 1
      // Predicated region
      $region13: #{base_conv_forward.3} parent=11 // pred_check
        %p134 = pneg %p70
      $region14: #{base_conv_forward.3} parent=11 // pred_check_branch
        %136 = sbr.rel (%p134) target = $region16
      $region15: #{base_conv_forward.3} parent=11 // pred_region
        _
      $region16: #{base_conv_forward.3} parent=11 // pred_fallthru
        _
      // Predicated region
      $region17: #{base_conv_forward.3} parent=11 // pred_check
        %p137 = pneg %p91
      $region18: #{base_conv_forward.3} parent=11 // pred_check_branch
        %139 = sbr.rel (%p137) target = $region20
      $region19: #{base_conv_forward.3} parent=11 // pred_region
        _
      $region20: #{base_conv_forward.3} parent=11 // pred_fallthru
        _
    $region12: #{base_conv_forward.3} parent=5 // pred_fallthru
      _
    %p140 = scmp.lt.s32.totalorder %s9, 2
    // Predicated region
    $region21: #{base_conv_forward.3} parent=5 // pred_check
      %p141 = pneg %p140
    $region22: #{base_conv_forward.3} parent=5 // pred_check_branch
      %143 = sbr.rel (%p141) target = $region24
    $region23: #{base_conv_forward.3} parent=5 // pred_region
      // Predicated region
      $region25: #{base_conv_forward.3} parent=23 // pred_check
        %p144 = pneg %p43
      $region26: #{base_conv_forward.3} parent=23 // pred_check_branch
        %146 = sbr.rel (%p144) target = $region28
      $region27: #{base_conv_forward.3} parent=23 // pred_region
        %p147 = scmp.lt.s32.totalorder %s16, 1
        %s148 = scalar_select %p147, %s16, 1
        %p149 = scmp.lt.s32.totalorder %s17, 0
        %s150 = scalar_select %p149, %s17, 0
        %s151 = smul.addr %s150, 32
        %s152 = smul.addr %s148, 32
        %s153 = sadd.s32 %s151, %s152
        %s154 = smul.addr %s153, 4
        %s155 = scalar_lea.vmem %s0, %s154
      $region28: #{base_conv_forward.3} parent=23 // pred_fallthru
        _
    $region24: #{base_conv_forward.3} parent=5 // pred_fallthru
      _
    %p156 = scmp.le.s32.totalorder 1, %s9
    %p157 = scmp.lt.s32.totalorder %s9, 3
    %p158 = pnand %p156, %p157
    %p159 = pneg %p158
    // Predicated region
    $region29: #{base_conv_forward.3} parent=5 // pred_check
      _
    $region30: #{base_conv_forward.3} parent=5 // pred_check_branch
      %161 = sbr.rel (%p158) target = $region32
    $region31: #{base_conv_forward.3} parent=5 // pred_region
      %s162 = ssub.s32 %s9, 1
      %p163 = scmp.lt.s32.totalorder %s18, 1
      %s164 = scalar_select %p163, %s18, 1
      %p165 = scmp.lt.s32.totalorder %s19, 0
      %s166 = scalar_select %p165, %s19, 0
      %s167 = smul.addr %s166, 32
      %s168 = smul.addr %s164, 32
      %s169 = sadd.s32 %s167, %s168
      %s170 = smul.addr %s169, 4
      %s171 = scalar_lea.vmem %s0, %s170
      %p172 = pneg %p49
      %p173 = pneg %p46
      %p174 = pneg %p70
      %p175 = pneg %p67
      %p176 = pneg %p91
      %p177 = pneg %p88
      %p178 = pneg %p119
      %p179 = pneg %p116
      %s180 = smul.u32 2, %s19
      %p181 = scmp.lt.s32.totalorder %s18, 1
      %s182 = scalar_select %p181, %s18, 1
      %p183 = scmp.lt.s32.totalorder %s180, 1
      %s184 = scalar_select %p183, %s180, 1
      %s185 = smul.addr %s182, 2
      %s186 = sadd.s32 %s184, %s185
      %s187 = smul.addr %s186, 8
      %s188 = scalar_lea.vmem %s3, %s187
      %p189 = scmp.lt.s32.totalorder %s18, 1
      %s190 = scalar_select %p189, %s18, 1
      %p191 = scmp.lt.s32.totalorder %s19, 0
      %s192 = scalar_select %p191, %s19, 0
      %s193 = smul.addr %s192, 32
      %s194 = smul.addr %s190, 32
      %s195 = sadd.s32 %s193, %s194
      %s196 = smul.addr %s195, 4
      %s197 = scalar_lea.vmem %s0, %s196
      %s198 = smul.u32 2, %s19
      %p199 = scmp.lt.s32.totalorder %s18, 1
      %s200 = scalar_select %p199, %s18, 1
      %p201 = scmp.lt.s32.totalorder %s198, 1
      %s202 = scalar_select %p201, %s198, 1
      %s203 = smul.addr %s200, 2
      %s204 = sadd.s32 %s202, %s203
      %s205 = smul.addr %s204, 8
      %s206 = scalar_lea.vmem %s3, %s205
      %s207 = smul.u32 2, %s19
      %v208 = vld [vmem:[%s197] sm:$0xf]
      %v209 = vld [vmem:[%s197 + $0x4] sm:$0xf]
      %v210 = vld [vmem:[%s197 + $0x8] sm:$0xf]
      %v211 = vld [vmem:[%s197 + $0xc] sm:$0xf]
      %v212 = vld [vmem:[%s197 + $0x10] sm:$0xf]
      %v213 = vld [vmem:[%s197 + $0x14] sm:$0xf]
      %v214 = vld [vmem:[%s197 + $0x18] sm:$0xf]
      %v215 = vld [vmem:[%s197 + $0x1c] sm:$0xf]
      %v216 = vld [vmem:[%s197 + $0x20] sm:$0xf]
      %v217 = vld [vmem:[%s197 + $0x24] sm:$0xf]
      %v218 = vld [vmem:[%s197 + $0x28] sm:$0xf]
      %v219 = vld [vmem:[%s197 + $0x2c] sm:$0xf]
      %v220 = vld [vmem:[%s197 + $0x30] sm:$0xf]
      %v221 = vld [vmem:[%s197 + $0x34] sm:$0xf]
      %v222 = vld [vmem:[%s197 + $0x38] sm:$0xf]
      %v223 = vld [vmem:[%s197 + $0x3c] sm:$0xf]
      %v224 = vld [vmem:[%s197 + $0x40] sm:$0xf]
      %v225 = vld [vmem:[%s197 + $0x44] sm:$0xf]
      %v226 = vld [vmem:[%s197 + $0x48] sm:$0xf]
      %v227 = vld [vmem:[%s197 + $0x4c] sm:$0xf]
      %v228 = vld [vmem:[%s197 + $0x50] sm:$0xf]
      %v229 = vld [vmem:[%s197 + $0x54] sm:$0xf]
      %v230 = vld [vmem:[%s197 + $0x58] sm:$0xf]
      %v231 = vld [vmem:[%s197 + $0x5c] sm:$0xf]
      %v232 = vld [vmem:[%s197 + $0x60] sm:$0xf]
      %v233 = vld [vmem:[%s197 + $0x64] sm:$0xf]
      %v234 = vld [vmem:[%s197 + $0x68] sm:$0xf]
      %v235 = vld [vmem:[%s197 + $0x6c] sm:$0xf]
      %v236 = vld [vmem:[%s197 + $0x70] sm:$0xf]
      %v237 = vld [vmem:[%s197 + $0x74] sm:$0xf]
      %v238 = vld [vmem:[%s197 + $0x78] sm:$0xf]
      %v239 = vld [vmem:[%s197 + $0x7c] sm:$0xf]
      %v240 = vunpack.c.l.bf16 %v208
      %v241 = vunpack.c.l.bf16 %v209
      %v242 = vunpack.c.l.bf16 %v210
      %v243 = vunpack.c.l.bf16 %v211
      %v244 = vunpack.c.l.bf16 %v212
      %v245 = vunpack.c.l.bf16 %v213
      %v246 = vunpack.c.l.bf16 %v214
      %v247 = vunpack.c.l.bf16 %v215
      %v248 = vunpack.c.l.bf16 %v216
      %v249 = vunpack.c.l.bf16 %v217
      %v250 = vunpack.c.l.bf16 %v218
      %v251 = vunpack.c.l.bf16 %v219
      %v252 = vunpack.c.l.bf16 %v220
      %v253 = vunpack.c.l.bf16 %v221
      %v254 = vunpack.c.l.bf16 %v222
      %v255 = vunpack.c.l.bf16 %v223
      %v256 = vunpack.c.l.bf16 %v224
      %v257 = vunpack.c.l.bf16 %v225
      %v258 = vunpack.c.l.bf16 %v226
      %v259 = vunpack.c.l.bf16 %v227
      %v260 = vunpack.c.l.bf16 %v228
      %v261 = vunpack.c.l.bf16 %v229
      %v262 = vunpack.c.l.bf16 %v230
      %v263 = vunpack.c.l.bf16 %v231
      %v264 = vunpack.c.l.bf16 %v232
      %v265 = vunpack.c.l.bf16 %v233
      %v266 = vunpack.c.l.bf16 %v234
      %v267 = vunpack.c.l.bf16 %v235
      %v268 = vunpack.c.l.bf16 %v236
      %v269 = vunpack.c.l.bf16 %v237
      %v270 = vunpack.c.l.bf16 %v238
      %v271 = vunpack.c.l.bf16 %v239
      %v272 = vld [vmem:[%s1] sm:$0x1]
      %v274 = vperm.slane %v272, 0
      %v276 = vmul.f32 %v240, %v274
      %v277 = vmul.f32 %v241, %v274
      %v278 = vmul.f32 %v242, %v274
      %v279 = vmul.f32 %v243, %v274
      %v280 = vmul.f32 %v244, %v274
      %v281 = vmul.f32 %v245, %v274
      %v282 = vmul.f32 %v246, %v274
      %v283 = vmul.f32 %v247, %v274
      %v284 = vmul.f32 %v248, %v274
      %v285 = vmul.f32 %v249, %v274
      %v286 = vmul.f32 %v250, %v274
      %v287 = vmul.f32 %v251, %v274
      %v288 = vmul.f32 %v252, %v274
      %v289 = vmul.f32 %v253, %v274
      %v290 = vmul.f32 %v254, %v274
      %v291 = vmul.f32 %v255, %v274
      %v292 = vmul.f32 %v256, %v274
      %v293 = vmul.f32 %v257, %v274
      %v294 = vmul.f32 %v258, %v274
      %v295 = vmul.f32 %v259, %v274
      %v296 = vmul.f32 %v260, %v274
      %v297 = vmul.f32 %v261, %v274
      %v298 = vmul.f32 %v262, %v274
      %v299 = vmul.f32 %v263, %v274
      %v300 = vmul.f32 %v264, %v274
      %v301 = vmul.f32 %v265, %v274
      %v302 = vmul.f32 %v266, %v274
      %v303 = vmul.f32 %v267, %v274
      %v304 = vmul.f32 %v268, %v274
      %v305 = vmul.f32 %v269, %v274
      %v306 = vmul.f32 %v270, %v274
      %v307 = vmul.f32 %v271, %v274
      %v308 = vld [vmem:[%s2] sm:$0x1]
      %v310 = vperm.slane %v308, 0
      %v312 = vadd.f32 %v276, %v310
      %v313 = vadd.f32 %v277, %v310
      %v314 = vadd.f32 %v278, %v310
      %v315 = vadd.f32 %v279, %v310
      %v316 = vadd.f32 %v280, %v310
      %v317 = vadd.f32 %v281, %v310
      %v318 = vadd.f32 %v282, %v310
      %v319 = vadd.f32 %v283, %v310
      %v320 = vadd.f32 %v284, %v310
      %v321 = vadd.f32 %v285, %v310
      %v322 = vadd.f32 %v286, %v310
      %v323 = vadd.f32 %v287, %v310
      %v324 = vadd.f32 %v288, %v310
      %v325 = vadd.f32 %v289, %v310
      %v326 = vadd.f32 %v290, %v310
      %v327 = vadd.f32 %v291, %v310
      %v328 = vadd.f32 %v292, %v310
      %v329 = vadd.f32 %v293, %v310
      %v330 = vadd.f32 %v294, %v310
      %v331 = vadd.f32 %v295, %v310
      %v332 = vadd.f32 %v296, %v310
      %v333 = vadd.f32 %v297, %v310
      %v334 = vadd.f32 %v298, %v310
      %v335 = vadd.f32 %v299, %v310
      %v336 = vadd.f32 %v300, %v310
      %v337 = vadd.f32 %v301, %v310
      %v338 = vadd.f32 %v302, %v310
      %v339 = vadd.f32 %v303, %v310
      %v340 = vadd.f32 %v304, %v310
      %v341 = vadd.f32 %v305, %v310
      %v342 = vadd.f32 %v306, %v310
      %v343 = vadd.f32 %v307, %v310
      %v344 = vxor.u32 %v312, 2147483648
      %v345 = vxor.u32 %v313, 2147483648
      %v346 = vxor.u32 %v314, 2147483648
      %v347 = vxor.u32 %v315, 2147483648
      %v348 = vxor.u32 %v316, 2147483648
      %v349 = vxor.u32 %v317, 2147483648
      %v350 = vxor.u32 %v318, 2147483648
      %v351 = vxor.u32 %v319, 2147483648
      %v352 = vxor.u32 %v320, 2147483648
      %v353 = vxor.u32 %v321, 2147483648
      %v354 = vxor.u32 %v322, 2147483648
      %v355 = vxor.u32 %v323, 2147483648
      %v356 = vxor.u32 %v324, 2147483648
      %v357 = vxor.u32 %v325, 2147483648
      %v358 = vxor.u32 %v326, 2147483648
      %v359 = vxor.u32 %v327, 2147483648
      %v360 = vxor.u32 %v328, 2147483648
      %v361 = vxor.u32 %v329, 2147483648
      %v362 = vxor.u32 %v330, 2147483648
      %v363 = vxor.u32 %v331, 2147483648
      %v364 = vxor.u32 %v332, 2147483648
      %v365 = vxor.u32 %v333, 2147483648
      %v366 = vxor.u32 %v334, 2147483648
      %v367 = vxor.u32 %v335, 2147483648
      %v368 = vxor.u32 %v336, 2147483648
      %v369 = vxor.u32 %v337, 2147483648
      %v370 = vxor.u32 %v338, 2147483648
      %v371 = vxor.u32 %v339, 2147483648
      %v372 = vxor.u32 %v340, 2147483648
      %v373 = vxor.u32 %v341, 2147483648
      %v374 = vxor.u32 %v342, 2147483648
      %v375 = vxor.u32 %v343, 2147483648
      %v376 = vmul.f32 %v344, 1.442695
      %v377 = vpow.pop %v376
      %v378 = vmul.f32 %v345, 1.442695
      %v379 = vpow.pop %v378
      %v380 = vmul.f32 %v346, 1.442695
      %v381 = vpow.pop %v380
      %v382 = vmul.f32 %v347, 1.442695
      %v383 = vpow.pop %v382
      %v384 = vmul.f32 %v348, 1.442695
      %v385 = vpow.pop %v384
      %v386 = vmul.f32 %v349, 1.442695
      %v387 = vpow.pop %v386
      %v388 = vmul.f32 %v350, 1.442695
      %v389 = vpow.pop %v388
      %v390 = vmul.f32 %v351, 1.442695
      %v391 = vpow.pop %v390
      %v392 = vmul.f32 %v352, 1.442695
      %v393 = vpow.pop %v392
      %v394 = vmul.f32 %v353, 1.442695
      %v395 = vpow.pop %v394
      %v396 = vmul.f32 %v354, 1.442695
      %v397 = vpow.pop %v396
      %v398 = vmul.f32 %v355, 1.442695
      %v399 = vpow.pop %v398
      %v400 = vmul.f32 %v356, 1.442695
      %v401 = vpow.pop %v400
      %v402 = vmul.f32 %v357, 1.442695
      %v403 = vpow.pop %v402
      %v404 = vmul.f32 %v358, 1.442695
      %v405 = vpow.pop %v404
      %v406 = vmul.f32 %v359, 1.442695
      %v407 = vpow.pop %v406
      %v408 = vmul.f32 %v360, 1.442695
      %v409 = vpow.pop %v408
      %v410 = vmul.f32 %v361, 1.442695
      %v411 = vpow.pop %v410
      %v412 = vmul.f32 %v362, 1.442695
      %v413 = vpow.pop %v412
      %v414 = vmul.f32 %v363, 1.442695
      %v415 = vpow.pop %v414
      %v416 = vmul.f32 %v364, 1.442695
      %v417 = vpow.pop %v416
      %v418 = vmul.f32 %v365, 1.442695
      %v419 = vpow.pop %v418
      %v420 = vmul.f32 %v366, 1.442695
      %v421 = vpow.pop %v420
      %v422 = vmul.f32 %v367, 1.442695
      %v423 = vpow.pop %v422
      %v424 = vmul.f32 %v368, 1.442695
      %v425 = vpow.pop %v424
      %v426 = vmul.f32 %v369, 1.442695
      %v427 = vpow.pop %v426
      %v428 = vmul.f32 %v370, 1.442695
      %v429 = vpow.pop %v428
      %v430 = vmul.f32 %v371, 1.442695
      %v431 = vpow.pop %v430
      %v432 = vmul.f32 %v372, 1.442695
      %v433 = vpow.pop %v432
      %v434 = vmul.f32 %v373, 1.442695
      %v435 = vpow.pop %v434
      %v436 = vmul.f32 %v374, 1.442695
      %v437 = vpow.pop %v436
      %v438 = vmul.f32 %v375, 1.442695
      %v439 = vpow.pop %v438
      %v440 = vadd.f32 %v377, 1.0
      %v441 = vadd.f32 %v379, 1.0
      %v442 = vadd.f32 %v381, 1.0
      %v443 = vadd.f32 %v383, 1.0
      %v444 = vadd.f32 %v385, 1.0
      %v445 = vadd.f32 %v387, 1.0
      %v446 = vadd.f32 %v389, 1.0
      %v447 = vadd.f32 %v391, 1.0
      %v448 = vadd.f32 %v393, 1.0
      %v449 = vadd.f32 %v395, 1.0
      %v450 = vadd.f32 %v397, 1.0
      %v451 = vadd.f32 %v399, 1.0
      %v452 = vadd.f32 %v401, 1.0
      %v453 = vadd.f32 %v403, 1.0
      %v454 = vadd.f32 %v405, 1.0
      %v455 = vadd.f32 %v407, 1.0
      %v456 = vadd.f32 %v409, 1.0
      %v457 = vadd.f32 %v411, 1.0
      %v458 = vadd.f32 %v413, 1.0
      %v459 = vadd.f32 %v415, 1.0
      %v460 = vadd.f32 %v417, 1.0
      %v461 = vadd.f32 %v419, 1.0
      %v462 = vadd.f32 %v421, 1.0
      %v463 = vadd.f32 %v423, 1.0
      %v464 = vadd.f32 %v425, 1.0
      %v465 = vadd.f32 %v427, 1.0
      %v466 = vadd.f32 %v429, 1.0
      %v467 = vadd.f32 %v431, 1.0
      %v468 = vadd.f32 %v433, 1.0
      %v469 = vadd.f32 %v435, 1.0
      %v470 = vadd.f32 %v437, 1.0
      %v471 = vadd.f32 %v439, 1.0
      %v472 = vrcp.pop %v440
      %v473 = vmul.f32 %v440, %v472
      %v474 = vsub.f32 1.0, %v473
      %v475 = vmul.f32 %v472, %v474
      %v476 = vadd.f32 %v472, %v475
      %vm477 = vweird.f32 %v440
      %vm478 = vweird.f32 %v472
      %vm479 = vmor %vm477, %vm478
      %v480 = vsel %vm479, %v472, %v476
      %v481 = vand.u32 2147483647, %v440
      %vm482 = vcmp.eq.f32.partialorder %v481, 8.507059e+37
      %v483 = vand.u32 %v440, 2147483648
      %v484 = vor.u32 1.1754944e-38, %v483
      %v485 = vsel %vm482, %v484, %v480
      %v486 = vmul.f32 1.0, %v485
      %v487 = vrcp.pop %v441
      %v488 = vmul.f32 %v441, %v487
      %v489 = vsub.f32 1.0, %v488
      %v490 = vmul.f32 %v487, %v489
      %v491 = vadd.f32 %v487, %v490
      %vm492 = vweird.f32 %v441
      %vm493 = vweird.f32 %v487
      %vm494 = vmor %vm492, %vm493
      %v495 = vsel %vm494, %v487, %v491
      %v496 = vand.u32 2147483647, %v441
      %vm497 = vcmp.eq.f32.partialorder %v496, 8.507059e+37
      %v498 = vand.u32 %v441, 2147483648
      %v499 = vor.u32 1.1754944e-38, %v498
      %v500 = vsel %vm497, %v499, %v495
      %v501 = vmul.f32 1.0, %v500
      %v502 = vrcp.pop %v442
      %v503 = vmul.f32 %v442, %v502
      %v504 = vsub.f32 1.0, %v503
      %v505 = vmul.f32 %v502, %v504
      %v506 = vadd.f32 %v502, %v505
      %vm507 = vweird.f32 %v442
      %vm508 = vweird.f32 %v502
      %vm509 = vmor %vm507, %vm508
      %v510 = vsel %vm509, %v502, %v506
      %v511 = vand.u32 2147483647, %v442
      %vm512 = vcmp.eq.f32.partialorder %v511, 8.507059e+37
      %v513 = vand.u32 %v442, 2147483648
      %v514 = vor.u32 1.1754944e-38, %v513
      %v515 = vsel %vm512, %v514, %v510
      %v516 = vmul.f32 1.0, %v515
      %v517 = vrcp.pop %v443
      %v518 = vmul.f32 %v443, %v517
      %v519 = vsub.f32 1.0, %v518
      %v520 = vmul.f32 %v517, %v519
      %v521 = vadd.f32 %v517, %v520
      %vm522 = vweird.f32 %v443
      %vm523 = vweird.f32 %v517
      %vm524 = vmor %vm522, %vm523
      %v525 = vsel %vm524, %v517, %v521
      %v526 = vand.u32 2147483647, %v443
      %vm527 = vcmp.eq.f32.partialorder %v526, 8.507059e+37
      %v528 = vand.u32 %v443, 2147483648
      %v529 = vor.u32 1.1754944e-38, %v528
      %v530 = vsel %vm527, %v529, %v525
      %v531 = vmul.f32 1.0, %v530
      %v532 = vrcp.pop %v444
      %v533 = vmul.f32 %v444, %v532
      %v534 = vsub.f32 1.0, %v533
      %v535 = vmul.f32 %v532, %v534
      %v536 = vadd.f32 %v532, %v535
      %vm537 = vweird.f32 %v444
      %vm538 = vweird.f32 %v532
      %vm539 = vmor %vm537, %vm538
      %v540 = vsel %vm539, %v532, %v536
      %v541 = vand.u32 2147483647, %v444
      %vm542 = vcmp.eq.f32.partialorder %v541, 8.507059e+37
      %v543 = vand.u32 %v444, 2147483648
      %v544 = vor.u32 1.1754944e-38, %v543
      %v545 = vsel %vm542, %v544, %v540
      %v546 = vmul.f32 1.0, %v545
      %v547 = vrcp.pop %v445
      %v548 = vmul.f32 %v445, %v547
      %v549 = vsub.f32 1.0, %v548
      %v550 = vmul.f32 %v547, %v549
      %v551 = vadd.f32 %v547, %v550
      %vm552 = vweird.f32 %v445
      %vm553 = vweird.f32 %v547
      %vm554 = vmor %vm552, %vm553
      %v555 = vsel %vm554, %v547, %v551
      %v556 = vand.u32 2147483647, %v445
      %vm557 = vcmp.eq.f32.partialorder %v556, 8.507059e+37
      %v558 = vand.u32 %v445, 2147483648
      %v559 = vor.u32 1.1754944e-38, %v558
      %v560 = vsel %vm557, %v559, %v555
      %v561 = vmul.f32 1.0, %v560
      %v562 = vrcp.pop %v446
      %v563 = vmul.f32 %v446, %v562
      %v564 = vsub.f32 1.0, %v563
      %v565 = vmul.f32 %v562, %v564
      %v566 = vadd.f32 %v562, %v565
      %vm567 = vweird.f32 %v446
      %vm568 = vweird.f32 %v562
      %vm569 = vmor %vm567, %vm568
      %v570 = vsel %vm569, %v562, %v566
      %v571 = vand.u32 2147483647, %v446
      %vm572 = vcmp.eq.f32.partialorder %v571, 8.507059e+37
      %v573 = vand.u32 %v446, 2147483648
      %v574 = vor.u32 1.1754944e-38, %v573
      %v575 = vsel %vm572, %v574, %v570
      %v576 = vmul.f32 1.0, %v575
      %v577 = vrcp.pop %v447
      %v578 = vmul.f32 %v447, %v577
      %v579 = vsub.f32 1.0, %v578
      %v580 = vmul.f32 %v577, %v579
      %v581 = vadd.f32 %v577, %v580
      %vm582 = vweird.f32 %v447
      %vm583 = vweird.f32 %v577
      %vm584 = vmor %vm582, %vm583
      %v585 = vsel %vm584, %v577, %v581
      %v586 = vand.u32 2147483647, %v447
      %vm587 = vcmp.eq.f32.partialorder %v586, 8.507059e+37
      %v588 = vand.u32 %v447, 2147483648
      %v589 = vor.u32 1.1754944e-38, %v588
      %v590 = vsel %vm587, %v589, %v585
      %v591 = vmul.f32 1.0, %v590
      %v592 = vrcp.pop %v448
      %v593 = vmul.f32 %v448, %v592
      %v594 = vsub.f32 1.0, %v593
      %v595 = vmul.f32 %v592, %v594
      %v596 = vadd.f32 %v592, %v595
      %vm597 = vweird.f32 %v448
      %vm598 = vweird.f32 %v592
      %vm599 = vmor %vm597, %vm598
      %v600 = vsel %vm599, %v592, %v596
      %v601 = vand.u32 2147483647, %v448
      %vm602 = vcmp.eq.f32.partialorder %v601, 8.507059e+37
      %v603 = vand.u32 %v448, 2147483648
      %v604 = vor.u32 1.1754944e-38, %v603
      %v605 = vsel %vm602, %v604, %v600
      %v606 = vmul.f32 1.0, %v605
      %v607 = vrcp.pop %v449
      %v608 = vmul.f32 %v449, %v607
      %v609 = vsub.f32 1.0, %v608
      %v610 = vmul.f32 %v607, %v609
      %v611 = vadd.f32 %v607, %v610
      %vm612 = vweird.f32 %v449
      %vm613 = vweird.f32 %v607
      %vm614 = vmor %vm612, %vm613
      %v615 = vsel %vm614, %v607, %v611
      %v616 = vand.u32 2147483647, %v449
      %vm617 = vcmp.eq.f32.partialorder %v616, 8.507059e+37
      %v618 = vand.u32 %v449, 2147483648
      %v619 = vor.u32 1.1754944e-38, %v618
      %v620 = vsel %vm617, %v619, %v615
      %v621 = vmul.f32 1.0, %v620
      %v622 = vrcp.pop %v450
      %v623 = vmul.f32 %v450, %v622
      %v624 = vsub.f32 1.0, %v623
      %v625 = vmul.f32 %v622, %v624
      %v626 = vadd.f32 %v622, %v625
      %vm627 = vweird.f32 %v450
      %vm628 = vweird.f32 %v622
      %vm629 = vmor %vm627, %vm628
      %v630 = vsel %vm629, %v622, %v626
      %v631 = vand.u32 2147483647, %v450
      %vm632 = vcmp.eq.f32.partialorder %v631, 8.507059e+37
      %v633 = vand.u32 %v450, 2147483648
      %v634 = vor.u32 1.1754944e-38, %v633
      %v635 = vsel %vm632, %v634, %v630
      %v636 = vmul.f32 1.0, %v635
      %v637 = vrcp.pop %v451
      %v638 = vmul.f32 %v451, %v637
      %v639 = vsub.f32 1.0, %v638
      %v640 = vmul.f32 %v637, %v639
      %v641 = vadd.f32 %v637, %v640
      %vm642 = vweird.f32 %v451
      %vm643 = vweird.f32 %v637
      %vm644 = vmor %vm642, %vm643
      %v645 = vsel %vm644, %v637, %v641
      %v646 = vand.u32 2147483647, %v451
      %vm647 = vcmp.eq.f32.partialorder %v646, 8.507059e+37
      %v648 = vand.u32 %v451, 2147483648
      %v649 = vor.u32 1.1754944e-38, %v648
      %v650 = vsel %vm647, %v649, %v645
      %v651 = vmul.f32 1.0, %v650
      %v652 = vrcp.pop %v452
      %v653 = vmul.f32 %v452, %v652
      %v654 = vsub.f32 1.0, %v653
      %v655 = vmul.f32 %v652, %v654
      %v656 = vadd.f32 %v652, %v655
      %vm657 = vweird.f32 %v452
      %vm658 = vweird.f32 %v652
      %vm659 = vmor %vm657, %vm658
      %v660 = vsel %vm659, %v652, %v656
      %v661 = vand.u32 2147483647, %v452
      %vm662 = vcmp.eq.f32.partialorder %v661, 8.507059e+37
      %v663 = vand.u32 %v452, 2147483648
      %v664 = vor.u32 1.1754944e-38, %v663
      %v665 = vsel %vm662, %v664, %v660
      %v666 = vmul.f32 1.0, %v665
      %v667 = vrcp.pop %v453
      %v668 = vmul.f32 %v453, %v667
      %v669 = vsub.f32 1.0, %v668
      %v670 = vmul.f32 %v667, %v669
      %v671 = vadd.f32 %v667, %v670
      %vm672 = vweird.f32 %v453
      %vm673 = vweird.f32 %v667
      %vm674 = vmor %vm672, %vm673
      %v675 = vsel %vm674, %v667, %v671
      %v676 = vand.u32 2147483647, %v453
      %vm677 = vcmp.eq.f32.partialorder %v676, 8.507059e+37
      %v678 = vand.u32 %v453, 2147483648
      %v679 = vor.u32 1.1754944e-38, %v678
      %v680 = vsel %vm677, %v679, %v675
      %v681 = vmul.f32 1.0, %v680
      %v682 = vrcp.pop %v454
      %v683 = vmul.f32 %v454, %v682
      %v684 = vsub.f32 1.0, %v683
      %v685 = vmul.f32 %v682, %v684
      %v686 = vadd.f32 %v682, %v685
      %vm687 = vweird.f32 %v454
      %vm688 = vweird.f32 %v682
      %vm689 = vmor %vm687, %vm688
      %v690 = vsel %vm689, %v682, %v686
      %v691 = vand.u32 2147483647, %v454
      %vm692 = vcmp.eq.f32.partialorder %v691, 8.507059e+37
      %v693 = vand.u32 %v454, 2147483648
      %v694 = vor.u32 1.1754944e-38, %v693
      %v695 = vsel %vm692, %v694, %v690
      %v696 = vmul.f32 1.0, %v695
      %v697 = vrcp.pop %v455
      %v698 = vmul.f32 %v455, %v697
      %v699 = vsub.f32 1.0, %v698
      %v700 = vmul.f32 %v697, %v699
      %v701 = vadd.f32 %v697, %v700
      %vm702 = vweird.f32 %v455
      %vm703 = vweird.f32 %v697
      %vm704 = vmor %vm702, %vm703
      %v705 = vsel %vm704, %v697, %v701
      %v706 = vand.u32 2147483647, %v455
      %vm707 = vcmp.eq.f32.partialorder %v706, 8.507059e+37
      %v708 = vand.u32 %v455, 2147483648
      %v709 = vor.u32 1.1754944e-38, %v708
      %v710 = vsel %vm707, %v709, %v705
      %v711 = vmul.f32 1.0, %v710
      %v712 = vrcp.pop %v456
      %v713 = vmul.f32 %v456, %v712
      %v714 = vsub.f32 1.0, %v713
      %v715 = vmul.f32 %v712, %v714
      %v716 = vadd.f32 %v712, %v715
      %vm717 = vweird.f32 %v456
      %vm718 = vweird.f32 %v712
      %vm719 = vmor %vm717, %vm718
      %v720 = vsel %vm719, %v712, %v716
      %v721 = vand.u32 2147483647, %v456
      %vm722 = vcmp.eq.f32.partialorder %v721, 8.507059e+37
      %v723 = vand.u32 %v456, 2147483648
      %v724 = vor.u32 1.1754944e-38, %v723
      %v725 = vsel %vm722, %v724, %v720
      %v726 = vmul.f32 1.0, %v725
      %v727 = vrcp.pop %v457
      %v728 = vmul.f32 %v457, %v727
      %v729 = vsub.f32 1.0, %v728
      %v730 = vmul.f32 %v727, %v729
      %v731 = vadd.f32 %v727, %v730
      %vm732 = vweird.f32 %v457
      %vm733 = vweird.f32 %v727
      %vm734 = vmor %vm732, %vm733
      %v735 = vsel %vm734, %v727, %v731
      %v736 = vand.u32 2147483647, %v457
      %vm737 = vcmp.eq.f32.partialorder %v736, 8.507059e+37
      %v738 = vand.u32 %v457, 2147483648
      %v739 = vor.u32 1.1754944e-38, %v738
      %v740 = vsel %vm737, %v739, %v735
      %v741 = vmul.f32 1.0, %v740
      %v742 = vrcp.pop %v458
      %v743 = vmul.f32 %v458, %v742
      %v744 = vsub.f32 1.0, %v743
      %v745 = vmul.f32 %v742, %v744
      %v746 = vadd.f32 %v742, %v745
      %vm747 = vweird.f32 %v458
      %vm748 = vweird.f32 %v742
      %vm749 = vmor %vm747, %vm748
      %v750 = vsel %vm749, %v742, %v746
      %v751 = vand.u32 2147483647, %v458
      %vm752 = vcmp.eq.f32.partialorder %v751, 8.507059e+37
      %v753 = vand.u32 %v458, 2147483648
      %v754 = vor.u32 1.1754944e-38, %v753
      %v755 = vsel %vm752, %v754, %v750
      %v756 = vmul.f32 1.0, %v755
      %v757 = vrcp.pop %v459
      %v758 = vmul.f32 %v459, %v757
      %v759 = vsub.f32 1.0, %v758
      %v760 = vmul.f32 %v757, %v759
      %v761 = vadd.f32 %v757, %v760
      %vm762 = vweird.f32 %v459
      %vm763 = vweird.f32 %v757
      %vm764 = vmor %vm762, %vm763
      %v765 = vsel %vm764, %v757, %v761
      %v766 = vand.u32 2147483647, %v459
      %vm767 = vcmp.eq.f32.partialorder %v766, 8.507059e+37
      %v768 = vand.u32 %v459, 2147483648
      %v769 = vor.u32 1.1754944e-38, %v768
      %v770 = vsel %vm767, %v769, %v765
      %v771 = vmul.f32 1.0, %v770
      %v772 = vrcp.pop %v460
      %v773 = vmul.f32 %v460, %v772
      %v774 = vsub.f32 1.0, %v773
      %v775 = vmul.f32 %v772, %v774
      %v776 = vadd.f32 %v772, %v775
      %vm777 = vweird.f32 %v460
      %vm778 = vweird.f32 %v772
      %vm779 = vmor %vm777, %vm778
      %v780 = vsel %vm779, %v772, %v776
      %v781 = vand.u32 2147483647, %v460
      %vm782 = vcmp.eq.f32.partialorder %v781, 8.507059e+37
      %v783 = vand.u32 %v460, 2147483648
      %v784 = vor.u32 1.1754944e-38, %v783
      %v785 = vsel %vm782, %v784, %v780
      %v786 = vmul.f32 1.0, %v785
      %v787 = vrcp.pop %v461
      %v788 = vmul.f32 %v461, %v787
      %v789 = vsub.f32 1.0, %v788
      %v790 = vmul.f32 %v787, %v789
      %v791 = vadd.f32 %v787, %v790
      %vm792 = vweird.f32 %v461
      %vm793 = vweird.f32 %v787
      %vm794 = vmor %vm792, %vm793
      %v795 = vsel %vm794, %v787, %v791
      %v796 = vand.u32 2147483647, %v461
      %vm797 = vcmp.eq.f32.partialorder %v796, 8.507059e+37
      %v798 = vand.u32 %v461, 2147483648
      %v799 = vor.u32 1.1754944e-38, %v798
      %v800 = vsel %vm797, %v799, %v795
      %v801 = vmul.f32 1.0, %v800
      %v802 = vrcp.pop %v462
      %v803 = vmul.f32 %v462, %v802
      %v804 = vsub.f32 1.0, %v803
      %v805 = vmul.f32 %v802, %v804
      %v806 = vadd.f32 %v802, %v805
      %vm807 = vweird.f32 %v462
      %vm808 = vweird.f32 %v802
      %vm809 = vmor %vm807, %vm808
      %v810 = vsel %vm809, %v802, %v806
      %v811 = vand.u32 2147483647, %v462
      %vm812 = vcmp.eq.f32.partialorder %v811, 8.507059e+37
      %v813 = vand.u32 %v462, 2147483648
      %v814 = vor.u32 1.1754944e-38, %v813
      %v815 = vsel %vm812, %v814, %v810
      %v816 = vmul.f32 1.0, %v815
      %v817 = vrcp.pop %v463
      %v818 = vmul.f32 %v463, %v817
      %v819 = vsub.f32 1.0, %v818
      %v820 = vmul.f32 %v817, %v819
      %v821 = vadd.f32 %v817, %v820
      %vm822 = vweird.f32 %v463
      %vm823 = vweird.f32 %v817
      %vm824 = vmor %vm822, %vm823
      %v825 = vsel %vm824, %v817, %v821
      %v826 = vand.u32 2147483647, %v463
      %vm827 = vcmp.eq.f32.partialorder %v826, 8.507059e+37
      %v828 = vand.u32 %v463, 2147483648
      %v829 = vor.u32 1.1754944e-38, %v828
      %v830 = vsel %vm827, %v829, %v825
      %v831 = vmul.f32 1.0, %v830
      %v832 = vrcp.pop %v464
      %v833 = vmul.f32 %v464, %v832
      %v834 = vsub.f32 1.0, %v833
      %v835 = vmul.f32 %v832, %v834
      %v836 = vadd.f32 %v832, %v835
      %vm837 = vweird.f32 %v464
      %vm838 = vweird.f32 %v832
      %vm839 = vmor %vm837, %vm838
      %v840 = vsel %vm839, %v832, %v836
      %v841 = vand.u32 2147483647, %v464
      %vm842 = vcmp.eq.f32.partialorder %v841, 8.507059e+37
      %v843 = vand.u32 %v464, 2147483648
      %v844 = vor.u32 1.1754944e-38, %v843
      %v845 = vsel %vm842, %v844, %v840
      %v846 = vmul.f32 1.0, %v845
      %v847 = vrcp.pop %v465
      %v848 = vmul.f32 %v465, %v847
      %v849 = vsub.f32 1.0, %v848
      %v850 = vmul.f32 %v847, %v849
      %v851 = vadd.f32 %v847, %v850
      %vm852 = vweird.f32 %v465
      %vm853 = vweird.f32 %v847
      %vm854 = vmor %vm852, %vm853
      %v855 = vsel %vm854, %v847, %v851
      %v856 = vand.u32 2147483647, %v465
      %vm857 = vcmp.eq.f32.partialorder %v856, 8.507059e+37
      %v858 = vand.u32 %v465, 2147483648
      %v859 = vor.u32 1.1754944e-38, %v858
      %v860 = vsel %vm857, %v859, %v855
      %v861 = vmul.f32 1.0, %v860
      %v862 = vrcp.pop %v466
      %v863 = vmul.f32 %v466, %v862
      %v864 = vsub.f32 1.0, %v863
      %v865 = vmul.f32 %v862, %v864
      %v866 = vadd.f32 %v862, %v865
      %vm867 = vweird.f32 %v466
      %vm868 = vweird.f32 %v862
      %vm869 = vmor %vm867, %vm868
      %v870 = vsel %vm869, %v862, %v866
      %v871 = vand.u32 2147483647, %v466
      %vm872 = vcmp.eq.f32.partialorder %v871, 8.507059e+37
      %v873 = vand.u32 %v466, 2147483648
      %v874 = vor.u32 1.1754944e-38, %v873
      %v875 = vsel %vm872, %v874, %v870
      %v876 = vmul.f32 1.0, %v875
      %v877 = vrcp.pop %v467
      %v878 = vmul.f32 %v467, %v877
      %v879 = vsub.f32 1.0, %v878
      %v880 = vmul.f32 %v877, %v879
      %v881 = vadd.f32 %v877, %v880
      %vm882 = vweird.f32 %v467
      %vm883 = vweird.f32 %v877
      %vm884 = vmor %vm882, %vm883
      %v885 = vsel %vm884, %v877, %v881
      %v886 = vand.u32 2147483647, %v467
      %vm887 = vcmp.eq.f32.partialorder %v886, 8.507059e+37
      %v888 = vand.u32 %v467, 2147483648
      %v889 = vor.u32 1.1754944e-38, %v888
      %v890 = vsel %vm887, %v889, %v885
      %v891 = vmul.f32 1.0, %v890
      %v892 = vrcp.pop %v468
      %v893 = vmul.f32 %v468, %v892
      %v894 = vsub.f32 1.0, %v893
      %v895 = vmul.f32 %v892, %v894
      %v896 = vadd.f32 %v892, %v895
      %vm897 = vweird.f32 %v468
      %vm898 = vweird.f32 %v892
      %vm899 = vmor %vm897, %vm898
      %v900 = vsel %vm899, %v892, %v896
      %v901 = vand.u32 2147483647, %v468
      %vm902 = vcmp.eq.f32.partialorder %v901, 8.507059e+37
      %v903 = vand.u32 %v468, 2147483648
      %v904 = vor.u32 1.1754944e-38, %v903
      %v905 = vsel %vm902, %v904, %v900
      %v906 = vmul.f32 1.0, %v905
      %v907 = vrcp.pop %v469
      %v908 = vmul.f32 %v469, %v907
      %v909 = vsub.f32 1.0, %v908
      %v910 = vmul.f32 %v907, %v909
      %v911 = vadd.f32 %v907, %v910
      %vm912 = vweird.f32 %v469
      %vm913 = vweird.f32 %v907
      %vm914 = vmor %vm912, %vm913
      %v915 = vsel %vm914, %v907, %v911
      %v916 = vand.u32 2147483647, %v469
      %vm917 = vcmp.eq.f32.partialorder %v916, 8.507059e+37
      %v918 = vand.u32 %v469, 2147483648
      %v919 = vor.u32 1.1754944e-38, %v918
      %v920 = vsel %vm917, %v919, %v915
      %v921 = vmul.f32 1.0, %v920
      %v922 = vrcp.pop %v470
      %v923 = vmul.f32 %v470, %v922
      %v924 = vsub.f32 1.0, %v923
      %v925 = vmul.f32 %v922, %v924
      %v926 = vadd.f32 %v922, %v925
      %vm927 = vweird.f32 %v470
      %vm928 = vweird.f32 %v922
      %vm929 = vmor %vm927, %vm928
      %v930 = vsel %vm929, %v922, %v926
      %v931 = vand.u32 2147483647, %v470
      %vm932 = vcmp.eq.f32.partialorder %v931, 8.507059e+37
      %v933 = vand.u32 %v470, 2147483648
      %v934 = vor.u32 1.1754944e-38, %v933
      %v935 = vsel %vm932, %v934, %v930
      %v936 = vmul.f32 1.0, %v935
      %v937 = vrcp.pop %v471
      %v938 = vmul.f32 %v471, %v937
      %v939 = vsub.f32 1.0, %v938
      %v940 = vmul.f32 %v937, %v939
      %v941 = vadd.f32 %v937, %v940
      %vm942 = vweird.f32 %v471
      %vm943 = vweird.f32 %v937
      %vm944 = vmor %vm942, %vm943
      %v945 = vsel %vm944, %v937, %v941
      %v946 = vand.u32 2147483647, %v471
      %vm947 = vcmp.eq.f32.partialorder %v946, 8.507059e+37
      %v948 = vand.u32 %v471, 2147483648
      %v949 = vor.u32 1.1754944e-38, %v948
      %v950 = vsel %vm947, %v949, %v945
      %v951 = vmul.f32 1.0, %v950
      %v952 = vmul.f32 %v312, %v486
      %v953 = vmul.f32 %v313, %v501
      %v954 = vmul.f32 %v314, %v516
      %v955 = vmul.f32 %v315, %v531
      %v956 = vmul.f32 %v316, %v546
      %v957 = vmul.f32 %v317, %v561
      %v958 = vmul.f32 %v318, %v576
      %v959 = vmul.f32 %v319, %v591
      %v960 = vmul.f32 %v320, %v606
      %v961 = vmul.f32 %v321, %v621
      %v962 = vmul.f32 %v322, %v636
      %v963 = vmul.f32 %v323, %v651
      %v964 = vmul.f32 %v324, %v666
      %v965 = vmul.f32 %v325, %v681
      %v966 = vmul.f32 %v326, %v696
      %v967 = vmul.f32 %v327, %v711
      %v968 = vmul.f32 %v328, %v726
      %v969 = vmul.f32 %v329, %v741
      %v970 = vmul.f32 %v330, %v756
      %v971 = vmul.f32 %v331, %v771
      %v972 = vmul.f32 %v332, %v786
      %v973 = vmul.f32 %v333, %v801
      %v974 = vmul.f32 %v334, %v816
      %v975 = vmul.f32 %v335, %v831
      %v976 = vmul.f32 %v336, %v846
      %v977 = vmul.f32 %v337, %v861
      %v978 = vmul.f32 %v338, %v876
      %v979 = vmul.f32 %v339, %v891
      %v980 = vmul.f32 %v340, %v906
      %v981 = vmul.f32 %v341, %v921
      %v982 = vmul.f32 %v342, %v936
      %v983 = vmul.f32 %v343, %v951
      %984 = vxpose.xlu0.b32.start [1/16] %v952, 128
      %985 = vxpose.xlu0.b32.cont [2/16] %v953, 128
      %986 = vxpose.xlu0.b32.cont [3/16] %v954, 128
      %987 = vxpose.xlu0.b32.cont [4/16] %v955, 128
      %988 = vxpose.xlu0.b32.cont [5/16] %v956, 128
      %989 = vxpose.xlu0.b32.cont [6/16] %v957, 128
      %990 = vxpose.xlu0.b32.cont [7/16] %v958, 128
      %991 = vxpose.xlu0.b32.cont [8/16] %v959, 128
      %992 = vxpose.xlu0.b32.cont [9/16] %v960, 128
      %993 = vxpose.xlu0.b32.cont [10/16] %v961, 128
      %994 = vxpose.xlu0.b32.cont [11/16] %v962, 128
      %995 = vxpose.xlu0.b32.cont [12/16] %v963, 128
      %996 = vxpose.xlu0.b32.cont [13/16] %v964, 128
      %997 = vxpose.xlu0.b32.cont [14/16] %v965, 128
      %998 = vxpose.xlu0.b32.cont [15/16] %v966, 128
      %999 = vxpose.xlu0.b32.end [16/16] %v967, 128
      %v1000 = vpop.trf.xlu0
      %v1001 = vpop.trf.xlu0
      %v1002 = vpop.trf.xlu0
      %v1003 = vpop.trf.xlu0
      %v1004 = vpop.trf.xlu0
      %v1005 = vpop.trf.xlu0
      %v1006 = vpop.trf.xlu0
      %v1007 = vpop.trf.xlu0
      %v1008 = vpop.trf.xlu0
      %v1009 = vpop.trf.xlu0
      %v1010 = vpop.trf.xlu0
      %v1011 = vpop.trf.xlu0
      %v1012 = vpop.trf.xlu0
      %v1013 = vpop.trf.xlu0
      %v1014 = vpop.trf.xlu0
      %v1015 = vpop.trf.xlu0
      %1016 = vxpose.xlu0.b32.start [1/16] %v968, 128
      %1017 = vxpose.xlu0.b32.cont [2/16] %v969, 128
      %1018 = vxpose.xlu0.b32.cont [3/16] %v970, 128
      %1019 = vxpose.xlu0.b32.cont [4/16] %v971, 128
      %1020 = vxpose.xlu0.b32.cont [5/16] %v972, 128
      %1021 = vxpose.xlu0.b32.cont [6/16] %v973, 128
      %1022 = vxpose.xlu0.b32.cont [7/16] %v974, 128
      %1023 = vxpose.xlu0.b32.cont [8/16] %v975, 128
      %1024 = vxpose.xlu0.b32.cont [9/16] %v976, 128
      %1025 = vxpose.xlu0.b32.cont [10/16] %v977, 128
      %1026 = vxpose.xlu0.b32.cont [11/16] %v978, 128
      %1027 = vxpose.xlu0.b32.cont [12/16] %v979, 128
      %1028 = vxpose.xlu0.b32.cont [13/16] %v980, 128
      %1029 = vxpose.xlu0.b32.cont [14/16] %v981, 128
      %1030 = vxpose.xlu0.b32.cont [15/16] %v982, 128
      %1031 = vxpose.xlu0.b32.end [16/16] %v983, 128
      %v1032 = vpop.trf.xlu0
      %v1033 = vpop.trf.xlu0
      %v1034 = vpop.trf.xlu0
      %v1035 = vpop.trf.xlu0
      %v1036 = vpop.trf.xlu0
      %v1037 = vpop.trf.xlu0
      %v1038 = vpop.trf.xlu0
      %v1039 = vpop.trf.xlu0
      %v1040 = vpop.trf.xlu0
      %v1041 = vpop.trf.xlu0
      %v1042 = vpop.trf.xlu0
      %v1043 = vpop.trf.xlu0
      %v1044 = vpop.trf.xlu0
      %v1045 = vpop.trf.xlu0
      %v1046 = vpop.trf.xlu0
      %v1047 = vpop.trf.xlu0
      %1048 = vst [vmem:[%s206] sm:$0xff] %v1000
      %1049 = vst [vmem:[%s206 + $0x8] sm:$0xff] %v1032
      %s1050 = smul.u32 2, %s19
      %p1051 = scmp.lt.s32.totalorder %s18, 1
      %s1052 = scalar_select %p1051, %s18, 1
      %p1053 = scmp.lt.s32.totalorder %s1050, 1
      %s1054 = scalar_select %p1053, %s1050, 1
      %s1055 = smul.addr %s1052, 2
      %s1056 = sadd.s32 %s1054, %s1055
      %s1057 = smul.addr %s1056, 8
      %s1058 = scalar_lea.vmem %s3, %s1057
      // Predicated region
      $region33: #{base_conv_forward.3} parent=31 // pred_check
        %p1059 = pneg %p116
      $region34: #{base_conv_forward.3} parent=31 // pred_check_branch
        %1061 = sbr.rel (%p1059) target = $region36
      $region35: #{base_conv_forward.3} parent=31 // pred_region
        %s1062 = smul.u32 2, %s19
      $region36: #{base_conv_forward.3} parent=31 // pred_fallthru
        _
    $region32: #{base_conv_forward.3} parent=5 // pred_fallthru
      _
    %p1063 = scmp.le.s32.totalorder 2, %s9
    // Predicated region
    $region37: #{base_conv_forward.3} parent=5 // pred_check
      %p1064 = pneg %p1063
    $region38: #{base_conv_forward.3} parent=5 // pred_check_branch
      %1066 = sbr.rel (%p1064) target = $region40
    $region39: #{base_conv_forward.3} parent=5 // pred_region
      %s1067 = ssub.s32 %s9, 2
      // Predicated region
      $region41: #{base_conv_forward.3} parent=39 // pred_check
        %p1068 = pneg %p122
      $region42: #{base_conv_forward.3} parent=39 // pred_check_branch
        %1070 = sbr.rel (%p1068) target = $region44
      $region43: #{base_conv_forward.3} parent=39 // pred_region
        %s1071 = smul.u32 2, %s21
        %p1072 = scmp.lt.s32.totalorder %s20, 1
        %s1073 = scalar_select %p1072, %s20, 1
        %p1074 = scmp.lt.s32.totalorder %s1071, 1
        %s1075 = scalar_select %p1074, %s1071, 1
        %s1076 = smul.addr %s1073, 2
        %s1077 = sadd.s32 %s1075, %s1076
        %s1078 = smul.addr %s1077, 8
        %s1079 = scalar_lea.vmem %s3, %s1078
      $region44: #{base_conv_forward.3} parent=39 // pred_fallthru
        _
    $region40: #{base_conv_forward.3} parent=5 // pred_fallthru
      _
  $region6: #{base_conv_forward.3} parent=0 // loop_footer
    %s13 = sadd.s32 1, %s9
  $region7: #{base_conv_forward.3} parent=0 // loop_footer_branch
    %8 = sbr.rel target = $region3
  $region8: #{base_conv_forward.3} parent=0 // loop_exit
    _

// kernel: base_conv_forward.2
$region0: #{base_conv_forward.2}
  #allocation0 [shape = 'u32[]', space=smem, size = 0x4, offset = 0x4, fixed_abs, tag = 'smem constant byte address 0x4 - core index']
  #allocation1 [shape = 'u32[72,128]{1,0:T(1,128)}', space=vmem, size = 0x9000, scoped, tag = 'internal scratch']
  %s0 = inlined_call_operand.vmem [shape: bf16[2,1,18,18,4], index: 0, kind: input, shape index: {}]
  %s1 = inlined_call_operand.vmem [shape: bf16[9,4,128], index: 1, kind: input, shape index: {}]
  %s2 = inlined_call_operand.vmem [shape: bf16[2,1,256,128], index: 2, kind: output, shape index: {0}]
  %s3 = inlined_call_operand.vmem [shape: f32[2,1,8,128], index: 3, kind: output, shape index: {1}]
  %4 = xla_tuple %s2, %s3
  %s5 = sld [smem:[#allocation0]]
  $region49: #{base_conv_forward.2} parent=0
    _
  %s7 = ssub.s32 1, %s5
  %s8 = scalar_select 0, %s7, %s5
  loop: start=0, step=1, limit=4
  $region2: #{base_conv_forward.2} parent=0 // loop_pre_header
    _
  $region3: #{base_conv_forward.2} parent=0 // loop_header
    %s10 = sphi 0, %s14
    %p11 = scmp.ge.s32.totalorder %s10, 4
    %s17 = sphi 0, %s29
    %s18 = sphi 0, %s25
    %s19 = sphi 0, %s17
    %s20 = sphi 0, %s18
    %s21 = sphi 0, %s19
    %s22 = sphi 0, %s20
    %s34 = sphi 0, %s36
    %s37 = sphi 0, %s34
    %s38 = sphi 0, %s37
    %s54 = sphi 0, %s38
    %s58 = sphi 0, %s58
    %s60 = sphi 0, %s58
    %s61 = sphi 0, %s60
    %s75 = sphi 0, %s61
    %s83 = sphi 0, %s85
    %s86 = sphi 0, %s83
    %s87 = sphi 0, %s86
    %s103 = sphi 0, %s87
    %s111 = sphi 0, %s113
    %s114 = sphi 0, %s111
    %s115 = sphi 0, %s114
    %s131 = sphi 0, %s115
  $region4: #{base_conv_forward.2} parent=0 // loop_header_branch
    %13 = sbr.rel (%p11) target = $region8
  $region5: #{base_conv_forward.2} parent=0 // loop_body
    %s15 = ssub.s32 %s10, 1
    %s16 = ssub.s32 %s10, 2
    %s23 = sadd.s32 1, %s18
    %p24 = scmp.ge.s32.totalorder %s23, 1
    %s25 = scalar_select %p24, 0, %s23
    %s26 = sadd.s32 1, %s17
    %s27 = scalar_select %p24, %s26, %s17
    %p28 = scmp.ge.s32.totalorder %s27, 2
    %s29 = scalar_select %p28, 0, %s27
    %s30 = ssub.s32 %s17, %s29
    %s31 = ssub.s32 %s18, %s25
    %s32 = sor.u32 %s30, %s31
    %p33 = scmp.eq.s32.totalorder %s32, 0
    %s35 = sadd.s32 %s34, 1
    %s36 = scalar_select %p33, %s34, %s35
    %p39 = pneg %p33
    %p40 = scmp.eq.s32.totalorder %s10, 1
    %p41 = por %p39, %p40
    %p42 = scmp.ne.s32.totalorder %s34, %s37
    %p43 = scmp.eq.s32.totalorder %s10, 0
    %p44 = por %p42, %p43
    %p45 = scmp.ne.s32.totalorder %s34, %s37
    %p46 = scmp.eq.s32.totalorder %s15, 1
    %p47 = por %p45, %p46
    %p48 = scmp.ne.s32.totalorder %s37, %s38
    %p49 = scmp.eq.s32.totalorder %s15, 0
    %p50 = por %p48, %p49
    %p51 = scmp.ne.s32.totalorder %s37, %s38
    %p52 = scmp.eq.s32.totalorder %s16, 1
    %p53 = por %p51, %p52
    %p55 = scmp.ne.s32.totalorder %s38, %s54
    %p56 = scmp.eq.s32.totalorder %s16, 0
    %p57 = por %p55, %p56
    %s59 = sadd.s32 %s58, 1
    %p62 = scmp.eq.s32.totalorder %s10, 1
    %p63 = scmp.ne.s32.totalorder %s58, %s60
    %p64 = scmp.eq.s32.totalorder %s10, 0
    %p65 = por %p63, %p64
    %p66 = scmp.ne.s32.totalorder %s58, %s60
    %p67 = scmp.eq.s32.totalorder %s15, 1
    %p68 = por %p66, %p67
    %p69 = scmp.ne.s32.totalorder %s60, %s61
    %p70 = scmp.eq.s32.totalorder %s15, 0
    %p71 = por %p69, %p70
    %p72 = scmp.ne.s32.totalorder %s60, %s61
    %p73 = scmp.eq.s32.totalorder %s16, 1
    %p74 = por %p72, %p73
    %p76 = scmp.ne.s32.totalorder %s61, %s75
    %p77 = scmp.eq.s32.totalorder %s16, 0
    %p78 = por %p76, %p77
    %s79 = ssub.s32 %s17, %s29
    %s80 = ssub.s32 %s18, %s25
    %s81 = sor.u32 %s79, %s80
    %p82 = scmp.eq.s32.totalorder %s81, 0
    %s84 = sadd.s32 %s83, 1
    %s85 = scalar_select %p82, %s83, %s84
    %p88 = pneg %p82
    %p89 = scmp.eq.s32.totalorder %s10, 1
    %p90 = por %p88, %p89
    %p91 = scmp.ne.s32.totalorder %s83, %s86
    %p92 = scmp.eq.s32.totalorder %s10, 0
    %p93 = por %p91, %p92
    %p94 = scmp.ne.s32.totalorder %s83, %s86
    %p95 = scmp.eq.s32.totalorder %s15, 1
    %p96 = por %p94, %p95
    %p97 = scmp.ne.s32.totalorder %s86, %s87
    %p98 = scmp.eq.s32.totalorder %s15, 0
    %p99 = por %p97, %p98
    %p100 = scmp.ne.s32.totalorder %s86, %s87
    %p101 = scmp.eq.s32.totalorder %s16, 1
    %p102 = por %p100, %p101
    %p104 = scmp.ne.s32.totalorder %s87, %s103
    %p105 = scmp.eq.s32.totalorder %s16, 0
    %p106 = por %p104, %p105
    %s107 = ssub.s32 %s17, %s29
    %s108 = ssub.s32 %s18, %s25
    %s109 = sor.u32 %s107, %s108
    %p110 = scmp.eq.s32.totalorder %s109, 0
    %s112 = sadd.s32 %s111, 1
    %s113 = scalar_select %p110, %s111, %s112
    %p116 = pneg %p110
    %p117 = scmp.eq.s32.totalorder %s10, 1
    %p118 = por %p116, %p117
    %p119 = scmp.ne.s32.totalorder %s111, %s114
    %p120 = scmp.eq.s32.totalorder %s10, 0
    %p121 = por %p119, %p120
    %p122 = scmp.ne.s32.totalorder %s111, %s114
    %p123 = scmp.eq.s32.totalorder %s15, 1
    %p124 = por %p122, %p123
    %p125 = scmp.ne.s32.totalorder %s114, %s115
    %p126 = scmp.eq.s32.totalorder %s15, 0
    %p127 = por %p125, %p126
    %p128 = scmp.ne.s32.totalorder %s114, %s115
    %p129 = scmp.eq.s32.totalorder %s16, 1
    %p130 = por %p128, %p129
    %p132 = scmp.ne.s32.totalorder %s115, %s131
    %p133 = scmp.eq.s32.totalorder %s16, 0
    %p134 = por %p132, %p133
    %p135 = scmp.le.s32.totalorder 1, %s10
    %p136 = scmp.lt.s32.totalorder %s10, 3
    %p137 = pnand %p135, %p136
    %p138 = pneg %p137
    // Predicated region
    $region9: #{base_conv_forward.2} parent=5 // pred_check
      _
    $region10: #{base_conv_forward.2} parent=5 // pred_check_branch
      %140 = sbr.rel (%p137) target = $region12
    $region11: #{base_conv_forward.2} parent=5 // pred_region
      %s141 = ssub.s32 %s10, 1
      // Predicated region
      $region13: #{base_conv_forward.2} parent=11 // pred_check
        %p142 = pneg %p71
      $region14: #{base_conv_forward.2} parent=11 // pred_check_branch
        %144 = sbr.rel (%p142) target = $region16
      $region15: #{base_conv_forward.2} parent=11 // pred_region
        _
      $region16: #{base_conv_forward.2} parent=11 // pred_fallthru
        _
    $region12: #{base_conv_forward.2} parent=5 // pred_fallthru
      _
    %p145 = scmp.lt.s32.totalorder %s10, 2
    // Predicated region
    $region17: #{base_conv_forward.2} parent=5 // pred_check
      %p146 = pneg %p145
    $region18: #{base_conv_forward.2} parent=5 // pred_check_branch
      %148 = sbr.rel (%p146) target = $region20
    $region19: #{base_conv_forward.2} parent=5 // pred_region
      // Predicated region
      $region21: #{base_conv_forward.2} parent=19 // pred_check
        %p149 = pneg %p44
      $region22: #{base_conv_forward.2} parent=19 // pred_check_branch
        %151 = sbr.rel (%p149) target = $region24
      $region23: #{base_conv_forward.2} parent=19 // pred_region
        %p152 = scmp.lt.s32.totalorder %s17, 1
        %s153 = scalar_select %p152, %s17, 1
        %p154 = scmp.lt.s32.totalorder %s18, 0
        %s155 = scalar_select %p154, %s18, 0
        %s156 = smul.addr %s155, 54
        %s157 = smul.addr %s153, 54
        %s158 = sadd.s32 %s156, %s157
        %s159 = smul.addr %s158, 4
        %s160 = scalar_lea.vmem %s0, %s159
      $region24: #{base_conv_forward.2} parent=19 // pred_fallthru
        _
    $region20: #{base_conv_forward.2} parent=5 // pred_fallthru
      _
    %p161 = scmp.le.s32.totalorder 1, %s10
    %p162 = scmp.lt.s32.totalorder %s10, 3
    %p163 = pnand %p161, %p162
    %p164 = pneg %p163
    // Predicated region
    $region25: #{base_conv_forward.2} parent=5 // pred_check
      _
    $region26: #{base_conv_forward.2} parent=5 // pred_check_branch
      %166 = sbr.rel (%p163) target = $region28
    $region27: #{base_conv_forward.2} parent=5 // pred_region
      %s167 = ssub.s32 %s10, 1
      %p168 = scmp.lt.s32.totalorder %s19, 1
      %s169 = scalar_select %p168, %s19, 1
      %p170 = scmp.lt.s32.totalorder %s20, 0
      %s171 = scalar_select %p170, %s20, 0
      %s172 = smul.addr %s171, 54
      %s173 = smul.addr %s169, 54
      %s174 = sadd.s32 %s172, %s173
      %s175 = smul.addr %s174, 4
      %s176 = scalar_lea.vmem %s0, %s175
      %p177 = pneg %p50
      %p178 = pneg %p47
      %p179 = pneg %p71
      %p180 = pneg %p68
      %p181 = pneg %p99
      %p182 = pneg %p96
      %p183 = scmp.lt.s32.totalorder %s19, 1
      %s184 = scalar_select %p183, %s19, 1
      %p185 = scmp.lt.s32.totalorder %s20, 0
      %s186 = scalar_select %p185, %s20, 0
      %s187 = smul.addr %s186, 32
      %s188 = smul.addr %s184, 32
      %s189 = sadd.s32 %s187, %s188
      %s190 = smul.addr %s189, 4
      %s191 = scalar_lea.vmem %s2, %s190
      %p192 = pneg %p127
      %p193 = pneg %p124
      %p194 = scmp.lt.s32.totalorder %s19, 1
      %s195 = scalar_select %p194, %s19, 1
      %p196 = scmp.lt.s32.totalorder %s20, 0
      %s197 = scalar_select %p196, %s20, 0
      %s198 = sadd.s32 %s197, %s195
      %s199 = smul.addr %s198, 8
      %s200 = scalar_lea.vmem %s3, %s199
      %p201 = scmp.lt.s32.totalorder %s19, 1
      %s202 = scalar_select %p201, %s19, 1
      %p203 = scmp.lt.s32.totalorder %s20, 0
      %s204 = scalar_select %p203, %s20, 0
      %s205 = smul.addr %s204, 54
      %s206 = smul.addr %s202, 54
      %s207 = sadd.s32 %s205, %s206
      %s208 = smul.addr %s207, 4
      %s209 = scalar_lea.vmem %s0, %s208
      %p210 = scmp.lt.s32.totalorder %s19, 1
      %s211 = scalar_select %p210, %s19, 1
      %p212 = scmp.lt.s32.totalorder %s20, 0
      %s213 = scalar_select %p212, %s20, 0
      %s214 = smul.addr %s213, 32
      %s215 = smul.addr %s211, 32
      %s216 = sadd.s32 %s214, %s215
      %s217 = smul.addr %s216, 4
      %s218 = scalar_lea.vmem %s2, %s217
      %p219 = scmp.lt.s32.totalorder %s19, 1
      %s220 = scalar_select %p219, %s19, 1
      %p221 = scmp.lt.s32.totalorder %s20, 0
      %s222 = scalar_select %p221, %s20, 0
      %s223 = sadd.s32 %s222, %s220
      %s224 = smul.addr %s223, 8
      %s225 = scalar_lea.vmem %s3, %s224
      %v227 = vld [vmem:[%s209] sm:$0xf]
      %v228 = vld [vmem:[%s209 + $0x4] sm:$0xf]
      %v229 = vld [vmem:[%s209 + $0x8] sm:$0x1]
      %v230 = vld [vmem:[%s209 + $0xc] sm:$0xf]
      %v231 = vld [vmem:[%s209 + $0x10] sm:$0xf]
      %v232 = vld [vmem:[%s209 + $0x14] sm:$0x1]
      %v233 = vld [vmem:[%s209 + $0x18] sm:$0xf]
      %v234 = vld [vmem:[%s209 + $0x1c] sm:$0xf]
      %v235 = vld [vmem:[%s209 + $0x20] sm:$0x1]
      %v236 = vld [vmem:[%s209 + $0x24] sm:$0xf]
      %v237 = vld [vmem:[%s209 + $0x28] sm:$0xf]
      %v238 = vld [vmem:[%s209 + $0x2c] sm:$0x1]
      %v239 = vld [vmem:[%s209 + $0x30] sm:$0xf]
      %v240 = vld [vmem:[%s209 + $0x34] sm:$0xf]
      %v241 = vld [vmem:[%s209 + $0x38] sm:$0x1]
      %v242 = vld [vmem:[%s209 + $0x3c] sm:$0xf]
      %v243 = vld [vmem:[%s209 + $0x40] sm:$0xf]
      %v244 = vld [vmem:[%s209 + $0x44] sm:$0x1]
      %v245 = vld [vmem:[%s209 + $0x48] sm:$0xf]
      %v246 = vld [vmem:[%s209 + $0x4c] sm:$0xf]
      %v247 = vld [vmem:[%s209 + $0x50] sm:$0x1]
      %v248 = vld [vmem:[%s209 + $0x54] sm:$0xf]
      %v249 = vld [vmem:[%s209 + $0x58] sm:$0xf]
      %v250 = vld [vmem:[%s209 + $0x5c] sm:$0x1]
      %v251 = vld [vmem:[%s209 + $0x60] sm:$0xf]
      %v252 = vld [vmem:[%s209 + $0x64] sm:$0xf]
      %v253 = vld [vmem:[%s209 + $0x68] sm:$0x1]
      %v254 = vld [vmem:[%s209 + $0x6c] sm:$0xf]
      %v255 = vld [vmem:[%s209 + $0x70] sm:$0xf]
      %v256 = vld [vmem:[%s209 + $0x74] sm:$0x1]
      %v257 = vld [vmem:[%s209 + $0x78] sm:$0xf]
      %v258 = vld [vmem:[%s209 + $0x7c] sm:$0xf]
      %v259 = vld [vmem:[%s209 + $0x80] sm:$0x1]
      %v260 = vld [vmem:[%s209 + $0x84] sm:$0xf]
      %v261 = vld [vmem:[%s209 + $0x88] sm:$0xf]
      %v262 = vld [vmem:[%s209 + $0x8c] sm:$0x1]
      %v263 = vld [vmem:[%s209 + $0x90] sm:$0xf]
      %v264 = vld [vmem:[%s209 + $0x94] sm:$0xf]
      %v265 = vld [vmem:[%s209 + $0x98] sm:$0x1]
      %v266 = vld [vmem:[%s209 + $0x9c] sm:$0xf]
      %v267 = vld [vmem:[%s209 + $0xa0] sm:$0xf]
      %v268 = vld [vmem:[%s209 + $0xa4] sm:$0x1]
      %v269 = vld [vmem:[%s209 + $0xa8] sm:$0xf]
      %v270 = vld [vmem:[%s209 + $0xac] sm:$0xf]
      %v271 = vld [vmem:[%s209 + $0xb0] sm:$0x1]
      %v272 = vld [vmem:[%s209 + $0xb4] sm:$0xf]
      %v273 = vld [vmem:[%s209 + $0xb8] sm:$0xf]
      %v274 = vld [vmem:[%s209 + $0xbc] sm:$0x1]
      %v275 = vld [vmem:[%s209 + $0xc0] sm:$0xf]
      %v276 = vld [vmem:[%s209 + $0xc4] sm:$0xf]
      %v277 = vld [vmem:[%s209 + $0xc8] sm:$0x1]
      %v278 = vld [vmem:[%s209 + $0xcc] sm:$0xf]
      %v279 = vld [vmem:[%s209 + $0xd0] sm:$0xf]
      %v280 = vld [vmem:[%s209 + $0xd4] sm:$0x1]
      %v281 = vld [vmem:[%s1] sm:$0x3]
      %vm282 = vsmask.f32 3328
      %vm283 = vsmask.f32 7440
      %vm284 = vmor %vm282, %vm283
      %v286 = vshrl.u32 %v227, 16
      %v288 = vrot.slane %v286, 4
      %v289 = vshll.u32 %v227, 16
      %v291 = vrot.slane %v289, 5
      %v292 = vor.u32 %v288, %v291
      %v293 = vrot.slane %v292, 4
      %v295 = vshll.u32 %v228, 16
      %v297 = vrot.slane %v295, 5
      %v298 = vsel %vm284, %v293, %v297
      %v299 = vshrl.u32 %v228, 16
      %v301 = vrot.slane %v299, 4
      %v302 = vor.u32 %v301, %v297
      %v303 = vrot.slane %v302, 4
      %v305 = vshll.u32 %v229, 16
      %v307 = vrot.slane %v305, 5
      %v308 = vsel %vm284, %v303, %v307
      %v310 = vshrl.u32 %v230, 16
      %v312 = vrot.slane %v310, 4
      %v313 = vshll.u32 %v230, 16
      %v315 = vrot.slane %v313, 5
      %v316 = vor.u32 %v312, %v315
      %v317 = vrot.slane %v316, 4
      %v319 = vshll.u32 %v231, 16
      %v321 = vrot.slane %v319, 5
      %v322 = vsel %vm284, %v317, %v321
      %v323 = vshrl.u32 %v231, 16
      %v325 = vrot.slane %v323, 4
      %v326 = vor.u32 %v325, %v321
      %v327 = vrot.slane %v326, 4
      %v329 = vshll.u32 %v232, 16
      %v331 = vrot.slane %v329, 5
      %v332 = vsel %vm284, %v327, %v331
      %v334 = vshrl.u32 %v233, 16
      %v336 = vrot.slane %v334, 4
      %v337 = vshll.u32 %v233, 16
      %v339 = vrot.slane %v337, 5
      %v340 = vor.u32 %v336, %v339
      %v341 = vrot.slane %v340, 4
      %v343 = vshll.u32 %v234, 16
      %v345 = vrot.slane %v343, 5
      %v346 = vsel %vm284, %v341, %v345
      %v347 = vshrl.u32 %v234, 16
      %v349 = vrot.slane %v347, 4
      %v350 = vor.u32 %v349, %v345
      %v351 = vrot.slane %v350, 4
      %v353 = vshll.u32 %v235, 16
      %v355 = vrot.slane %v353, 5
      %v356 = vsel %vm284, %v351, %v355
      %v358 = vshrl.u32 %v236, 16
      %v360 = vrot.slane %v358, 4
      %v361 = vshll.u32 %v236, 16
      %v363 = vrot.slane %v361, 5
      %v364 = vor.u32 %v360, %v363
      %v365 = vrot.slane %v364, 4
      %v367 = vshll.u32 %v237, 16
      %v369 = vrot.slane %v367, 5
      %v370 = vsel %vm284, %v365, %v369
      %v371 = vshrl.u32 %v237, 16
      %v373 = vrot.slane %v371, 4
      %v374 = vor.u32 %v373, %v369
      %v375 = vrot.slane %v374, 4
      %v377 = vshll.u32 %v238, 16
      %v379 = vrot.slane %v377, 5
      %v380 = vsel %vm284, %v375, %v379
      %v382 = vshrl.u32 %v239, 16
      %v384 = vrot.slane %v382, 4
      %v385 = vshll.u32 %v239, 16
      %v387 = vrot.slane %v385, 5
      %v388 = vor.u32 %v384, %v387
      %v389 = vrot.slane %v388, 4
      %v391 = vshll.u32 %v240, 16
      %v393 = vrot.slane %v391, 5
      %v394 = vsel %vm284, %v389, %v393
      %v395 = vshrl.u32 %v240, 16
      %v397 = vrot.slane %v395, 4
      %v398 = vor.u32 %v397, %v393
      %v399 = vrot.slane %v398, 4
      %v401 = vshll.u32 %v241, 16
      %v403 = vrot.slane %v401, 5
      %v404 = vsel %vm284, %v399, %v403
      %v406 = vshrl.u32 %v242, 16
      %v408 = vrot.slane %v406, 4
      %v409 = vshll.u32 %v242, 16
      %v411 = vrot.slane %v409, 5
      %v412 = vor.u32 %v408, %v411
      %v413 = vrot.slane %v412, 4
      %v415 = vshll.u32 %v243, 16
      %v417 = vrot.slane %v415, 5
      %v418 = vsel %vm284, %v413, %v417
      %v419 = vshrl.u32 %v243, 16
      %v421 = vrot.slane %v419, 4
      %v422 = vor.u32 %v421, %v417
      %v423 = vrot.slane %v422, 4
      %v425 = vshll.u32 %v244, 16
      %v427 = vrot.slane %v425, 5
      %v428 = vsel %vm284, %v423, %v427
      %v430 = vshrl.u32 %v245, 16
      %v432 = vrot.slane %v430, 4
      %v433 = vshll.u32 %v245, 16
      %v435 = vrot.slane %v433, 5
      %v436 = vor.u32 %v432, %v435
      %v437 = vrot.slane %v436, 4
      %v439 = vshll.u32 %v246, 16
      %v441 = vrot.slane %v439, 5
      %v442 = vsel %vm284, %v437, %v441
      %v443 = vshrl.u32 %v246, 16
      %v445 = vrot.slane %v443, 4
      %v446 = vor.u32 %v445, %v441
      %v447 = vrot.slane %v446, 4
      %v449 = vshll.u32 %v247, 16
      %v451 = vrot.slane %v449, 5
      %v452 = vsel %vm284, %v447, %v451
      %v454 = vshrl.u32 %v248, 16
      %v456 = vrot.slane %v454, 4
      %v457 = vshll.u32 %v248, 16
      %v459 = vrot.slane %v457, 5
      %v460 = vor.u32 %v456, %v459
      %v461 = vrot.slane %v460, 4
      %v463 = vshll.u32 %v249, 16
      %v465 = vrot.slane %v463, 5
      %v466 = vsel %vm284, %v461, %v465
      %v467 = vshrl.u32 %v249, 16
      %v469 = vrot.slane %v467, 4
      %v470 = vor.u32 %v469, %v465
      %v471 = vrot.slane %v470, 4
      %v473 = vshll.u32 %v250, 16
      %v475 = vrot.slane %v473, 5
      %v476 = vsel %vm284, %v471, %v475
      %v478 = vshrl.u32 %v251, 16
      %v480 = vrot.slane %v478, 4
      %v481 = vshll.u32 %v251, 16
      %v483 = vrot.slane %v481, 5
      %v484 = vor.u32 %v480, %v483
      %v485 = vrot.slane %v484, 4
      %v487 = vshll.u32 %v252, 16
      %v489 = vrot.slane %v487, 5
      %v490 = vsel %vm284, %v485, %v489
      %v491 = vshrl.u32 %v252, 16
      %v493 = vrot.slane %v491, 4
      %v494 = vor.u32 %v493, %v489
      %v495 = vrot.slane %v494, 4
      %v497 = vshll.u32 %v253, 16
      %v499 = vrot.slane %v497, 5
      %v500 = vsel %vm284, %v495, %v499
      %v502 = vshrl.u32 %v254, 16
      %v504 = vrot.slane %v502, 4
      %v505 = vshll.u32 %v254, 16
      %v507 = vrot.slane %v505, 5
      %v508 = vor.u32 %v504, %v507
      %v509 = vrot.slane %v508, 4
      %v511 = vshll.u32 %v255, 16
      %v513 = vrot.slane %v511, 5
      %v514 = vsel %vm284, %v509, %v513
      %v515 = vshrl.u32 %v255, 16
      %v517 = vrot.slane %v515, 4
      %v518 = vor.u32 %v517, %v513
      %v519 = vrot.slane %v518, 4
      %v521 = vshll.u32 %v256, 16
      %v523 = vrot.slane %v521, 5
      %v524 = vsel %vm284, %v519, %v523
      %v526 = vshrl.u32 %v257, 16
      %v528 = vrot.slane %v526, 4
      %v529 = vshll.u32 %v257, 16
      %v531 = vrot.slane %v529, 5
      %v532 = vor.u32 %v528, %v531
      %v533 = vrot.slane %v532, 4
      %v535 = vshll.u32 %v258, 16
      %v537 = vrot.slane %v535, 5
      %v538 = vsel %vm284, %v533, %v537
      %v539 = vshrl.u32 %v258, 16
      %v541 = vrot.slane %v539, 4
      %v542 = vor.u32 %v541, %v537
      %v543 = vrot.slane %v542, 4
      %v545 = vshll.u32 %v259, 16
      %v547 = vrot.slane %v545, 5
      %v548 = vsel %vm284, %v543, %v547
      %v550 = vshrl.u32 %v260, 16
      %v552 = vrot.slane %v550, 4
      %v553 = vshll.u32 %v260, 16
      %v555 = vrot.slane %v553, 5
      %v556 = vor.u32 %v552, %v555
      %v557 = vrot.slane %v556, 4
      %v559 = vshll.u32 %v261, 16
      %v561 = vrot.slane %v559, 5
      %v562 = vsel %vm284, %v557, %v561
      %v563 = vshrl.u32 %v261, 16
      %v565 = vrot.slane %v563, 4
      %v566 = vor.u32 %v565, %v561
      %v567 = vrot.slane %v566, 4
      %v569 = vshll.u32 %v262, 16
      %v571 = vrot.slane %v569, 5
      %v572 = vsel %vm284, %v567, %v571
      %v574 = vshrl.u32 %v263, 16
      %v576 = vrot.slane %v574, 4
      %v577 = vshll.u32 %v263, 16
      %v579 = vrot.slane %v577, 5
      %v580 = vor.u32 %v576, %v579
      %v581 = vrot.slane %v580, 4
      %v583 = vshll.u32 %v264, 16
      %v585 = vrot.slane %v583, 5
      %v586 = vsel %vm284, %v581, %v585
      %v587 = vshrl.u32 %v264, 16
      %v589 = vrot.slane %v587, 4
      %v590 = vor.u32 %v589, %v585
      %v591 = vrot.slane %v590, 4
      %v593 = vshll.u32 %v265, 16
      %v595 = vrot.slane %v593, 5
      %v596 = vsel %vm284, %v591, %v595
      %v598 = vshrl.u32 %v266, 16
      %v600 = vrot.slane %v598, 4
      %v601 = vshll.u32 %v266, 16
      %v603 = vrot.slane %v601, 5
      %v604 = vor.u32 %v600, %v603
      %v605 = vrot.slane %v604, 4
      %v607 = vshll.u32 %v267, 16
      %v609 = vrot.slane %v607, 5
      %v610 = vsel %vm284, %v605, %v609
      %v611 = vshrl.u32 %v267, 16
      %v613 = vrot.slane %v611, 4
      %v614 = vor.u32 %v613, %v609
      %v615 = vrot.slane %v614, 4
      %v617 = vshll.u32 %v268, 16
      %v619 = vrot.slane %v617, 5
      %v620 = vsel %vm284, %v615, %v619
      %v622 = vshrl.u32 %v269, 16
      %v624 = vrot.slane %v622, 4
      %v625 = vshll.u32 %v269, 16
      %v627 = vrot.slane %v625, 5
      %v628 = vor.u32 %v624, %v627
      %v629 = vrot.slane %v628, 4
      %v631 = vshll.u32 %v270, 16
      %v633 = vrot.slane %v631, 5
      %v634 = vsel %vm284, %v629, %v633
      %v635 = vshrl.u32 %v270, 16
      %v637 = vrot.slane %v635, 4
      %v638 = vor.u32 %v637, %v633
      %v639 = vrot.slane %v638, 4
      %v641 = vshll.u32 %v271, 16
      %v643 = vrot.slane %v641, 5
      %v644 = vsel %vm284, %v639, %v643
      %v646 = vshrl.u32 %v272, 16
      %v648 = vrot.slane %v646, 4
      %v649 = vshll.u32 %v272, 16
      %v651 = vrot.slane %v649, 5
      %v652 = vor.u32 %v648, %v651
      %v653 = vrot.slane %v652, 4
      %v655 = vshll.u32 %v273, 16
      %v657 = vrot.slane %v655, 5
      %v658 = vsel %vm284, %v653, %v657
      %v659 = vshrl.u32 %v273, 16
      %v661 = vrot.slane %v659, 4
      %v662 = vor.u32 %v661, %v657
      %v663 = vrot.slane %v662, 4
      %v665 = vshll.u32 %v274, 16
      %v667 = vrot.slane %v665, 5
      %v668 = vsel %vm284, %v663, %v667
      %s669 = scalar_lea.vmem %s1, 2
      %v670 = vld [vmem:[%s669] sm:$0x3]
      %v671 = vunpack.c.l.b16 %v298
      %v672 = vunpack.c.l.b16 %v308
      %v673 = vunpack.c.l.b16 %v322
      %v674 = vunpack.c.l.b16 %v332
      %v675 = vunpack.c.l.b16 %v346
      %v676 = vunpack.c.l.b16 %v356
      %v677 = vunpack.c.l.b16 %v370
      %v678 = vunpack.c.l.b16 %v380
      %v679 = vunpack.c.l.b16 %v394
      %v680 = vunpack.c.l.b16 %v404
      %v681 = vunpack.c.l.b16 %v418
      %v682 = vunpack.c.l.b16 %v428
      %v683 = vunpack.c.l.b16 %v442
      %v684 = vunpack.c.l.b16 %v452
      %v685 = vunpack.c.l.b16 %v466
      %v686 = vunpack.c.l.b16 %v476
      %v687 = vunpack.c.l.b16 %v490
      %v688 = vunpack.c.l.b16 %v500
      %v689 = vunpack.c.l.b16 %v514
      %v690 = vunpack.c.l.b16 %v524
      %v691 = vunpack.c.l.b16 %v538
      %v692 = vunpack.c.l.b16 %v548
      %v693 = vunpack.c.l.b16 %v562
      %v694 = vunpack.c.l.b16 %v572
      %v695 = vunpack.c.l.b16 %v586
      %v696 = vunpack.c.l.b16 %v596
      %v697 = vunpack.c.l.b16 %v610
      %v698 = vunpack.c.l.b16 %v620
      %v699 = vunpack.c.l.b16 %v634
      %v700 = vunpack.c.l.b16 %v644
      %v701 = vunpack.c.l.b16 %v658
      %v702 = vunpack.c.l.b16 %v668
      %v703 = vpack.c.b16 %v672, %v671
      %v704 = vpack.c.b16 %v674, %v673
      %v705 = vpack.c.b16 %v676, %v675
      %v706 = vpack.c.b16 %v678, %v677
      %v707 = vpack.c.b16 %v680, %v679
      %v708 = vpack.c.b16 %v682, %v681
      %v709 = vpack.c.b16 %v684, %v683
      %v710 = vpack.c.b16 %v686, %v685
      %v711 = vpack.c.b16 %v688, %v687
      %v712 = vpack.c.b16 %v690, %v689
      %v713 = vpack.c.b16 %v692, %v691
      %v714 = vpack.c.b16 %v694, %v693
      %v715 = vpack.c.b16 %v696, %v695
      %v716 = vpack.c.b16 %v698, %v697
      %v717 = vpack.c.b16 %v700, %v699
      %v718 = vpack.c.b16 %v702, %v701
      %vm719 = vcmask 31744
      %v721 = vsel %vm719, %v703, 0
      %v724 = vsel %vm719, %v704, 0
      %v727 = vsel %vm719, %v705, 0
      %v730 = vsel %vm719, %v706, 0
      %v733 = vsel %vm719, %v707, 0
      %v736 = vsel %vm719, %v708, 0
      %v739 = vsel %vm719, %v709, 0
      %v742 = vsel %vm719, %v710, 0
      %v745 = vsel %vm719, %v711, 0
      %v748 = vsel %vm719, %v712, 0
      %v751 = vsel %vm719, %v713, 0
      %v754 = vsel %vm719, %v714, 0
      %v757 = vsel %vm719, %v715, 0
      %v760 = vsel %vm719, %v716, 0
      %v763 = vsel %vm719, %v717, 0
      %v766 = vsel %vm719, %v718, 0
      %vm768 = vcmask 1041408
      %v770 = vsel %vm768, %v670, 0
      %772 = vmatpush.bf16.msra.mxu0 0
      %773 = vmatpush.bf16.msra.mxu0 0
      %774 = vmatpush.bf16.msra.mxu0 0
      %775 = vmatpush.bf16.msra.mxu0 0
      %776 = vmatpush.bf16.msra.mxu0 0
      %777 = vmatpush.bf16.msra.mxu0 0
      %778 = vmatpush.bf16.msra.mxu0 0
      %779 = vmatpush.bf16.msra.mxu0 %v770
      %780 = vmatmul.bf16.gmra.mxu0 %v721
      %v781 = vpop.f32.mrf.mxu0
      %v782 = vadd.f32 0.0, %v781
      %v783 = vpop.f32.mrf.mxu0
      %v784 = vadd.f32 0.0, %v783
      %785 = vmatmul.bf16.gmra.mxu0 %v724
      %v786 = vpop.f32.mrf.mxu0
      %v787 = vadd.f32 0.0, %v786
      %v788 = vpop.f32.mrf.mxu0
      %v789 = vadd.f32 0.0, %v788
      %790 = vmatmul.bf16.gmra.mxu0 %v727
      %v791 = vpop.f32.mrf.mxu0
      %v792 = vadd.f32 0.0, %v791
      %v793 = vpop.f32.mrf.mxu0
      %v794 = vadd.f32 0.0, %v793
      %795 = vmatmul.bf16.gmra.mxu0 %v730
      %v796 = vpop.f32.mrf.mxu0
      %v797 = vadd.f32 0.0, %v796
      %v798 = vpop.f32.mrf.mxu0
      %v799 = vadd.f32 0.0, %v798
      %800 = vmatmul.bf16.gmra.mxu0 %v733
      %v801 = vpop.f32.mrf.mxu0
      %v802 = vadd.f32 0.0, %v801
      %v803 = vpop.f32.mrf.mxu0
      %v804 = vadd.f32 0.0, %v803
      %805 = vmatmul.bf16.gmra.mxu0 %v736
      %v806 = vpop.f32.mrf.mxu0
      %v807 = vadd.f32 0.0, %v806
      %v808 = vpop.f32.mrf.mxu0
      %v809 = vadd.f32 0.0, %v808
      %810 = vmatmul.bf16.gmra.mxu0 %v739
      %v811 = vpop.f32.mrf.mxu0
      %v812 = vadd.f32 0.0, %v811
      %v813 = vpop.f32.mrf.mxu0
      %v814 = vadd.f32 0.0, %v813
      %815 = vmatmul.bf16.gmra.mxu0 %v742
      %v816 = vpop.f32.mrf.mxu0
      %v817 = vadd.f32 0.0, %v816
      %v818 = vpop.f32.mrf.mxu0
      %v819 = vadd.f32 0.0, %v818
      %820 = vmatmul.bf16.gmra.mxu0 %v745
      %v821 = vpop.f32.mrf.mxu0
      %v822 = vadd.f32 0.0, %v821
      %v823 = vpop.f32.mrf.mxu0
      %v824 = vadd.f32 0.0, %v823
      %825 = vmatmul.bf16.gmra.mxu0 %v748
      %v826 = vpop.f32.mrf.mxu0
      %v827 = vadd.f32 0.0, %v826
      %v828 = vpop.f32.mrf.mxu0
      %v829 = vadd.f32 0.0, %v828
      %830 = vmatmul.bf16.gmra.mxu0 %v751
      %v831 = vpop.f32.mrf.mxu0
      %v832 = vadd.f32 0.0, %v831
      %v833 = vpop.f32.mrf.mxu0
      %v834 = vadd.f32 0.0, %v833
      %835 = vmatmul.bf16.gmra.mxu0 %v754
      %v836 = vpop.f32.mrf.mxu0
      %v837 = vadd.f32 0.0, %v836
      %v838 = vpop.f32.mrf.mxu0
      %v839 = vadd.f32 0.0, %v838
      %840 = vmatmul.bf16.gmra.mxu0 %v757
      %v841 = vpop.f32.mrf.mxu0
      %v842 = vadd.f32 0.0, %v841
      %v843 = vpop.f32.mrf.mxu0
      %v844 = vadd.f32 0.0, %v843
      %845 = vmatmul.bf16.gmra.mxu0 %v760
      %v846 = vpop.f32.mrf.mxu0
      %v847 = vadd.f32 0.0, %v846
      %v848 = vpop.f32.mrf.mxu0
      %v849 = vadd.f32 0.0, %v848
      %850 = vmatmul.bf16.gmra.mxu0 %v763
      %v851 = vpop.f32.mrf.mxu0
      %v852 = vadd.f32 0.0, %v851
      %v853 = vpop.f32.mrf.mxu0
      %v854 = vadd.f32 0.0, %v853
      %855 = vmatmul.bf16.gmra.mxu0 %v766
      %v856 = vpop.f32.mrf.mxu0
      %v857 = vadd.f32 0.0, %v856
      %v858 = vpop.f32.mrf.mxu0
      %v859 = vadd.f32 0.0, %v858
      %860 = vdwg.mxu0
      %v893 = vunpack.c.l.b16 %v227
      %v894 = vunpack.c.l.b16 %v228
      %v895 = vunpack.c.l.b16 %v230
      %v896 = vunpack.c.l.b16 %v231
      %v897 = vunpack.c.l.b16 %v233
      %v898 = vunpack.c.l.b16 %v234
      %v899 = vunpack.c.l.b16 %v236
      %v900 = vunpack.c.l.b16 %v237
      %v901 = vunpack.c.l.b16 %v239
      %v902 = vunpack.c.l.b16 %v240
      %v903 = vunpack.c.l.b16 %v242
      %v904 = vunpack.c.l.b16 %v243
      %v905 = vunpack.c.l.b16 %v245
      %v906 = vunpack.c.l.b16 %v246
      %v907 = vunpack.c.l.b16 %v248
      %v908 = vunpack.c.l.b16 %v249
      %v909 = vunpack.c.l.b16 %v251
      %v910 = vunpack.c.l.b16 %v252
      %v911 = vunpack.c.l.b16 %v254
      %v912 = vunpack.c.l.b16 %v255
      %v913 = vunpack.c.l.b16 %v257
      %v914 = vunpack.c.l.b16 %v258
      %v915 = vunpack.c.l.b16 %v260
      %v916 = vunpack.c.l.b16 %v261
      %v917 = vunpack.c.l.b16 %v263
      %v918 = vunpack.c.l.b16 %v264
      %v919 = vunpack.c.l.b16 %v266
      %v920 = vunpack.c.l.b16 %v267
      %v921 = vunpack.c.l.b16 %v269
      %v922 = vunpack.c.l.b16 %v270
      %v923 = vunpack.c.l.b16 %v272
      %v924 = vunpack.c.l.b16 %v273
      %v925 = vpack.c.b16 %v894, %v893
      %v926 = vpack.c.b16 %v896, %v895
      %v927 = vpack.c.b16 %v898, %v897
      %v928 = vpack.c.b16 %v900, %v899
      %v929 = vpack.c.b16 %v902, %v901
      %v930 = vpack.c.b16 %v904, %v903
      %v931 = vpack.c.b16 %v906, %v905
      %v932 = vpack.c.b16 %v908, %v907
      %v933 = vpack.c.b16 %v910, %v909
      %v934 = vpack.c.b16 %v912, %v911
      %v935 = vpack.c.b16 %v914, %v913
      %v936 = vpack.c.b16 %v916, %v915
      %v937 = vpack.c.b16 %v918, %v917
      %v938 = vpack.c.b16 %v920, %v919
      %v939 = vpack.c.b16 %v922, %v921
      %v940 = vpack.c.b16 %v924, %v923
      %v942 = vsel %vm719, %v925, 0
      %v945 = vsel %vm719, %v926, 0
      %v948 = vsel %vm719, %v927, 0
      %v951 = vsel %vm719, %v928, 0
      %v954 = vsel %vm719, %v929, 0
      %v957 = vsel %vm719, %v930, 0
      %v960 = vsel %vm719, %v931, 0
      %v963 = vsel %vm719, %v932, 0
      %v966 = vsel %vm719, %v933, 0
      %v969 = vsel %vm719, %v934, 0
      %v972 = vsel %vm719, %v935, 0
      %v975 = vsel %vm719, %v936, 0
      %v978 = vsel %vm719, %v937, 0
      %v981 = vsel %vm719, %v938, 0
      %v984 = vsel %vm719, %v939, 0
      %v987 = vsel %vm719, %v940, 0
      %v990 = vsel %vm768, %v281, 0
      %992 = vmatpush.bf16.msra.mxu0 0
      %993 = vmatpush.bf16.msra.mxu0 0
      %994 = vmatpush.bf16.msra.mxu0 0
      %995 = vmatpush.bf16.msra.mxu0 0
      %996 = vmatpush.bf16.msra.mxu0 0
      %997 = vmatpush.bf16.msra.mxu0 0
      %998 = vmatpush.bf16.msra.mxu0 0
      %999 = vmatpush.bf16.msra.mxu0 %v990
      %1000 = vmatmul.bf16.gmra.mxu0 %v942
      %v1001 = vpop.f32.mrf.mxu0
      %v1002 = vadd.f32 %v782, %v1001
      %v1003 = vpop.f32.mrf.mxu0
      %v1004 = vadd.f32 %v784, %v1003
      %1005 = vmatmul.bf16.gmra.mxu0 %v945
      %v1006 = vpop.f32.mrf.mxu0
      %v1007 = vadd.f32 %v787, %v1006
      %v1008 = vpop.f32.mrf.mxu0
      %v1009 = vadd.f32 %v789, %v1008
      %1010 = vmatmul.bf16.gmra.mxu0 %v948
      %v1011 = vpop.f32.mrf.mxu0
      %v1012 = vadd.f32 %v792, %v1011
      %v1013 = vpop.f32.mrf.mxu0
      %v1014 = vadd.f32 %v794, %v1013
      %1015 = vmatmul.bf16.gmra.mxu0 %v951
      %v1016 = vpop.f32.mrf.mxu0
      %v1017 = vadd.f32 %v797, %v1016
      %v1018 = vpop.f32.mrf.mxu0
      %v1019 = vadd.f32 %v799, %v1018
      %1020 = vmatmul.bf16.gmra.mxu0 %v954
      %v1021 = vpop.f32.mrf.mxu0
      %v1022 = vadd.f32 %v802, %v1021
      %v1023 = vpop.f32.mrf.mxu0
      %v1024 = vadd.f32 %v804, %v1023
      %1025 = vmatmul.bf16.gmra.mxu0 %v957
      %v1026 = vpop.f32.mrf.mxu0
      %v1027 = vadd.f32 %v807, %v1026
      %v1028 = vpop.f32.mrf.mxu0
      %v1029 = vadd.f32 %v809, %v1028
      %1030 = vmatmul.bf16.gmra.mxu0 %v960
      %v1031 = vpop.f32.mrf.mxu0
      %v1032 = vadd.f32 %v812, %v1031
      %v1033 = vpop.f32.mrf.mxu0
      %v1034 = vadd.f32 %v814, %v1033
      %1035 = vmatmul.bf16.gmra.mxu0 %v963
      %v1036 = vpop.f32.mrf.mxu0
      %v1037 = vadd.f32 %v817, %v1036
      %v1038 = vpop.f32.mrf.mxu0
      %v1039 = vadd.f32 %v819, %v1038
      %1040 = vmatmul.bf16.gmra.mxu0 %v966
      %v1041 = vpop.f32.mrf.mxu0
      %v1042 = vadd.f32 %v822, %v1041
      %v1043 = vpop.f32.mrf.mxu0
      %v1044 = vadd.f32 %v824, %v1043
      %1045 = vmatmul.bf16.gmra.mxu0 %v969
      %v1046 = vpop.f32.mrf.mxu0
      %v1047 = vadd.f32 %v827, %v1046
      %v1048 = vpop.f32.mrf.mxu0
      %v1049 = vadd.f32 %v829, %v1048
      %1050 = vmatmul.bf16.gmra.mxu0 %v972
      %v1051 = vpop.f32.mrf.mxu0
      %v1052 = vadd.f32 %v832, %v1051
      %v1053 = vpop.f32.mrf.mxu0
      %v1054 = vadd.f32 %v834, %v1053
      %1055 = vmatmul.bf16.gmra.mxu0 %v975
      %v1056 = vpop.f32.mrf.mxu0
      %v1057 = vadd.f32 %v837, %v1056
      %v1058 = vpop.f32.mrf.mxu0
      %v1059 = vadd.f32 %v839, %v1058
      %1060 = vmatmul.bf16.gmra.mxu0 %v978
      %v1061 = vpop.f32.mrf.mxu0
      %v1062 = vadd.f32 %v842, %v1061
      %v1063 = vpop.f32.mrf.mxu0
      %v1064 = vadd.f32 %v844, %v1063
      %1065 = vmatmul.bf16.gmra.mxu0 %v981
      %v1066 = vpop.f32.mrf.mxu0
      %v1067 = vadd.f32 %v847, %v1066
      %v1068 = vpop.f32.mrf.mxu0
      %v1069 = vadd.f32 %v849, %v1068
      %1070 = vmatmul.bf16.gmra.mxu0 %v984
      %v1071 = vpop.f32.mrf.mxu0
      %v1072 = vadd.f32 %v852, %v1071
      %v1073 = vpop.f32.mrf.mxu0
      %v1074 = vadd.f32 %v854, %v1073
      %1075 = vmatmul.bf16.gmra.mxu0 %v987
      %v1076 = vpop.f32.mrf.mxu0
      %v1077 = vadd.f32 %v857, %v1076
      %v1078 = vpop.f32.mrf.mxu0
      %v1079 = vadd.f32 %v859, %v1078
      %1080 = vdwg.mxu0
      %vm1097 = vcmask 1042432
      %vm1098 = vcmask 1046532
      %vm1099 = vmor %vm1097, %vm1098
      %v1100 = vrot.slane %v227, 5
      %v1101 = vrot.slane %v1100, 4
      %v1102 = vrot.slane %v228, 5
      %v1103 = vsel %vm1099, %v1101, %v1102
      %v1104 = vrot.slane %v1102, 4
      %v1105 = vrot.slane %v229, 5
      %v1106 = vsel %vm1099, %v1104, %v1105
      %v1107 = vrot.slane %v230, 5
      %v1108 = vrot.slane %v1107, 4
      %v1109 = vrot.slane %v231, 5
      %v1110 = vsel %vm1099, %v1108, %v1109
      %v1111 = vrot.slane %v1109, 4
      %v1112 = vrot.slane %v232, 5
      %v1113 = vsel %vm1099, %v1111, %v1112
      %v1114 = vrot.slane %v233, 5
      %v1115 = vrot.slane %v1114, 4
      %v1116 = vrot.slane %v234, 5
      %v1117 = vsel %vm1099, %v1115, %v1116
      %v1118 = vrot.slane %v1116, 4
      %v1119 = vrot.slane %v235, 5
      %v1120 = vsel %vm1099, %v1118, %v1119
      %v1121 = vrot.slane %v236, 5
      %v1122 = vrot.slane %v1121, 4
      %v1123 = vrot.slane %v237, 5
      %v1124 = vsel %vm1099, %v1122, %v1123
      %v1125 = vrot.slane %v1123, 4
      %v1126 = vrot.slane %v238, 5
      %v1127 = vsel %vm1099, %v1125, %v1126
      %v1128 = vrot.slane %v239, 5
      %v1129 = vrot.slane %v1128, 4
      %v1130 = vrot.slane %v240, 5
      %v1131 = vsel %vm1099, %v1129, %v1130
      %v1132 = vrot.slane %v1130, 4
      %v1133 = vrot.slane %v241, 5
      %v1134 = vsel %vm1099, %v1132, %v1133
      %v1135 = vrot.slane %v242, 5
      %v1136 = vrot.slane %v1135, 4
      %v1137 = vrot.slane %v243, 5
      %v1138 = vsel %vm1099, %v1136, %v1137
      %v1139 = vrot.slane %v1137, 4
      %v1140 = vrot.slane %v244, 5
      %v1141 = vsel %vm1099, %v1139, %v1140
      %v1142 = vrot.slane %v245, 5
      %v1143 = vrot.slane %v1142, 4
      %v1144 = vrot.slane %v246, 5
      %v1145 = vsel %vm1099, %v1143, %v1144
      %v1146 = vrot.slane %v1144, 4
      %v1147 = vrot.slane %v247, 5
      %v1148 = vsel %vm1099, %v1146, %v1147
      %v1149 = vrot.slane %v248, 5
      %v1150 = vrot.slane %v1149, 4
      %v1151 = vrot.slane %v249, 5
      %v1152 = vsel %vm1099, %v1150, %v1151
      %v1153 = vrot.slane %v1151, 4
      %v1154 = vrot.slane %v250, 5
      %v1155 = vsel %vm1099, %v1153, %v1154
      %v1156 = vrot.slane %v251, 5
      %v1157 = vrot.slane %v1156, 4
      %v1158 = vrot.slane %v252, 5
      %v1159 = vsel %vm1099, %v1157, %v1158
      %v1160 = vrot.slane %v1158, 4
      %v1161 = vrot.slane %v253, 5
      %v1162 = vsel %vm1099, %v1160, %v1161
      %v1163 = vrot.slane %v254, 5
      %v1164 = vrot.slane %v1163, 4
      %v1165 = vrot.slane %v255, 5
      %v1166 = vsel %vm1099, %v1164, %v1165
      %v1167 = vrot.slane %v1165, 4
      %v1168 = vrot.slane %v256, 5
      %v1169 = vsel %vm1099, %v1167, %v1168
      %v1170 = vrot.slane %v257, 5
      %v1171 = vrot.slane %v1170, 4
      %v1172 = vrot.slane %v258, 5
      %v1173 = vsel %vm1099, %v1171, %v1172
      %v1174 = vrot.slane %v1172, 4
      %v1175 = vrot.slane %v259, 5
      %v1176 = vsel %vm1099, %v1174, %v1175
      %v1177 = vrot.slane %v260, 5
      %v1178 = vrot.slane %v1177, 4
      %v1179 = vrot.slane %v261, 5
      %v1180 = vsel %vm1099, %v1178, %v1179
      %v1181 = vrot.slane %v1179, 4
      %v1182 = vrot.slane %v262, 5
      %v1183 = vsel %vm1099, %v1181, %v1182
      %v1184 = vrot.slane %v263, 5
      %v1185 = vrot.slane %v1184, 4
      %v1186 = vrot.slane %v264, 5
      %v1187 = vsel %vm1099, %v1185, %v1186
      %v1188 = vrot.slane %v1186, 4
      %v1189 = vrot.slane %v265, 5
      %v1190 = vsel %vm1099, %v1188, %v1189
      %v1191 = vrot.slane %v266, 5
      %v1192 = vrot.slane %v1191, 4
      %v1193 = vrot.slane %v267, 5
      %v1194 = vsel %vm1099, %v1192, %v1193
      %v1195 = vrot.slane %v1193, 4
      %v1196 = vrot.slane %v268, 5
      %v1197 = vsel %vm1099, %v1195, %v1196
      %v1198 = vrot.slane %v269, 5
      %v1199 = vrot.slane %v1198, 4
      %v1200 = vrot.slane %v270, 5
      %v1201 = vsel %vm1099, %v1199, %v1200
      %v1202 = vrot.slane %v1200, 4
      %v1203 = vrot.slane %v271, 5
      %v1204 = vsel %vm1099, %v1202, %v1203
      %v1205 = vrot.slane %v272, 5
      %v1206 = vrot.slane %v1205, 4
      %v1207 = vrot.slane %v273, 5
      %v1208 = vsel %vm1099, %v1206, %v1207
      %v1209 = vrot.slane %v1207, 4
      %v1210 = vrot.slane %v274, 5
      %v1211 = vsel %vm1099, %v1209, %v1210
      %s1212 = scalar_lea.vmem %s1, 4
      %v1213 = vld [vmem:[%s1212] sm:$0x3]
      %v1214 = vunpack.c.l.b16 %v1103
      %v1215 = vunpack.c.l.b16 %v1106
      %v1216 = vunpack.c.l.b16 %v1110
      %v1217 = vunpack.c.l.b16 %v1113
      %v1218 = vunpack.c.l.b16 %v1117
      %v1219 = vunpack.c.l.b16 %v1120
      %v1220 = vunpack.c.l.b16 %v1124
      %v1221 = vunpack.c.l.b16 %v1127
      %v1222 = vunpack.c.l.b16 %v1131
      %v1223 = vunpack.c.l.b16 %v1134
      %v1224 = vunpack.c.l.b16 %v1138
      %v1225 = vunpack.c.l.b16 %v1141
      %v1226 = vunpack.c.l.b16 %v1145
      %v1227 = vunpack.c.l.b16 %v1148
      %v1228 = vunpack.c.l.b16 %v1152
      %v1229 = vunpack.c.l.b16 %v1155
      %v1230 = vunpack.c.l.b16 %v1159
      %v1231 = vunpack.c.l.b16 %v1162
      %v1232 = vunpack.c.l.b16 %v1166
      %v1233 = vunpack.c.l.b16 %v1169
      %v1234 = vunpack.c.l.b16 %v1173
      %v1235 = vunpack.c.l.b16 %v1176
      %v1236 = vunpack.c.l.b16 %v1180
      %v1237 = vunpack.c.l.b16 %v1183
      %v1238 = vunpack.c.l.b16 %v1187
      %v1239 = vunpack.c.l.b16 %v1190
      %v1240 = vunpack.c.l.b16 %v1194
      %v1241 = vunpack.c.l.b16 %v1197
      %v1242 = vunpack.c.l.b16 %v1201
      %v1243 = vunpack.c.l.b16 %v1204
      %v1244 = vunpack.c.l.b16 %v1208
      %v1245 = vunpack.c.l.b16 %v1211
      %v1246 = vpack.c.b16 %v1215, %v1214
      %v1247 = vpack.c.b16 %v1217, %v1216
      %v1248 = vpack.c.b16 %v1219, %v1218
      %v1249 = vpack.c.b16 %v1221, %v1220
      %v1250 = vpack.c.b16 %v1223, %v1222
      %v1251 = vpack.c.b16 %v1225, %v1224
      %v1252 = vpack.c.b16 %v1227, %v1226
      %v1253 = vpack.c.b16 %v1229, %v1228
      %v1254 = vpack.c.b16 %v1231, %v1230
      %v1255 = vpack.c.b16 %v1233, %v1232
      %v1256 = vpack.c.b16 %v1235, %v1234
      %v1257 = vpack.c.b16 %v1237, %v1236
      %v1258 = vpack.c.b16 %v1239, %v1238
      %v1259 = vpack.c.b16 %v1241, %v1240
      %v1260 = vpack.c.b16 %v1243, %v1242
      %v1261 = vpack.c.b16 %v1245, %v1244
      %v1263 = vsel %vm719, %v1246, 0
      %v1266 = vsel %vm719, %v1247, 0
      %v1269 = vsel %vm719, %v1248, 0
      %v1272 = vsel %vm719, %v1249, 0
      %v1275 = vsel %vm719, %v1250, 0
      %v1278 = vsel %vm719, %v1251, 0
      %v1281 = vsel %vm719, %v1252, 0
      %v1284 = vsel %vm719, %v1253, 0
      %v1287 = vsel %vm719, %v1254, 0
      %v1290 = vsel %vm719, %v1255, 0
      %v1293 = vsel %vm719, %v1256, 0
      %v1296 = vsel %vm719, %v1257, 0
      %v1299 = vsel %vm719, %v1258, 0
      %v1302 = vsel %vm719, %v1259, 0
      %v1305 = vsel %vm719, %v1260, 0
      %v1308 = vsel %vm719, %v1261, 0
      %v1311 = vsel %vm768, %v1213, 0
      %1313 = vmatpush.bf16.msra.mxu0 0
      %1314 = vmatpush.bf16.msra.mxu0 0
      %1315 = vmatpush.bf16.msra.mxu0 0
      %1316 = vmatpush.bf16.msra.mxu0 0
      %1317 = vmatpush.bf16.msra.mxu0 0
      %1318 = vmatpush.bf16.msra.mxu0 0
      %1319 = vmatpush.bf16.msra.mxu0 0
      %1320 = vmatpush.bf16.msra.mxu0 %v1311
      %1321 = vmatmul.bf16.gmra.mxu0 %v1263
      %v1322 = vpop.f32.mrf.mxu0
      %v1323 = vadd.f32 0.0, %v1322
      %v1324 = vpop.f32.mrf.mxu0
      %v1325 = vadd.f32 0.0, %v1324
      %1326 = vmatmul.bf16.gmra.mxu0 %v1266
      %v1327 = vpop.f32.mrf.mxu0
      %v1328 = vadd.f32 0.0, %v1327
      %v1329 = vpop.f32.mrf.mxu0
      %v1330 = vadd.f32 0.0, %v1329
      %1331 = vmatmul.bf16.gmra.mxu0 %v1269
      %v1332 = vpop.f32.mrf.mxu0
      %v1333 = vadd.f32 0.0, %v1332
      %v1334 = vpop.f32.mrf.mxu0
      %v1335 = vadd.f32 0.0, %v1334
      %1336 = vmatmul.bf16.gmra.mxu0 %v1272
      %v1337 = vpop.f32.mrf.mxu0
      %v1338 = vadd.f32 0.0, %v1337
      %v1339 = vpop.f32.mrf.mxu0
      %v1340 = vadd.f32 0.0, %v1339
      %1341 = vmatmul.bf16.gmra.mxu0 %v1275
      %v1342 = vpop.f32.mrf.mxu0
      %v1343 = vadd.f32 0.0, %v1342
      %v1344 = vpop.f32.mrf.mxu0
      %v1345 = vadd.f32 0.0, %v1344
      %1346 = vmatmul.bf16.gmra.mxu0 %v1278
      %v1347 = vpop.f32.mrf.mxu0
      %v1348 = vadd.f32 0.0, %v1347
      %v1349 = vpop.f32.mrf.mxu0
      %v1350 = vadd.f32 0.0, %v1349
      %1351 = vmatmul.bf16.gmra.mxu0 %v1281
      %v1352 = vpop.f32.mrf.mxu0
      %v1353 = vadd.f32 0.0, %v1352
      %v1354 = vpop.f32.mrf.mxu0
      %v1355 = vadd.f32 0.0, %v1354
      %1356 = vmatmul.bf16.gmra.mxu0 %v1284
      %v1357 = vpop.f32.mrf.mxu0
      %v1358 = vadd.f32 0.0, %v1357
      %v1359 = vpop.f32.mrf.mxu0
      %v1360 = vadd.f32 0.0, %v1359
      %1361 = vmatmul.bf16.gmra.mxu0 %v1287
      %v1362 = vpop.f32.mrf.mxu0
      %v1363 = vadd.f32 0.0, %v1362
      %v1364 = vpop.f32.mrf.mxu0
      %v1365 = vadd.f32 0.0, %v1364
      %1366 = vmatmul.bf16.gmra.mxu0 %v1290
      %v1367 = vpop.f32.mrf.mxu0
      %v1368 = vadd.f32 0.0, %v1367
      %v1369 = vpop.f32.mrf.mxu0
      %v1370 = vadd.f32 0.0, %v1369
      %1371 = vmatmul.bf16.gmra.mxu0 %v1293
      %v1372 = vpop.f32.mrf.mxu0
      %v1373 = vadd.f32 0.0, %v1372
      %v1374 = vpop.f32.mrf.mxu0
      %v1375 = vadd.f32 0.0, %v1374
      %1376 = vmatmul.bf16.gmra.mxu0 %v1296
      %v1377 = vpop.f32.mrf.mxu0
      %v1378 = vadd.f32 0.0, %v1377
      %v1379 = vpop.f32.mrf.mxu0
      %v1380 = vadd.f32 0.0, %v1379
      %1381 = vmatmul.bf16.gmra.mxu0 %v1299
      %v1382 = vpop.f32.mrf.mxu0
      %v1383 = vadd.f32 0.0, %v1382
      %v1384 = vpop.f32.mrf.mxu0
      %v1385 = vadd.f32 0.0, %v1384
      %1386 = vmatmul.bf16.gmra.mxu0 %v1302
      %v1387 = vpop.f32.mrf.mxu0
      %v1388 = vadd.f32 0.0, %v1387
      %v1389 = vpop.f32.mrf.mxu0
      %v1390 = vadd.f32 0.0, %v1389
      %1391 = vmatmul.bf16.gmra.mxu0 %v1305
      %v1392 = vpop.f32.mrf.mxu0
      %v1393 = vadd.f32 0.0, %v1392
      %v1394 = vpop.f32.mrf.mxu0
      %v1395 = vadd.f32 0.0, %v1394
      %1396 = vmatmul.bf16.gmra.mxu0 %v1308
      %v1397 = vpop.f32.mrf.mxu0
      %v1398 = vadd.f32 0.0, %v1397
      %v1399 = vpop.f32.mrf.mxu0
      %v1400 = vadd.f32 0.0, %v1399
      %1401 = vdwg.mxu0
      %v1402 = vadd.f32 %v1002, %v1323
      %v1403 = vadd.f32 %v1004, %v1325
      %v1404 = vadd.f32 %v1007, %v1328
      %v1405 = vadd.f32 %v1009, %v1330
      %v1406 = vadd.f32 %v1012, %v1333
      %v1407 = vadd.f32 %v1014, %v1335
      %v1408 = vadd.f32 %v1017, %v1338
      %v1409 = vadd.f32 %v1019, %v1340
      %v1410 = vadd.f32 %v1022, %v1343
      %v1411 = vadd.f32 %v1024, %v1345
      %v1412 = vadd.f32 %v1027, %v1348
      %v1413 = vadd.f32 %v1029, %v1350
      %v1414 = vadd.f32 %v1032, %v1353
      %v1415 = vadd.f32 %v1034, %v1355
      %v1416 = vadd.f32 %v1037, %v1358
      %v1417 = vadd.f32 %v1039, %v1360
      %v1418 = vadd.f32 %v1042, %v1363
      %v1419 = vadd.f32 %v1044, %v1365
      %v1420 = vadd.f32 %v1047, %v1368
      %v1421 = vadd.f32 %v1049, %v1370
      %v1422 = vadd.f32 %v1052, %v1373
      %v1423 = vadd.f32 %v1054, %v1375
      %v1424 = vadd.f32 %v1057, %v1378
      %v1425 = vadd.f32 %v1059, %v1380
      %v1426 = vadd.f32 %v1062, %v1383
      %v1427 = vadd.f32 %v1064, %v1385
      %v1428 = vadd.f32 %v1067, %v1388
      %v1429 = vadd.f32 %v1069, %v1390
      %v1430 = vadd.f32 %v1072, %v1393
      %v1431 = vadd.f32 %v1074, %v1395
      %v1432 = vadd.f32 %v1077, %v1398
      %v1433 = vadd.f32 %v1079, %v1400
      %s1434 = scalar_lea.vmem %s1, 6
      %v1435 = vld [vmem:[%s1434] sm:$0x3]
      %v1438 = vunpack.c.l.b16 %v275
      %v1439 = vunpack.c.l.b16 %v276
      %v1440 = vpack.c.b16 %v1439, %v1438
      %v1442 = vsel %vm719, %v1440, 0
      %v1445 = vsel %vm768, %v1435, 0
      %1447 = vmatpush.bf16.msra.mxu0 0
      %1448 = vmatpush.bf16.msra.mxu0 0
      %1449 = vmatpush.bf16.msra.mxu0 0
      %1450 = vmatpush.bf16.msra.mxu0 0
      %1451 = vmatpush.bf16.msra.mxu0 0
      %1452 = vmatpush.bf16.msra.mxu0 0
      %1453 = vmatpush.bf16.msra.mxu0 0
      %1454 = vmatpush.bf16.msra.mxu0 %v1445
      %1455 = vmatmul.bf16.gmra.mxu0 %v945
      %v1456 = vpop.f32.mrf.mxu0
      %v1457 = vadd.f32 0.0, %v1456
      %v1458 = vpop.f32.mrf.mxu0
      %v1459 = vadd.f32 0.0, %v1458
      %1460 = vmatmul.bf16.gmra.mxu0 %v948
      %v1461 = vpop.f32.mrf.mxu0
      %v1462 = vadd.f32 0.0, %v1461
      %v1463 = vpop.f32.mrf.mxu0
      %v1464 = vadd.f32 0.0, %v1463
      %1465 = vmatmul.bf16.gmra.mxu0 %v951
      %v1466 = vpop.f32.mrf.mxu0
      %v1467 = vadd.f32 0.0, %v1466
      %v1468 = vpop.f32.mrf.mxu0
      %v1469 = vadd.f32 0.0, %v1468
      %1470 = vmatmul.bf16.gmra.mxu0 %v954
      %v1471 = vpop.f32.mrf.mxu0
      %v1472 = vadd.f32 0.0, %v1471
      %v1473 = vpop.f32.mrf.mxu0
      %v1474 = vadd.f32 0.0, %v1473
      %1475 = vmatmul.bf16.gmra.mxu0 %v957
      %v1476 = vpop.f32.mrf.mxu0
      %v1477 = vadd.f32 0.0, %v1476
      %v1478 = vpop.f32.mrf.mxu0
      %v1479 = vadd.f32 0.0, %v1478
      %1480 = vmatmul.bf16.gmra.mxu0 %v960
      %v1481 = vpop.f32.mrf.mxu0
      %v1482 = vadd.f32 0.0, %v1481
      %v1483 = vpop.f32.mrf.mxu0
      %v1484 = vadd.f32 0.0, %v1483
      %1485 = vmatmul.bf16.gmra.mxu0 %v963
      %v1486 = vpop.f32.mrf.mxu0
      %v1487 = vadd.f32 0.0, %v1486
      %v1488 = vpop.f32.mrf.mxu0
      %v1489 = vadd.f32 0.0, %v1488
      %1490 = vmatmul.bf16.gmra.mxu0 %v966
      %v1491 = vpop.f32.mrf.mxu0
      %v1492 = vadd.f32 0.0, %v1491
      %v1493 = vpop.f32.mrf.mxu0
      %v1494 = vadd.f32 0.0, %v1493
      %1495 = vmatmul.bf16.gmra.mxu0 %v969
      %v1496 = vpop.f32.mrf.mxu0
      %v1497 = vadd.f32 0.0, %v1496
      %v1498 = vpop.f32.mrf.mxu0
      %v1499 = vadd.f32 0.0, %v1498
      %1500 = vmatmul.bf16.gmra.mxu0 %v972
      %v1501 = vpop.f32.mrf.mxu0
      %v1502 = vadd.f32 0.0, %v1501
      %v1503 = vpop.f32.mrf.mxu0
      %v1504 = vadd.f32 0.0, %v1503
      %1505 = vmatmul.bf16.gmra.mxu0 %v975
      %v1506 = vpop.f32.mrf.mxu0
      %v1507 = vadd.f32 0.0, %v1506
      %v1508 = vpop.f32.mrf.mxu0
      %v1509 = vadd.f32 0.0, %v1508
      %1510 = vmatmul.bf16.gmra.mxu0 %v978
      %v1511 = vpop.f32.mrf.mxu0
      %v1512 = vadd.f32 0.0, %v1511
      %v1513 = vpop.f32.mrf.mxu0
      %v1514 = vadd.f32 0.0, %v1513
      %1515 = vmatmul.bf16.gmra.mxu0 %v981
      %v1516 = vpop.f32.mrf.mxu0
      %v1517 = vadd.f32 0.0, %v1516
      %v1518 = vpop.f32.mrf.mxu0
      %v1519 = vadd.f32 0.0, %v1518
      %1520 = vmatmul.bf16.gmra.mxu0 %v984
      %v1521 = vpop.f32.mrf.mxu0
      %v1522 = vadd.f32 0.0, %v1521
      %v1523 = vpop.f32.mrf.mxu0
      %v1524 = vadd.f32 0.0, %v1523
      %1525 = vmatmul.bf16.gmra.mxu0 %v987
      %v1526 = vpop.f32.mrf.mxu0
      %v1527 = vadd.f32 0.0, %v1526
      %v1528 = vpop.f32.mrf.mxu0
      %v1529 = vadd.f32 0.0, %v1528
      %1530 = vmatmul.bf16.gmra.mxu0 %v1442
      %v1531 = vpop.f32.mrf.mxu0
      %v1532 = vadd.f32 0.0, %v1531
      %v1533 = vpop.f32.mrf.mxu0
      %v1534 = vadd.f32 0.0, %v1533
      %1535 = vdwg.mxu0
      %v1536 = vadd.f32 %v1402, %v1457
      %v1537 = vadd.f32 %v1403, %v1459
      %v1538 = vadd.f32 %v1404, %v1462
      %v1539 = vadd.f32 %v1405, %v1464
      %v1540 = vadd.f32 %v1406, %v1467
      %v1541 = vadd.f32 %v1407, %v1469
      %v1542 = vadd.f32 %v1408, %v1472
      %v1543 = vadd.f32 %v1409, %v1474
      %v1544 = vadd.f32 %v1410, %v1477
      %v1545 = vadd.f32 %v1411, %v1479
      %v1546 = vadd.f32 %v1412, %v1482
      %v1547 = vadd.f32 %v1413, %v1484
      %v1548 = vadd.f32 %v1414, %v1487
      %v1549 = vadd.f32 %v1415, %v1489
      %v1550 = vadd.f32 %v1416, %v1492
      %v1551 = vadd.f32 %v1417, %v1494
      %v1552 = vadd.f32 %v1418, %v1497
      %v1553 = vadd.f32 %v1419, %v1499
      %v1554 = vadd.f32 %v1420, %v1502
      %v1555 = vadd.f32 %v1421, %v1504
      %v1556 = vadd.f32 %v1422, %v1507
      %v1557 = vadd.f32 %v1423, %v1509
      %v1558 = vadd.f32 %v1424, %v1512
      %v1559 = vadd.f32 %v1425, %v1514
      %v1560 = vadd.f32 %v1426, %v1517
      %v1561 = vadd.f32 %v1427, %v1519
      %v1562 = vadd.f32 %v1428, %v1522
      %v1563 = vadd.f32 %v1429, %v1524
      %v1564 = vadd.f32 %v1430, %v1527
      %v1565 = vadd.f32 %v1431, %v1529
      %v1566 = vadd.f32 %v1432, %v1532
      %v1567 = vadd.f32 %v1433, %v1534
      %v1569 = vshrl.u32 %v275, 16
      %v1571 = vrot.slane %v1569, 4
      %v1572 = vshll.u32 %v275, 16
      %v1574 = vrot.slane %v1572, 5
      %v1575 = vor.u32 %v1571, %v1574
      %v1576 = vrot.slane %v1575, 4
      %v1578 = vshll.u32 %v276, 16
      %v1580 = vrot.slane %v1578, 5
      %v1581 = vsel %vm284, %v1576, %v1580
      %v1582 = vshrl.u32 %v276, 16
      %v1584 = vrot.slane %v1582, 4
      %v1585 = vor.u32 %v1584, %v1580
      %v1586 = vrot.slane %v1585, 4
      %v1588 = vshll.u32 %v277, 16
      %v1590 = vrot.slane %v1588, 5
      %v1591 = vsel %vm284, %v1586, %v1590
      %s1592 = scalar_lea.vmem %s1, 8
      %v1593 = vld [vmem:[%s1592] sm:$0x3]
      %v1594 = vunpack.c.l.b16 %v1581
      %v1595 = vunpack.c.l.b16 %v1591
      %v1596 = vpack.c.b16 %v1595, %v1594
      %v1598 = vsel %vm719, %v1596, 0
      %v1601 = vsel %vm768, %v1593, 0
      %1603 = vmatpush.bf16.msra.mxu0 0
      %1604 = vmatpush.bf16.msra.mxu0 0
      %1605 = vmatpush.bf16.msra.mxu0 0
      %1606 = vmatpush.bf16.msra.mxu0 0
      %1607 = vmatpush.bf16.msra.mxu0 0
      %1608 = vmatpush.bf16.msra.mxu0 0
      %1609 = vmatpush.bf16.msra.mxu0 0
      %1610 = vmatpush.bf16.msra.mxu0 %v1601
      %1611 = vmatmul.bf16.gmra.mxu0 %v724
      %v1612 = vpop.f32.mrf.mxu0
      %v1613 = vadd.f32 0.0, %v1612
      %v1614 = vpop.f32.mrf.mxu0
      %v1615 = vadd.f32 0.0, %v1614
      %1616 = vmatmul.bf16.gmra.mxu0 %v727
      %v1617 = vpop.f32.mrf.mxu0
      %v1618 = vadd.f32 0.0, %v1617
      %v1619 = vpop.f32.mrf.mxu0
      %v1620 = vadd.f32 0.0, %v1619
      %1621 = vmatmul.bf16.gmra.mxu0 %v730
      %v1622 = vpop.f32.mrf.mxu0
      %v1623 = vadd.f32 0.0, %v1622
      %v1624 = vpop.f32.mrf.mxu0
      %v1625 = vadd.f32 0.0, %v1624
      %1626 = vmatmul.bf16.gmra.mxu0 %v733
      %v1627 = vpop.f32.mrf.mxu0
      %v1628 = vadd.f32 0.0, %v1627
      %v1629 = vpop.f32.mrf.mxu0
      %v1630 = vadd.f32 0.0, %v1629
      %1631 = vmatmul.bf16.gmra.mxu0 %v736
      %v1632 = vpop.f32.mrf.mxu0
      %v1633 = vadd.f32 0.0, %v1632
      %v1634 = vpop.f32.mrf.mxu0
      %v1635 = vadd.f32 0.0, %v1634
      %1636 = vmatmul.bf16.gmra.mxu0 %v739
      %v1637 = vpop.f32.mrf.mxu0
      %v1638 = vadd.f32 0.0, %v1637
      %v1639 = vpop.f32.mrf.mxu0
      %v1640 = vadd.f32 0.0, %v1639
      %1641 = vmatmul.bf16.gmra.mxu0 %v742
      %v1642 = vpop.f32.mrf.mxu0
      %v1643 = vadd.f32 0.0, %v1642
      %v1644 = vpop.f32.mrf.mxu0
      %v1645 = vadd.f32 0.0, %v1644
      %1646 = vmatmul.bf16.gmra.mxu0 %v745
      %v1647 = vpop.f32.mrf.mxu0
      %v1648 = vadd.f32 0.0, %v1647
      %v1649 = vpop.f32.mrf.mxu0
      %v1650 = vadd.f32 0.0, %v1649
      %1651 = vmatmul.bf16.gmra.mxu0 %v748
      %v1652 = vpop.f32.mrf.mxu0
      %v1653 = vadd.f32 0.0, %v1652
      %v1654 = vpop.f32.mrf.mxu0
      %v1655 = vadd.f32 0.0, %v1654
      %1656 = vmatmul.bf16.gmra.mxu0 %v751
      %v1657 = vpop.f32.mrf.mxu0
      %v1658 = vadd.f32 0.0, %v1657
      %v1659 = vpop.f32.mrf.mxu0
      %v1660 = vadd.f32 0.0, %v1659
      %1661 = vmatmul.bf16.gmra.mxu0 %v754
      %v1662 = vpop.f32.mrf.mxu0
      %v1663 = vadd.f32 0.0, %v1662
      %v1664 = vpop.f32.mrf.mxu0
      %v1665 = vadd.f32 0.0, %v1664
      %1666 = vmatmul.bf16.gmra.mxu0 %v757
      %v1667 = vpop.f32.mrf.mxu0
      %v1668 = vadd.f32 0.0, %v1667
      %v1669 = vpop.f32.mrf.mxu0
      %v1670 = vadd.f32 0.0, %v1669
      %1671 = vmatmul.bf16.gmra.mxu0 %v760
      %v1672 = vpop.f32.mrf.mxu0
      %v1673 = vadd.f32 0.0, %v1672
      %v1674 = vpop.f32.mrf.mxu0
      %v1675 = vadd.f32 0.0, %v1674
      %1676 = vmatmul.bf16.gmra.mxu0 %v763
      %v1677 = vpop.f32.mrf.mxu0
      %v1678 = vadd.f32 0.0, %v1677
      %v1679 = vpop.f32.mrf.mxu0
      %v1680 = vadd.f32 0.0, %v1679
      %1681 = vmatmul.bf16.gmra.mxu0 %v766
      %v1682 = vpop.f32.mrf.mxu0
      %v1683 = vadd.f32 0.0, %v1682
      %v1684 = vpop.f32.mrf.mxu0
      %v1685 = vadd.f32 0.0, %v1684
      %1686 = vmatmul.bf16.gmra.mxu0 %v1598
      %v1687 = vpop.f32.mrf.mxu0
      %v1688 = vadd.f32 0.0, %v1687
      %v1689 = vpop.f32.mrf.mxu0
      %v1690 = vadd.f32 0.0, %v1689
      %1691 = vdwg.mxu0
      %v1692 = vadd.f32 %v1536, %v1613
      %v1693 = vadd.f32 %v1537, %v1615
      %v1694 = vadd.f32 %v1538, %v1618
      %v1695 = vadd.f32 %v1539, %v1620
      %v1696 = vadd.f32 %v1540, %v1623
      %v1697 = vadd.f32 %v1541, %v1625
      %v1698 = vadd.f32 %v1542, %v1628
      %v1699 = vadd.f32 %v1543, %v1630
      %v1700 = vadd.f32 %v1544, %v1633
      %v1701 = vadd.f32 %v1545, %v1635
      %v1702 = vadd.f32 %v1546, %v1638
      %v1703 = vadd.f32 %v1547, %v1640
      %v1704 = vadd.f32 %v1548, %v1643
      %v1705 = vadd.f32 %v1549, %v1645
      %v1706 = vadd.f32 %v1550, %v1648
      %v1707 = vadd.f32 %v1551, %v1650
      %v1708 = vadd.f32 %v1552, %v1653
      %v1709 = vadd.f32 %v1553, %v1655
      %v1710 = vadd.f32 %v1554, %v1658
      %v1711 = vadd.f32 %v1555, %v1660
      %v1712 = vadd.f32 %v1556, %v1663
      %v1713 = vadd.f32 %v1557, %v1665
      %v1714 = vadd.f32 %v1558, %v1668
      %v1715 = vadd.f32 %v1559, %v1670
      %v1716 = vadd.f32 %v1560, %v1673
      %v1717 = vadd.f32 %v1561, %v1675
      %v1718 = vadd.f32 %v1562, %v1678
      %v1719 = vadd.f32 %v1563, %v1680
      %v1720 = vadd.f32 %v1564, %v1683
      %v1721 = vadd.f32 %v1565, %v1685
      %v1722 = vadd.f32 %v1566, %v1688
      %v1723 = vadd.f32 %v1567, %v1690
      %v1725 = vrot.slane %v275, 5
      %v1726 = vrot.slane %v1725, 4
      %v1727 = vrot.slane %v276, 5
      %v1728 = vsel %vm1099, %v1726, %v1727
      %v1729 = vrot.slane %v1727, 4
      %v1730 = vrot.slane %v277, 5
      %v1731 = vsel %vm1099, %v1729, %v1730
      %s1732 = scalar_lea.vmem %s1, 10
      %v1733 = vld [vmem:[%s1732] sm:$0x3]
      %v1734 = vunpack.c.l.b16 %v1728
      %v1735 = vunpack.c.l.b16 %v1731
      %v1736 = vpack.c.b16 %v1735, %v1734
      %v1738 = vsel %vm719, %v1736, 0
      %v1741 = vsel %vm768, %v1733, 0
      %1743 = vmatpush.bf16.msra.mxu0 0
      %1744 = vmatpush.bf16.msra.mxu0 0
      %1745 = vmatpush.bf16.msra.mxu0 0
      %1746 = vmatpush.bf16.msra.mxu0 0
      %1747 = vmatpush.bf16.msra.mxu0 0
      %1748 = vmatpush.bf16.msra.mxu0 0
      %1749 = vmatpush.bf16.msra.mxu0 0
      %1750 = vmatpush.bf16.msra.mxu0 %v1741
      %1751 = vmatmul.bf16.gmra.mxu0 %v1266
      %v1752 = vpop.f32.mrf.mxu0
      %v1753 = vadd.f32 0.0, %v1752
      %v1754 = vpop.f32.mrf.mxu0
      %v1755 = vadd.f32 0.0, %v1754
      %1756 = vmatmul.bf16.gmra.mxu0 %v1269
      %v1757 = vpop.f32.mrf.mxu0
      %v1758 = vadd.f32 0.0, %v1757
      %v1759 = vpop.f32.mrf.mxu0
      %v1760 = vadd.f32 0.0, %v1759
      %1761 = vmatmul.bf16.gmra.mxu0 %v1272
      %v1762 = vpop.f32.mrf.mxu0
      %v1763 = vadd.f32 0.0, %v1762
      %v1764 = vpop.f32.mrf.mxu0
      %v1765 = vadd.f32 0.0, %v1764
      %1766 = vmatmul.bf16.gmra.mxu0 %v1275
      %v1767 = vpop.f32.mrf.mxu0
      %v1768 = vadd.f32 0.0, %v1767
      %v1769 = vpop.f32.mrf.mxu0
      %v1770 = vadd.f32 0.0, %v1769
      %1771 = vmatmul.bf16.gmra.mxu0 %v1278
      %v1772 = vpop.f32.mrf.mxu0
      %v1773 = vadd.f32 0.0, %v1772
      %v1774 = vpop.f32.mrf.mxu0
      %v1775 = vadd.f32 0.0, %v1774
      %1776 = vmatmul.bf16.gmra.mxu0 %v1281
      %v1777 = vpop.f32.mrf.mxu0
      %v1778 = vadd.f32 0.0, %v1777
      %v1779 = vpop.f32.mrf.mxu0
      %v1780 = vadd.f32 0.0, %v1779
      %1781 = vmatmul.bf16.gmra.mxu0 %v1284
      %v1782 = vpop.f32.mrf.mxu0
      %v1783 = vadd.f32 0.0, %v1782
      %v1784 = vpop.f32.mrf.mxu0
      %v1785 = vadd.f32 0.0, %v1784
      %1786 = vmatmul.bf16.gmra.mxu0 %v1287
      %v1787 = vpop.f32.mrf.mxu0
      %v1788 = vadd.f32 0.0, %v1787
      %v1789 = vpop.f32.mrf.mxu0
      %v1790 = vadd.f32 0.0, %v1789
      %1791 = vmatmul.bf16.gmra.mxu0 %v1290
      %v1792 = vpop.f32.mrf.mxu0
      %v1793 = vadd.f32 0.0, %v1792
      %v1794 = vpop.f32.mrf.mxu0
      %v1795 = vadd.f32 0.0, %v1794
      %1796 = vmatmul.bf16.gmra.mxu0 %v1293
      %v1797 = vpop.f32.mrf.mxu0
      %v1798 = vadd.f32 0.0, %v1797
      %v1799 = vpop.f32.mrf.mxu0
      %v1800 = vadd.f32 0.0, %v1799
      %1801 = vmatmul.bf16.gmra.mxu0 %v1296
      %v1802 = vpop.f32.mrf.mxu0
      %v1803 = vadd.f32 0.0, %v1802
      %v1804 = vpop.f32.mrf.mxu0
      %v1805 = vadd.f32 0.0, %v1804
      %1806 = vmatmul.bf16.gmra.mxu0 %v1299
      %v1807 = vpop.f32.mrf.mxu0
      %v1808 = vadd.f32 0.0, %v1807
      %v1809 = vpop.f32.mrf.mxu0
      %v1810 = vadd.f32 0.0, %v1809
      %1811 = vmatmul.bf16.gmra.mxu0 %v1302
      %v1812 = vpop.f32.mrf.mxu0
      %v1813 = vadd.f32 0.0, %v1812
      %v1814 = vpop.f32.mrf.mxu0
      %v1815 = vadd.f32 0.0, %v1814
      %1816 = vmatmul.bf16.gmra.mxu0 %v1305
      %v1817 = vpop.f32.mrf.mxu0
      %v1818 = vadd.f32 0.0, %v1817
      %v1819 = vpop.f32.mrf.mxu0
      %v1820 = vadd.f32 0.0, %v1819
      %1821 = vmatmul.bf16.gmra.mxu0 %v1308
      %v1822 = vpop.f32.mrf.mxu0
      %v1823 = vadd.f32 0.0, %v1822
      %v1824 = vpop.f32.mrf.mxu0
      %v1825 = vadd.f32 0.0, %v1824
      %1826 = vmatmul.bf16.gmra.mxu0 %v1738
      %v1827 = vpop.f32.mrf.mxu0
      %v1828 = vadd.f32 0.0, %v1827
      %v1829 = vpop.f32.mrf.mxu0
      %v1830 = vadd.f32 0.0, %v1829
      %1831 = vdwg.mxu0
      %v1832 = vadd.f32 %v1692, %v1753
      %v1833 = vadd.f32 %v1693, %v1755
      %v1834 = vadd.f32 %v1694, %v1758
      %v1835 = vadd.f32 %v1695, %v1760
      %v1836 = vadd.f32 %v1696, %v1763
      %v1837 = vadd.f32 %v1697, %v1765
      %v1838 = vadd.f32 %v1698, %v1768
      %v1839 = vadd.f32 %v1699, %v1770
      %v1840 = vadd.f32 %v1700, %v1773
      %v1841 = vadd.f32 %v1701, %v1775
      %v1842 = vadd.f32 %v1702, %v1778
      %v1843 = vadd.f32 %v1703, %v1780
      %v1844 = vadd.f32 %v1704, %v1783
      %v1845 = vadd.f32 %v1705, %v1785
      %v1846 = vadd.f32 %v1706, %v1788
      %v1847 = vadd.f32 %v1707, %v1790
      %v1848 = vadd.f32 %v1708, %v1793
      %v1849 = vadd.f32 %v1709, %v1795
      %v1850 = vadd.f32 %v1710, %v1798
      %v1851 = vadd.f32 %v1711, %v1800
      %v1852 = vadd.f32 %v1712, %v1803
      %v1853 = vadd.f32 %v1713, %v1805
      %v1854 = vadd.f32 %v1714, %v1808
      %v1855 = vadd.f32 %v1715, %v1810
      %v1856 = vadd.f32 %v1716, %v1813
      %v1857 = vadd.f32 %v1717, %v1815
      %v1858 = vadd.f32 %v1718, %v1818
      %v1859 = vadd.f32 %v1719, %v1820
      %v1860 = vadd.f32 %v1720, %v1823
      %v1861 = vadd.f32 %v1721, %v1825
      %v1862 = vadd.f32 %v1722, %v1828
      %v1863 = vadd.f32 %v1723, %v1830
      %s1864 = scalar_lea.vmem %s1, 12
      %v1865 = vld [vmem:[%s1864] sm:$0x3]
      %v1868 = vunpack.c.l.b16 %v278
      %v1869 = vunpack.c.l.b16 %v279
      %v1870 = vpack.c.b16 %v1869, %v1868
      %v1872 = vsel %vm719, %v1870, 0
      %v1875 = vsel %vm768, %v1865, 0
      %1877 = vmatpush.bf16.msra.mxu0 0
      %1878 = vmatpush.bf16.msra.mxu0 0
      %1879 = vmatpush.bf16.msra.mxu0 0
      %1880 = vmatpush.bf16.msra.mxu0 0
      %1881 = vmatpush.bf16.msra.mxu0 0
      %1882 = vmatpush.bf16.msra.mxu0 0
      %1883 = vmatpush.bf16.msra.mxu0 0
      %1884 = vmatpush.bf16.msra.mxu0 %v1875
      %1885 = vmatmul.bf16.gmra.mxu0 %v948
      %v1886 = vpop.f32.mrf.mxu0
      %v1887 = vadd.f32 0.0, %v1886
      %v1888 = vpop.f32.mrf.mxu0
      %v1889 = vadd.f32 0.0, %v1888
      %1890 = vmatmul.bf16.gmra.mxu0 %v951
      %v1891 = vpop.f32.mrf.mxu0
      %v1892 = vadd.f32 0.0, %v1891
      %v1893 = vpop.f32.mrf.mxu0
      %v1894 = vadd.f32 0.0, %v1893
      %1895 = vmatmul.bf16.gmra.mxu0 %v954
      %v1896 = vpop.f32.mrf.mxu0
      %v1897 = vadd.f32 0.0, %v1896
      %v1898 = vpop.f32.mrf.mxu0
      %v1899 = vadd.f32 0.0, %v1898
      %1900 = vmatmul.bf16.gmra.mxu0 %v957
      %v1901 = vpop.f32.mrf.mxu0
      %v1902 = vadd.f32 0.0, %v1901
      %v1903 = vpop.f32.mrf.mxu0
      %v1904 = vadd.f32 0.0, %v1903
      %1905 = vmatmul.bf16.gmra.mxu0 %v960
      %v1906 = vpop.f32.mrf.mxu0
      %v1907 = vadd.f32 0.0, %v1906
      %v1908 = vpop.f32.mrf.mxu0
      %v1909 = vadd.f32 0.0, %v1908
      %1910 = vmatmul.bf16.gmra.mxu0 %v963
      %v1911 = vpop.f32.mrf.mxu0
      %v1912 = vadd.f32 0.0, %v1911
      %v1913 = vpop.f32.mrf.mxu0
      %v1914 = vadd.f32 0.0, %v1913
      %1915 = vmatmul.bf16.gmra.mxu0 %v966
      %v1916 = vpop.f32.mrf.mxu0
      %v1917 = vadd.f32 0.0, %v1916
      %v1918 = vpop.f32.mrf.mxu0
      %v1919 = vadd.f32 0.0, %v1918
      %1920 = vmatmul.bf16.gmra.mxu0 %v969
      %v1921 = vpop.f32.mrf.mxu0
      %v1922 = vadd.f32 0.0, %v1921
      %v1923 = vpop.f32.mrf.mxu0
      %v1924 = vadd.f32 0.0, %v1923
      %1925 = vmatmul.bf16.gmra.mxu0 %v972
      %v1926 = vpop.f32.mrf.mxu0
      %v1927 = vadd.f32 0.0, %v1926
      %v1928 = vpop.f32.mrf.mxu0
      %v1929 = vadd.f32 0.0, %v1928
      %1930 = vmatmul.bf16.gmra.mxu0 %v975
      %v1931 = vpop.f32.mrf.mxu0
      %v1932 = vadd.f32 0.0, %v1931
      %v1933 = vpop.f32.mrf.mxu0
      %v1934 = vadd.f32 0.0, %v1933
      %1935 = vmatmul.bf16.gmra.mxu0 %v978
      %v1936 = vpop.f32.mrf.mxu0
      %v1937 = vadd.f32 0.0, %v1936
      %v1938 = vpop.f32.mrf.mxu0
      %v1939 = vadd.f32 0.0, %v1938
      %1940 = vmatmul.bf16.gmra.mxu0 %v981
      %v1941 = vpop.f32.mrf.mxu0
      %v1942 = vadd.f32 0.0, %v1941
      %v1943 = vpop.f32.mrf.mxu0
      %v1944 = vadd.f32 0.0, %v1943
      %1945 = vmatmul.bf16.gmra.mxu0 %v984
      %v1946 = vpop.f32.mrf.mxu0
      %v1947 = vadd.f32 0.0, %v1946
      %v1948 = vpop.f32.mrf.mxu0
      %v1949 = vadd.f32 0.0, %v1948
      %1950 = vmatmul.bf16.gmra.mxu0 %v987
      %v1951 = vpop.f32.mrf.mxu0
      %v1952 = vadd.f32 0.0, %v1951
      %v1953 = vpop.f32.mrf.mxu0
      %v1954 = vadd.f32 0.0, %v1953
      %1955 = vmatmul.bf16.gmra.mxu0 %v1442
      %v1956 = vpop.f32.mrf.mxu0
      %v1957 = vadd.f32 0.0, %v1956
      %v1958 = vpop.f32.mrf.mxu0
      %v1959 = vadd.f32 0.0, %v1958
      %1960 = vmatmul.bf16.gmra.mxu0 %v1872
      %v1961 = vpop.f32.mrf.mxu0
      %v1962 = vadd.f32 0.0, %v1961
      %v1963 = vpop.f32.mrf.mxu0
      %v1964 = vadd.f32 0.0, %v1963
      %1965 = vdwg.mxu0
      %v1966 = vadd.f32 %v1832, %v1887
      %v1967 = vadd.f32 %v1833, %v1889
      %v1968 = vadd.f32 %v1834, %v1892
      %v1969 = vadd.f32 %v1835, %v1894
      %v1970 = vadd.f32 %v1836, %v1897
      %v1971 = vadd.f32 %v1837, %v1899
      %v1972 = vadd.f32 %v1838, %v1902
      %v1973 = vadd.f32 %v1839, %v1904
      %v1974 = vadd.f32 %v1840, %v1907
      %v1975 = vadd.f32 %v1841, %v1909
      %v1976 = vadd.f32 %v1842, %v1912
      %v1977 = vadd.f32 %v1843, %v1914
      %v1978 = vadd.f32 %v1844, %v1917
      %v1979 = vadd.f32 %v1845, %v1919
      %v1980 = vadd.f32 %v1846, %v1922
      %v1981 = vadd.f32 %v1847, %v1924
      %v1982 = vadd.f32 %v1848, %v1927
      %v1983 = vadd.f32 %v1849, %v1929
      %v1984 = vadd.f32 %v1850, %v1932
      %v1985 = vadd.f32 %v1851, %v1934
      %v1986 = vadd.f32 %v1852, %v1937
      %v1987 = vadd.f32 %v1853, %v1939
      %v1988 = vadd.f32 %v1854, %v1942
      %v1989 = vadd.f32 %v1855, %v1944
      %v1990 = vadd.f32 %v1856, %v1947
      %v1991 = vadd.f32 %v1857, %v1949
      %v1992 = vadd.f32 %v1858, %v1952
      %v1993 = vadd.f32 %v1859, %v1954
      %v1994 = vadd.f32 %v1860, %v1957
      %v1995 = vadd.f32 %v1861, %v1959
      %v1996 = vadd.f32 %v1862, %v1962
      %v1997 = vadd.f32 %v1863, %v1964
      %v1999 = vshrl.u32 %v278, 16
      %v2001 = vrot.slane %v1999, 4
      %v2002 = vshll.u32 %v278, 16
      %v2004 = vrot.slane %v2002, 5
      %v2005 = vor.u32 %v2001, %v2004
      %v2006 = vrot.slane %v2005, 4
      %v2008 = vshll.u32 %v279, 16
      %v2010 = vrot.slane %v2008, 5
      %v2011 = vsel %vm284, %v2006, %v2010
      %v2012 = vshrl.u32 %v279, 16
      %v2014 = vrot.slane %v2012, 4
      %v2015 = vor.u32 %v2014, %v2010
      %v2016 = vrot.slane %v2015, 4
      %v2018 = vshll.u32 %v280, 16
      %v2020 = vrot.slane %v2018, 5
      %v2021 = vsel %vm284, %v2016, %v2020
      %s2022 = scalar_lea.vmem %s1, 14
      %v2023 = vld [vmem:[%s2022] sm:$0x3]
      %v2024 = vunpack.c.l.b16 %v2011
      %v2025 = vunpack.c.l.b16 %v2021
      %v2026 = vpack.c.b16 %v2025, %v2024
      %v2028 = vsel %vm719, %v2026, 0
      %v2031 = vsel %vm768, %v2023, 0
      %2033 = vmatpush.bf16.msra.mxu0 0
      %2034 = vmatpush.bf16.msra.mxu0 0
      %2035 = vmatpush.bf16.msra.mxu0 0
      %2036 = vmatpush.bf16.msra.mxu0 0
      %2037 = vmatpush.bf16.msra.mxu0 0
      %2038 = vmatpush.bf16.msra.mxu0 0
      %2039 = vmatpush.bf16.msra.mxu0 0
      %2040 = vmatpush.bf16.msra.mxu0 %v2031
      %2041 = vmatmul.bf16.gmra.mxu0 %v727
      %v2042 = vpop.f32.mrf.mxu0
      %v2043 = vadd.f32 0.0, %v2042
      %v2044 = vpop.f32.mrf.mxu0
      %v2045 = vadd.f32 0.0, %v2044
      %2046 = vmatmul.bf16.gmra.mxu0 %v730
      %v2047 = vpop.f32.mrf.mxu0
      %v2048 = vadd.f32 0.0, %v2047
      %v2049 = vpop.f32.mrf.mxu0
      %v2050 = vadd.f32 0.0, %v2049
      %2051 = vmatmul.bf16.gmra.mxu0 %v733
      %v2052 = vpop.f32.mrf.mxu0
      %v2053 = vadd.f32 0.0, %v2052
      %v2054 = vpop.f32.mrf.mxu0
      %v2055 = vadd.f32 0.0, %v2054
      %2056 = vmatmul.bf16.gmra.mxu0 %v736
      %v2057 = vpop.f32.mrf.mxu0
      %v2058 = vadd.f32 0.0, %v2057
      %v2059 = vpop.f32.mrf.mxu0
      %v2060 = vadd.f32 0.0, %v2059
      %2061 = vmatmul.bf16.gmra.mxu0 %v739
      %v2062 = vpop.f32.mrf.mxu0
      %v2063 = vadd.f32 0.0, %v2062
      %v2064 = vpop.f32.mrf.mxu0
      %v2065 = vadd.f32 0.0, %v2064
      %2066 = vmatmul.bf16.gmra.mxu0 %v742
      %v2067 = vpop.f32.mrf.mxu0
      %v2068 = vadd.f32 0.0, %v2067
      %v2069 = vpop.f32.mrf.mxu0
      %v2070 = vadd.f32 0.0, %v2069
      %2071 = vmatmul.bf16.gmra.mxu0 %v745
      %v2072 = vpop.f32.mrf.mxu0
      %v2073 = vadd.f32 0.0, %v2072
      %v2074 = vpop.f32.mrf.mxu0
      %v2075 = vadd.f32 0.0, %v2074
      %2076 = vmatmul.bf16.gmra.mxu0 %v748
      %v2077 = vpop.f32.mrf.mxu0
      %v2078 = vadd.f32 0.0, %v2077
      %v2079 = vpop.f32.mrf.mxu0
      %v2080 = vadd.f32 0.0, %v2079
      %2081 = vmatmul.bf16.gmra.mxu0 %v751
      %v2082 = vpop.f32.mrf.mxu0
      %v2083 = vadd.f32 0.0, %v2082
      %v2084 = vpop.f32.mrf.mxu0
      %v2085 = vadd.f32 0.0, %v2084
      %2086 = vmatmul.bf16.gmra.mxu0 %v754
      %v2087 = vpop.f32.mrf.mxu0
      %v2088 = vadd.f32 0.0, %v2087
      %v2089 = vpop.f32.mrf.mxu0
      %v2090 = vadd.f32 0.0, %v2089
      %2091 = vmatmul.bf16.gmra.mxu0 %v757
      %v2092 = vpop.f32.mrf.mxu0
      %v2093 = vadd.f32 0.0, %v2092
      %v2094 = vpop.f32.mrf.mxu0
      %v2095 = vadd.f32 0.0, %v2094
      %2096 = vmatmul.bf16.gmra.mxu0 %v760
      %v2097 = vpop.f32.mrf.mxu0
      %v2098 = vadd.f32 0.0, %v2097
      %v2099 = vpop.f32.mrf.mxu0
      %v2100 = vadd.f32 0.0, %v2099
      %2101 = vmatmul.bf16.gmra.mxu0 %v763
      %v2102 = vpop.f32.mrf.mxu0
      %v2103 = vadd.f32 0.0, %v2102
      %v2104 = vpop.f32.mrf.mxu0
      %v2105 = vadd.f32 0.0, %v2104
      %2106 = vmatmul.bf16.gmra.mxu0 %v766
      %v2107 = vpop.f32.mrf.mxu0
      %v2108 = vadd.f32 0.0, %v2107
      %v2109 = vpop.f32.mrf.mxu0
      %v2110 = vadd.f32 0.0, %v2109
      %2111 = vmatmul.bf16.gmra.mxu0 %v1598
      %v2112 = vpop.f32.mrf.mxu0
      %v2113 = vadd.f32 0.0, %v2112
      %v2114 = vpop.f32.mrf.mxu0
      %v2115 = vadd.f32 0.0, %v2114
      %2116 = vmatmul.bf16.gmra.mxu0 %v2028
      %v2117 = vpop.f32.mrf.mxu0
      %v2118 = vadd.f32 0.0, %v2117
      %v2119 = vpop.f32.mrf.mxu0
      %v2120 = vadd.f32 0.0, %v2119
      %2121 = vdwg.mxu0
      %v2122 = vadd.f32 %v1966, %v2043
      %v2123 = vadd.f32 %v1967, %v2045
      %v2124 = vadd.f32 %v1968, %v2048
      %v2125 = vadd.f32 %v1969, %v2050
      %v2126 = vadd.f32 %v1970, %v2053
      %v2127 = vadd.f32 %v1971, %v2055
      %v2128 = vadd.f32 %v1972, %v2058
      %v2129 = vadd.f32 %v1973, %v2060
      %v2130 = vadd.f32 %v1974, %v2063
      %v2131 = vadd.f32 %v1975, %v2065
      %v2132 = vadd.f32 %v1976, %v2068
      %v2133 = vadd.f32 %v1977, %v2070
      %v2134 = vadd.f32 %v1978, %v2073
      %v2135 = vadd.f32 %v1979, %v2075
      %v2136 = vadd.f32 %v1980, %v2078
      %v2137 = vadd.f32 %v1981, %v2080
      %v2138 = vadd.f32 %v1982, %v2083
      %v2139 = vadd.f32 %v1983, %v2085
      %v2140 = vadd.f32 %v1984, %v2088
      %v2141 = vadd.f32 %v1985, %v2090
      %v2142 = vadd.f32 %v1986, %v2093
      %v2143 = vadd.f32 %v1987, %v2095
      %v2144 = vadd.f32 %v1988, %v2098
      %v2145 = vadd.f32 %v1989, %v2100
      %v2146 = vadd.f32 %v1990, %v2103
      %v2147 = vadd.f32 %v1991, %v2105
      %v2148 = vadd.f32 %v1992, %v2108
      %v2149 = vadd.f32 %v1993, %v2110
      %v2150 = vadd.f32 %v1994, %v2113
      %v2151 = vadd.f32 %v1995, %v2115
      %v2152 = vadd.f32 %v1996, %v2118
      %v2153 = vadd.f32 %v1997, %v2120
      %v2155 = vrot.slane %v278, 5
      %v2156 = vrot.slane %v2155, 4
      %v2157 = vrot.slane %v279, 5
      %v2158 = vsel %vm1099, %v2156, %v2157
      %v2159 = vrot.slane %v2157, 4
      %v2160 = vrot.slane %v280, 5
      %v2161 = vsel %vm1099, %v2159, %v2160
      %s2162 = scalar_lea.vmem %s1, 16
      %v2163 = vld [vmem:[%s2162] sm:$0x3]
      %v2164 = vunpack.c.l.b16 %v2158
      %v2165 = vunpack.c.l.b16 %v2161
      %v2166 = vpack.c.b16 %v2165, %v2164
      %v2168 = vsel %vm719, %v2166, 0
      %v2171 = vsel %vm768, %v2163, 0
      %2173 = vmatpush.bf16.msra.mxu0 0
      %2174 = vmatpush.bf16.msra.mxu0 0
      %2175 = vmatpush.bf16.msra.mxu0 0
      %2176 = vmatpush.bf16.msra.mxu0 0
      %2177 = vmatpush.bf16.msra.mxu0 0
      %2178 = vmatpush.bf16.msra.mxu0 0
      %2179 = vmatpush.bf16.msra.mxu0 0
      %2180 = vmatpush.bf16.msra.mxu0 %v2171
      %2181 = vmatmul.bf16.gmra.mxu0 %v1269
      %v2182 = vpop.f32.mrf.mxu0
      %v2183 = vadd.f32 0.0, %v2182
      %v2184 = vpop.f32.mrf.mxu0
      %v2185 = vadd.f32 0.0, %v2184
      %2186 = vmatmul.bf16.gmra.mxu0 %v1272
      %v2187 = vpop.f32.mrf.mxu0
      %v2188 = vadd.f32 0.0, %v2187
      %v2189 = vpop.f32.mrf.mxu0
      %v2190 = vadd.f32 0.0, %v2189
      %2191 = vmatmul.bf16.gmra.mxu0 %v1275
      %v2192 = vpop.f32.mrf.mxu0
      %v2193 = vadd.f32 0.0, %v2192
      %v2194 = vpop.f32.mrf.mxu0
      %v2195 = vadd.f32 0.0, %v2194
      %2196 = vmatmul.bf16.gmra.mxu0 %v1278
      %v2197 = vpop.f32.mrf.mxu0
      %v2198 = vadd.f32 0.0, %v2197
      %v2199 = vpop.f32.mrf.mxu0
      %v2200 = vadd.f32 0.0, %v2199
      %2201 = vmatmul.bf16.gmra.mxu0 %v1281
      %v2202 = vpop.f32.mrf.mxu0
      %v2203 = vadd.f32 0.0, %v2202
      %v2204 = vpop.f32.mrf.mxu0
      %v2205 = vadd.f32 0.0, %v2204
      %2206 = vmatmul.bf16.gmra.mxu0 %v1284
      %v2207 = vpop.f32.mrf.mxu0
      %v2208 = vadd.f32 0.0, %v2207
      %v2209 = vpop.f32.mrf.mxu0
      %v2210 = vadd.f32 0.0, %v2209
      %2211 = vmatmul.bf16.gmra.mxu0 %v1287
      %v2212 = vpop.f32.mrf.mxu0
      %v2213 = vadd.f32 0.0, %v2212
      %v2214 = vpop.f32.mrf.mxu0
      %v2215 = vadd.f32 0.0, %v2214
      %2216 = vmatmul.bf16.gmra.mxu0 %v1290
      %v2217 = vpop.f32.mrf.mxu0
      %v2218 = vadd.f32 0.0, %v2217
      %v2219 = vpop.f32.mrf.mxu0
      %v2220 = vadd.f32 0.0, %v2219
      %2221 = vmatmul.bf16.gmra.mxu0 %v1293
      %v2222 = vpop.f32.mrf.mxu0
      %v2223 = vadd.f32 0.0, %v2222
      %v2224 = vpop.f32.mrf.mxu0
      %v2225 = vadd.f32 0.0, %v2224
      %2226 = vmatmul.bf16.gmra.mxu0 %v1296
      %v2227 = vpop.f32.mrf.mxu0
      %v2228 = vadd.f32 0.0, %v2227
      %v2229 = vpop.f32.mrf.mxu0
      %v2230 = vadd.f32 0.0, %v2229
      %2231 = vmatmul.bf16.gmra.mxu0 %v1299
      %v2232 = vpop.f32.mrf.mxu0
      %v2233 = vadd.f32 0.0, %v2232
      %v2234 = vpop.f32.mrf.mxu0
      %v2235 = vadd.f32 0.0, %v2234
      %2236 = vmatmul.bf16.gmra.mxu0 %v1302
      %v2237 = vpop.f32.mrf.mxu0
      %v2238 = vadd.f32 0.0, %v2237
      %v2239 = vpop.f32.mrf.mxu0
      %v2240 = vadd.f32 0.0, %v2239
      %2241 = vmatmul.bf16.gmra.mxu0 %v1305
      %v2242 = vpop.f32.mrf.mxu0
      %v2243 = vadd.f32 0.0, %v2242
      %v2244 = vpop.f32.mrf.mxu0
      %v2245 = vadd.f32 0.0, %v2244
      %2246 = vmatmul.bf16.gmra.mxu0 %v1308
      %v2247 = vpop.f32.mrf.mxu0
      %v2248 = vadd.f32 0.0, %v2247
      %v2249 = vpop.f32.mrf.mxu0
      %v2250 = vadd.f32 0.0, %v2249
      %2251 = vmatmul.bf16.gmra.mxu0 %v1738
      %v2252 = vpop.f32.mrf.mxu0
      %v2253 = vadd.f32 0.0, %v2252
      %v2254 = vpop.f32.mrf.mxu0
      %v2255 = vadd.f32 0.0, %v2254
      %2256 = vmatmul.bf16.gmra.mxu0 %v2168
      %v2257 = vpop.f32.mrf.mxu0
      %v2258 = vadd.f32 0.0, %v2257
      %v2259 = vpop.f32.mrf.mxu0
      %v2260 = vadd.f32 0.0, %v2259
      %2261 = vdwg.mxu0
      %v2262 = vadd.f32 %v2122, %v2183
      %v2263 = vadd.f32 %v2123, %v2185
      %v2264 = vadd.f32 %v2124, %v2188
      %v2265 = vadd.f32 %v2125, %v2190
      %v2266 = vadd.f32 %v2126, %v2193
      %v2267 = vadd.f32 %v2127, %v2195
      %v2268 = vadd.f32 %v2128, %v2198
      %v2269 = vadd.f32 %v2129, %v2200
      %v2270 = vadd.f32 %v2130, %v2203
      %v2271 = vadd.f32 %v2131, %v2205
      %v2272 = vadd.f32 %v2132, %v2208
      %v2273 = vadd.f32 %v2133, %v2210
      %v2274 = vadd.f32 %v2134, %v2213
      %v2275 = vadd.f32 %v2135, %v2215
      %v2276 = vadd.f32 %v2136, %v2218
      %v2277 = vadd.f32 %v2137, %v2220
      %v2278 = vadd.f32 %v2138, %v2223
      %v2279 = vadd.f32 %v2139, %v2225
      %v2280 = vadd.f32 %v2140, %v2228
      %v2281 = vadd.f32 %v2141, %v2230
      %v2282 = vadd.f32 %v2142, %v2233
      %v2283 = vadd.f32 %v2143, %v2235
      %v2284 = vadd.f32 %v2144, %v2238
      %v2285 = vadd.f32 %v2145, %v2240
      %v2286 = vadd.f32 %v2146, %v2243
      %v2287 = vadd.f32 %v2147, %v2245
      %v2288 = vadd.f32 %v2148, %v2248
      %v2289 = vadd.f32 %v2149, %v2250
      %v2290 = vadd.f32 %v2150, %v2253
      %v2291 = vadd.f32 %v2151, %v2255
      %v2292 = vadd.f32 %v2152, %v2258
      %v2293 = vadd.f32 %v2153, %v2260
      %v2294 = vpack.c.bf16 %v2262, %v2262
      %v2295 = vpack.c.bf16 %v2263, %v2263
      %v2296 = vpack.c.bf16 %v2264, %v2264
      %v2297 = vpack.c.bf16 %v2265, %v2265
      %v2298 = vpack.c.bf16 %v2266, %v2266
      %v2299 = vpack.c.bf16 %v2267, %v2267
      %v2300 = vpack.c.bf16 %v2268, %v2268
      %v2301 = vpack.c.bf16 %v2269, %v2269
      %v2302 = vpack.c.bf16 %v2270, %v2270
      %v2303 = vpack.c.bf16 %v2271, %v2271
      %v2304 = vpack.c.bf16 %v2272, %v2272
      %v2305 = vpack.c.bf16 %v2273, %v2273
      %v2306 = vpack.c.bf16 %v2274, %v2274
      %v2307 = vpack.c.bf16 %v2275, %v2275
      %v2308 = vpack.c.bf16 %v2276, %v2276
      %v2309 = vpack.c.bf16 %v2277, %v2277
      %v2310 = vpack.c.bf16 %v2278, %v2278
      %v2311 = vpack.c.bf16 %v2279, %v2279
      %v2312 = vpack.c.bf16 %v2280, %v2280
      %v2313 = vpack.c.bf16 %v2281, %v2281
      %v2314 = vpack.c.bf16 %v2282, %v2282
      %v2315 = vpack.c.bf16 %v2283, %v2283
      %v2316 = vpack.c.bf16 %v2284, %v2284
      %v2317 = vpack.c.bf16 %v2285, %v2285
      %v2318 = vpack.c.bf16 %v2286, %v2286
      %v2319 = vpack.c.bf16 %v2287, %v2287
      %v2320 = vpack.c.bf16 %v2288, %v2288
      %v2321 = vpack.c.bf16 %v2289, %v2289
      %v2322 = vpack.c.bf16 %v2290, %v2290
      %v2323 = vpack.c.bf16 %v2291, %v2291
      %v2324 = vpack.c.bf16 %v2292, %v2292
      %v2325 = vpack.c.bf16 %v2293, %v2293
      %2326 = vst [vmem:[%s218] sm:$0xf] %v2294
      %2327 = vst [vmem:[%s218 + $0x4] sm:$0xf] %v2295
      %2328 = vst [vmem:[%s218 + $0x8] sm:$0xf] %v2296
      %2329 = vst [vmem:[%s218 + $0xc] sm:$0xf] %v2297
      %2330 = vst [vmem:[%s218 + $0x10] sm:$0xf] %v2298
      %2331 = vst [vmem:[%s218 + $0x14] sm:$0xf] %v2299
      %2332 = vst [vmem:[%s218 + $0x18] sm:$0xf] %v2300
      %2333 = vst [vmem:[%s218 + $0x1c] sm:$0xf] %v2301
      %2334 = vst [vmem:[%s218 + $0x20] sm:$0xf] %v2302
      %2335 = vst [vmem:[%s218 + $0x24] sm:$0xf] %v2303
      %2336 = vst [vmem:[%s218 + $0x28] sm:$0xf] %v2304
      %2337 = vst [vmem:[%s218 + $0x2c] sm:$0xf] %v2305
      %2338 = vst [vmem:[%s218 + $0x30] sm:$0xf] %v2306
      %2339 = vst [vmem:[%s218 + $0x34] sm:$0xf] %v2307
      %2340 = vst [vmem:[%s218 + $0x38] sm:$0xf] %v2308
      %2341 = vst [vmem:[%s218 + $0x3c] sm:$0xf] %v2309
      %2342 = vst [vmem:[%s218 + $0x40] sm:$0xf] %v2310
      %2343 = vst [vmem:[%s218 + $0x44] sm:$0xf] %v2311
      %2344 = vst [vmem:[%s218 + $0x48] sm:$0xf] %v2312
      %2345 = vst [vmem:[%s218 + $0x4c] sm:$0xf] %v2313
      %2346 = vst [vmem:[%s218 + $0x50] sm:$0xf] %v2314
      %2347 = vst [vmem:[%s218 + $0x54] sm:$0xf] %v2315
      %2348 = vst [vmem:[%s218 + $0x58] sm:$0xf] %v2316
      %2349 = vst [vmem:[%s218 + $0x5c] sm:$0xf] %v2317
      %2350 = vst [vmem:[%s218 + $0x60] sm:$0xf] %v2318
      %2351 = vst [vmem:[%s218 + $0x64] sm:$0xf] %v2319
      %2352 = vst [vmem:[%s218 + $0x68] sm:$0xf] %v2320
      %2353 = vst [vmem:[%s218 + $0x6c] sm:$0xf] %v2321
      %2354 = vst [vmem:[%s218 + $0x70] sm:$0xf] %v2322
      %2355 = vst [vmem:[%s218 + $0x74] sm:$0xf] %v2323
      %2356 = vst [vmem:[%s218 + $0x78] sm:$0xf] %v2324
      %2357 = vst [vmem:[%s218 + $0x7c] sm:$0xf] %v2325
      %s2358 = smul.u32 %s20, 16
      %s2359 = ssub.s32 16, %s2358
      %p2360 = scmp.lt.s32.totalorder %s2359, 16
      %s2361 = scalar_select %p2360, %s2359, 16
      %s2362 = smul.u32 %s2361, 16
      %v2363 = vlaneseq
      %v2364 = vshrl.u32 %v2363, 7
      %v2365 = vadd.s32 %v2364, 8
      %v2366 = vadd.s32 %v2364, 16
      %v2367 = vadd.s32 %v2364, 24
      %v2368 = vadd.s32 %v2364, 32
      %v2369 = vadd.s32 %v2364, 40
      %v2370 = vadd.s32 %v2364, 48
      %v2371 = vadd.s32 %v2364, 56
      %v2372 = vadd.s32 %v2364, 64
      %v2373 = vadd.s32 %v2364, 72
      %v2374 = vadd.s32 %v2364, 80
      %v2375 = vadd.s32 %v2364, 88
      %v2376 = vadd.s32 %v2364, 96
      %v2377 = vadd.s32 %v2364, 104
      %v2378 = vadd.s32 %v2364, 112
      %v2379 = vadd.s32 %v2364, 120
      %v2380 = vadd.s32 %v2364, 128
      %v2381 = vadd.s32 %v2364, 136
      %v2382 = vadd.s32 %v2364, 144
      %v2383 = vadd.s32 %v2364, 152
      %v2384 = vadd.s32 %v2364, 160
      %v2385 = vadd.s32 %v2364, 168
      %v2386 = vadd.s32 %v2364, 176
      %v2387 = vadd.s32 %v2364, 184
      %v2388 = vadd.s32 %v2364, 192
      %v2389 = vadd.s32 %v2364, 200
      %v2390 = vadd.s32 %v2364, 208
      %v2391 = vadd.s32 %v2364, 216
      %v2392 = vadd.s32 %v2364, 224
      %v2393 = vadd.s32 %v2364, 232
      %v2394 = vadd.s32 %v2364, 240
      %v2395 = vadd.s32 %v2364, 248
      %v2396 = vstv %s2362
      %vm2397 = vcmp.lt.s32.totalorder %v2364, %v2396
      %vm2398 = vcmp.lt.s32.totalorder %v2365, %v2396
      %vm2399 = vcmp.lt.s32.totalorder %v2366, %v2396
      %vm2400 = vcmp.lt.s32.totalorder %v2367, %v2396
      %vm2401 = vcmp.lt.s32.totalorder %v2368, %v2396
      %vm2402 = vcmp.lt.s32.totalorder %v2369, %v2396
      %vm2403 = vcmp.lt.s32.totalorder %v2370, %v2396
      %vm2404 = vcmp.lt.s32.totalorder %v2371, %v2396
      %vm2405 = vcmp.lt.s32.totalorder %v2372, %v2396
      %vm2406 = vcmp.lt.s32.totalorder %v2373, %v2396
      %vm2407 = vcmp.lt.s32.totalorder %v2374, %v2396
      %vm2408 = vcmp.lt.s32.totalorder %v2375, %v2396
      %vm2409 = vcmp.lt.s32.totalorder %v2376, %v2396
      %vm2410 = vcmp.lt.s32.totalorder %v2377, %v2396
      %vm2411 = vcmp.lt.s32.totalorder %v2378, %v2396
      %vm2412 = vcmp.lt.s32.totalorder %v2379, %v2396
      %vm2413 = vcmp.lt.s32.totalorder %v2380, %v2396
      %vm2414 = vcmp.lt.s32.totalorder %v2381, %v2396
      %vm2415 = vcmp.lt.s32.totalorder %v2382, %v2396
      %vm2416 = vcmp.lt.s32.totalorder %v2383, %v2396
      %vm2417 = vcmp.lt.s32.totalorder %v2384, %v2396
      %vm2418 = vcmp.lt.s32.totalorder %v2385, %v2396
      %vm2419 = vcmp.lt.s32.totalorder %v2386, %v2396
      %vm2420 = vcmp.lt.s32.totalorder %v2387, %v2396
      %vm2421 = vcmp.lt.s32.totalorder %v2388, %v2396
      %vm2422 = vcmp.lt.s32.totalorder %v2389, %v2396
      %vm2423 = vcmp.lt.s32.totalorder %v2390, %v2396
      %vm2424 = vcmp.lt.s32.totalorder %v2391, %v2396
      %vm2425 = vcmp.lt.s32.totalorder %v2392, %v2396
      %vm2426 = vcmp.lt.s32.totalorder %v2393, %v2396
      %vm2427 = vcmp.lt.s32.totalorder %v2394, %v2396
      %vm2428 = vcmp.lt.s32.totalorder %v2395, %v2396
      %v2429 = vsel %vm2397, 1, 0
      %v2430 = vsel %vm2398, 1, 0
      %v2431 = vsel %vm2399, 1, 0
      %v2432 = vsel %vm2400, 1, 0
      %v2433 = vsel %vm2401, 1, 0
      %v2434 = vsel %vm2402, 1, 0
      %v2435 = vsel %vm2403, 1, 0
      %v2436 = vsel %vm2404, 1, 0
      %v2437 = vsel %vm2405, 1, 0
      %v2438 = vsel %vm2406, 1, 0
      %v2439 = vsel %vm2407, 1, 0
      %v2440 = vsel %vm2408, 1, 0
      %v2441 = vsel %vm2409, 1, 0
      %v2442 = vsel %vm2410, 1, 0
      %v2443 = vsel %vm2411, 1, 0
      %v2444 = vsel %vm2412, 1, 0
      %v2445 = vsel %vm2413, 1, 0
      %v2446 = vsel %vm2414, 1, 0
      %v2447 = vsel %vm2415, 1, 0
      %v2448 = vsel %vm2416, 1, 0
      %v2449 = vsel %vm2417, 1, 0
      %v2450 = vsel %vm2418, 1, 0
      %v2451 = vsel %vm2419, 1, 0
      %v2452 = vsel %vm2420, 1, 0
      %v2453 = vsel %vm2421, 1, 0
      %v2454 = vsel %vm2422, 1, 0
      %v2455 = vsel %vm2423, 1, 0
      %v2456 = vsel %vm2424, 1, 0
      %v2457 = vsel %vm2425, 1, 0
      %v2458 = vsel %vm2426, 1, 0
      %v2459 = vsel %vm2427, 1, 0
      %v2460 = vsel %vm2428, 1, 0
      %vm2461 = vcmp.eq.s32.totalorder %v2429, 1
      %vm2462 = vcmp.eq.s32.totalorder %v2430, 1
      %vm2463 = vcmp.eq.s32.totalorder %v2431, 1
      %vm2464 = vcmp.eq.s32.totalorder %v2432, 1
      %vm2465 = vcmp.eq.s32.totalorder %v2433, 1
      %vm2466 = vcmp.eq.s32.totalorder %v2434, 1
      %vm2467 = vcmp.eq.s32.totalorder %v2435, 1
      %vm2468 = vcmp.eq.s32.totalorder %v2436, 1
      %vm2469 = vcmp.eq.s32.totalorder %v2437, 1
      %vm2470 = vcmp.eq.s32.totalorder %v2438, 1
      %vm2471 = vcmp.eq.s32.totalorder %v2439, 1
      %vm2472 = vcmp.eq.s32.totalorder %v2440, 1
      %vm2473 = vcmp.eq.s32.totalorder %v2441, 1
      %vm2474 = vcmp.eq.s32.totalorder %v2442, 1
      %vm2475 = vcmp.eq.s32.totalorder %v2443, 1
      %vm2476 = vcmp.eq.s32.totalorder %v2444, 1
      %vm2477 = vcmp.eq.s32.totalorder %v2445, 1
      %vm2478 = vcmp.eq.s32.totalorder %v2446, 1
      %vm2479 = vcmp.eq.s32.totalorder %v2447, 1
      %vm2480 = vcmp.eq.s32.totalorder %v2448, 1
      %vm2481 = vcmp.eq.s32.totalorder %v2449, 1
      %vm2482 = vcmp.eq.s32.totalorder %v2450, 1
      %vm2483 = vcmp.eq.s32.totalorder %v2451, 1
      %vm2484 = vcmp.eq.s32.totalorder %v2452, 1
      %vm2485 = vcmp.eq.s32.totalorder %v2453, 1
      %vm2486 = vcmp.eq.s32.totalorder %v2454, 1
      %vm2487 = vcmp.eq.s32.totalorder %v2455, 1
      %vm2488 = vcmp.eq.s32.totalorder %v2456, 1
      %vm2489 = vcmp.eq.s32.totalorder %v2457, 1
      %vm2490 = vcmp.eq.s32.totalorder %v2458, 1
      %vm2491 = vcmp.eq.s32.totalorder %v2459, 1
      %vm2492 = vcmp.eq.s32.totalorder %v2460, 1
      %v2493 = vsel %vm2461, %v2262, 0.0
      %v2494 = vsel %vm2462, %v2263, 0.0
      %v2495 = vsel %vm2463, %v2264, 0.0
      %v2496 = vsel %vm2464, %v2265, 0.0
      %v2497 = vsel %vm2465, %v2266, 0.0
      %v2498 = vsel %vm2466, %v2267, 0.0
      %v2499 = vsel %vm2467, %v2268, 0.0
      %v2500 = vsel %vm2468, %v2269, 0.0
      %v2501 = vsel %vm2469, %v2270, 0.0
      %v2502 = vsel %vm2470, %v2271, 0.0
      %v2503 = vsel %vm2471, %v2272, 0.0
      %v2504 = vsel %vm2472, %v2273, 0.0
      %v2505 = vsel %vm2473, %v2274, 0.0
      %v2506 = vsel %vm2474, %v2275, 0.0
      %v2507 = vsel %vm2475, %v2276, 0.0
      %v2508 = vsel %vm2476, %v2277, 0.0
      %v2509 = vsel %vm2477, %v2278, 0.0
      %v2510 = vsel %vm2478, %v2279, 0.0
      %v2511 = vsel %vm2479, %v2280, 0.0
      %v2512 = vsel %vm2480, %v2281, 0.0
      %v2513 = vsel %vm2481, %v2282, 0.0
      %v2514 = vsel %vm2482, %v2283, 0.0
      %v2515 = vsel %vm2483, %v2284, 0.0
      %v2516 = vsel %vm2484, %v2285, 0.0
      %v2517 = vsel %vm2485, %v2286, 0.0
      %v2518 = vsel %vm2486, %v2287, 0.0
      %v2519 = vsel %vm2487, %v2288, 0.0
      %v2520 = vsel %vm2488, %v2289, 0.0
      %v2521 = vsel %vm2489, %v2290, 0.0
      %v2522 = vsel %vm2490, %v2291, 0.0
      %v2523 = vsel %vm2491, %v2292, 0.0
      %v2524 = vsel %vm2492, %v2293, 0.0
      %v2525 = vadd.f32 %v2493, %v2494
      %v2526 = vadd.f32 %v2525, %v2495
      %v2527 = vadd.f32 %v2526, %v2496
      %v2528 = vadd.f32 %v2527, %v2497
      %v2529 = vadd.f32 %v2528, %v2498
      %v2530 = vadd.f32 %v2529, %v2499
      %v2531 = vadd.f32 %v2530, %v2500
      %v2532 = vadd.f32 %v2531, %v2501
      %v2533 = vadd.f32 %v2532, %v2502
      %v2534 = vadd.f32 %v2533, %v2503
      %v2535 = vadd.f32 %v2534, %v2504
      %v2536 = vadd.f32 %v2535, %v2505
      %v2537 = vadd.f32 %v2536, %v2506
      %v2538 = vadd.f32 %v2537, %v2507
      %v2539 = vadd.f32 %v2538, %v2508
      %v2540 = vadd.f32 %v2539, %v2509
      %v2541 = vadd.f32 %v2540, %v2510
      %v2542 = vadd.f32 %v2541, %v2511
      %v2543 = vadd.f32 %v2542, %v2512
      %v2544 = vadd.f32 %v2543, %v2513
      %v2545 = vadd.f32 %v2544, %v2514
      %v2546 = vadd.f32 %v2545, %v2515
      %v2547 = vadd.f32 %v2546, %v2516
      %v2548 = vadd.f32 %v2547, %v2517
      %v2549 = vadd.f32 %v2548, %v2518
      %v2550 = vadd.f32 %v2549, %v2519
      %v2551 = vadd.f32 %v2550, %v2520
      %v2552 = vadd.f32 %v2551, %v2521
      %v2553 = vadd.f32 %v2552, %v2522
      %v2554 = vadd.f32 %v2553, %v2523
      %v2555 = vadd.f32 %v2554, %v2524
      %v2556 = vrot.slane %v2555, 4
      %v2557 = vadd.f32 %v2555, %v2556
      %v2558 = vrot.slane %v2557, 2
      %v2559 = vadd.f32 %v2557, %v2558
      %v2560 = vrot.slane %v2559, 1
      %v2561 = vadd.f32 %v2559, %v2560
      %v2562 = vmul.f32 %v2493, %v2493
      %v2563 = vmul.f32 %v2494, %v2494
      %v2564 = vmul.f32 %v2495, %v2495
      %v2565 = vmul.f32 %v2496, %v2496
      %v2566 = vmul.f32 %v2497, %v2497
      %v2567 = vmul.f32 %v2498, %v2498
      %v2568 = vmul.f32 %v2499, %v2499
      %v2569 = vmul.f32 %v2500, %v2500
      %v2570 = vmul.f32 %v2501, %v2501
      %v2571 = vmul.f32 %v2502, %v2502
      %v2572 = vmul.f32 %v2503, %v2503
      %v2573 = vmul.f32 %v2504, %v2504
      %v2574 = vmul.f32 %v2505, %v2505
      %v2575 = vmul.f32 %v2506, %v2506
      %v2576 = vmul.f32 %v2507, %v2507
      %v2577 = vmul.f32 %v2508, %v2508
      %v2578 = vmul.f32 %v2509, %v2509
      %v2579 = vmul.f32 %v2510, %v2510
      %v2580 = vmul.f32 %v2511, %v2511
      %v2581 = vmul.f32 %v2512, %v2512
      %v2582 = vmul.f32 %v2513, %v2513
      %v2583 = vmul.f32 %v2514, %v2514
      %v2584 = vmul.f32 %v2515, %v2515
      %v2585 = vmul.f32 %v2516, %v2516
      %v2586 = vmul.f32 %v2517, %v2517
      %v2587 = vmul.f32 %v2518, %v2518
      %v2588 = vmul.f32 %v2519, %v2519
      %v2589 = vmul.f32 %v2520, %v2520
      %v2590 = vmul.f32 %v2521, %v2521
      %v2591 = vmul.f32 %v2522, %v2522
      %v2592 = vmul.f32 %v2523, %v2523
      %v2593 = vmul.f32 %v2524, %v2524
      %v2594 = vadd.f32 %v2562, %v2563
      %v2595 = vadd.f32 %v2594, %v2564
      %v2596 = vadd.f32 %v2595, %v2565
      %v2597 = vadd.f32 %v2596, %v2566
      %v2598 = vadd.f32 %v2597, %v2567
      %v2599 = vadd.f32 %v2598, %v2568
      %v2600 = vadd.f32 %v2599, %v2569
      %v2601 = vadd.f32 %v2600, %v2570
      %v2602 = vadd.f32 %v2601, %v2571
      %v2603 = vadd.f32 %v2602, %v2572
      %v2604 = vadd.f32 %v2603, %v2573
      %v2605 = vadd.f32 %v2604, %v2574
      %v2606 = vadd.f32 %v2605, %v2575
      %v2607 = vadd.f32 %v2606, %v2576
      %v2608 = vadd.f32 %v2607, %v2577
      %v2609 = vadd.f32 %v2608, %v2578
      %v2610 = vadd.f32 %v2609, %v2579
      %v2611 = vadd.f32 %v2610, %v2580
      %v2612 = vadd.f32 %v2611, %v2581
      %v2613 = vadd.f32 %v2612, %v2582
      %v2614 = vadd.f32 %v2613, %v2583
      %v2615 = vadd.f32 %v2614, %v2584
      %v2616 = vadd.f32 %v2615, %v2585
      %v2617 = vadd.f32 %v2616, %v2586
      %v2618 = vadd.f32 %v2617, %v2587
      %v2619 = vadd.f32 %v2618, %v2588
      %v2620 = vadd.f32 %v2619, %v2589
      %v2621 = vadd.f32 %v2620, %v2590
      %v2622 = vadd.f32 %v2621, %v2591
      %v2623 = vadd.f32 %v2622, %v2592
      %v2624 = vadd.f32 %v2623, %v2593
      %v2625 = vrot.slane %v2624, 4
      %v2626 = vadd.f32 %v2624, %v2625
      %v2627 = vrot.slane %v2626, 2
      %v2628 = vadd.f32 %v2626, %v2627
      %v2629 = vrot.slane %v2628, 1
      %v2630 = vadd.f32 %v2628, %v2629
      %vm2631 = vcmp.eq.s32.totalorder %v2364, 0
      %vm2632 = vcmp.eq.s32.totalorder %v2364, 1
      %v2633 = vsel %vm2632, %v2630, 0.0
      %v2634 = vsel %vm2631, %v2561, %v2633
      %2635 = vst [vmem:[%s225] sm:$0xff] %v2634
      %p2636 = scmp.lt.s32.totalorder %s19, 1
      %s2637 = scalar_select %p2636, %s19, 1
      %p2638 = scmp.lt.s32.totalorder %s20, 0
      %s2639 = scalar_select %p2638, %s20, 0
      %s2640 = smul.addr %s2639, 32
      %s2641 = smul.addr %s2637, 32
      %s2642 = sadd.s32 %s2640, %s2641
      %s2643 = smul.addr %s2642, 4
      %s2644 = scalar_lea.vmem %s2, %s2643
      %p2645 = scmp.lt.s32.totalorder %s19, 1
      %s2646 = scalar_select %p2645, %s19, 1
      %p2647 = scmp.lt.s32.totalorder %s20, 0
      %s2648 = scalar_select %p2647, %s20, 0
      %s2649 = sadd.s32 %s2648, %s2646
      %s2650 = smul.addr %s2649, 8
      %s2651 = scalar_lea.vmem %s3, %s2650
      // Predicated region
      $region29: #{base_conv_forward.2} parent=27 // pred_check
        %p2652 = pneg %p96
      $region30: #{base_conv_forward.2} parent=27 // pred_check_branch
        %2654 = sbr.rel (%p2652) target = $region32
      $region31: #{base_conv_forward.2} parent=27 // pred_region
        _
      $region32: #{base_conv_forward.2} parent=27 // pred_fallthru
        _
      // Predicated region
      $region33: #{base_conv_forward.2} parent=27 // pred_check
        %p2655 = pneg %p124
      $region34: #{base_conv_forward.2} parent=27 // pred_check_branch
        %2657 = sbr.rel (%p2655) target = $region36
      $region35: #{base_conv_forward.2} parent=27 // pred_region
        _
      $region36: #{base_conv_forward.2} parent=27 // pred_fallthru
        _
    $region28: #{base_conv_forward.2} parent=5 // pred_fallthru
      _
    %p2658 = scmp.le.s32.totalorder 2, %s10
    // Predicated region
    $region37: #{base_conv_forward.2} parent=5 // pred_check
      %p2659 = pneg %p2658
    $region38: #{base_conv_forward.2} parent=5 // pred_check_branch
      %2661 = sbr.rel (%p2659) target = $region40
    $region39: #{base_conv_forward.2} parent=5 // pred_region
      %s2662 = ssub.s32 %s10, 2
      // Predicated region
      $region41: #{base_conv_forward.2} parent=39 // pred_check
        %p2663 = pneg %p102
      $region42: #{base_conv_forward.2} parent=39 // pred_check_branch
        %2665 = sbr.rel (%p2663) target = $region44
      $region43: #{base_conv_forward.2} parent=39 // pred_region
        %p2666 = scmp.lt.s32.totalorder %s21, 1
        %s2667 = scalar_select %p2666, %s21, 1
        %p2668 = scmp.lt.s32.totalorder %s22, 0
        %s2669 = scalar_select %p2668, %s22, 0
        %s2670 = smul.addr %s2669, 32
        %s2671 = smul.addr %s2667, 32
        %s2672 = sadd.s32 %s2670, %s2671
        %s2673 = smul.addr %s2672, 4
        %s2674 = scalar_lea.vmem %s2, %s2673
      $region44: #{base_conv_forward.2} parent=39 // pred_fallthru
        _
      // Predicated region
      $region45: #{base_conv_forward.2} parent=39 // pred_check
        %p2675 = pneg %p130
      $region46: #{base_conv_forward.2} parent=39 // pred_check_branch
        %2677 = sbr.rel (%p2675) target = $region48
      $region47: #{base_conv_forward.2} parent=39 // pred_region
        %p2678 = scmp.lt.s32.totalorder %s21, 1
        %s2679 = scalar_select %p2678, %s21, 1
        %p2680 = scmp.lt.s32.totalorder %s22, 0
        %s2681 = scalar_select %p2680, %s22, 0
        %s2682 = sadd.s32 %s2681, %s2679
        %s2683 = smul.addr %s2682, 8
        %s2684 = scalar_lea.vmem %s3, %s2683
      $region48: #{base_conv_forward.2} parent=39 // pred_fallthru
        _
    $region40: #{base_conv_forward.2} parent=5 // pred_fallthru
      _
  $region6: #{base_conv_forward.2} parent=0 // loop_footer
    %s14 = sadd.s32 1, %s10
  $region7: #{base_conv_forward.2} parent=0 // loop_footer_branch
    %9 = sbr.rel target = $region3
  $region8: #{base_conv_forward.2} parent=0 // loop_exit
    _

// kernel: base_conv_forward.3
$region0: #{base_conv_forward.3}
  #allocation0 [shape = 'u32[]', space=smem, size = 0x4, offset = 0x4, fixed_abs, tag = 'smem constant byte address 0x4 - core index']
  #allocation1 [shape = 'u32[72,128]{1,0:T(1,128)}', space=vmem, size = 0x9000, scoped, tag = 'internal scratch']
  %s0 = inlined_call_operand.vmem [shape: bf16[2,1,256,128], index: 0, kind: input, shape index: {}]
  %s1 = inlined_call_operand.vmem [shape: f32[1,128], index: 1, kind: input, shape index: {}]
  %s2 = inlined_call_operand.vmem [shape: f32[1,128], index: 2, kind: input, shape index: {}]
  %s3 = inlined_call_operand.vmem [shape: f32[2,1,256,128], index: 3, kind: output, shape index: {}]
  %s4 = sld [smem:[#allocation0]]
  $region45: #{base_conv_forward.3} parent=0
    _
  %s6 = ssub.s32 1, %s4
  %s7 = scalar_select 0, %s6, %s4
  loop: start=0, step=1, limit=4
  $region2: #{base_conv_forward.3} parent=0 // loop_pre_header
    _
  $region3: #{base_conv_forward.3} parent=0 // loop_header
    %s9 = sphi 0, %s13
    %p10 = scmp.ge.s32.totalorder %s9, 4
    %s16 = sphi 0, %s28
    %s17 = sphi 0, %s24
    %s18 = sphi 0, %s16
    %s19 = sphi 0, %s17
    %s20 = sphi 0, %s18
    %s21 = sphi 0, %s19
    %s33 = sphi 0, %s35
    %s36 = sphi 0, %s33
    %s37 = sphi 0, %s36
    %s53 = sphi 0, %s37
    %s57 = sphi 0, %s57
    %s59 = sphi 0, %s57
    %s60 = sphi 0, %s59
    %s74 = sphi 0, %s60
    %s78 = sphi 0, %s78
    %s80 = sphi 0, %s78
    %s81 = sphi 0, %s80
    %s95 = sphi 0, %s81
    %s103 = sphi 0, %s105
    %s106 = sphi 0, %s103
    %s107 = sphi 0, %s106
    %s123 = sphi 0, %s107
  $region4: #{base_conv_forward.3} parent=0 // loop_header_branch
    %12 = sbr.rel (%p10) target = $region8
  $region5: #{base_conv_forward.3} parent=0 // loop_body
    %s14 = ssub.s32 %s9, 1
    %s15 = ssub.s32 %s9, 2
    %s22 = sadd.s32 1, %s17
    %p23 = scmp.ge.s32.totalorder %s22, 1
    %s24 = scalar_select %p23, 0, %s22
    %s25 = sadd.s32 1, %s16
    %s26 = scalar_select %p23, %s25, %s16
    %p27 = scmp.ge.s32.totalorder %s26, 2
    %s28 = scalar_select %p27, 0, %s26
    %s29 = ssub.s32 %s16, %s28
    %s30 = ssub.s32 %s17, %s24
    %s31 = sor.u32 %s29, %s30
    %p32 = scmp.eq.s32.totalorder %s31, 0
    %s34 = sadd.s32 %s33, 1
    %s35 = scalar_select %p32, %s33, %s34
    %p38 = pneg %p32
    %p39 = scmp.eq.s32.totalorder %s9, 1
    %p40 = por %p38, %p39
    %p41 = scmp.ne.s32.totalorder %s33, %s36
    %p42 = scmp.eq.s32.totalorder %s9, 0
    %p43 = por %p41, %p42
    %p44 = scmp.ne.s32.totalorder %s33, %s36
    %p45 = scmp.eq.s32.totalorder %s14, 1
    %p46 = por %p44, %p45
    %p47 = scmp.ne.s32.totalorder %s36, %s37
    %p48 = scmp.eq.s32.totalorder %s14, 0
    %p49 = por %p47, %p48
    %p50 = scmp.ne.s32.totalorder %s36, %s37
    %p51 = scmp.eq.s32.totalorder %s15, 1
    %p52 = por %p50, %p51
    %p54 = scmp.ne.s32.totalorder %s37, %s53
    %p55 = scmp.eq.s32.totalorder %s15, 0
    %p56 = por %p54, %p55
    %s58 = sadd.s32 %s57, 1
    %p61 = scmp.eq.s32.totalorder %s9, 1
    %p62 = scmp.ne.s32.totalorder %s57, %s59
    %p63 = scmp.eq.s32.totalorder %s9, 0
    %p64 = por %p62, %p63
    %p65 = scmp.ne.s32.totalorder %s57, %s59
    %p66 = scmp.eq.s32.totalorder %s14, 1
    %p67 = por %p65, %p66
    %p68 = scmp.ne.s32.totalorder %s59, %s60
    %p69 = scmp.eq.s32.totalorder %s14, 0
    %p70 = por %p68, %p69
    %p71 = scmp.ne.s32.totalorder %s59, %s60
    %p72 = scmp.eq.s32.totalorder %s15, 1
    %p73 = por %p71, %p72
    %p75 = scmp.ne.s32.totalorder %s60, %s74
    %p76 = scmp.eq.s32.totalorder %s15, 0
    %p77 = por %p75, %p76
    %s79 = sadd.s32 %s78, 1
    %p82 = scmp.eq.s32.totalorder %s9, 1
    %p83 = scmp.ne.s32.totalorder %s78, %s80
    %p84 = scmp.eq.s32.totalorder %s9, 0
    %p85 = por %p83, %p84
    %p86 = scmp.ne.s32.totalorder %s78, %s80
    %p87 = scmp.eq.s32.totalorder %s14, 1
    %p88 = por %p86, %p87
    %p89 = scmp.ne.s32.totalorder %s80, %s81
    %p90 = scmp.eq.s32.totalorder %s14, 0
    %p91 = por %p89, %p90
    %p92 = scmp.ne.s32.totalorder %s80, %s81
    %p93 = scmp.eq.s32.totalorder %s15, 1
    %p94 = por %p92, %p93
    %p96 = scmp.ne.s32.totalorder %s81, %s95
    %p97 = scmp.eq.s32.totalorder %s15, 0
    %p98 = por %p96, %p97
    %s99 = ssub.s32 %s16, %s28
    %s100 = ssub.s32 %s17, %s24
    %s101 = sor.u32 %s99, %s100
    %p102 = scmp.eq.s32.totalorder %s101, 0
    %s104 = sadd.s32 %s103, 1
    %s105 = scalar_select %p102, %s103, %s104
    %p108 = pneg %p102
    %p109 = scmp.eq.s32.totalorder %s9, 1
    %p110 = por %p108, %p109
    %p111 = scmp.ne.s32.totalorder %s103, %s106
    %p112 = scmp.eq.s32.totalorder %s9, 0
    %p113 = por %p111, %p112
    %p114 = scmp.ne.s32.totalorder %s103, %s106
    %p115 = scmp.eq.s32.totalorder %s14, 1
    %p116 = por %p114, %p115
    %p117 = scmp.ne.s32.totalorder %s106, %s107
    %p118 = scmp.eq.s32.totalorder %s14, 0
    %p119 = por %p117, %p118
    %p120 = scmp.ne.s32.totalorder %s106, %s107
    %p121 = scmp.eq.s32.totalorder %s15, 1
    %p122 = por %p120, %p121
    %p124 = scmp.ne.s32.totalorder %s107, %s123
    %p125 = scmp.eq.s32.totalorder %s15, 0
    %p126 = por %p124, %p125
    %p127 = scmp.le.s32.totalorder 1, %s9
    %p128 = scmp.lt.s32.totalorder %s9, 3
    %p129 = pnand %p127, %p128
    %p130 = pneg %p129
    // Predicated region
    $region9: #{base_conv_forward.3} parent=5 // pred_check
      _
    $region10: #{base_conv_forward.3} parent=5 // pred_check_branch
      %132 = sbr.rel (%p129) target = $region12
    $region11: #{base_conv_forward.3} parent=5 // pred_region
      %s133 = ssub.s32 %s9, 1
      // Predicated region
      $region13: #{base_conv_forward.3} parent=11 // pred_check
        %p134 = pneg %p70
      $region14: #{base_conv_forward.3} parent=11 // pred_check_branch
        %136 = sbr.rel (%p134) target = $region16
      $region15: #{base_conv_forward.3} parent=11 // pred_region
        _
      $region16: #{base_conv_forward.3} parent=11 // pred_fallthru
        _
      // Predicated region
      $region17: #{base_conv_forward.3} parent=11 // pred_check
        %p137 = pneg %p91
      $region18: #{base_conv_forward.3} parent=11 // pred_check_branch
        %139 = sbr.rel (%p137) target = $region20
      $region19: #{base_conv_forward.3} parent=11 // pred_region
        _
      $region20: #{base_conv_forward.3} parent=11 // pred_fallthru
        _
    $region12: #{base_conv_forward.3} parent=5 // pred_fallthru
      _
    %p140 = scmp.lt.s32.totalorder %s9, 2
    // Predicated region
    $region21: #{base_conv_forward.3} parent=5 // pred_check
      %p141 = pneg %p140
    $region22: #{base_conv_forward.3} parent=5 // pred_check_branch
      %143 = sbr.rel (%p141) target = $region24
    $region23: #{base_conv_forward.3} parent=5 // pred_region
      // Predicated region
      $region25: #{base_conv_forward.3} parent=23 // pred_check
        %p144 = pneg %p43
      $region26: #{base_conv_forward.3} parent=23 // pred_check_branch
        %146 = sbr.rel (%p144) target = $region28
      $region27: #{base_conv_forward.3} parent=23 // pred_region
        %p147 = scmp.lt.s32.totalorder %s16, 1
        %s148 = scalar_select %p147, %s16, 1
        %p149 = scmp.lt.s32.totalorder %s17, 0
        %s150 = scalar_select %p149, %s17, 0
        %s151 = smul.addr %s150, 32
        %s152 = smul.addr %s148, 32
        %s153 = sadd.s32 %s151, %s152
        %s154 = smul.addr %s153, 4
        %s155 = scalar_lea.vmem %s0, %s154
      $region28: #{base_conv_forward.3} parent=23 // pred_fallthru
        _
    $region24: #{base_conv_forward.3} parent=5 // pred_fallthru
      _
    %p156 = scmp.le.s32.totalorder 1, %s9
    %p157 = scmp.lt.s32.totalorder %s9, 3
    %p158 = pnand %p156, %p157
    %p159 = pneg %p158
    // Predicated region
    $region29: #{base_conv_forward.3} parent=5 // pred_check
      _
    $region30: #{base_conv_forward.3} parent=5 // pred_check_branch
      %161 = sbr.rel (%p158) target = $region32
    $region31: #{base_conv_forward.3} parent=5 // pred_region
      %s162 = ssub.s32 %s9, 1
      %p163 = scmp.lt.s32.totalorder %s18, 1
      %s164 = scalar_select %p163, %s18, 1
      %p165 = scmp.lt.s32.totalorder %s19, 0
      %s166 = scalar_select %p165, %s19, 0
      %s167 = smul.addr %s166, 32
      %s168 = smul.addr %s164, 32
      %s169 = sadd.s32 %s167, %s168
      %s170 = smul.addr %s169, 4
      %s171 = scalar_lea.vmem %s0, %s170
      %p172 = pneg %p49
      %p173 = pneg %p46
      %p174 = pneg %p70
      %p175 = pneg %p67
      %p176 = pneg %p91
      %p177 = pneg %p88
      %p178 = pneg %p119
      %p179 = pneg %p116
      %p180 = scmp.lt.s32.totalorder %s18, 1
      %s181 = scalar_select %p180, %s18, 1
      %p182 = scmp.lt.s32.totalorder %s19, 0
      %s183 = scalar_select %p182, %s19, 0
      %s184 = smul.addr %s183, 32
      %s185 = smul.addr %s181, 32
      %s186 = sadd.s32 %s184, %s185
      %s187 = smul.addr %s186, 8
      %s188 = scalar_lea.vmem %s3, %s187
      %p189 = scmp.lt.s32.totalorder %s18, 1
      %s190 = scalar_select %p189, %s18, 1
      %p191 = scmp.lt.s32.totalorder %s19, 0
      %s192 = scalar_select %p191, %s19, 0
      %s193 = smul.addr %s192, 32
      %s194 = smul.addr %s190, 32
      %s195 = sadd.s32 %s193, %s194
      %s196 = smul.addr %s195, 4
      %s197 = scalar_lea.vmem %s0, %s196
      %p198 = scmp.lt.s32.totalorder %s18, 1
      %s199 = scalar_select %p198, %s18, 1
      %p200 = scmp.lt.s32.totalorder %s19, 0
      %s201 = scalar_select %p200, %s19, 0
      %s202 = smul.addr %s201, 32
      %s203 = smul.addr %s199, 32
      %s204 = sadd.s32 %s202, %s203
      %s205 = smul.addr %s204, 8
      %s206 = scalar_lea.vmem %s3, %s205
      %v207 = vld [vmem:[%s197] sm:$0xf]
      %v208 = vld [vmem:[%s197 + $0x4] sm:$0xf]
      %v209 = vld [vmem:[%s197 + $0x8] sm:$0xf]
      %v210 = vld [vmem:[%s197 + $0xc] sm:$0xf]
      %v211 = vld [vmem:[%s197 + $0x10] sm:$0xf]
      %v212 = vld [vmem:[%s197 + $0x14] sm:$0xf]
      %v213 = vld [vmem:[%s197 + $0x18] sm:$0xf]
      %v214 = vld [vmem:[%s197 + $0x1c] sm:$0xf]
      %v215 = vld [vmem:[%s197 + $0x20] sm:$0xf]
      %v216 = vld [vmem:[%s197 + $0x24] sm:$0xf]
      %v217 = vld [vmem:[%s197 + $0x28] sm:$0xf]
      %v218 = vld [vmem:[%s197 + $0x2c] sm:$0xf]
      %v219 = vld [vmem:[%s197 + $0x30] sm:$0xf]
      %v220 = vld [vmem:[%s197 + $0x34] sm:$0xf]
      %v221 = vld [vmem:[%s197 + $0x38] sm:$0xf]
      %v222 = vld [vmem:[%s197 + $0x3c] sm:$0xf]
      %v223 = vld [vmem:[%s197 + $0x40] sm:$0xf]
      %v224 = vld [vmem:[%s197 + $0x44] sm:$0xf]
      %v225 = vld [vmem:[%s197 + $0x48] sm:$0xf]
      %v226 = vld [vmem:[%s197 + $0x4c] sm:$0xf]
      %v227 = vld [vmem:[%s197 + $0x50] sm:$0xf]
      %v228 = vld [vmem:[%s197 + $0x54] sm:$0xf]
      %v229 = vld [vmem:[%s197 + $0x58] sm:$0xf]
      %v230 = vld [vmem:[%s197 + $0x5c] sm:$0xf]
      %v231 = vld [vmem:[%s197 + $0x60] sm:$0xf]
      %v232 = vld [vmem:[%s197 + $0x64] sm:$0xf]
      %v233 = vld [vmem:[%s197 + $0x68] sm:$0xf]
      %v234 = vld [vmem:[%s197 + $0x6c] sm:$0xf]
      %v235 = vld [vmem:[%s197 + $0x70] sm:$0xf]
      %v236 = vld [vmem:[%s197 + $0x74] sm:$0xf]
      %v237 = vld [vmem:[%s197 + $0x78] sm:$0xf]
      %v238 = vld [vmem:[%s197 + $0x7c] sm:$0xf]
      %v239 = vunpack.c.l.bf16 %v207
      %v240 = vunpack.c.l.bf16 %v208
      %v241 = vunpack.c.l.bf16 %v209
      %v242 = vunpack.c.l.bf16 %v210
      %v243 = vunpack.c.l.bf16 %v211
      %v244 = vunpack.c.l.bf16 %v212
      %v245 = vunpack.c.l.bf16 %v213
      %v246 = vunpack.c.l.bf16 %v214
      %v247 = vunpack.c.l.bf16 %v215
      %v248 = vunpack.c.l.bf16 %v216
      %v249 = vunpack.c.l.bf16 %v217
      %v250 = vunpack.c.l.bf16 %v218
      %v251 = vunpack.c.l.bf16 %v219
      %v252 = vunpack.c.l.bf16 %v220
      %v253 = vunpack.c.l.bf16 %v221
      %v254 = vunpack.c.l.bf16 %v222
      %v255 = vunpack.c.l.bf16 %v223
      %v256 = vunpack.c.l.bf16 %v224
      %v257 = vunpack.c.l.bf16 %v225
      %v258 = vunpack.c.l.bf16 %v226
      %v259 = vunpack.c.l.bf16 %v227
      %v260 = vunpack.c.l.bf16 %v228
      %v261 = vunpack.c.l.bf16 %v229
      %v262 = vunpack.c.l.bf16 %v230
      %v263 = vunpack.c.l.bf16 %v231
      %v264 = vunpack.c.l.bf16 %v232
      %v265 = vunpack.c.l.bf16 %v233
      %v266 = vunpack.c.l.bf16 %v234
      %v267 = vunpack.c.l.bf16 %v235
      %v268 = vunpack.c.l.bf16 %v236
      %v269 = vunpack.c.l.bf16 %v237
      %v270 = vunpack.c.l.bf16 %v238
      %v271 = vld [vmem:[%s1] sm:$0x1]
      %v273 = vperm.slane %v271, 0
      %v275 = vmul.f32 %v239, %v273
      %v276 = vmul.f32 %v240, %v273
      %v277 = vmul.f32 %v241, %v273
      %v278 = vmul.f32 %v242, %v273
      %v279 = vmul.f32 %v243, %v273
      %v280 = vmul.f32 %v244, %v273
      %v281 = vmul.f32 %v245, %v273
      %v282 = vmul.f32 %v246, %v273
      %v283 = vmul.f32 %v247, %v273
      %v284 = vmul.f32 %v248, %v273
      %v285 = vmul.f32 %v249, %v273
      %v286 = vmul.f32 %v250, %v273
      %v287 = vmul.f32 %v251, %v273
      %v288 = vmul.f32 %v252, %v273
      %v289 = vmul.f32 %v253, %v273
      %v290 = vmul.f32 %v254, %v273
      %v291 = vmul.f32 %v255, %v273
      %v292 = vmul.f32 %v256, %v273
      %v293 = vmul.f32 %v257, %v273
      %v294 = vmul.f32 %v258, %v273
      %v295 = vmul.f32 %v259, %v273
      %v296 = vmul.f32 %v260, %v273
      %v297 = vmul.f32 %v261, %v273
      %v298 = vmul.f32 %v262, %v273
      %v299 = vmul.f32 %v263, %v273
      %v300 = vmul.f32 %v264, %v273
      %v301 = vmul.f32 %v265, %v273
      %v302 = vmul.f32 %v266, %v273
      %v303 = vmul.f32 %v267, %v273
      %v304 = vmul.f32 %v268, %v273
      %v305 = vmul.f32 %v269, %v273
      %v306 = vmul.f32 %v270, %v273
      %v307 = vld [vmem:[%s2] sm:$0x1]
      %v309 = vperm.slane %v307, 0
      %v311 = vadd.f32 %v275, %v309
      %v312 = vadd.f32 %v276, %v309
      %v313 = vadd.f32 %v277, %v309
      %v314 = vadd.f32 %v278, %v309
      %v315 = vadd.f32 %v279, %v309
      %v316 = vadd.f32 %v280, %v309
      %v317 = vadd.f32 %v281, %v309
      %v318 = vadd.f32 %v282, %v309
      %v319 = vadd.f32 %v283, %v309
      %v320 = vadd.f32 %v284, %v309
      %v321 = vadd.f32 %v285, %v309
      %v322 = vadd.f32 %v286, %v309
      %v323 = vadd.f32 %v287, %v309
      %v324 = vadd.f32 %v288, %v309
      %v325 = vadd.f32 %v289, %v309
      %v326 = vadd.f32 %v290, %v309
      %v327 = vadd.f32 %v291, %v309
      %v328 = vadd.f32 %v292, %v309
      %v329 = vadd.f32 %v293, %v309
      %v330 = vadd.f32 %v294, %v309
      %v331 = vadd.f32 %v295, %v309
      %v332 = vadd.f32 %v296, %v309
      %v333 = vadd.f32 %v297, %v309
      %v334 = vadd.f32 %v298, %v309
      %v335 = vadd.f32 %v299, %v309
      %v336 = vadd.f32 %v300, %v309
      %v337 = vadd.f32 %v301, %v309
      %v338 = vadd.f32 %v302, %v309
      %v339 = vadd.f32 %v303, %v309
      %v340 = vadd.f32 %v304, %v309
      %v341 = vadd.f32 %v305, %v309
      %v342 = vadd.f32 %v306, %v309
      %v343 = vxor.u32 %v311, 2147483648
      %v344 = vxor.u32 %v312, 2147483648
      %v345 = vxor.u32 %v313, 2147483648
      %v346 = vxor.u32 %v314, 2147483648
      %v347 = vxor.u32 %v315, 2147483648
      %v348 = vxor.u32 %v316, 2147483648
      %v349 = vxor.u32 %v317, 2147483648
      %v350 = vxor.u32 %v318, 2147483648
      %v351 = vxor.u32 %v319, 2147483648
      %v352 = vxor.u32 %v320, 2147483648
      %v353 = vxor.u32 %v321, 2147483648
      %v354 = vxor.u32 %v322, 2147483648
      %v355 = vxor.u32 %v323, 2147483648
      %v356 = vxor.u32 %v324, 2147483648
      %v357 = vxor.u32 %v325, 2147483648
      %v358 = vxor.u32 %v326, 2147483648
      %v359 = vxor.u32 %v327, 2147483648
      %v360 = vxor.u32 %v328, 2147483648
      %v361 = vxor.u32 %v329, 2147483648
      %v362 = vxor.u32 %v330, 2147483648
      %v363 = vxor.u32 %v331, 2147483648
      %v364 = vxor.u32 %v332, 2147483648
      %v365 = vxor.u32 %v333, 2147483648
      %v366 = vxor.u32 %v334, 2147483648
      %v367 = vxor.u32 %v335, 2147483648
      %v368 = vxor.u32 %v336, 2147483648
      %v369 = vxor.u32 %v337, 2147483648
      %v370 = vxor.u32 %v338, 2147483648
      %v371 = vxor.u32 %v339, 2147483648
      %v372 = vxor.u32 %v340, 2147483648
      %v373 = vxor.u32 %v341, 2147483648
      %v374 = vxor.u32 %v342, 2147483648
      %v375 = vmul.f32 %v343, 1.442695
      %v376 = vpow.pop %v375
      %v377 = vmul.f32 %v344, 1.442695
      %v378 = vpow.pop %v377
      %v379 = vmul.f32 %v345, 1.442695
      %v380 = vpow.pop %v379
      %v381 = vmul.f32 %v346, 1.442695
      %v382 = vpow.pop %v381
      %v383 = vmul.f32 %v347, 1.442695
      %v384 = vpow.pop %v383
      %v385 = vmul.f32 %v348, 1.442695
      %v386 = vpow.pop %v385
      %v387 = vmul.f32 %v349, 1.442695
      %v388 = vpow.pop %v387
      %v389 = vmul.f32 %v350, 1.442695
      %v390 = vpow.pop %v389
      %v391 = vmul.f32 %v351, 1.442695
      %v392 = vpow.pop %v391
      %v393 = vmul.f32 %v352, 1.442695
      %v394 = vpow.pop %v393
      %v395 = vmul.f32 %v353, 1.442695
      %v396 = vpow.pop %v395
      %v397 = vmul.f32 %v354, 1.442695
      %v398 = vpow.pop %v397
      %v399 = vmul.f32 %v355, 1.442695
      %v400 = vpow.pop %v399
      %v401 = vmul.f32 %v356, 1.442695
      %v402 = vpow.pop %v401
      %v403 = vmul.f32 %v357, 1.442695
      %v404 = vpow.pop %v403
      %v405 = vmul.f32 %v358, 1.442695
      %v406 = vpow.pop %v405
      %v407 = vmul.f32 %v359, 1.442695
      %v408 = vpow.pop %v407
      %v409 = vmul.f32 %v360, 1.442695
      %v410 = vpow.pop %v409
      %v411 = vmul.f32 %v361, 1.442695
      %v412 = vpow.pop %v411
      %v413 = vmul.f32 %v362, 1.442695
      %v414 = vpow.pop %v413
      %v415 = vmul.f32 %v363, 1.442695
      %v416 = vpow.pop %v415
      %v417 = vmul.f32 %v364, 1.442695
      %v418 = vpow.pop %v417
      %v419 = vmul.f32 %v365, 1.442695
      %v420 = vpow.pop %v419
      %v421 = vmul.f32 %v366, 1.442695
      %v422 = vpow.pop %v421
      %v423 = vmul.f32 %v367, 1.442695
      %v424 = vpow.pop %v423
      %v425 = vmul.f32 %v368, 1.442695
      %v426 = vpow.pop %v425
      %v427 = vmul.f32 %v369, 1.442695
      %v428 = vpow.pop %v427
      %v429 = vmul.f32 %v370, 1.442695
      %v430 = vpow.pop %v429
      %v431 = vmul.f32 %v371, 1.442695
      %v432 = vpow.pop %v431
      %v433 = vmul.f32 %v372, 1.442695
      %v434 = vpow.pop %v433
      %v435 = vmul.f32 %v373, 1.442695
      %v436 = vpow.pop %v435
      %v437 = vmul.f32 %v374, 1.442695
      %v438 = vpow.pop %v437
      %v439 = vadd.f32 %v376, 1.0
      %v440 = vadd.f32 %v378, 1.0
      %v441 = vadd.f32 %v380, 1.0
      %v442 = vadd.f32 %v382, 1.0
      %v443 = vadd.f32 %v384, 1.0
      %v444 = vadd.f32 %v386, 1.0
      %v445 = vadd.f32 %v388, 1.0
      %v446 = vadd.f32 %v390, 1.0
      %v447 = vadd.f32 %v392, 1.0
      %v448 = vadd.f32 %v394, 1.0
      %v449 = vadd.f32 %v396, 1.0
      %v450 = vadd.f32 %v398, 1.0
      %v451 = vadd.f32 %v400, 1.0
      %v452 = vadd.f32 %v402, 1.0
      %v453 = vadd.f32 %v404, 1.0
      %v454 = vadd.f32 %v406, 1.0
      %v455 = vadd.f32 %v408, 1.0
      %v456 = vadd.f32 %v410, 1.0
      %v457 = vadd.f32 %v412, 1.0
      %v458 = vadd.f32 %v414, 1.0
      %v459 = vadd.f32 %v416, 1.0
      %v460 = vadd.f32 %v418, 1.0
      %v461 = vadd.f32 %v420, 1.0
      %v462 = vadd.f32 %v422, 1.0
      %v463 = vadd.f32 %v424, 1.0
      %v464 = vadd.f32 %v426, 1.0
      %v465 = vadd.f32 %v428, 1.0
      %v466 = vadd.f32 %v430, 1.0
      %v467 = vadd.f32 %v432, 1.0
      %v468 = vadd.f32 %v434, 1.0
      %v469 = vadd.f32 %v436, 1.0
      %v470 = vadd.f32 %v438, 1.0
      %v471 = vrcp.pop %v439
      %v472 = vmul.f32 %v439, %v471
      %v473 = vsub.f32 1.0, %v472
      %v474 = vmul.f32 %v471, %v473
      %v475 = vadd.f32 %v471, %v474
      %vm476 = vweird.f32 %v439
      %vm477 = vweird.f32 %v471
      %vm478 = vmor %vm476, %vm477
      %v479 = vsel %vm478, %v471, %v475
      %v480 = vand.u32 2147483647, %v439
      %vm481 = vcmp.eq.f32.partialorder %v480, 8.507059e+37
      %v482 = vand.u32 %v439, 2147483648
      %v483 = vor.u32 1.1754944e-38, %v482
      %v484 = vsel %vm481, %v483, %v479
      %v485 = vmul.f32 1.0, %v484
      %v486 = vrcp.pop %v440
      %v487 = vmul.f32 %v440, %v486
      %v488 = vsub.f32 1.0, %v487
      %v489 = vmul.f32 %v486, %v488
      %v490 = vadd.f32 %v486, %v489
      %vm491 = vweird.f32 %v440
      %vm492 = vweird.f32 %v486
      %vm493 = vmor %vm491, %vm492
      %v494 = vsel %vm493, %v486, %v490
      %v495 = vand.u32 2147483647, %v440
      %vm496 = vcmp.eq.f32.partialorder %v495, 8.507059e+37
      %v497 = vand.u32 %v440, 2147483648
      %v498 = vor.u32 1.1754944e-38, %v497
      %v499 = vsel %vm496, %v498, %v494
      %v500 = vmul.f32 1.0, %v499
      %v501 = vrcp.pop %v441
      %v502 = vmul.f32 %v441, %v501
      %v503 = vsub.f32 1.0, %v502
      %v504 = vmul.f32 %v501, %v503
      %v505 = vadd.f32 %v501, %v504
      %vm506 = vweird.f32 %v441
      %vm507 = vweird.f32 %v501
      %vm508 = vmor %vm506, %vm507
      %v509 = vsel %vm508, %v501, %v505
      %v510 = vand.u32 2147483647, %v441
      %vm511 = vcmp.eq.f32.partialorder %v510, 8.507059e+37
      %v512 = vand.u32 %v441, 2147483648
      %v513 = vor.u32 1.1754944e-38, %v512
      %v514 = vsel %vm511, %v513, %v509
      %v515 = vmul.f32 1.0, %v514
      %v516 = vrcp.pop %v442
      %v517 = vmul.f32 %v442, %v516
      %v518 = vsub.f32 1.0, %v517
      %v519 = vmul.f32 %v516, %v518
      %v520 = vadd.f32 %v516, %v519
      %vm521 = vweird.f32 %v442
      %vm522 = vweird.f32 %v516
      %vm523 = vmor %vm521, %vm522
      %v524 = vsel %vm523, %v516, %v520
      %v525 = vand.u32 2147483647, %v442
      %vm526 = vcmp.eq.f32.partialorder %v525, 8.507059e+37
      %v527 = vand.u32 %v442, 2147483648
      %v528 = vor.u32 1.1754944e-38, %v527
      %v529 = vsel %vm526, %v528, %v524
      %v530 = vmul.f32 1.0, %v529
      %v531 = vrcp.pop %v443
      %v532 = vmul.f32 %v443, %v531
      %v533 = vsub.f32 1.0, %v532
      %v534 = vmul.f32 %v531, %v533
      %v535 = vadd.f32 %v531, %v534
      %vm536 = vweird.f32 %v443
      %vm537 = vweird.f32 %v531
      %vm538 = vmor %vm536, %vm537
      %v539 = vsel %vm538, %v531, %v535
      %v540 = vand.u32 2147483647, %v443
      %vm541 = vcmp.eq.f32.partialorder %v540, 8.507059e+37
      %v542 = vand.u32 %v443, 2147483648
      %v543 = vor.u32 1.1754944e-38, %v542
      %v544 = vsel %vm541, %v543, %v539
      %v545 = vmul.f32 1.0, %v544
      %v546 = vrcp.pop %v444
      %v547 = vmul.f32 %v444, %v546
      %v548 = vsub.f32 1.0, %v547
      %v549 = vmul.f32 %v546, %v548
      %v550 = vadd.f32 %v546, %v549
      %vm551 = vweird.f32 %v444
      %vm552 = vweird.f32 %v546
      %vm553 = vmor %vm551, %vm552
      %v554 = vsel %vm553, %v546, %v550
      %v555 = vand.u32 2147483647, %v444
      %vm556 = vcmp.eq.f32.partialorder %v555, 8.507059e+37
      %v557 = vand.u32 %v444, 2147483648
      %v558 = vor.u32 1.1754944e-38, %v557
      %v559 = vsel %vm556, %v558, %v554
      %v560 = vmul.f32 1.0, %v559
      %v561 = vrcp.pop %v445
      %v562 = vmul.f32 %v445, %v561
      %v563 = vsub.f32 1.0, %v562
      %v564 = vmul.f32 %v561, %v563
      %v565 = vadd.f32 %v561, %v564
      %vm566 = vweird.f32 %v445
      %vm567 = vweird.f32 %v561
      %vm568 = vmor %vm566, %vm567
      %v569 = vsel %vm568, %v561, %v565
      %v570 = vand.u32 2147483647, %v445
      %vm571 = vcmp.eq.f32.partialorder %v570, 8.507059e+37
      %v572 = vand.u32 %v445, 2147483648
      %v573 = vor.u32 1.1754944e-38, %v572
      %v574 = vsel %vm571, %v573, %v569
      %v575 = vmul.f32 1.0, %v574
      %v576 = vrcp.pop %v446
      %v577 = vmul.f32 %v446, %v576
      %v578 = vsub.f32 1.0, %v577
      %v579 = vmul.f32 %v576, %v578
      %v580 = vadd.f32 %v576, %v579
      %vm581 = vweird.f32 %v446
      %vm582 = vweird.f32 %v576
      %vm583 = vmor %vm581, %vm582
      %v584 = vsel %vm583, %v576, %v580
      %v585 = vand.u32 2147483647, %v446
      %vm586 = vcmp.eq.f32.partialorder %v585, 8.507059e+37
      %v587 = vand.u32 %v446, 2147483648
      %v588 = vor.u32 1.1754944e-38, %v587
      %v589 = vsel %vm586, %v588, %v584
      %v590 = vmul.f32 1.0, %v589
      %v591 = vrcp.pop %v447
      %v592 = vmul.f32 %v447, %v591
      %v593 = vsub.f32 1.0, %v592
      %v594 = vmul.f32 %v591, %v593
      %v595 = vadd.f32 %v591, %v594
      %vm596 = vweird.f32 %v447
      %vm597 = vweird.f32 %v591
      %vm598 = vmor %vm596, %vm597
      %v599 = vsel %vm598, %v591, %v595
      %v600 = vand.u32 2147483647, %v447
      %vm601 = vcmp.eq.f32.partialorder %v600, 8.507059e+37
      %v602 = vand.u32 %v447, 2147483648
      %v603 = vor.u32 1.1754944e-38, %v602
      %v604 = vsel %vm601, %v603, %v599
      %v605 = vmul.f32 1.0, %v604
      %v606 = vrcp.pop %v448
      %v607 = vmul.f32 %v448, %v606
      %v608 = vsub.f32 1.0, %v607
      %v609 = vmul.f32 %v606, %v608
      %v610 = vadd.f32 %v606, %v609
      %vm611 = vweird.f32 %v448
      %vm612 = vweird.f32 %v606
      %vm613 = vmor %vm611, %vm612
      %v614 = vsel %vm613, %v606, %v610
      %v615 = vand.u32 2147483647, %v448
      %vm616 = vcmp.eq.f32.partialorder %v615, 8.507059e+37
      %v617 = vand.u32 %v448, 2147483648
      %v618 = vor.u32 1.1754944e-38, %v617
      %v619 = vsel %vm616, %v618, %v614
      %v620 = vmul.f32 1.0, %v619
      %v621 = vrcp.pop %v449
      %v622 = vmul.f32 %v449, %v621
      %v623 = vsub.f32 1.0, %v622
      %v624 = vmul.f32 %v621, %v623
      %v625 = vadd.f32 %v621, %v624
      %vm626 = vweird.f32 %v449
      %vm627 = vweird.f32 %v621
      %vm628 = vmor %vm626, %vm627
      %v629 = vsel %vm628, %v621, %v625
      %v630 = vand.u32 2147483647, %v449
      %vm631 = vcmp.eq.f32.partialorder %v630, 8.507059e+37
      %v632 = vand.u32 %v449, 2147483648
      %v633 = vor.u32 1.1754944e-38, %v632
      %v634 = vsel %vm631, %v633, %v629
      %v635 = vmul.f32 1.0, %v634
      %v636 = vrcp.pop %v450
      %v637 = vmul.f32 %v450, %v636
      %v638 = vsub.f32 1.0, %v637
      %v639 = vmul.f32 %v636, %v638
      %v640 = vadd.f32 %v636, %v639
      %vm641 = vweird.f32 %v450
      %vm642 = vweird.f32 %v636
      %vm643 = vmor %vm641, %vm642
      %v644 = vsel %vm643, %v636, %v640
      %v645 = vand.u32 2147483647, %v450
      %vm646 = vcmp.eq.f32.partialorder %v645, 8.507059e+37
      %v647 = vand.u32 %v450, 2147483648
      %v648 = vor.u32 1.1754944e-38, %v647
      %v649 = vsel %vm646, %v648, %v644
      %v650 = vmul.f32 1.0, %v649
      %v651 = vrcp.pop %v451
      %v652 = vmul.f32 %v451, %v651
      %v653 = vsub.f32 1.0, %v652
      %v654 = vmul.f32 %v651, %v653
      %v655 = vadd.f32 %v651, %v654
      %vm656 = vweird.f32 %v451
      %vm657 = vweird.f32 %v651
      %vm658 = vmor %vm656, %vm657
      %v659 = vsel %vm658, %v651, %v655
      %v660 = vand.u32 2147483647, %v451
      %vm661 = vcmp.eq.f32.partialorder %v660, 8.507059e+37
      %v662 = vand.u32 %v451, 2147483648
      %v663 = vor.u32 1.1754944e-38, %v662
      %v664 = vsel %vm661, %v663, %v659
      %v665 = vmul.f32 1.0, %v664
      %v666 = vrcp.pop %v452
      %v667 = vmul.f32 %v452, %v666
      %v668 = vsub.f32 1.0, %v667
      %v669 = vmul.f32 %v666, %v668
      %v670 = vadd.f32 %v666, %v669
      %vm671 = vweird.f32 %v452
      %vm672 = vweird.f32 %v666
      %vm673 = vmor %vm671, %vm672
      %v674 = vsel %vm673, %v666, %v670
      %v675 = vand.u32 2147483647, %v452
      %vm676 = vcmp.eq.f32.partialorder %v675, 8.507059e+37
      %v677 = vand.u32 %v452, 2147483648
      %v678 = vor.u32 1.1754944e-38, %v677
      %v679 = vsel %vm676, %v678, %v674
      %v680 = vmul.f32 1.0, %v679
      %v681 = vrcp.pop %v453
      %v682 = vmul.f32 %v453, %v681
      %v683 = vsub.f32 1.0, %v682
      %v684 = vmul.f32 %v681, %v683
      %v685 = vadd.f32 %v681, %v684
      %vm686 = vweird.f32 %v453
      %vm687 = vweird.f32 %v681
      %vm688 = vmor %vm686, %vm687
      %v689 = vsel %vm688, %v681, %v685
      %v690 = vand.u32 2147483647, %v453
      %vm691 = vcmp.eq.f32.partialorder %v690, 8.507059e+37
      %v692 = vand.u32 %v453, 2147483648
      %v693 = vor.u32 1.1754944e-38, %v692
      %v694 = vsel %vm691, %v693, %v689
      %v695 = vmul.f32 1.0, %v694
      %v696 = vrcp.pop %v454
      %v697 = vmul.f32 %v454, %v696
      %v698 = vsub.f32 1.0, %v697
      %v699 = vmul.f32 %v696, %v698
      %v700 = vadd.f32 %v696, %v699
      %vm701 = vweird.f32 %v454
      %vm702 = vweird.f32 %v696
      %vm703 = vmor %vm701, %vm702
      %v704 = vsel %vm703, %v696, %v700
      %v705 = vand.u32 2147483647, %v454
      %vm706 = vcmp.eq.f32.partialorder %v705, 8.507059e+37
      %v707 = vand.u32 %v454, 2147483648
      %v708 = vor.u32 1.1754944e-38, %v707
      %v709 = vsel %vm706, %v708, %v704
      %v710 = vmul.f32 1.0, %v709
      %v711 = vrcp.pop %v455
      %v712 = vmul.f32 %v455, %v711
      %v713 = vsub.f32 1.0, %v712
      %v714 = vmul.f32 %v711, %v713
      %v715 = vadd.f32 %v711, %v714
      %vm716 = vweird.f32 %v455
      %vm717 = vweird.f32 %v711
      %vm718 = vmor %vm716, %vm717
      %v719 = vsel %vm718, %v711, %v715
      %v720 = vand.u32 2147483647, %v455
      %vm721 = vcmp.eq.f32.partialorder %v720, 8.507059e+37
      %v722 = vand.u32 %v455, 2147483648
      %v723 = vor.u32 1.1754944e-38, %v722
      %v724 = vsel %vm721, %v723, %v719
      %v725 = vmul.f32 1.0, %v724
      %v726 = vrcp.pop %v456
      %v727 = vmul.f32 %v456, %v726
      %v728 = vsub.f32 1.0, %v727
      %v729 = vmul.f32 %v726, %v728
      %v730 = vadd.f32 %v726, %v729
      %vm731 = vweird.f32 %v456
      %vm732 = vweird.f32 %v726
      %vm733 = vmor %vm731, %vm732
      %v734 = vsel %vm733, %v726, %v730
      %v735 = vand.u32 2147483647, %v456
      %vm736 = vcmp.eq.f32.partialorder %v735, 8.507059e+37
      %v737 = vand.u32 %v456, 2147483648
      %v738 = vor.u32 1.1754944e-38, %v737
      %v739 = vsel %vm736, %v738, %v734
      %v740 = vmul.f32 1.0, %v739
      %v741 = vrcp.pop %v457
      %v742 = vmul.f32 %v457, %v741
      %v743 = vsub.f32 1.0, %v742
      %v744 = vmul.f32 %v741, %v743
      %v745 = vadd.f32 %v741, %v744
      %vm746 = vweird.f32 %v457
      %vm747 = vweird.f32 %v741
      %vm748 = vmor %vm746, %vm747
      %v749 = vsel %vm748, %v741, %v745
      %v750 = vand.u32 2147483647, %v457
      %vm751 = vcmp.eq.f32.partialorder %v750, 8.507059e+37
      %v752 = vand.u32 %v457, 2147483648
      %v753 = vor.u32 1.1754944e-38, %v752
      %v754 = vsel %vm751, %v753, %v749
      %v755 = vmul.f32 1.0, %v754
      %v756 = vrcp.pop %v458
      %v757 = vmul.f32 %v458, %v756
      %v758 = vsub.f32 1.0, %v757
      %v759 = vmul.f32 %v756, %v758
      %v760 = vadd.f32 %v756, %v759
      %vm761 = vweird.f32 %v458
      %vm762 = vweird.f32 %v756
      %vm763 = vmor %vm761, %vm762
      %v764 = vsel %vm763, %v756, %v760
      %v765 = vand.u32 2147483647, %v458
      %vm766 = vcmp.eq.f32.partialorder %v765, 8.507059e+37
      %v767 = vand.u32 %v458, 2147483648
      %v768 = vor.u32 1.1754944e-38, %v767
      %v769 = vsel %vm766, %v768, %v764
      %v770 = vmul.f32 1.0, %v769
      %v771 = vrcp.pop %v459
      %v772 = vmul.f32 %v459, %v771
      %v773 = vsub.f32 1.0, %v772
      %v774 = vmul.f32 %v771, %v773
      %v775 = vadd.f32 %v771, %v774
      %vm776 = vweird.f32 %v459
      %vm777 = vweird.f32 %v771
      %vm778 = vmor %vm776, %vm777
      %v779 = vsel %vm778, %v771, %v775
      %v780 = vand.u32 2147483647, %v459
      %vm781 = vcmp.eq.f32.partialorder %v780, 8.507059e+37
      %v782 = vand.u32 %v459, 2147483648
      %v783 = vor.u32 1.1754944e-38, %v782
      %v784 = vsel %vm781, %v783, %v779
      %v785 = vmul.f32 1.0, %v784
      %v786 = vrcp.pop %v460
      %v787 = vmul.f32 %v460, %v786
      %v788 = vsub.f32 1.0, %v787
      %v789 = vmul.f32 %v786, %v788
      %v790 = vadd.f32 %v786, %v789
      %vm791 = vweird.f32 %v460
      %vm792 = vweird.f32 %v786
      %vm793 = vmor %vm791, %vm792
      %v794 = vsel %vm793, %v786, %v790
      %v795 = vand.u32 2147483647, %v460
      %vm796 = vcmp.eq.f32.partialorder %v795, 8.507059e+37
      %v797 = vand.u32 %v460, 2147483648
      %v798 = vor.u32 1.1754944e-38, %v797
      %v799 = vsel %vm796, %v798, %v794
      %v800 = vmul.f32 1.0, %v799
      %v801 = vrcp.pop %v461
      %v802 = vmul.f32 %v461, %v801
      %v803 = vsub.f32 1.0, %v802
      %v804 = vmul.f32 %v801, %v803
      %v805 = vadd.f32 %v801, %v804
      %vm806 = vweird.f32 %v461
      %vm807 = vweird.f32 %v801
      %vm808 = vmor %vm806, %vm807
      %v809 = vsel %vm808, %v801, %v805
      %v810 = vand.u32 2147483647, %v461
      %vm811 = vcmp.eq.f32.partialorder %v810, 8.507059e+37
      %v812 = vand.u32 %v461, 2147483648
      %v813 = vor.u32 1.1754944e-38, %v812
      %v814 = vsel %vm811, %v813, %v809
      %v815 = vmul.f32 1.0, %v814
      %v816 = vrcp.pop %v462
      %v817 = vmul.f32 %v462, %v816
      %v818 = vsub.f32 1.0, %v817
      %v819 = vmul.f32 %v816, %v818
      %v820 = vadd.f32 %v816, %v819
      %vm821 = vweird.f32 %v462
      %vm822 = vweird.f32 %v816
      %vm823 = vmor %vm821, %vm822
      %v824 = vsel %vm823, %v816, %v820
      %v825 = vand.u32 2147483647, %v462
      %vm826 = vcmp.eq.f32.partialorder %v825, 8.507059e+37
      %v827 = vand.u32 %v462, 2147483648
      %v828 = vor.u32 1.1754944e-38, %v827
      %v829 = vsel %vm826, %v828, %v824
      %v830 = vmul.f32 1.0, %v829
      %v831 = vrcp.pop %v463
      %v832 = vmul.f32 %v463, %v831
      %v833 = vsub.f32 1.0, %v832
      %v834 = vmul.f32 %v831, %v833
      %v835 = vadd.f32 %v831, %v834
      %vm836 = vweird.f32 %v463
      %vm837 = vweird.f32 %v831
      %vm838 = vmor %vm836, %vm837
      %v839 = vsel %vm838, %v831, %v835
      %v840 = vand.u32 2147483647, %v463
      %vm841 = vcmp.eq.f32.partialorder %v840, 8.507059e+37
      %v842 = vand.u32 %v463, 2147483648
      %v843 = vor.u32 1.1754944e-38, %v842
      %v844 = vsel %vm841, %v843, %v839
      %v845 = vmul.f32 1.0, %v844
      %v846 = vrcp.pop %v464
      %v847 = vmul.f32 %v464, %v846
      %v848 = vsub.f32 1.0, %v847
      %v849 = vmul.f32 %v846, %v848
      %v850 = vadd.f32 %v846, %v849
      %vm851 = vweird.f32 %v464
      %vm852 = vweird.f32 %v846
      %vm853 = vmor %vm851, %vm852
      %v854 = vsel %vm853, %v846, %v850
      %v855 = vand.u32 2147483647, %v464
      %vm856 = vcmp.eq.f32.partialorder %v855, 8.507059e+37
      %v857 = vand.u32 %v464, 2147483648
      %v858 = vor.u32 1.1754944e-38, %v857
      %v859 = vsel %vm856, %v858, %v854
      %v860 = vmul.f32 1.0, %v859
      %v861 = vrcp.pop %v465
      %v862 = vmul.f32 %v465, %v861
      %v863 = vsub.f32 1.0, %v862
      %v864 = vmul.f32 %v861, %v863
      %v865 = vadd.f32 %v861, %v864
      %vm866 = vweird.f32 %v465
      %vm867 = vweird.f32 %v861
      %vm868 = vmor %vm866, %vm867
      %v869 = vsel %vm868, %v861, %v865
      %v870 = vand.u32 2147483647, %v465
      %vm871 = vcmp.eq.f32.partialorder %v870, 8.507059e+37
      %v872 = vand.u32 %v465, 2147483648
      %v873 = vor.u32 1.1754944e-38, %v872
      %v874 = vsel %vm871, %v873, %v869
      %v875 = vmul.f32 1.0, %v874
      %v876 = vrcp.pop %v466
      %v877 = vmul.f32 %v466, %v876
      %v878 = vsub.f32 1.0, %v877
      %v879 = vmul.f32 %v876, %v878
      %v880 = vadd.f32 %v876, %v879
      %vm881 = vweird.f32 %v466
      %vm882 = vweird.f32 %v876
      %vm883 = vmor %vm881, %vm882
      %v884 = vsel %vm883, %v876, %v880
      %v885 = vand.u32 2147483647, %v466
      %vm886 = vcmp.eq.f32.partialorder %v885, 8.507059e+37
      %v887 = vand.u32 %v466, 2147483648
      %v888 = vor.u32 1.1754944e-38, %v887
      %v889 = vsel %vm886, %v888, %v884
      %v890 = vmul.f32 1.0, %v889
      %v891 = vrcp.pop %v467
      %v892 = vmul.f32 %v467, %v891
      %v893 = vsub.f32 1.0, %v892
      %v894 = vmul.f32 %v891, %v893
      %v895 = vadd.f32 %v891, %v894
      %vm896 = vweird.f32 %v467
      %vm897 = vweird.f32 %v891
      %vm898 = vmor %vm896, %vm897
      %v899 = vsel %vm898, %v891, %v895
      %v900 = vand.u32 2147483647, %v467
      %vm901 = vcmp.eq.f32.partialorder %v900, 8.507059e+37
      %v902 = vand.u32 %v467, 2147483648
      %v903 = vor.u32 1.1754944e-38, %v902
      %v904 = vsel %vm901, %v903, %v899
      %v905 = vmul.f32 1.0, %v904
      %v906 = vrcp.pop %v468
      %v907 = vmul.f32 %v468, %v906
      %v908 = vsub.f32 1.0, %v907
      %v909 = vmul.f32 %v906, %v908
      %v910 = vadd.f32 %v906, %v909
      %vm911 = vweird.f32 %v468
      %vm912 = vweird.f32 %v906
      %vm913 = vmor %vm911, %vm912
      %v914 = vsel %vm913, %v906, %v910
      %v915 = vand.u32 2147483647, %v468
      %vm916 = vcmp.eq.f32.partialorder %v915, 8.507059e+37
      %v917 = vand.u32 %v468, 2147483648
      %v918 = vor.u32 1.1754944e-38, %v917
      %v919 = vsel %vm916, %v918, %v914
      %v920 = vmul.f32 1.0, %v919
      %v921 = vrcp.pop %v469
      %v922 = vmul.f32 %v469, %v921
      %v923 = vsub.f32 1.0, %v922
      %v924 = vmul.f32 %v921, %v923
      %v925 = vadd.f32 %v921, %v924
      %vm926 = vweird.f32 %v469
      %vm927 = vweird.f32 %v921
      %vm928 = vmor %vm926, %vm927
      %v929 = vsel %vm928, %v921, %v925
      %v930 = vand.u32 2147483647, %v469
      %vm931 = vcmp.eq.f32.partialorder %v930, 8.507059e+37
      %v932 = vand.u32 %v469, 2147483648
      %v933 = vor.u32 1.1754944e-38, %v932
      %v934 = vsel %vm931, %v933, %v929
      %v935 = vmul.f32 1.0, %v934
      %v936 = vrcp.pop %v470
      %v937 = vmul.f32 %v470, %v936
      %v938 = vsub.f32 1.0, %v937
      %v939 = vmul.f32 %v936, %v938
      %v940 = vadd.f32 %v936, %v939
      %vm941 = vweird.f32 %v470
      %vm942 = vweird.f32 %v936
      %vm943 = vmor %vm941, %vm942
      %v944 = vsel %vm943, %v936, %v940
      %v945 = vand.u32 2147483647, %v470
      %vm946 = vcmp.eq.f32.partialorder %v945, 8.507059e+37
      %v947 = vand.u32 %v470, 2147483648
      %v948 = vor.u32 1.1754944e-38, %v947
      %v949 = vsel %vm946, %v948, %v944
      %v950 = vmul.f32 1.0, %v949
      %v951 = vmul.f32 %v311, %v485
      %v952 = vmul.f32 %v312, %v500
      %v953 = vmul.f32 %v313, %v515
      %v954 = vmul.f32 %v314, %v530
      %v955 = vmul.f32 %v315, %v545
      %v956 = vmul.f32 %v316, %v560
      %v957 = vmul.f32 %v317, %v575
      %v958 = vmul.f32 %v318, %v590
      %v959 = vmul.f32 %v319, %v605
      %v960 = vmul.f32 %v320, %v620
      %v961 = vmul.f32 %v321, %v635
      %v962 = vmul.f32 %v322, %v650
      %v963 = vmul.f32 %v323, %v665
      %v964 = vmul.f32 %v324, %v680
      %v965 = vmul.f32 %v325, %v695
      %v966 = vmul.f32 %v326, %v710
      %v967 = vmul.f32 %v327, %v725
      %v968 = vmul.f32 %v328, %v740
      %v969 = vmul.f32 %v329, %v755
      %v970 = vmul.f32 %v330, %v770
      %v971 = vmul.f32 %v331, %v785
      %v972 = vmul.f32 %v332, %v800
      %v973 = vmul.f32 %v333, %v815
      %v974 = vmul.f32 %v334, %v830
      %v975 = vmul.f32 %v335, %v845
      %v976 = vmul.f32 %v336, %v860
      %v977 = vmul.f32 %v337, %v875
      %v978 = vmul.f32 %v338, %v890
      %v979 = vmul.f32 %v339, %v905
      %v980 = vmul.f32 %v340, %v920
      %v981 = vmul.f32 %v341, %v935
      %v982 = vmul.f32 %v342, %v950
      %983 = vst [vmem:[%s206] sm:$0xff] %v951
      %984 = vst [vmem:[%s206 + $0x8] sm:$0xff] %v952
      %985 = vst [vmem:[%s206 + $0x10] sm:$0xff] %v953
      %986 = vst [vmem:[%s206 + $0x18] sm:$0xff] %v954
      %987 = vst [vmem:[%s206 + $0x20] sm:$0xff] %v955
      %988 = vst [vmem:[%s206 + $0x28] sm:$0xff] %v956
      %989 = vst [vmem:[%s206 + $0x30] sm:$0xff] %v957
      %990 = vst [vmem:[%s206 + $0x38] sm:$0xff] %v958
      %991 = vst [vmem:[%s206 + $0x40] sm:$0xff] %v959
      %992 = vst [vmem:[%s206 + $0x48] sm:$0xff] %v960
      %993 = vst [vmem:[%s206 + $0x50] sm:$0xff] %v961
      %994 = vst [vmem:[%s206 + $0x58] sm:$0xff] %v962
      %995 = vst [vmem:[%s206 + $0x60] sm:$0xff] %v963
      %996 = vst [vmem:[%s206 + $0x68] sm:$0xff] %v964
      %997 = vst [vmem:[%s206 + $0x70] sm:$0xff] %v965
      %998 = vst [vmem:[%s206 + $0x78] sm:$0xff] %v966
      %999 = vst [vmem:[%s206 + $0x80] sm:$0xff] %v967
      %1000 = vst [vmem:[%s206 + $0x88] sm:$0xff] %v968
      %1001 = vst [vmem:[%s206 + $0x90] sm:$0xff] %v969
      %1002 = vst [vmem:[%s206 + $0x98] sm:$0xff] %v970
      %1003 = vst [vmem:[%s206 + $0xa0] sm:$0xff] %v971
      %1004 = vst [vmem:[%s206 + $0xa8] sm:$0xff] %v972
      %1005 = vst [vmem:[%s206 + $0xb0] sm:$0xff] %v973
      %1006 = vst [vmem:[%s206 + $0xb8] sm:$0xff] %v974
      %1007 = vst [vmem:[%s206 + $0xc0] sm:$0xff] %v975
      %1008 = vst [vmem:[%s206 + $0xc8] sm:$0xff] %v976
      %1009 = vst [vmem:[%s206 + $0xd0] sm:$0xff] %v977
      %1010 = vst [vmem:[%s206 + $0xd8] sm:$0xff] %v978
      %1011 = vst [vmem:[%s206 + $0xe0] sm:$0xff] %v979
      %1012 = vst [vmem:[%s206 + $0xe8] sm:$0xff] %v980
      %1013 = vst [vmem:[%s206 + $0xf0] sm:$0xff] %v981
      %1014 = vst [vmem:[%s206 + $0xf8] sm:$0xff] %v982
      %p1015 = scmp.lt.s32.totalorder %s18, 1
      %s1016 = scalar_select %p1015, %s18, 1
      %p1017 = scmp.lt.s32.totalorder %s19, 0
      %s1018 = scalar_select %p1017, %s19, 0
      %s1019 = smul.addr %s1018, 32
      %s1020 = smul.addr %s1016, 32
      %s1021 = sadd.s32 %s1019, %s1020
      %s1022 = smul.addr %s1021, 8
      %s1023 = scalar_lea.vmem %s3, %s1022
      // Predicated region
      $region33: #{base_conv_forward.3} parent=31 // pred_check
        %p1024 = pneg %p116
      $region34: #{base_conv_forward.3} parent=31 // pred_check_branch
        %1026 = sbr.rel (%p1024) target = $region36
      $region35: #{base_conv_forward.3} parent=31 // pred_region
        _
      $region36: #{base_conv_forward.3} parent=31 // pred_fallthru
        _
    $region32: #{base_conv_forward.3} parent=5 // pred_fallthru
      _
    %p1027 = scmp.le.s32.totalorder 2, %s9
    // Predicated region
    $region37: #{base_conv_forward.3} parent=5 // pred_check
      %p1028 = pneg %p1027
    $region38: #{base_conv_forward.3} parent=5 // pred_check_branch
      %1030 = sbr.rel (%p1028) target = $region40
    $region39: #{base_conv_forward.3} parent=5 // pred_region
      %s1031 = ssub.s32 %s9, 2
      // Predicated region
      $region41: #{base_conv_forward.3} parent=39 // pred_check
        %p1032 = pneg %p122
      $region42: #{base_conv_forward.3} parent=39 // pred_check_branch
        %1034 = sbr.rel (%p1032) target = $region44
      $region43: #{base_conv_forward.3} parent=39 // pred_region
        %p1035 = scmp.lt.s32.totalorder %s20, 1
        %s1036 = scalar_select %p1035, %s20, 1
        %p1037 = scmp.lt.s32.totalorder %s21, 0
        %s1038 = scalar_select %p1037, %s21, 0
        %s1039 = smul.addr %s1038, 32
        %s1040 = smul.addr %s1036, 32
        %s1041 = sadd.s32 %s1039, %s1040
        %s1042 = smul.addr %s1041, 8
        %s1043 = scalar_lea.vmem %s3, %s1042
      $region44: #{base_conv_forward.3} parent=39 // pred_fallthru
        _
    $region40: #{base_conv_forward.3} parent=5 // pred_fallthru
      _
  $region6: #{base_conv_forward.3} parent=0 // loop_footer
    %s13 = sadd.s32 1, %s9
  $region7: #{base_conv_forward.3} parent=0 // loop_footer_branch
    %8 = sbr.rel target = $region3
  $region8: #{base_conv_forward.3} parent=0 // loop_exit
    _

// kernel: base_conv_forward.2
$region0: #{base_conv_forward.2}
  #allocation0 [shape = 'u32[]', space=smem, size = 0x4, offset = 0x4, fixed_abs, tag = 'smem constant byte address 0x4 - core index']
  #allocation1 [shape = 'u32[72,128]{1,0:T(1,128)}', space=vmem, size = 0x9000, scoped, tag = 'internal scratch']
  %s0 = inlined_call_operand.vmem [shape: bf16[2,1,18,18,4], index: 0, kind: input, shape index: {}]
  %s1 = inlined_call_operand.vmem [shape: bf16[9,4,128], index: 1, kind: input, shape index: {}]
  %s2 = inlined_call_operand.vmem [shape: bf16[2,1,256,128], index: 2, kind: output, shape index: {0}]
  %s3 = inlined_call_operand.vmem [shape: f32[2,1,8,128], index: 3, kind: output, shape index: {1}]
  %4 = xla_tuple %s2, %s3
  %s5 = sld [smem:[#allocation0]]
  $region49: #{base_conv_forward.2} parent=0
    _
  %s7 = ssub.s32 1, %s5
  %s8 = scalar_select 0, %s7, %s5
  loop: start=0, step=1, limit=4
  $region2: #{base_conv_forward.2} parent=0 // loop_pre_header
    _
  $region3: #{base_conv_forward.2} parent=0 // loop_header
    %s10 = sphi 0, %s14
    %p11 = scmp.ge.s32.totalorder %s10, 4
    %s17 = sphi 0, %s29
    %s18 = sphi 0, %s25
    %s19 = sphi 0, %s17
    %s20 = sphi 0, %s18
    %s21 = sphi 0, %s19
    %s22 = sphi 0, %s20
    %s34 = sphi 0, %s36
    %s37 = sphi 0, %s34
    %s38 = sphi 0, %s37
    %s54 = sphi 0, %s38
    %s58 = sphi 0, %s58
    %s60 = sphi 0, %s58
    %s61 = sphi 0, %s60
    %s75 = sphi 0, %s61
    %s83 = sphi 0, %s85
    %s86 = sphi 0, %s83
    %s87 = sphi 0, %s86
    %s103 = sphi 0, %s87
    %s111 = sphi 0, %s113
    %s114 = sphi 0, %s111
    %s115 = sphi 0, %s114
    %s131 = sphi 0, %s115
  $region4: #{base_conv_forward.2} parent=0 // loop_header_branch
    %13 = sbr.rel (%p11) target = $region8
  $region5: #{base_conv_forward.2} parent=0 // loop_body
    %s15 = ssub.s32 %s10, 1
    %s16 = ssub.s32 %s10, 2
    %s23 = sadd.s32 1, %s18
    %p24 = scmp.ge.s32.totalorder %s23, 1
    %s25 = scalar_select %p24, 0, %s23
    %s26 = sadd.s32 1, %s17
    %s27 = scalar_select %p24, %s26, %s17
    %p28 = scmp.ge.s32.totalorder %s27, 2
    %s29 = scalar_select %p28, 0, %s27
    %s30 = ssub.s32 %s17, %s29
    %s31 = ssub.s32 %s18, %s25
    %s32 = sor.u32 %s30, %s31
    %p33 = scmp.eq.s32.totalorder %s32, 0
    %s35 = sadd.s32 %s34, 1
    %s36 = scalar_select %p33, %s34, %s35
    %p39 = pneg %p33
    %p40 = scmp.eq.s32.totalorder %s10, 1
    %p41 = por %p39, %p40
    %p42 = scmp.ne.s32.totalorder %s34, %s37
    %p43 = scmp.eq.s32.totalorder %s10, 0
    %p44 = por %p42, %p43
    %p45 = scmp.ne.s32.totalorder %s34, %s37
    %p46 = scmp.eq.s32.totalorder %s15, 1
    %p47 = por %p45, %p46
    %p48 = scmp.ne.s32.totalorder %s37, %s38
    %p49 = scmp.eq.s32.totalorder %s15, 0
    %p50 = por %p48, %p49
    %p51 = scmp.ne.s32.totalorder %s37, %s38
    %p52 = scmp.eq.s32.totalorder %s16, 1
    %p53 = por %p51, %p52
    %p55 = scmp.ne.s32.totalorder %s38, %s54
    %p56 = scmp.eq.s32.totalorder %s16, 0
    %p57 = por %p55, %p56
    %s59 = sadd.s32 %s58, 1
    %p62 = scmp.eq.s32.totalorder %s10, 1
    %p63 = scmp.ne.s32.totalorder %s58, %s60
    %p64 = scmp.eq.s32.totalorder %s10, 0
    %p65 = por %p63, %p64
    %p66 = scmp.ne.s32.totalorder %s58, %s60
    %p67 = scmp.eq.s32.totalorder %s15, 1
    %p68 = por %p66, %p67
    %p69 = scmp.ne.s32.totalorder %s60, %s61
    %p70 = scmp.eq.s32.totalorder %s15, 0
    %p71 = por %p69, %p70
    %p72 = scmp.ne.s32.totalorder %s60, %s61
    %p73 = scmp.eq.s32.totalorder %s16, 1
    %p74 = por %p72, %p73
    %p76 = scmp.ne.s32.totalorder %s61, %s75
    %p77 = scmp.eq.s32.totalorder %s16, 0
    %p78 = por %p76, %p77
    %s79 = ssub.s32 %s17, %s29
    %s80 = ssub.s32 %s18, %s25
    %s81 = sor.u32 %s79, %s80
    %p82 = scmp.eq.s32.totalorder %s81, 0
    %s84 = sadd.s32 %s83, 1
    %s85 = scalar_select %p82, %s83, %s84
    %p88 = pneg %p82
    %p89 = scmp.eq.s32.totalorder %s10, 1
    %p90 = por %p88, %p89
    %p91 = scmp.ne.s32.totalorder %s83, %s86
    %p92 = scmp.eq.s32.totalorder %s10, 0
    %p93 = por %p91, %p92
    %p94 = scmp.ne.s32.totalorder %s83, %s86
    %p95 = scmp.eq.s32.totalorder %s15, 1
    %p96 = por %p94, %p95
    %p97 = scmp.ne.s32.totalorder %s86, %s87
    %p98 = scmp.eq.s32.totalorder %s15, 0
    %p99 = por %p97, %p98
    %p100 = scmp.ne.s32.totalorder %s86, %s87
    %p101 = scmp.eq.s32.totalorder %s16, 1
    %p102 = por %p100, %p101
    %p104 = scmp.ne.s32.totalorder %s87, %s103
    %p105 = scmp.eq.s32.totalorder %s16, 0
    %p106 = por %p104, %p105
    %s107 = ssub.s32 %s17, %s29
    %s108 = ssub.s32 %s18, %s25
    %s109 = sor.u32 %s107, %s108
    %p110 = scmp.eq.s32.totalorder %s109, 0
    %s112 = sadd.s32 %s111, 1
    %s113 = scalar_select %p110, %s111, %s112
    %p116 = pneg %p110
    %p117 = scmp.eq.s32.totalorder %s10, 1
    %p118 = por %p116, %p117
    %p119 = scmp.ne.s32.totalorder %s111, %s114
    %p120 = scmp.eq.s32.totalorder %s10, 0
    %p121 = por %p119, %p120
    %p122 = scmp.ne.s32.totalorder %s111, %s114
    %p123 = scmp.eq.s32.totalorder %s15, 1
    %p124 = por %p122, %p123
    %p125 = scmp.ne.s32.totalorder %s114, %s115
    %p126 = scmp.eq.s32.totalorder %s15, 0
    %p127 = por %p125, %p126
    %p128 = scmp.ne.s32.totalorder %s114, %s115
    %p129 = scmp.eq.s32.totalorder %s16, 1
    %p130 = por %p128, %p129
    %p132 = scmp.ne.s32.totalorder %s115, %s131
    %p133 = scmp.eq.s32.totalorder %s16, 0
    %p134 = por %p132, %p133
    %p135 = scmp.le.s32.totalorder 1, %s10
    %p136 = scmp.lt.s32.totalorder %s10, 3
    %p137 = pnand %p135, %p136
    %p138 = pneg %p137
    // Predicated region
    $region9: #{base_conv_forward.2} parent=5 // pred_check
      _
    $region10: #{base_conv_forward.2} parent=5 // pred_check_branch
      %140 = sbr.rel (%p137) target = $region12
    $region11: #{base_conv_forward.2} parent=5 // pred_region
      %s141 = ssub.s32 %s10, 1
      // Predicated region
      $region13: #{base_conv_forward.2} parent=11 // pred_check
        %p142 = pneg %p71
      $region14: #{base_conv_forward.2} parent=11 // pred_check_branch
        %144 = sbr.rel (%p142) target = $region16
      $region15: #{base_conv_forward.2} parent=11 // pred_region
        _
      $region16: #{base_conv_forward.2} parent=11 // pred_fallthru
        _
    $region12: #{base_conv_forward.2} parent=5 // pred_fallthru
      _
    %p145 = scmp.lt.s32.totalorder %s10, 2
    // Predicated region
    $region17: #{base_conv_forward.2} parent=5 // pred_check
      %p146 = pneg %p145
    $region18: #{base_conv_forward.2} parent=5 // pred_check_branch
      %148 = sbr.rel (%p146) target = $region20
    $region19: #{base_conv_forward.2} parent=5 // pred_region
      // Predicated region
      $region21: #{base_conv_forward.2} parent=19 // pred_check
        %p149 = pneg %p44
      $region22: #{base_conv_forward.2} parent=19 // pred_check_branch
        %151 = sbr.rel (%p149) target = $region24
      $region23: #{base_conv_forward.2} parent=19 // pred_region
        %p152 = scmp.lt.s32.totalorder %s17, 1
        %s153 = scalar_select %p152, %s17, 1
        %p154 = scmp.lt.s32.totalorder %s18, 0
        %s155 = scalar_select %p154, %s18, 0
        %s156 = smul.addr %s155, 54
        %s157 = smul.addr %s153, 54
        %s158 = sadd.s32 %s156, %s157
        %s159 = smul.addr %s158, 4
        %s160 = scalar_lea.vmem %s0, %s159
      $region24: #{base_conv_forward.2} parent=19 // pred_fallthru
        _
    $region20: #{base_conv_forward.2} parent=5 // pred_fallthru
      _
    %p161 = scmp.le.s32.totalorder 1, %s10
    %p162 = scmp.lt.s32.totalorder %s10, 3
    %p163 = pnand %p161, %p162
    %p164 = pneg %p163
    // Predicated region
    $region25: #{base_conv_forward.2} parent=5 // pred_check
      _
    $region26: #{base_conv_forward.2} parent=5 // pred_check_branch
      %166 = sbr.rel (%p163) target = $region28
    $region27: #{base_conv_forward.2} parent=5 // pred_region
      %s167 = ssub.s32 %s10, 1
      %p168 = scmp.lt.s32.totalorder %s19, 1
      %s169 = scalar_select %p168, %s19, 1
      %p170 = scmp.lt.s32.totalorder %s20, 0
      %s171 = scalar_select %p170, %s20, 0
      %s172 = smul.addr %s171, 54
      %s173 = smul.addr %s169, 54
      %s174 = sadd.s32 %s172, %s173
      %s175 = smul.addr %s174, 4
      %s176 = scalar_lea.vmem %s0, %s175
      %p177 = pneg %p50
      %p178 = pneg %p47
      %p179 = pneg %p71
      %p180 = pneg %p68
      %p181 = pneg %p99
      %p182 = pneg %p96
      %p183 = scmp.lt.s32.totalorder %s19, 1
      %s184 = scalar_select %p183, %s19, 1
      %p185 = scmp.lt.s32.totalorder %s20, 0
      %s186 = scalar_select %p185, %s20, 0
      %s187 = smul.addr %s186, 32
      %s188 = smul.addr %s184, 32
      %s189 = sadd.s32 %s187, %s188
      %s190 = smul.addr %s189, 4
      %s191 = scalar_lea.vmem %s2, %s190
      %p192 = pneg %p127
      %p193 = pneg %p124
      %p194 = scmp.lt.s32.totalorder %s19, 1
      %s195 = scalar_select %p194, %s19, 1
      %p196 = scmp.lt.s32.totalorder %s20, 0
      %s197 = scalar_select %p196, %s20, 0
      %s198 = sadd.s32 %s197, %s195
      %s199 = smul.addr %s198, 8
      %s200 = scalar_lea.vmem %s3, %s199
      %p201 = scmp.lt.s32.totalorder %s19, 1
      %s202 = scalar_select %p201, %s19, 1
      %p203 = scmp.lt.s32.totalorder %s20, 0
      %s204 = scalar_select %p203, %s20, 0
      %s205 = smul.addr %s204, 54
      %s206 = smul.addr %s202, 54
      %s207 = sadd.s32 %s205, %s206
      %s208 = smul.addr %s207, 4
      %s209 = scalar_lea.vmem %s0, %s208
      %p210 = scmp.lt.s32.totalorder %s19, 1
      %s211 = scalar_select %p210, %s19, 1
      %p212 = scmp.lt.s32.totalorder %s20, 0
      %s213 = scalar_select %p212, %s20, 0
      %s214 = smul.addr %s213, 32
      %s215 = smul.addr %s211, 32
      %s216 = sadd.s32 %s214, %s215
      %s217 = smul.addr %s216, 4
      %s218 = scalar_lea.vmem %s2, %s217
      %p219 = scmp.lt.s32.totalorder %s19, 1
      %s220 = scalar_select %p219, %s19, 1
      %p221 = scmp.lt.s32.totalorder %s20, 0
      %s222 = scalar_select %p221, %s20, 0
      %s223 = sadd.s32 %s222, %s220
      %s224 = smul.addr %s223, 8
      %s225 = scalar_lea.vmem %s3, %s224
      %v227 = vld [vmem:[%s209] sm:$0xf]
      %v228 = vld [vmem:[%s209 + $0x4] sm:$0xf]
      %v229 = vld [vmem:[%s209 + $0x8] sm:$0x1]
      %v230 = vld [vmem:[%s209 + $0xc] sm:$0xf]
      %v231 = vld [vmem:[%s209 + $0x10] sm:$0xf]
      %v232 = vld [vmem:[%s209 + $0x14] sm:$0x1]
      %v233 = vld [vmem:[%s209 + $0x18] sm:$0xf]
      %v234 = vld [vmem:[%s209 + $0x1c] sm:$0xf]
      %v235 = vld [vmem:[%s209 + $0x20] sm:$0x1]
      %v236 = vld [vmem:[%s209 + $0x24] sm:$0xf]
      %v237 = vld [vmem:[%s209 + $0x28] sm:$0xf]
      %v238 = vld [vmem:[%s209 + $0x2c] sm:$0x1]
      %v239 = vld [vmem:[%s209 + $0x30] sm:$0xf]
      %v240 = vld [vmem:[%s209 + $0x34] sm:$0xf]
      %v241 = vld [vmem:[%s209 + $0x38] sm:$0x1]
      %v242 = vld [vmem:[%s209 + $0x3c] sm:$0xf]
      %v243 = vld [vmem:[%s209 + $0x40] sm:$0xf]
      %v244 = vld [vmem:[%s209 + $0x44] sm:$0x1]
      %v245 = vld [vmem:[%s209 + $0x48] sm:$0xf]
      %v246 = vld [vmem:[%s209 + $0x4c] sm:$0xf]
      %v247 = vld [vmem:[%s209 + $0x50] sm:$0x1]
      %v248 = vld [vmem:[%s209 + $0x54] sm:$0xf]
      %v249 = vld [vmem:[%s209 + $0x58] sm:$0xf]
      %v250 = vld [vmem:[%s209 + $0x5c] sm:$0x1]
      %v251 = vld [vmem:[%s209 + $0x60] sm:$0xf]
      %v252 = vld [vmem:[%s209 + $0x64] sm:$0xf]
      %v253 = vld [vmem:[%s209 + $0x68] sm:$0x1]
      %v254 = vld [vmem:[%s209 + $0x6c] sm:$0xf]
      %v255 = vld [vmem:[%s209 + $0x70] sm:$0xf]
      %v256 = vld [vmem:[%s209 + $0x74] sm:$0x1]
      %v257 = vld [vmem:[%s209 + $0x78] sm:$0xf]
      %v258 = vld [vmem:[%s209 + $0x7c] sm:$0xf]
      %v259 = vld [vmem:[%s209 + $0x80] sm:$0x1]
      %v260 = vld [vmem:[%s209 + $0x84] sm:$0xf]
      %v261 = vld [vmem:[%s209 + $0x88] sm:$0xf]
      %v262 = vld [vmem:[%s209 + $0x8c] sm:$0x1]
      %v263 = vld [vmem:[%s209 + $0x90] sm:$0xf]
      %v264 = vld [vmem:[%s209 + $0x94] sm:$0xf]
      %v265 = vld [vmem:[%s209 + $0x98] sm:$0x1]
      %v266 = vld [vmem:[%s209 + $0x9c] sm:$0xf]
      %v267 = vld [vmem:[%s209 + $0xa0] sm:$0xf]
      %v268 = vld [vmem:[%s209 + $0xa4] sm:$0x1]
      %v269 = vld [vmem:[%s209 + $0xa8] sm:$0xf]
      %v270 = vld [vmem:[%s209 + $0xac] sm:$0xf]
      %v271 = vld [vmem:[%s209 + $0xb0] sm:$0x1]
      %v272 = vld [vmem:[%s209 + $0xb4] sm:$0xf]
      %v273 = vld [vmem:[%s209 + $0xb8] sm:$0xf]
      %v274 = vld [vmem:[%s209 + $0xbc] sm:$0x1]
      %v275 = vld [vmem:[%s209 + $0xc0] sm:$0xf]
      %v276 = vld [vmem:[%s209 + $0xc4] sm:$0xf]
      %v277 = vld [vmem:[%s209 + $0xc8] sm:$0x1]
      %v278 = vld [vmem:[%s209 + $0xcc] sm:$0xf]
      %v279 = vld [vmem:[%s209 + $0xd0] sm:$0xf]
      %v280 = vld [vmem:[%s209 + $0xd4] sm:$0x1]
      %v281 = vld [vmem:[%s1] sm:$0x3]
      %vm282 = vsmask.f32 3328
      %vm283 = vsmask.f32 7440
      %vm284 = vmor %vm282, %vm283
      %v286 = vshrl.u32 %v227, 16
      %v288 = vrot.slane %v286, 4
      %v289 = vshll.u32 %v227, 16
      %v291 = vrot.slane %v289, 5
      %v292 = vor.u32 %v288, %v291
      %v293 = vrot.slane %v292, 4
      %v295 = vshll.u32 %v228, 16
      %v297 = vrot.slane %v295, 5
      %v298 = vsel %vm284, %v293, %v297
      %v299 = vshrl.u32 %v228, 16
      %v301 = vrot.slane %v299, 4
      %v302 = vor.u32 %v301, %v297
      %v303 = vrot.slane %v302, 4
      %v305 = vshll.u32 %v229, 16
      %v307 = vrot.slane %v305, 5
      %v308 = vsel %vm284, %v303, %v307
      %v310 = vshrl.u32 %v230, 16
      %v312 = vrot.slane %v310, 4
      %v313 = vshll.u32 %v230, 16
      %v315 = vrot.slane %v313, 5
      %v316 = vor.u32 %v312, %v315
      %v317 = vrot.slane %v316, 4
      %v319 = vshll.u32 %v231, 16
      %v321 = vrot.slane %v319, 5
      %v322 = vsel %vm284, %v317, %v321
      %v323 = vshrl.u32 %v231, 16
      %v325 = vrot.slane %v323, 4
      %v326 = vor.u32 %v325, %v321
      %v327 = vrot.slane %v326, 4
      %v329 = vshll.u32 %v232, 16
      %v331 = vrot.slane %v329, 5
      %v332 = vsel %vm284, %v327, %v331
      %v334 = vshrl.u32 %v233, 16
      %v336 = vrot.slane %v334, 4
      %v337 = vshll.u32 %v233, 16
      %v339 = vrot.slane %v337, 5
      %v340 = vor.u32 %v336, %v339
      %v341 = vrot.slane %v340, 4
      %v343 = vshll.u32 %v234, 16
      %v345 = vrot.slane %v343, 5
      %v346 = vsel %vm284, %v341, %v345
      %v347 = vshrl.u32 %v234, 16
      %v349 = vrot.slane %v347, 4
      %v350 = vor.u32 %v349, %v345
      %v351 = vrot.slane %v350, 4
      %v353 = vshll.u32 %v235, 16
      %v355 = vrot.slane %v353, 5
      %v356 = vsel %vm284, %v351, %v355
      %v358 = vshrl.u32 %v236, 16
      %v360 = vrot.slane %v358, 4
      %v361 = vshll.u32 %v236, 16
      %v363 = vrot.slane %v361, 5
      %v364 = vor.u32 %v360, %v363
      %v365 = vrot.slane %v364, 4
      %v367 = vshll.u32 %v237, 16
      %v369 = vrot.slane %v367, 5
      %v370 = vsel %vm284, %v365, %v369
      %v371 = vshrl.u32 %v237, 16
      %v373 = vrot.slane %v371, 4
      %v374 = vor.u32 %v373, %v369
      %v375 = vrot.slane %v374, 4
      %v377 = vshll.u32 %v238, 16
      %v379 = vrot.slane %v377, 5
      %v380 = vsel %vm284, %v375, %v379
      %v382 = vshrl.u32 %v239, 16
      %v384 = vrot.slane %v382, 4
      %v385 = vshll.u32 %v239, 16
      %v387 = vrot.slane %v385, 5
      %v388 = vor.u32 %v384, %v387
      %v389 = vrot.slane %v388, 4
      %v391 = vshll.u32 %v240, 16
      %v393 = vrot.slane %v391, 5
      %v394 = vsel %vm284, %v389, %v393
      %v395 = vshrl.u32 %v240, 16
      %v397 = vrot.slane %v395, 4
      %v398 = vor.u32 %v397, %v393
      %v399 = vrot.slane %v398, 4
      %v401 = vshll.u32 %v241, 16
      %v403 = vrot.slane %v401, 5
      %v404 = vsel %vm284, %v399, %v403
      %v406 = vshrl.u32 %v242, 16
      %v408 = vrot.slane %v406, 4
      %v409 = vshll.u32 %v242, 16
      %v411 = vrot.slane %v409, 5
      %v412 = vor.u32 %v408, %v411
      %v413 = vrot.slane %v412, 4
      %v415 = vshll.u32 %v243, 16
      %v417 = vrot.slane %v415, 5
      %v418 = vsel %vm284, %v413, %v417
      %v419 = vshrl.u32 %v243, 16
      %v421 = vrot.slane %v419, 4
      %v422 = vor.u32 %v421, %v417
      %v423 = vrot.slane %v422, 4
      %v425 = vshll.u32 %v244, 16
      %v427 = vrot.slane %v425, 5
      %v428 = vsel %vm284, %v423, %v427
      %v430 = vshrl.u32 %v245, 16
      %v432 = vrot.slane %v430, 4
      %v433 = vshll.u32 %v245, 16
      %v435 = vrot.slane %v433, 5
      %v436 = vor.u32 %v432, %v435
      %v437 = vrot.slane %v436, 4
      %v439 = vshll.u32 %v246, 16
      %v441 = vrot.slane %v439, 5
      %v442 = vsel %vm284, %v437, %v441
      %v443 = vshrl.u32 %v246, 16
      %v445 = vrot.slane %v443, 4
      %v446 = vor.u32 %v445, %v441
      %v447 = vrot.slane %v446, 4
      %v449 = vshll.u32 %v247, 16
      %v451 = vrot.slane %v449, 5
      %v452 = vsel %vm284, %v447, %v451
      %v454 = vshrl.u32 %v248, 16
      %v456 = vrot.slane %v454, 4
      %v457 = vshll.u32 %v248, 16
      %v459 = vrot.slane %v457, 5
      %v460 = vor.u32 %v456, %v459
      %v461 = vrot.slane %v460, 4
      %v463 = vshll.u32 %v249, 16
      %v465 = vrot.slane %v463, 5
      %v466 = vsel %vm284, %v461, %v465
      %v467 = vshrl.u32 %v249, 16
      %v469 = vrot.slane %v467, 4
      %v470 = vor.u32 %v469, %v465
      %v471 = vrot.slane %v470, 4
      %v473 = vshll.u32 %v250, 16
      %v475 = vrot.slane %v473, 5
      %v476 = vsel %vm284, %v471, %v475
      %v478 = vshrl.u32 %v251, 16
      %v480 = vrot.slane %v478, 4
      %v481 = vshll.u32 %v251, 16
      %v483 = vrot.slane %v481, 5
      %v484 = vor.u32 %v480, %v483
      %v485 = vrot.slane %v484, 4
      %v487 = vshll.u32 %v252, 16
      %v489 = vrot.slane %v487, 5
      %v490 = vsel %vm284, %v485, %v489
      %v491 = vshrl.u32 %v252, 16
      %v493 = vrot.slane %v491, 4
      %v494 = vor.u32 %v493, %v489
      %v495 = vrot.slane %v494, 4
      %v497 = vshll.u32 %v253, 16
      %v499 = vrot.slane %v497, 5
      %v500 = vsel %vm284, %v495, %v499
      %v502 = vshrl.u32 %v254, 16
      %v504 = vrot.slane %v502, 4
      %v505 = vshll.u32 %v254, 16
      %v507 = vrot.slane %v505, 5
      %v508 = vor.u32 %v504, %v507
      %v509 = vrot.slane %v508, 4
      %v511 = vshll.u32 %v255, 16
      %v513 = vrot.slane %v511, 5
      %v514 = vsel %vm284, %v509, %v513
      %v515 = vshrl.u32 %v255, 16
      %v517 = vrot.slane %v515, 4
      %v518 = vor.u32 %v517, %v513
      %v519 = vrot.slane %v518, 4
      %v521 = vshll.u32 %v256, 16
      %v523 = vrot.slane %v521, 5
      %v524 = vsel %vm284, %v519, %v523
      %v526 = vshrl.u32 %v257, 16
      %v528 = vrot.slane %v526, 4
      %v529 = vshll.u32 %v257, 16
      %v531 = vrot.slane %v529, 5
      %v532 = vor.u32 %v528, %v531
      %v533 = vrot.slane %v532, 4
      %v535 = vshll.u32 %v258, 16
      %v537 = vrot.slane %v535, 5
      %v538 = vsel %vm284, %v533, %v537
      %v539 = vshrl.u32 %v258, 16
      %v541 = vrot.slane %v539, 4
      %v542 = vor.u32 %v541, %v537
      %v543 = vrot.slane %v542, 4
      %v545 = vshll.u32 %v259, 16
      %v547 = vrot.slane %v545, 5
      %v548 = vsel %vm284, %v543, %v547
      %v550 = vshrl.u32 %v260, 16
      %v552 = vrot.slane %v550, 4
      %v553 = vshll.u32 %v260, 16
      %v555 = vrot.slane %v553, 5
      %v556 = vor.u32 %v552, %v555
      %v557 = vrot.slane %v556, 4
      %v559 = vshll.u32 %v261, 16
      %v561 = vrot.slane %v559, 5
      %v562 = vsel %vm284, %v557, %v561
      %v563 = vshrl.u32 %v261, 16
      %v565 = vrot.slane %v563, 4
      %v566 = vor.u32 %v565, %v561
      %v567 = vrot.slane %v566, 4
      %v569 = vshll.u32 %v262, 16
      %v571 = vrot.slane %v569, 5
      %v572 = vsel %vm284, %v567, %v571
      %v574 = vshrl.u32 %v263, 16
      %v576 = vrot.slane %v574, 4
      %v577 = vshll.u32 %v263, 16
      %v579 = vrot.slane %v577, 5
      %v580 = vor.u32 %v576, %v579
      %v581 = vrot.slane %v580, 4
      %v583 = vshll.u32 %v264, 16
      %v585 = vrot.slane %v583, 5
      %v586 = vsel %vm284, %v581, %v585
      %v587 = vshrl.u32 %v264, 16
      %v589 = vrot.slane %v587, 4
      %v590 = vor.u32 %v589, %v585
      %v591 = vrot.slane %v590, 4
      %v593 = vshll.u32 %v265, 16
      %v595 = vrot.slane %v593, 5
      %v596 = vsel %vm284, %v591, %v595
      %v598 = vshrl.u32 %v266, 16
      %v600 = vrot.slane %v598, 4
      %v601 = vshll.u32 %v266, 16
      %v603 = vrot.slane %v601, 5
      %v604 = vor.u32 %v600, %v603
      %v605 = vrot.slane %v604, 4
      %v607 = vshll.u32 %v267, 16
      %v609 = vrot.slane %v607, 5
      %v610 = vsel %vm284, %v605, %v609
      %v611 = vshrl.u32 %v267, 16
      %v613 = vrot.slane %v611, 4
      %v614 = vor.u32 %v613, %v609
      %v615 = vrot.slane %v614, 4
      %v617 = vshll.u32 %v268, 16
      %v619 = vrot.slane %v617, 5
      %v620 = vsel %vm284, %v615, %v619
      %v622 = vshrl.u32 %v269, 16
      %v624 = vrot.slane %v622, 4
      %v625 = vshll.u32 %v269, 16
      %v627 = vrot.slane %v625, 5
      %v628 = vor.u32 %v624, %v627
      %v629 = vrot.slane %v628, 4
      %v631 = vshll.u32 %v270, 16
      %v633 = vrot.slane %v631, 5
      %v634 = vsel %vm284, %v629, %v633
      %v635 = vshrl.u32 %v270, 16
      %v637 = vrot.slane %v635, 4
      %v638 = vor.u32 %v637, %v633
      %v639 = vrot.slane %v638, 4
      %v641 = vshll.u32 %v271, 16
      %v643 = vrot.slane %v641, 5
      %v644 = vsel %vm284, %v639, %v643
      %v646 = vshrl.u32 %v272, 16
      %v648 = vrot.slane %v646, 4
      %v649 = vshll.u32 %v272, 16
      %v651 = vrot.slane %v649, 5
      %v652 = vor.u32 %v648, %v651
      %v653 = vrot.slane %v652, 4
      %v655 = vshll.u32 %v273, 16
      %v657 = vrot.slane %v655, 5
      %v658 = vsel %vm284, %v653, %v657
      %v659 = vshrl.u32 %v273, 16
      %v661 = vrot.slane %v659, 4
      %v662 = vor.u32 %v661, %v657
      %v663 = vrot.slane %v662, 4
      %v665 = vshll.u32 %v274, 16
      %v667 = vrot.slane %v665, 5
      %v668 = vsel %vm284, %v663, %v667
      %s669 = scalar_lea.vmem %s1, 2
      %v670 = vld [vmem:[%s669] sm:$0x3]
      %v671 = vunpack.c.l.b16 %v298
      %v672 = vunpack.c.l.b16 %v308
      %v673 = vunpack.c.l.b16 %v322
      %v674 = vunpack.c.l.b16 %v332
      %v675 = vunpack.c.l.b16 %v346
      %v676 = vunpack.c.l.b16 %v356
      %v677 = vunpack.c.l.b16 %v370
      %v678 = vunpack.c.l.b16 %v380
      %v679 = vunpack.c.l.b16 %v394
      %v680 = vunpack.c.l.b16 %v404
      %v681 = vunpack.c.l.b16 %v418
      %v682 = vunpack.c.l.b16 %v428
      %v683 = vunpack.c.l.b16 %v442
      %v684 = vunpack.c.l.b16 %v452
      %v685 = vunpack.c.l.b16 %v466
      %v686 = vunpack.c.l.b16 %v476
      %v687 = vunpack.c.l.b16 %v490
      %v688 = vunpack.c.l.b16 %v500
      %v689 = vunpack.c.l.b16 %v514
      %v690 = vunpack.c.l.b16 %v524
      %v691 = vunpack.c.l.b16 %v538
      %v692 = vunpack.c.l.b16 %v548
      %v693 = vunpack.c.l.b16 %v562
      %v694 = vunpack.c.l.b16 %v572
      %v695 = vunpack.c.l.b16 %v586
      %v696 = vunpack.c.l.b16 %v596
      %v697 = vunpack.c.l.b16 %v610
      %v698 = vunpack.c.l.b16 %v620
      %v699 = vunpack.c.l.b16 %v634
      %v700 = vunpack.c.l.b16 %v644
      %v701 = vunpack.c.l.b16 %v658
      %v702 = vunpack.c.l.b16 %v668
      %v703 = vpack.c.b16 %v672, %v671
      %v704 = vpack.c.b16 %v674, %v673
      %v705 = vpack.c.b16 %v676, %v675
      %v706 = vpack.c.b16 %v678, %v677
      %v707 = vpack.c.b16 %v680, %v679
      %v708 = vpack.c.b16 %v682, %v681
      %v709 = vpack.c.b16 %v684, %v683
      %v710 = vpack.c.b16 %v686, %v685
      %v711 = vpack.c.b16 %v688, %v687
      %v712 = vpack.c.b16 %v690, %v689
      %v713 = vpack.c.b16 %v692, %v691
      %v714 = vpack.c.b16 %v694, %v693
      %v715 = vpack.c.b16 %v696, %v695
      %v716 = vpack.c.b16 %v698, %v697
      %v717 = vpack.c.b16 %v700, %v699
      %v718 = vpack.c.b16 %v702, %v701
      %vm719 = vcmask 31744
      %v721 = vsel %vm719, %v703, 0
      %v724 = vsel %vm719, %v704, 0
      %v727 = vsel %vm719, %v705, 0
      %v730 = vsel %vm719, %v706, 0
      %v733 = vsel %vm719, %v707, 0
      %v736 = vsel %vm719, %v708, 0
      %v739 = vsel %vm719, %v709, 0
      %v742 = vsel %vm719, %v710, 0
      %v745 = vsel %vm719, %v711, 0
      %v748 = vsel %vm719, %v712, 0
      %v751 = vsel %vm719, %v713, 0
      %v754 = vsel %vm719, %v714, 0
      %v757 = vsel %vm719, %v715, 0
      %v760 = vsel %vm719, %v716, 0
      %v763 = vsel %vm719, %v717, 0
      %v766 = vsel %vm719, %v718, 0
      %vm768 = vcmask 1041408
      %v770 = vsel %vm768, %v670, 0
      %772 = vmatpush.bf16.msra.mxu0 0
      %773 = vmatpush.bf16.msra.mxu0 0
      %774 = vmatpush.bf16.msra.mxu0 0
      %775 = vmatpush.bf16.msra.mxu0 0
      %776 = vmatpush.bf16.msra.mxu0 0
      %777 = vmatpush.bf16.msra.mxu0 0
      %778 = vmatpush.bf16.msra.mxu0 0
      %779 = vmatpush.bf16.msra.mxu0 %v770
      %780 = vmatmul.bf16.gmra.mxu0 %v721
      %v781 = vpop.f32.mrf.mxu0
      %v782 = vadd.f32 0.0, %v781
      %v783 = vpop.f32.mrf.mxu0
      %v784 = vadd.f32 0.0, %v783
      %785 = vmatmul.bf16.gmra.mxu0 %v724
      %v786 = vpop.f32.mrf.mxu0
      %v787 = vadd.f32 0.0, %v786
      %v788 = vpop.f32.mrf.mxu0
      %v789 = vadd.f32 0.0, %v788
      %790 = vmatmul.bf16.gmra.mxu0 %v727
      %v791 = vpop.f32.mrf.mxu0
      %v792 = vadd.f32 0.0, %v791
      %v793 = vpop.f32.mrf.mxu0
      %v794 = vadd.f32 0.0, %v793
      %795 = vmatmul.bf16.gmra.mxu0 %v730
      %v796 = vpop.f32.mrf.mxu0
      %v797 = vadd.f32 0.0, %v796
      %v798 = vpop.f32.mrf.mxu0
      %v799 = vadd.f32 0.0, %v798
      %800 = vmatmul.bf16.gmra.mxu0 %v733
      %v801 = vpop.f32.mrf.mxu0
      %v802 = vadd.f32 0.0, %v801
      %v803 = vpop.f32.mrf.mxu0
      %v804 = vadd.f32 0.0, %v803
      %805 = vmatmul.bf16.gmra.mxu0 %v736
      %v806 = vpop.f32.mrf.mxu0
      %v807 = vadd.f32 0.0, %v806
      %v808 = vpop.f32.mrf.mxu0
      %v809 = vadd.f32 0.0, %v808
      %810 = vmatmul.bf16.gmra.mxu0 %v739
      %v811 = vpop.f32.mrf.mxu0
      %v812 = vadd.f32 0.0, %v811
      %v813 = vpop.f32.mrf.mxu0
      %v814 = vadd.f32 0.0, %v813
      %815 = vmatmul.bf16.gmra.mxu0 %v742
      %v816 = vpop.f32.mrf.mxu0
      %v817 = vadd.f32 0.0, %v816
      %v818 = vpop.f32.mrf.mxu0
      %v819 = vadd.f32 0.0, %v818
      %820 = vmatmul.bf16.gmra.mxu0 %v745
      %v821 = vpop.f32.mrf.mxu0
      %v822 = vadd.f32 0.0, %v821
      %v823 = vpop.f32.mrf.mxu0
      %v824 = vadd.f32 0.0, %v823
      %825 = vmatmul.bf16.gmra.mxu0 %v748
      %v826 = vpop.f32.mrf.mxu0
      %v827 = vadd.f32 0.0, %v826
      %v828 = vpop.f32.mrf.mxu0
      %v829 = vadd.f32 0.0, %v828
      %830 = vmatmul.bf16.gmra.mxu0 %v751
      %v831 = vpop.f32.mrf.mxu0
      %v832 = vadd.f32 0.0, %v831
      %v833 = vpop.f32.mrf.mxu0
      %v834 = vadd.f32 0.0, %v833
      %835 = vmatmul.bf16.gmra.mxu0 %v754
      %v836 = vpop.f32.mrf.mxu0
      %v837 = vadd.f32 0.0, %v836
      %v838 = vpop.f32.mrf.mxu0
      %v839 = vadd.f32 0.0, %v838
      %840 = vmatmul.bf16.gmra.mxu0 %v757
      %v841 = vpop.f32.mrf.mxu0
      %v842 = vadd.f32 0.0, %v841
      %v843 = vpop.f32.mrf.mxu0
      %v844 = vadd.f32 0.0, %v843
      %845 = vmatmul.bf16.gmra.mxu0 %v760
      %v846 = vpop.f32.mrf.mxu0
      %v847 = vadd.f32 0.0, %v846
      %v848 = vpop.f32.mrf.mxu0
      %v849 = vadd.f32 0.0, %v848
      %850 = vmatmul.bf16.gmra.mxu0 %v763
      %v851 = vpop.f32.mrf.mxu0
      %v852 = vadd.f32 0.0, %v851
      %v853 = vpop.f32.mrf.mxu0
      %v854 = vadd.f32 0.0, %v853
      %855 = vmatmul.bf16.gmra.mxu0 %v766
      %v856 = vpop.f32.mrf.mxu0
      %v857 = vadd.f32 0.0, %v856
      %v858 = vpop.f32.mrf.mxu0
      %v859 = vadd.f32 0.0, %v858
      %860 = vdwg.mxu0
      %v893 = vunpack.c.l.b16 %v227
      %v894 = vunpack.c.l.b16 %v228
      %v895 = vunpack.c.l.b16 %v230
      %v896 = vunpack.c.l.b16 %v231
      %v897 = vunpack.c.l.b16 %v233
      %v898 = vunpack.c.l.b16 %v234
      %v899 = vunpack.c.l.b16 %v236
      %v900 = vunpack.c.l.b16 %v237
      %v901 = vunpack.c.l.b16 %v239
      %v902 = vunpack.c.l.b16 %v240
      %v903 = vunpack.c.l.b16 %v242
      %v904 = vunpack.c.l.b16 %v243
      %v905 = vunpack.c.l.b16 %v245
      %v906 = vunpack.c.l.b16 %v246
      %v907 = vunpack.c.l.b16 %v248
      %v908 = vunpack.c.l.b16 %v249
      %v909 = vunpack.c.l.b16 %v251
      %v910 = vunpack.c.l.b16 %v252
      %v911 = vunpack.c.l.b16 %v254
      %v912 = vunpack.c.l.b16 %v255
      %v913 = vunpack.c.l.b16 %v257
      %v914 = vunpack.c.l.b16 %v258
      %v915 = vunpack.c.l.b16 %v260
      %v916 = vunpack.c.l.b16 %v261
      %v917 = vunpack.c.l.b16 %v263
      %v918 = vunpack.c.l.b16 %v264
      %v919 = vunpack.c.l.b16 %v266
      %v920 = vunpack.c.l.b16 %v267
      %v921 = vunpack.c.l.b16 %v269
      %v922 = vunpack.c.l.b16 %v270
      %v923 = vunpack.c.l.b16 %v272
      %v924 = vunpack.c.l.b16 %v273
      %v925 = vpack.c.b16 %v894, %v893
      %v926 = vpack.c.b16 %v896, %v895
      %v927 = vpack.c.b16 %v898, %v897
      %v928 = vpack.c.b16 %v900, %v899
      %v929 = vpack.c.b16 %v902, %v901
      %v930 = vpack.c.b16 %v904, %v903
      %v931 = vpack.c.b16 %v906, %v905
      %v932 = vpack.c.b16 %v908, %v907
      %v933 = vpack.c.b16 %v910, %v909
      %v934 = vpack.c.b16 %v912, %v911
      %v935 = vpack.c.b16 %v914, %v913
      %v936 = vpack.c.b16 %v916, %v915
      %v937 = vpack.c.b16 %v918, %v917
      %v938 = vpack.c.b16 %v920, %v919
      %v939 = vpack.c.b16 %v922, %v921
      %v940 = vpack.c.b16 %v924, %v923
      %v942 = vsel %vm719, %v925, 0
      %v945 = vsel %vm719, %v926, 0
      %v948 = vsel %vm719, %v927, 0
      %v951 = vsel %vm719, %v928, 0
      %v954 = vsel %vm719, %v929, 0
      %v957 = vsel %vm719, %v930, 0
      %v960 = vsel %vm719, %v931, 0
      %v963 = vsel %vm719, %v932, 0
      %v966 = vsel %vm719, %v933, 0
      %v969 = vsel %vm719, %v934, 0
      %v972 = vsel %vm719, %v935, 0
      %v975 = vsel %vm719, %v936, 0
      %v978 = vsel %vm719, %v937, 0
      %v981 = vsel %vm719, %v938, 0
      %v984 = vsel %vm719, %v939, 0
      %v987 = vsel %vm719, %v940, 0
      %v990 = vsel %vm768, %v281, 0
      %992 = vmatpush.bf16.msra.mxu0 0
      %993 = vmatpush.bf16.msra.mxu0 0
      %994 = vmatpush.bf16.msra.mxu0 0
      %995 = vmatpush.bf16.msra.mxu0 0
      %996 = vmatpush.bf16.msra.mxu0 0
      %997 = vmatpush.bf16.msra.mxu0 0
      %998 = vmatpush.bf16.msra.mxu0 0
      %999 = vmatpush.bf16.msra.mxu0 %v990
      %1000 = vmatmul.bf16.gmra.mxu0 %v942
      %v1001 = vpop.f32.mrf.mxu0
      %v1002 = vadd.f32 %v782, %v1001
      %v1003 = vpop.f32.mrf.mxu0
      %v1004 = vadd.f32 %v784, %v1003
      %1005 = vmatmul.bf16.gmra.mxu0 %v945
      %v1006 = vpop.f32.mrf.mxu0
      %v1007 = vadd.f32 %v787, %v1006
      %v1008 = vpop.f32.mrf.mxu0
      %v1009 = vadd.f32 %v789, %v1008
      %1010 = vmatmul.bf16.gmra.mxu0 %v948
      %v1011 = vpop.f32.mrf.mxu0
      %v1012 = vadd.f32 %v792, %v1011
      %v1013 = vpop.f32.mrf.mxu0
      %v1014 = vadd.f32 %v794, %v1013
      %1015 = vmatmul.bf16.gmra.mxu0 %v951
      %v1016 = vpop.f32.mrf.mxu0
      %v1017 = vadd.f32 %v797, %v1016
      %v1018 = vpop.f32.mrf.mxu0
      %v1019 = vadd.f32 %v799, %v1018
      %1020 = vmatmul.bf16.gmra.mxu0 %v954
      %v1021 = vpop.f32.mrf.mxu0
      %v1022 = vadd.f32 %v802, %v1021
      %v1023 = vpop.f32.mrf.mxu0
      %v1024 = vadd.f32 %v804, %v1023
      %1025 = vmatmul.bf16.gmra.mxu0 %v957
      %v1026 = vpop.f32.mrf.mxu0
      %v1027 = vadd.f32 %v807, %v1026
      %v1028 = vpop.f32.mrf.mxu0
      %v1029 = vadd.f32 %v809, %v1028
      %1030 = vmatmul.bf16.gmra.mxu0 %v960
      %v1031 = vpop.f32.mrf.mxu0
      %v1032 = vadd.f32 %v812, %v1031
      %v1033 = vpop.f32.mrf.mxu0
      %v1034 = vadd.f32 %v814, %v1033
      %1035 = vmatmul.bf16.gmra.mxu0 %v963
      %v1036 = vpop.f32.mrf.mxu0
      %v1037 = vadd.f32 %v817, %v1036
      %v1038 = vpop.f32.mrf.mxu0
      %v1039 = vadd.f32 %v819, %v1038
      %1040 = vmatmul.bf16.gmra.mxu0 %v966
      %v1041 = vpop.f32.mrf.mxu0
      %v1042 = vadd.f32 %v822, %v1041
      %v1043 = vpop.f32.mrf.mxu0
      %v1044 = vadd.f32 %v824, %v1043
      %1045 = vmatmul.bf16.gmra.mxu0 %v969
      %v1046 = vpop.f32.mrf.mxu0
      %v1047 = vadd.f32 %v827, %v1046
      %v1048 = vpop.f32.mrf.mxu0
      %v1049 = vadd.f32 %v829, %v1048
      %1050 = vmatmul.bf16.gmra.mxu0 %v972
      %v1051 = vpop.f32.mrf.mxu0
      %v1052 = vadd.f32 %v832, %v1051
      %v1053 = vpop.f32.mrf.mxu0
      %v1054 = vadd.f32 %v834, %v1053
      %1055 = vmatmul.bf16.gmra.mxu0 %v975
      %v1056 = vpop.f32.mrf.mxu0
      %v1057 = vadd.f32 %v837, %v1056
      %v1058 = vpop.f32.mrf.mxu0
      %v1059 = vadd.f32 %v839, %v1058
      %1060 = vmatmul.bf16.gmra.mxu0 %v978
      %v1061 = vpop.f32.mrf.mxu0
      %v1062 = vadd.f32 %v842, %v1061
      %v1063 = vpop.f32.mrf.mxu0
      %v1064 = vadd.f32 %v844, %v1063
      %1065 = vmatmul.bf16.gmra.mxu0 %v981
      %v1066 = vpop.f32.mrf.mxu0
      %v1067 = vadd.f32 %v847, %v1066
      %v1068 = vpop.f32.mrf.mxu0
      %v1069 = vadd.f32 %v849, %v1068
      %1070 = vmatmul.bf16.gmra.mxu0 %v984
      %v1071 = vpop.f32.mrf.mxu0
      %v1072 = vadd.f32 %v852, %v1071
      %v1073 = vpop.f32.mrf.mxu0
      %v1074 = vadd.f32 %v854, %v1073
      %1075 = vmatmul.bf16.gmra.mxu0 %v987
      %v1076 = vpop.f32.mrf.mxu0
      %v1077 = vadd.f32 %v857, %v1076
      %v1078 = vpop.f32.mrf.mxu0
      %v1079 = vadd.f32 %v859, %v1078
      %1080 = vdwg.mxu0
      %vm1097 = vcmask 1042432
      %vm1098 = vcmask 1046532
      %vm1099 = vmor %vm1097, %vm1098
      %v1100 = vrot.slane %v227, 5
      %v1101 = vrot.slane %v1100, 4
      %v1102 = vrot.slane %v228, 5
      %v1103 = vsel %vm1099, %v1101, %v1102
      %v1104 = vrot.slane %v1102, 4
      %v1105 = vrot.slane %v229, 5
      %v1106 = vsel %vm1099, %v1104, %v1105
      %v1107 = vrot.slane %v230, 5
      %v1108 = vrot.slane %v1107, 4
      %v1109 = vrot.slane %v231, 5
      %v1110 = vsel %vm1099, %v1108, %v1109
      %v1111 = vrot.slane %v1109, 4
      %v1112 = vrot.slane %v232, 5
      %v1113 = vsel %vm1099, %v1111, %v1112
      %v1114 = vrot.slane %v233, 5
      %v1115 = vrot.slane %v1114, 4
      %v1116 = vrot.slane %v234, 5
      %v1117 = vsel %vm1099, %v1115, %v1116
      %v1118 = vrot.slane %v1116, 4
      %v1119 = vrot.slane %v235, 5
      %v1120 = vsel %vm1099, %v1118, %v1119
      %v1121 = vrot.slane %v236, 5
      %v1122 = vrot.slane %v1121, 4
      %v1123 = vrot.slane %v237, 5
      %v1124 = vsel %vm1099, %v1122, %v1123
      %v1125 = vrot.slane %v1123, 4
      %v1126 = vrot.slane %v238, 5
      %v1127 = vsel %vm1099, %v1125, %v1126
      %v1128 = vrot.slane %v239, 5
      %v1129 = vrot.slane %v1128, 4
      %v1130 = vrot.slane %v240, 5
      %v1131 = vsel %vm1099, %v1129, %v1130
      %v1132 = vrot.slane %v1130, 4
      %v1133 = vrot.slane %v241, 5
      %v1134 = vsel %vm1099, %v1132, %v1133
      %v1135 = vrot.slane %v242, 5
      %v1136 = vrot.slane %v1135, 4
      %v1137 = vrot.slane %v243, 5
      %v1138 = vsel %vm1099, %v1136, %v1137
      %v1139 = vrot.slane %v1137, 4
      %v1140 = vrot.slane %v244, 5
      %v1141 = vsel %vm1099, %v1139, %v1140
      %v1142 = vrot.slane %v245, 5
      %v1143 = vrot.slane %v1142, 4
      %v1144 = vrot.slane %v246, 5
      %v1145 = vsel %vm1099, %v1143, %v1144
      %v1146 = vrot.slane %v1144, 4
      %v1147 = vrot.slane %v247, 5
      %v1148 = vsel %vm1099, %v1146, %v1147
      %v1149 = vrot.slane %v248, 5
      %v1150 = vrot.slane %v1149, 4
      %v1151 = vrot.slane %v249, 5
      %v1152 = vsel %vm1099, %v1150, %v1151
      %v1153 = vrot.slane %v1151, 4
      %v1154 = vrot.slane %v250, 5
      %v1155 = vsel %vm1099, %v1153, %v1154
      %v1156 = vrot.slane %v251, 5
      %v1157 = vrot.slane %v1156, 4
      %v1158 = vrot.slane %v252, 5
      %v1159 = vsel %vm1099, %v1157, %v1158
      %v1160 = vrot.slane %v1158, 4
      %v1161 = vrot.slane %v253, 5
      %v1162 = vsel %vm1099, %v1160, %v1161
      %v1163 = vrot.slane %v254, 5
      %v1164 = vrot.slane %v1163, 4
      %v1165 = vrot.slane %v255, 5
      %v1166 = vsel %vm1099, %v1164, %v1165
      %v1167 = vrot.slane %v1165, 4
      %v1168 = vrot.slane %v256, 5
      %v1169 = vsel %vm1099, %v1167, %v1168
      %v1170 = vrot.slane %v257, 5
      %v1171 = vrot.slane %v1170, 4
      %v1172 = vrot.slane %v258, 5
      %v1173 = vsel %vm1099, %v1171, %v1172
      %v1174 = vrot.slane %v1172, 4
      %v1175 = vrot.slane %v259, 5
      %v1176 = vsel %vm1099, %v1174, %v1175
      %v1177 = vrot.slane %v260, 5
      %v1178 = vrot.slane %v1177, 4
      %v1179 = vrot.slane %v261, 5
      %v1180 = vsel %vm1099, %v1178, %v1179
      %v1181 = vrot.slane %v1179, 4
      %v1182 = vrot.slane %v262, 5
      %v1183 = vsel %vm1099, %v1181, %v1182
      %v1184 = vrot.slane %v263, 5
      %v1185 = vrot.slane %v1184, 4
      %v1186 = vrot.slane %v264, 5
      %v1187 = vsel %vm1099, %v1185, %v1186
      %v1188 = vrot.slane %v1186, 4
      %v1189 = vrot.slane %v265, 5
      %v1190 = vsel %vm1099, %v1188, %v1189
      %v1191 = vrot.slane %v266, 5
      %v1192 = vrot.slane %v1191, 4
      %v1193 = vrot.slane %v267, 5
      %v1194 = vsel %vm1099, %v1192, %v1193
      %v1195 = vrot.slane %v1193, 4
      %v1196 = vrot.slane %v268, 5
      %v1197 = vsel %vm1099, %v1195, %v1196
      %v1198 = vrot.slane %v269, 5
      %v1199 = vrot.slane %v1198, 4
      %v1200 = vrot.slane %v270, 5
      %v1201 = vsel %vm1099, %v1199, %v1200
      %v1202 = vrot.slane %v1200, 4
      %v1203 = vrot.slane %v271, 5
      %v1204 = vsel %vm1099, %v1202, %v1203
      %v1205 = vrot.slane %v272, 5
      %v1206 = vrot.slane %v1205, 4
      %v1207 = vrot.slane %v273, 5
      %v1208 = vsel %vm1099, %v1206, %v1207
      %v1209 = vrot.slane %v1207, 4
      %v1210 = vrot.slane %v274, 5
      %v1211 = vsel %vm1099, %v1209, %v1210
      %s1212 = scalar_lea.vmem %s1, 4
      %v1213 = vld [vmem:[%s1212] sm:$0x3]
      %v1214 = vunpack.c.l.b16 %v1103
      %v1215 = vunpack.c.l.b16 %v1106
      %v1216 = vunpack.c.l.b16 %v1110
      %v1217 = vunpack.c.l.b16 %v1113
      %v1218 = vunpack.c.l.b16 %v1117
      %v1219 = vunpack.c.l.b16 %v1120
      %v1220 = vunpack.c.l.b16 %v1124
      %v1221 = vunpack.c.l.b16 %v1127
      %v1222 = vunpack.c.l.b16 %v1131
      %v1223 = vunpack.c.l.b16 %v1134
      %v1224 = vunpack.c.l.b16 %v1138
      %v1225 = vunpack.c.l.b16 %v1141
      %v1226 = vunpack.c.l.b16 %v1145
      %v1227 = vunpack.c.l.b16 %v1148
      %v1228 = vunpack.c.l.b16 %v1152
      %v1229 = vunpack.c.l.b16 %v1155
      %v1230 = vunpack.c.l.b16 %v1159
      %v1231 = vunpack.c.l.b16 %v1162
      %v1232 = vunpack.c.l.b16 %v1166
      %v1233 = vunpack.c.l.b16 %v1169
      %v1234 = vunpack.c.l.b16 %v1173
      %v1235 = vunpack.c.l.b16 %v1176
      %v1236 = vunpack.c.l.b16 %v1180
      %v1237 = vunpack.c.l.b16 %v1183
      %v1238 = vunpack.c.l.b16 %v1187
      %v1239 = vunpack.c.l.b16 %v1190
      %v1240 = vunpack.c.l.b16 %v1194
      %v1241 = vunpack.c.l.b16 %v1197
      %v1242 = vunpack.c.l.b16 %v1201
      %v1243 = vunpack.c.l.b16 %v1204
      %v1244 = vunpack.c.l.b16 %v1208
      %v1245 = vunpack.c.l.b16 %v1211
      %v1246 = vpack.c.b16 %v1215, %v1214
      %v1247 = vpack.c.b16 %v1217, %v1216
      %v1248 = vpack.c.b16 %v1219, %v1218
      %v1249 = vpack.c.b16 %v1221, %v1220
      %v1250 = vpack.c.b16 %v1223, %v1222
      %v1251 = vpack.c.b16 %v1225, %v1224
      %v1252 = vpack.c.b16 %v1227, %v1226
      %v1253 = vpack.c.b16 %v1229, %v1228
      %v1254 = vpack.c.b16 %v1231, %v1230
      %v1255 = vpack.c.b16 %v1233, %v1232
      %v1256 = vpack.c.b16 %v1235, %v1234
      %v1257 = vpack.c.b16 %v1237, %v1236
      %v1258 = vpack.c.b16 %v1239, %v1238
      %v1259 = vpack.c.b16 %v1241, %v1240
      %v1260 = vpack.c.b16 %v1243, %v1242
      %v1261 = vpack.c.b16 %v1245, %v1244
      %v1263 = vsel %vm719, %v1246, 0
      %v1266 = vsel %vm719, %v1247, 0
      %v1269 = vsel %vm719, %v1248, 0
      %v1272 = vsel %vm719, %v1249, 0
      %v1275 = vsel %vm719, %v1250, 0
      %v1278 = vsel %vm719, %v1251, 0
      %v1281 = vsel %vm719, %v1252, 0
      %v1284 = vsel %vm719, %v1253, 0
      %v1287 = vsel %vm719, %v1254, 0
      %v1290 = vsel %vm719, %v1255, 0
      %v1293 = vsel %vm719, %v1256, 0
      %v1296 = vsel %vm719, %v1257, 0
      %v1299 = vsel %vm719, %v1258, 0
      %v1302 = vsel %vm719, %v1259, 0
      %v1305 = vsel %vm719, %v1260, 0
      %v1308 = vsel %vm719, %v1261, 0
      %v1311 = vsel %vm768, %v1213, 0
      %1313 = vmatpush.bf16.msra.mxu0 0
      %1314 = vmatpush.bf16.msra.mxu0 0
      %1315 = vmatpush.bf16.msra.mxu0 0
      %1316 = vmatpush.bf16.msra.mxu0 0
      %1317 = vmatpush.bf16.msra.mxu0 0
      %1318 = vmatpush.bf16.msra.mxu0 0
      %1319 = vmatpush.bf16.msra.mxu0 0
      %1320 = vmatpush.bf16.msra.mxu0 %v1311
      %1321 = vmatmul.bf16.gmra.mxu0 %v1263
      %v1322 = vpop.f32.mrf.mxu0
      %v1323 = vadd.f32 0.0, %v1322
      %v1324 = vpop.f32.mrf.mxu0
      %v1325 = vadd.f32 0.0, %v1324
      %1326 = vmatmul.bf16.gmra.mxu0 %v1266
      %v1327 = vpop.f32.mrf.mxu0
      %v1328 = vadd.f32 0.0, %v1327
      %v1329 = vpop.f32.mrf.mxu0
      %v1330 = vadd.f32 0.0, %v1329
      %1331 = vmatmul.bf16.gmra.mxu0 %v1269
      %v1332 = vpop.f32.mrf.mxu0
      %v1333 = vadd.f32 0.0, %v1332
      %v1334 = vpop.f32.mrf.mxu0
      %v1335 = vadd.f32 0.0, %v1334
      %1336 = vmatmul.bf16.gmra.mxu0 %v1272
      %v1337 = vpop.f32.mrf.mxu0
      %v1338 = vadd.f32 0.0, %v1337
      %v1339 = vpop.f32.mrf.mxu0
      %v1340 = vadd.f32 0.0, %v1339
      %1341 = vmatmul.bf16.gmra.mxu0 %v1275
      %v1342 = vpop.f32.mrf.mxu0
      %v1343 = vadd.f32 0.0, %v1342
      %v1344 = vpop.f32.mrf.mxu0
      %v1345 = vadd.f32 0.0, %v1344
      %1346 = vmatmul.bf16.gmra.mxu0 %v1278
      %v1347 = vpop.f32.mrf.mxu0
      %v1348 = vadd.f32 0.0, %v1347
      %v1349 = vpop.f32.mrf.mxu0
      %v1350 = vadd.f32 0.0, %v1349
      %1351 = vmatmul.bf16.gmra.mxu0 %v1281
      %v1352 = vpop.f32.mrf.mxu0
      %v1353 = vadd.f32 0.0, %v1352
      %v1354 = vpop.f32.mrf.mxu0
      %v1355 = vadd.f32 0.0, %v1354
      %1356 = vmatmul.bf16.gmra.mxu0 %v1284
      %v1357 = vpop.f32.mrf.mxu0
      %v1358 = vadd.f32 0.0, %v1357
      %v1359 = vpop.f32.mrf.mxu0
      %v1360 = vadd.f32 0.0, %v1359
      %1361 = vmatmul.bf16.gmra.mxu0 %v1287
      %v1362 = vpop.f32.mrf.mxu0
      %v1363 = vadd.f32 0.0, %v1362
      %v1364 = vpop.f32.mrf.mxu0
      %v1365 = vadd.f32 0.0, %v1364
      %1366 = vmatmul.bf16.gmra.mxu0 %v1290
      %v1367 = vpop.f32.mrf.mxu0
      %v1368 = vadd.f32 0.0, %v1367
      %v1369 = vpop.f32.mrf.mxu0
      %v1370 = vadd.f32 0.0, %v1369
      %1371 = vmatmul.bf16.gmra.mxu0 %v1293
      %v1372 = vpop.f32.mrf.mxu0
      %v1373 = vadd.f32 0.0, %v1372
      %v1374 = vpop.f32.mrf.mxu0
      %v1375 = vadd.f32 0.0, %v1374
      %1376 = vmatmul.bf16.gmra.mxu0 %v1296
      %v1377 = vpop.f32.mrf.mxu0
      %v1378 = vadd.f32 0.0, %v1377
      %v1379 = vpop.f32.mrf.mxu0
      %v1380 = vadd.f32 0.0, %v1379
      %1381 = vmatmul.bf16.gmra.mxu0 %v1299
      %v1382 = vpop.f32.mrf.mxu0
      %v1383 = vadd.f32 0.0, %v1382
      %v1384 = vpop.f32.mrf.mxu0
      %v1385 = vadd.f32 0.0, %v1384
      %1386 = vmatmul.bf16.gmra.mxu0 %v1302
      %v1387 = vpop.f32.mrf.mxu0
      %v1388 = vadd.f32 0.0, %v1387
      %v1389 = vpop.f32.mrf.mxu0
      %v1390 = vadd.f32 0.0, %v1389
      %1391 = vmatmul.bf16.gmra.mxu0 %v1305
      %v1392 = vpop.f32.mrf.mxu0
      %v1393 = vadd.f32 0.0, %v1392
      %v1394 = vpop.f32.mrf.mxu0
      %v1395 = vadd.f32 0.0, %v1394
      %1396 = vmatmul.bf16.gmra.mxu0 %v1308
      %v1397 = vpop.f32.mrf.mxu0
      %v1398 = vadd.f32 0.0, %v1397
      %v1399 = vpop.f32.mrf.mxu0
      %v1400 = vadd.f32 0.0, %v1399
      %1401 = vdwg.mxu0
      %v1402 = vadd.f32 %v1002, %v1323
      %v1403 = vadd.f32 %v1004, %v1325
      %v1404 = vadd.f32 %v1007, %v1328
      %v1405 = vadd.f32 %v1009, %v1330
      %v1406 = vadd.f32 %v1012, %v1333
      %v1407 = vadd.f32 %v1014, %v1335
      %v1408 = vadd.f32 %v1017, %v1338
      %v1409 = vadd.f32 %v1019, %v1340
      %v1410 = vadd.f32 %v1022, %v1343
      %v1411 = vadd.f32 %v1024, %v1345
      %v1412 = vadd.f32 %v1027, %v1348
      %v1413 = vadd.f32 %v1029, %v1350
      %v1414 = vadd.f32 %v1032, %v1353
      %v1415 = vadd.f32 %v1034, %v1355
      %v1416 = vadd.f32 %v1037, %v1358
      %v1417 = vadd.f32 %v1039, %v1360
      %v1418 = vadd.f32 %v1042, %v1363
      %v1419 = vadd.f32 %v1044, %v1365
      %v1420 = vadd.f32 %v1047, %v1368
      %v1421 = vadd.f32 %v1049, %v1370
      %v1422 = vadd.f32 %v1052, %v1373
      %v1423 = vadd.f32 %v1054, %v1375
      %v1424 = vadd.f32 %v1057, %v1378
      %v1425 = vadd.f32 %v1059, %v1380
      %v1426 = vadd.f32 %v1062, %v1383
      %v1427 = vadd.f32 %v1064, %v1385
      %v1428 = vadd.f32 %v1067, %v1388
      %v1429 = vadd.f32 %v1069, %v1390
      %v1430 = vadd.f32 %v1072, %v1393
      %v1431 = vadd.f32 %v1074, %v1395
      %v1432 = vadd.f32 %v1077, %v1398
      %v1433 = vadd.f32 %v1079, %v1400
      %s1434 = scalar_lea.vmem %s1, 6
      %v1435 = vld [vmem:[%s1434] sm:$0x3]
      %v1438 = vunpack.c.l.b16 %v275
      %v1439 = vunpack.c.l.b16 %v276
      %v1440 = vpack.c.b16 %v1439, %v1438
      %v1442 = vsel %vm719, %v1440, 0
      %v1445 = vsel %vm768, %v1435, 0
      %1447 = vmatpush.bf16.msra.mxu0 0
      %1448 = vmatpush.bf16.msra.mxu0 0
      %1449 = vmatpush.bf16.msra.mxu0 0
      %1450 = vmatpush.bf16.msra.mxu0 0
      %1451 = vmatpush.bf16.msra.mxu0 0
      %1452 = vmatpush.bf16.msra.mxu0 0
      %1453 = vmatpush.bf16.msra.mxu0 0
      %1454 = vmatpush.bf16.msra.mxu0 %v1445
      %1455 = vmatmul.bf16.gmra.mxu0 %v945
      %v1456 = vpop.f32.mrf.mxu0
      %v1457 = vadd.f32 0.0, %v1456
      %v1458 = vpop.f32.mrf.mxu0
      %v1459 = vadd.f32 0.0, %v1458
      %1460 = vmatmul.bf16.gmra.mxu0 %v948
      %v1461 = vpop.f32.mrf.mxu0
      %v1462 = vadd.f32 0.0, %v1461
      %v1463 = vpop.f32.mrf.mxu0
      %v1464 = vadd.f32 0.0, %v1463
      %1465 = vmatmul.bf16.gmra.mxu0 %v951
      %v1466 = vpop.f32.mrf.mxu0
      %v1467 = vadd.f32 0.0, %v1466
      %v1468 = vpop.f32.mrf.mxu0
      %v1469 = vadd.f32 0.0, %v1468
      %1470 = vmatmul.bf16.gmra.mxu0 %v954
      %v1471 = vpop.f32.mrf.mxu0
      %v1472 = vadd.f32 0.0, %v1471
      %v1473 = vpop.f32.mrf.mxu0
      %v1474 = vadd.f32 0.0, %v1473
      %1475 = vmatmul.bf16.gmra.mxu0 %v957
      %v1476 = vpop.f32.mrf.mxu0
      %v1477 = vadd.f32 0.0, %v1476
      %v1478 = vpop.f32.mrf.mxu0
      %v1479 = vadd.f32 0.0, %v1478
      %1480 = vmatmul.bf16.gmra.mxu0 %v960
      %v1481 = vpop.f32.mrf.mxu0
      %v1482 = vadd.f32 0.0, %v1481
      %v1483 = vpop.f32.mrf.mxu0
      %v1484 = vadd.f32 0.0, %v1483
      %1485 = vmatmul.bf16.gmra.mxu0 %v963
      %v1486 = vpop.f32.mrf.mxu0
      %v1487 = vadd.f32 0.0, %v1486
      %v1488 = vpop.f32.mrf.mxu0
      %v1489 = vadd.f32 0.0, %v1488
      %1490 = vmatmul.bf16.gmra.mxu0 %v966
      %v1491 = vpop.f32.mrf.mxu0
      %v1492 = vadd.f32 0.0, %v1491
      %v1493 = vpop.f32.mrf.mxu0
      %v1494 = vadd.f32 0.0, %v1493
      %1495 = vmatmul.bf16.gmra.mxu0 %v969
      %v1496 = vpop.f32.mrf.mxu0
      %v1497 = vadd.f32 0.0, %v1496
      %v1498 = vpop.f32.mrf.mxu0
      %v1499 = vadd.f32 0.0, %v1498
      %1500 = vmatmul.bf16.gmra.mxu0 %v972
      %v1501 = vpop.f32.mrf.mxu0
      %v1502 = vadd.f32 0.0, %v1501
      %v1503 = vpop.f32.mrf.mxu0
      %v1504 = vadd.f32 0.0, %v1503
      %1505 = vmatmul.bf16.gmra.mxu0 %v975
      %v1506 = vpop.f32.mrf.mxu0
      %v1507 = vadd.f32 0.0, %v1506
      %v1508 = vpop.f32.mrf.mxu0
      %v1509 = vadd.f32 0.0, %v1508
      %1510 = vmatmul.bf16.gmra.mxu0 %v978
      %v1511 = vpop.f32.mrf.mxu0
      %v1512 = vadd.f32 0.0, %v1511
      %v1513 = vpop.f32.mrf.mxu0
      %v1514 = vadd.f32 0.0, %v1513
      %1515 = vmatmul.bf16.gmra.mxu0 %v981
      %v1516 = vpop.f32.mrf.mxu0
      %v1517 = vadd.f32 0.0, %v1516
      %v1518 = vpop.f32.mrf.mxu0
      %v1519 = vadd.f32 0.0, %v1518
      %1520 = vmatmul.bf16.gmra.mxu0 %v984
      %v1521 = vpop.f32.mrf.mxu0
      %v1522 = vadd.f32 0.0, %v1521
      %v1523 = vpop.f32.mrf.mxu0
      %v1524 = vadd.f32 0.0, %v1523
      %1525 = vmatmul.bf16.gmra.mxu0 %v987
      %v1526 = vpop.f32.mrf.mxu0
      %v1527 = vadd.f32 0.0, %v1526
      %v1528 = vpop.f32.mrf.mxu0
      %v1529 = vadd.f32 0.0, %v1528
      %1530 = vmatmul.bf16.gmra.mxu0 %v1442
      %v1531 = vpop.f32.mrf.mxu0
      %v1532 = vadd.f32 0.0, %v1531
      %v1533 = vpop.f32.mrf.mxu0
      %v1534 = vadd.f32 0.0, %v1533
      %1535 = vdwg.mxu0
      %v1536 = vadd.f32 %v1402, %v1457
      %v1537 = vadd.f32 %v1403, %v1459
      %v1538 = vadd.f32 %v1404, %v1462
      %v1539 = vadd.f32 %v1405, %v1464
      %v1540 = vadd.f32 %v1406, %v1467
      %v1541 = vadd.f32 %v1407, %v1469
      %v1542 = vadd.f32 %v1408, %v1472
      %v1543 = vadd.f32 %v1409, %v1474
      %v1544 = vadd.f32 %v1410, %v1477
      %v1545 = vadd.f32 %v1411, %v1479
      %v1546 = vadd.f32 %v1412, %v1482
      %v1547 = vadd.f32 %v1413, %v1484
      %v1548 = vadd.f32 %v1414, %v1487
      %v1549 = vadd.f32 %v1415, %v1489
      %v1550 = vadd.f32 %v1416, %v1492
      %v1551 = vadd.f32 %v1417, %v1494
      %v1552 = vadd.f32 %v1418, %v1497
      %v1553 = vadd.f32 %v1419, %v1499
      %v1554 = vadd.f32 %v1420, %v1502
      %v1555 = vadd.f32 %v1421, %v1504
      %v1556 = vadd.f32 %v1422, %v1507
      %v1557 = vadd.f32 %v1423, %v1509
      %v1558 = vadd.f32 %v1424, %v1512
      %v1559 = vadd.f32 %v1425, %v1514
      %v1560 = vadd.f32 %v1426, %v1517
      %v1561 = vadd.f32 %v1427, %v1519
      %v1562 = vadd.f32 %v1428, %v1522
      %v1563 = vadd.f32 %v1429, %v1524
      %v1564 = vadd.f32 %v1430, %v1527
      %v1565 = vadd.f32 %v1431, %v1529
      %v1566 = vadd.f32 %v1432, %v1532
      %v1567 = vadd.f32 %v1433, %v1534
      %v1569 = vshrl.u32 %v275, 16
      %v1571 = vrot.slane %v1569, 4
      %v1572 = vshll.u32 %v275, 16
      %v1574 = vrot.slane %v1572, 5
      %v1575 = vor.u32 %v1571, %v1574
      %v1576 = vrot.slane %v1575, 4
      %v1578 = vshll.u32 %v276, 16
      %v1580 = vrot.slane %v1578, 5
      %v1581 = vsel %vm284, %v1576, %v1580
      %v1582 = vshrl.u32 %v276, 16
      %v1584 = vrot.slane %v1582, 4
      %v1585 = vor.u32 %v1584, %v1580
      %v1586 = vrot.slane %v1585, 4
      %v1588 = vshll.u32 %v277, 16
      %v1590 = vrot.slane %v1588, 5
      %v1591 = vsel %vm284, %v1586, %v1590
      %s1592 = scalar_lea.vmem %s1, 8
      %v1593 = vld [vmem:[%s1592] sm:$0x3]
      %v1594 = vunpack.c.l.b16 %v1581
      %v1595 = vunpack.c.l.b16 %v1591
      %v1596 = vpack.c.b16 %v1595, %v1594
      %v1598 = vsel %vm719, %v1596, 0
      %v1601 = vsel %vm768, %v1593, 0
      %1603 = vmatpush.bf16.msra.mxu0 0
      %1604 = vmatpush.bf16.msra.mxu0 0
      %1605 = vmatpush.bf16.msra.mxu0 0
      %1606 = vmatpush.bf16.msra.mxu0 0
      %1607 = vmatpush.bf16.msra.mxu0 0
      %1608 = vmatpush.bf16.msra.mxu0 0
      %1609 = vmatpush.bf16.msra.mxu0 0
      %1610 = vmatpush.bf16.msra.mxu0 %v1601
      %1611 = vmatmul.bf16.gmra.mxu0 %v724
      %v1612 = vpop.f32.mrf.mxu0
      %v1613 = vadd.f32 0.0, %v1612
      %v1614 = vpop.f32.mrf.mxu0
      %v1615 = vadd.f32 0.0, %v1614
      %1616 = vmatmul.bf16.gmra.mxu0 %v727
      %v1617 = vpop.f32.mrf.mxu0
      %v1618 = vadd.f32 0.0, %v1617
      %v1619 = vpop.f32.mrf.mxu0
      %v1620 = vadd.f32 0.0, %v1619
      %1621 = vmatmul.bf16.gmra.mxu0 %v730
      %v1622 = vpop.f32.mrf.mxu0
      %v1623 = vadd.f32 0.0, %v1622
      %v1624 = vpop.f32.mrf.mxu0
      %v1625 = vadd.f32 0.0, %v1624
      %1626 = vmatmul.bf16.gmra.mxu0 %v733
      %v1627 = vpop.f32.mrf.mxu0
      %v1628 = vadd.f32 0.0, %v1627
      %v1629 = vpop.f32.mrf.mxu0
      %v1630 = vadd.f32 0.0, %v1629
      %1631 = vmatmul.bf16.gmra.mxu0 %v736
      %v1632 = vpop.f32.mrf.mxu0
      %v1633 = vadd.f32 0.0, %v1632
      %v1634 = vpop.f32.mrf.mxu0
      %v1635 = vadd.f32 0.0, %v1634
      %1636 = vmatmul.bf16.gmra.mxu0 %v739
      %v1637 = vpop.f32.mrf.mxu0
      %v1638 = vadd.f32 0.0, %v1637
      %v1639 = vpop.f32.mrf.mxu0
      %v1640 = vadd.f32 0.0, %v1639
      %1641 = vmatmul.bf16.gmra.mxu0 %v742
      %v1642 = vpop.f32.mrf.mxu0
      %v1643 = vadd.f32 0.0, %v1642
      %v1644 = vpop.f32.mrf.mxu0
      %v1645 = vadd.f32 0.0, %v1644
      %1646 = vmatmul.bf16.gmra.mxu0 %v745
      %v1647 = vpop.f32.mrf.mxu0
      %v1648 = vadd.f32 0.0, %v1647
      %v1649 = vpop.f32.mrf.mxu0
      %v1650 = vadd.f32 0.0, %v1649
      %1651 = vmatmul.bf16.gmra.mxu0 %v748
      %v1652 = vpop.f32.mrf.mxu0
      %v1653 = vadd.f32 0.0, %v1652
      %v1654 = vpop.f32.mrf.mxu0
      %v1655 = vadd.f32 0.0, %v1654
      %1656 = vmatmul.bf16.gmra.mxu0 %v751
      %v1657 = vpop.f32.mrf.mxu0
      %v1658 = vadd.f32 0.0, %v1657
      %v1659 = vpop.f32.mrf.mxu0
      %v1660 = vadd.f32 0.0, %v1659
      %1661 = vmatmul.bf16.gmra.mxu0 %v754
      %v1662 = vpop.f32.mrf.mxu0
      %v1663 = vadd.f32 0.0, %v1662
      %v1664 = vpop.f32.mrf.mxu0
      %v1665 = vadd.f32 0.0, %v1664
      %1666 = vmatmul.bf16.gmra.mxu0 %v757
      %v1667 = vpop.f32.mrf.mxu0
      %v1668 = vadd.f32 0.0, %v1667
      %v1669 = vpop.f32.mrf.mxu0
      %v1670 = vadd.f32 0.0, %v1669
      %1671 = vmatmul.bf16.gmra.mxu0 %v760
      %v1672 = vpop.f32.mrf.mxu0
      %v1673 = vadd.f32 0.0, %v1672
      %v1674 = vpop.f32.mrf.mxu0
      %v1675 = vadd.f32 0.0, %v1674
      %1676 = vmatmul.bf16.gmra.mxu0 %v763
      %v1677 = vpop.f32.mrf.mxu0
      %v1678 = vadd.f32 0.0, %v1677
      %v1679 = vpop.f32.mrf.mxu0
      %v1680 = vadd.f32 0.0, %v1679
      %1681 = vmatmul.bf16.gmra.mxu0 %v766
      %v1682 = vpop.f32.mrf.mxu0
      %v1683 = vadd.f32 0.0, %v1682
      %v1684 = vpop.f32.mrf.mxu0
      %v1685 = vadd.f32 0.0, %v1684
      %1686 = vmatmul.bf16.gmra.mxu0 %v1598
      %v1687 = vpop.f32.mrf.mxu0
      %v1688 = vadd.f32 0.0, %v1687
      %v1689 = vpop.f32.mrf.mxu0
      %v1690 = vadd.f32 0.0, %v1689
      %1691 = vdwg.mxu0
      %v1692 = vadd.f32 %v1536, %v1613
      %v1693 = vadd.f32 %v1537, %v1615
      %v1694 = vadd.f32 %v1538, %v1618
      %v1695 = vadd.f32 %v1539, %v1620
      %v1696 = vadd.f32 %v1540, %v1623
      %v1697 = vadd.f32 %v1541, %v1625
      %v1698 = vadd.f32 %v1542, %v1628
      %v1699 = vadd.f32 %v1543, %v1630
      %v1700 = vadd.f32 %v1544, %v1633
      %v1701 = vadd.f32 %v1545, %v1635
      %v1702 = vadd.f32 %v1546, %v1638
      %v1703 = vadd.f32 %v1547, %v1640
      %v1704 = vadd.f32 %v1548, %v1643
      %v1705 = vadd.f32 %v1549, %v1645
      %v1706 = vadd.f32 %v1550, %v1648
      %v1707 = vadd.f32 %v1551, %v1650
      %v1708 = vadd.f32 %v1552, %v1653
      %v1709 = vadd.f32 %v1553, %v1655
      %v1710 = vadd.f32 %v1554, %v1658
      %v1711 = vadd.f32 %v1555, %v1660
      %v1712 = vadd.f32 %v1556, %v1663
      %v1713 = vadd.f32 %v1557, %v1665
      %v1714 = vadd.f32 %v1558, %v1668
      %v1715 = vadd.f32 %v1559, %v1670
      %v1716 = vadd.f32 %v1560, %v1673
      %v1717 = vadd.f32 %v1561, %v1675
      %v1718 = vadd.f32 %v1562, %v1678
      %v1719 = vadd.f32 %v1563, %v1680
      %v1720 = vadd.f32 %v1564, %v1683
      %v1721 = vadd.f32 %v1565, %v1685
      %v1722 = vadd.f32 %v1566, %v1688
      %v1723 = vadd.f32 %v1567, %v1690
      %v1725 = vrot.slane %v275, 5
      %v1726 = vrot.slane %v1725, 4
      %v1727 = vrot.slane %v276, 5
      %v1728 = vsel %vm1099, %v1726, %v1727
      %v1729 = vrot.slane %v1727, 4
      %v1730 = vrot.slane %v277, 5
      %v1731 = vsel %vm1099, %v1729, %v1730
      %s1732 = scalar_lea.vmem %s1, 10
      %v1733 = vld [vmem:[%s1732] sm:$0x3]
      %v1734 = vunpack.c.l.b16 %v1728
      %v1735 = vunpack.c.l.b16 %v1731
      %v1736 = vpack.c.b16 %v1735, %v1734
      %v1738 = vsel %vm719, %v1736, 0
      %v1741 = vsel %vm768, %v1733, 0
      %1743 = vmatpush.bf16.msra.mxu0 0
      %1744 = vmatpush.bf16.msra.mxu0 0
      %1745 = vmatpush.bf16.msra.mxu0 0
      %1746 = vmatpush.bf16.msra.mxu0 0
      %1747 = vmatpush.bf16.msra.mxu0 0
      %1748 = vmatpush.bf16.msra.mxu0 0
      %1749 = vmatpush.bf16.msra.mxu0 0
      %1750 = vmatpush.bf16.msra.mxu0 %v1741
      %1751 = vmatmul.bf16.gmra.mxu0 %v1266
      %v1752 = vpop.f32.mrf.mxu0
      %v1753 = vadd.f32 0.0, %v1752
      %v1754 = vpop.f32.mrf.mxu0
      %v1755 = vadd.f32 0.0, %v1754
      %1756 = vmatmul.bf16.gmra.mxu0 %v1269
      %v1757 = vpop.f32.mrf.mxu0
      %v1758 = vadd.f32 0.0, %v1757
      %v1759 = vpop.f32.mrf.mxu0
      %v1760 = vadd.f32 0.0, %v1759
      %1761 = vmatmul.bf16.gmra.mxu0 %v1272
      %v1762 = vpop.f32.mrf.mxu0
      %v1763 = vadd.f32 0.0, %v1762
      %v1764 = vpop.f32.mrf.mxu0
      %v1765 = vadd.f32 0.0, %v1764
      %1766 = vmatmul.bf16.gmra.mxu0 %v1275
      %v1767 = vpop.f32.mrf.mxu0
      %v1768 = vadd.f32 0.0, %v1767
      %v1769 = vpop.f32.mrf.mxu0
      %v1770 = vadd.f32 0.0, %v1769
      %1771 = vmatmul.bf16.gmra.mxu0 %v1278
      %v1772 = vpop.f32.mrf.mxu0
      %v1773 = vadd.f32 0.0, %v1772
      %v1774 = vpop.f32.mrf.mxu0
      %v1775 = vadd.f32 0.0, %v1774
      %1776 = vmatmul.bf16.gmra.mxu0 %v1281
      %v1777 = vpop.f32.mrf.mxu0
      %v1778 = vadd.f32 0.0, %v1777
      %v1779 = vpop.f32.mrf.mxu0
      %v1780 = vadd.f32 0.0, %v1779
      %1781 = vmatmul.bf16.gmra.mxu0 %v1284
      %v1782 = vpop.f32.mrf.mxu0
      %v1783 = vadd.f32 0.0, %v1782
      %v1784 = vpop.f32.mrf.mxu0
      %v1785 = vadd.f32 0.0, %v1784
      %1786 = vmatmul.bf16.gmra.mxu0 %v1287
      %v1787 = vpop.f32.mrf.mxu0
      %v1788 = vadd.f32 0.0, %v1787
      %v1789 = vpop.f32.mrf.mxu0
      %v1790 = vadd.f32 0.0, %v1789
      %1791 = vmatmul.bf16.gmra.mxu0 %v1290
      %v1792 = vpop.f32.mrf.mxu0
      %v1793 = vadd.f32 0.0, %v1792
      %v1794 = vpop.f32.mrf.mxu0
      %v1795 = vadd.f32 0.0, %v1794
      %1796 = vmatmul.bf16.gmra.mxu0 %v1293
      %v1797 = vpop.f32.mrf.mxu0
      %v1798 = vadd.f32 0.0, %v1797
      %v1799 = vpop.f32.mrf.mxu0
      %v1800 = vadd.f32 0.0, %v1799
      %1801 = vmatmul.bf16.gmra.mxu0 %v1296
      %v1802 = vpop.f32.mrf.mxu0
      %v1803 = vadd.f32 0.0, %v1802
      %v1804 = vpop.f32.mrf.mxu0
      %v1805 = vadd.f32 0.0, %v1804
      %1806 = vmatmul.bf16.gmra.mxu0 %v1299
      %v1807 = vpop.f32.mrf.mxu0
      %v1808 = vadd.f32 0.0, %v1807
      %v1809 = vpop.f32.mrf.mxu0
      %v1810 = vadd.f32 0.0, %v1809
      %1811 = vmatmul.bf16.gmra.mxu0 %v1302
      %v1812 = vpop.f32.mrf.mxu0
      %v1813 = vadd.f32 0.0, %v1812
      %v1814 = vpop.f32.mrf.mxu0
      %v1815 = vadd.f32 0.0, %v1814
      %1816 = vmatmul.bf16.gmra.mxu0 %v1305
      %v1817 = vpop.f32.mrf.mxu0
      %v1818 = vadd.f32 0.0, %v1817
      %v1819 = vpop.f32.mrf.mxu0
      %v1820 = vadd.f32 0.0, %v1819
      %1821 = vmatmul.bf16.gmra.mxu0 %v1308
      %v1822 = vpop.f32.mrf.mxu0
      %v1823 = vadd.f32 0.0, %v1822
      %v1824 = vpop.f32.mrf.mxu0
      %v1825 = vadd.f32 0.0, %v1824
      %1826 = vmatmul.bf16.gmra.mxu0 %v1738
      %v1827 = vpop.f32.mrf.mxu0
      %v1828 = vadd.f32 0.0, %v1827
      %v1829 = vpop.f32.mrf.mxu0
      %v1830 = vadd.f32 0.0, %v1829
      %1831 = vdwg.mxu0
      %v1832 = vadd.f32 %v1692, %v1753
      %v1833 = vadd.f32 %v1693, %v1755
      %v1834 = vadd.f32 %v1694, %v1758
      %v1835 = vadd.f32 %v1695, %v1760
      %v1836 = vadd.f32 %v1696, %v1763
      %v1837 = vadd.f32 %v1697, %v1765
      %v1838 = vadd.f32 %v1698, %v1768
      %v1839 = vadd.f32 %v1699, %v1770
      %v1840 = vadd.f32 %v1700, %v1773
      %v1841 = vadd.f32 %v1701, %v1775
      %v1842 = vadd.f32 %v1702, %v1778
      %v1843 = vadd.f32 %v1703, %v1780
      %v1844 = vadd.f32 %v1704, %v1783
      %v1845 = vadd.f32 %v1705, %v1785
      %v1846 = vadd.f32 %v1706, %v1788
      %v1847 = vadd.f32 %v1707, %v1790
      %v1848 = vadd.f32 %v1708, %v1793
      %v1849 = vadd.f32 %v1709, %v1795
      %v1850 = vadd.f32 %v1710, %v1798
      %v1851 = vadd.f32 %v1711, %v1800
      %v1852 = vadd.f32 %v1712, %v1803
      %v1853 = vadd.f32 %v1713, %v1805
      %v1854 = vadd.f32 %v1714, %v1808
      %v1855 = vadd.f32 %v1715, %v1810
      %v1856 = vadd.f32 %v1716, %v1813
      %v1857 = vadd.f32 %v1717, %v1815
      %v1858 = vadd.f32 %v1718, %v1818
      %v1859 = vadd.f32 %v1719, %v1820
      %v1860 = vadd.f32 %v1720, %v1823
      %v1861 = vadd.f32 %v1721, %v1825
      %v1862 = vadd.f32 %v1722, %v1828
      %v1863 = vadd.f32 %v1723, %v1830
      %s1864 = scalar_lea.vmem %s1, 12
      %v1865 = vld [vmem:[%s1864] sm:$0x3]
      %v1868 = vunpack.c.l.b16 %v278
      %v1869 = vunpack.c.l.b16 %v279
      %v1870 = vpack.c.b16 %v1869, %v1868
      %v1872 = vsel %vm719, %v1870, 0
      %v1875 = vsel %vm768, %v1865, 0
      %1877 = vmatpush.bf16.msra.mxu0 0
      %1878 = vmatpush.bf16.msra.mxu0 0
      %1879 = vmatpush.bf16.msra.mxu0 0
      %1880 = vmatpush.bf16.msra.mxu0 0
      %1881 = vmatpush.bf16.msra.mxu0 0
      %1882 = vmatpush.bf16.msra.mxu0 0
      %1883 = vmatpush.bf16.msra.mxu0 0
      %1884 = vmatpush.bf16.msra.mxu0 %v1875
      %1885 = vmatmul.bf16.gmra.mxu0 %v948
      %v1886 = vpop.f32.mrf.mxu0
      %v1887 = vadd.f32 0.0, %v1886
      %v1888 = vpop.f32.mrf.mxu0
      %v1889 = vadd.f32 0.0, %v1888
      %1890 = vmatmul.bf16.gmra.mxu0 %v951
      %v1891 = vpop.f32.mrf.mxu0
      %v1892 = vadd.f32 0.0, %v1891
      %v1893 = vpop.f32.mrf.mxu0
      %v1894 = vadd.f32 0.0, %v1893
      %1895 = vmatmul.bf16.gmra.mxu0 %v954
      %v1896 = vpop.f32.mrf.mxu0
      %v1897 = vadd.f32 0.0, %v1896
      %v1898 = vpop.f32.mrf.mxu0
      %v1899 = vadd.f32 0.0, %v1898
      %1900 = vmatmul.bf16.gmra.mxu0 %v957
      %v1901 = vpop.f32.mrf.mxu0
      %v1902 = vadd.f32 0.0, %v1901
      %v1903 = vpop.f32.mrf.mxu0
      %v1904 = vadd.f32 0.0, %v1903
      %1905 = vmatmul.bf16.gmra.mxu0 %v960
      %v1906 = vpop.f32.mrf.mxu0
      %v1907 = vadd.f32 0.0, %v1906
      %v1908 = vpop.f32.mrf.mxu0
      %v1909 = vadd.f32 0.0, %v1908
      %1910 = vmatmul.bf16.gmra.mxu0 %v963
      %v1911 = vpop.f32.mrf.mxu0
      %v1912 = vadd.f32 0.0, %v1911
      %v1913 = vpop.f32.mrf.mxu0
      %v1914 = vadd.f32 0.0, %v1913
      %1915 = vmatmul.bf16.gmra.mxu0 %v966
      %v1916 = vpop.f32.mrf.mxu0
      %v1917 = vadd.f32 0.0, %v1916
      %v1918 = vpop.f32.mrf.mxu0
      %v1919 = vadd.f32 0.0, %v1918
      %1920 = vmatmul.bf16.gmra.mxu0 %v969
      %v1921 = vpop.f32.mrf.mxu0
      %v1922 = vadd.f32 0.0, %v1921
      %v1923 = vpop.f32.mrf.mxu0
      %v1924 = vadd.f32 0.0, %v1923
      %1925 = vmatmul.bf16.gmra.mxu0 %v972
      %v1926 = vpop.f32.mrf.mxu0
      %v1927 = vadd.f32 0.0, %v1926
      %v1928 = vpop.f32.mrf.mxu0
      %v1929 = vadd.f32 0.0, %v1928
      %1930 = vmatmul.bf16.gmra.mxu0 %v975
      %v1931 = vpop.f32.mrf.mxu0
      %v1932 = vadd.f32 0.0, %v1931
      %v1933 = vpop.f32.mrf.mxu0
      %v1934 = vadd.f32 0.0, %v1933
      %1935 = vmatmul.bf16.gmra.mxu0 %v978
      %v1936 = vpop.f32.mrf.mxu0
      %v1937 = vadd.f32 0.0, %v1936
      %v1938 = vpop.f32.mrf.mxu0
      %v1939 = vadd.f32 0.0, %v1938
      %1940 = vmatmul.bf16.gmra.mxu0 %v981
      %v1941 = vpop.f32.mrf.mxu0
      %v1942 = vadd.f32 0.0, %v1941
      %v1943 = vpop.f32.mrf.mxu0
      %v1944 = vadd.f32 0.0, %v1943
      %1945 = vmatmul.bf16.gmra.mxu0 %v984
      %v1946 = vpop.f32.mrf.mxu0
      %v1947 = vadd.f32 0.0, %v1946
      %v1948 = vpop.f32.mrf.mxu0
      %v1949 = vadd.f32 0.0, %v1948
      %1950 = vmatmul.bf16.gmra.mxu0 %v987
      %v1951 = vpop.f32.mrf.mxu0
      %v1952 = vadd.f32 0.0, %v1951
      %v1953 = vpop.f32.mrf.mxu0
      %v1954 = vadd.f32 0.0, %v1953
      %1955 = vmatmul.bf16.gmra.mxu0 %v1442
      %v1956 = vpop.f32.mrf.mxu0
      %v1957 = vadd.f32 0.0, %v1956
      %v1958 = vpop.f32.mrf.mxu0
      %v1959 = vadd.f32 0.0, %v1958
      %1960 = vmatmul.bf16.gmra.mxu0 %v1872
      %v1961 = vpop.f32.mrf.mxu0
      %v1962 = vadd.f32 0.0, %v1961
      %v1963 = vpop.f32.mrf.mxu0
      %v1964 = vadd.f32 0.0, %v1963
      %1965 = vdwg.mxu0
      %v1966 = vadd.f32 %v1832, %v1887
      %v1967 = vadd.f32 %v1833, %v1889
      %v1968 = vadd.f32 %v1834, %v1892
      %v1969 = vadd.f32 %v1835, %v1894
      %v1970 = vadd.f32 %v1836, %v1897
      %v1971 = vadd.f32 %v1837, %v1899
      %v1972 = vadd.f32 %v1838, %v1902
      %v1973 = vadd.f32 %v1839, %v1904
      %v1974 = vadd.f32 %v1840, %v1907
      %v1975 = vadd.f32 %v1841, %v1909
      %v1976 = vadd.f32 %v1842, %v1912
      %v1977 = vadd.f32 %v1843, %v1914
      %v1978 = vadd.f32 %v1844, %v1917
      %v1979 = vadd.f32 %v1845, %v1919
      %v1980 = vadd.f32 %v1846, %v1922
      %v1981 = vadd.f32 %v1847, %v1924
      %v1982 = vadd.f32 %v1848, %v1927
      %v1983 = vadd.f32 %v1849, %v1929
      %v1984 = vadd.f32 %v1850, %v1932
      %v1985 = vadd.f32 %v1851, %v1934
      %v1986 = vadd.f32 %v1852, %v1937
      %v1987 = vadd.f32 %v1853, %v1939
      %v1988 = vadd.f32 %v1854, %v1942
      %v1989 = vadd.f32 %v1855, %v1944
      %v1990 = vadd.f32 %v1856, %v1947
      %v1991 = vadd.f32 %v1857, %v1949
      %v1992 = vadd.f32 %v1858, %v1952
      %v1993 = vadd.f32 %v1859, %v1954
      %v1994 = vadd.f32 %v1860, %v1957
      %v1995 = vadd.f32 %v1861, %v1959
      %v1996 = vadd.f32 %v1862, %v1962
      %v1997 = vadd.f32 %v1863, %v1964
      %v1999 = vshrl.u32 %v278, 16
      %v2001 = vrot.slane %v1999, 4
      %v2002 = vshll.u32 %v278, 16
      %v2004 = vrot.slane %v2002, 5
      %v2005 = vor.u32 %v2001, %v2004
      %v2006 = vrot.slane %v2005, 4
      %v2008 = vshll.u32 %v279, 16
      %v2010 = vrot.slane %v2008, 5
      %v2011 = vsel %vm284, %v2006, %v2010
      %v2012 = vshrl.u32 %v279, 16
      %v2014 = vrot.slane %v2012, 4
      %v2015 = vor.u32 %v2014, %v2010
      %v2016 = vrot.slane %v2015, 4
      %v2018 = vshll.u32 %v280, 16
      %v2020 = vrot.slane %v2018, 5
      %v2021 = vsel %vm284, %v2016, %v2020
      %s2022 = scalar_lea.vmem %s1, 14
      %v2023 = vld [vmem:[%s2022] sm:$0x3]
      %v2024 = vunpack.c.l.b16 %v2011
      %v2025 = vunpack.c.l.b16 %v2021
      %v2026 = vpack.c.b16 %v2025, %v2024
      %v2028 = vsel %vm719, %v2026, 0
      %v2031 = vsel %vm768, %v2023, 0
      %2033 = vmatpush.bf16.msra.mxu0 0
      %2034 = vmatpush.bf16.msra.mxu0 0
      %2035 = vmatpush.bf16.msra.mxu0 0
      %2036 = vmatpush.bf16.msra.mxu0 0
      %2037 = vmatpush.bf16.msra.mxu0 0
      %2038 = vmatpush.bf16.msra.mxu0 0
      %2039 = vmatpush.bf16.msra.mxu0 0
      %2040 = vmatpush.bf16.msra.mxu0 %v2031
      %2041 = vmatmul.bf16.gmra.mxu0 %v727
      %v2042 = vpop.f32.mrf.mxu0
      %v2043 = vadd.f32 0.0, %v2042
      %v2044 = vpop.f32.mrf.mxu0
      %v2045 = vadd.f32 0.0, %v2044
      %2046 = vmatmul.bf16.gmra.mxu0 %v730
      %v2047 = vpop.f32.mrf.mxu0
      %v2048 = vadd.f32 0.0, %v2047
      %v2049 = vpop.f32.mrf.mxu0
      %v2050 = vadd.f32 0.0, %v2049
      %2051 = vmatmul.bf16.gmra.mxu0 %v733
      %v2052 = vpop.f32.mrf.mxu0
      %v2053 = vadd.f32 0.0, %v2052
      %v2054 = vpop.f32.mrf.mxu0
      %v2055 = vadd.f32 0.0, %v2054
      %2056 = vmatmul.bf16.gmra.mxu0 %v736
      %v2057 = vpop.f32.mrf.mxu0
      %v2058 = vadd.f32 0.0, %v2057
      %v2059 = vpop.f32.mrf.mxu0
      %v2060 = vadd.f32 0.0, %v2059
      %2061 = vmatmul.bf16.gmra.mxu0 %v739
      %v2062 = vpop.f32.mrf.mxu0
      %v2063 = vadd.f32 0.0, %v2062
      %v2064 = vpop.f32.mrf.mxu0
      %v2065 = vadd.f32 0.0, %v2064
      %2066 = vmatmul.bf16.gmra.mxu0 %v742
      %v2067 = vpop.f32.mrf.mxu0
      %v2068 = vadd.f32 0.0, %v2067
      %v2069 = vpop.f32.mrf.mxu0
      %v2070 = vadd.f32 0.0, %v2069
      %2071 = vmatmul.bf16.gmra.mxu0 %v745
      %v2072 = vpop.f32.mrf.mxu0
      %v2073 = vadd.f32 0.0, %v2072
      %v2074 = vpop.f32.mrf.mxu0
      %v2075 = vadd.f32 0.0, %v2074
      %2076 = vmatmul.bf16.gmra.mxu0 %v748
      %v2077 = vpop.f32.mrf.mxu0
      %v2078 = vadd.f32 0.0, %v2077
      %v2079 = vpop.f32.mrf.mxu0
      %v2080 = vadd.f32 0.0, %v2079
      %2081 = vmatmul.bf16.gmra.mxu0 %v751
      %v2082 = vpop.f32.mrf.mxu0
      %v2083 = vadd.f32 0.0, %v2082
      %v2084 = vpop.f32.mrf.mxu0
      %v2085 = vadd.f32 0.0, %v2084
      %2086 = vmatmul.bf16.gmra.mxu0 %v754
      %v2087 = vpop.f32.mrf.mxu0
      %v2088 = vadd.f32 0.0, %v2087
      %v2089 = vpop.f32.mrf.mxu0
      %v2090 = vadd.f32 0.0, %v2089
      %2091 = vmatmul.bf16.gmra.mxu0 %v757
      %v2092 = vpop.f32.mrf.mxu0
      %v2093 = vadd.f32 0.0, %v2092
      %v2094 = vpop.f32.mrf.mxu0
      %v2095 = vadd.f32 0.0, %v2094
      %2096 = vmatmul.bf16.gmra.mxu0 %v760
      %v2097 = vpop.f32.mrf.mxu0
      %v2098 = vadd.f32 0.0, %v2097
      %v2099 = vpop.f32.mrf.mxu0
      %v2100 = vadd.f32 0.0, %v2099
      %2101 = vmatmul.bf16.gmra.mxu0 %v763
      %v2102 = vpop.f32.mrf.mxu0
      %v2103 = vadd.f32 0.0, %v2102
      %v2104 = vpop.f32.mrf.mxu0
      %v2105 = vadd.f32 0.0, %v2104
      %2106 = vmatmul.bf16.gmra.mxu0 %v766
      %v2107 = vpop.f32.mrf.mxu0
      %v2108 = vadd.f32 0.0, %v2107
      %v2109 = vpop.f32.mrf.mxu0
      %v2110 = vadd.f32 0.0, %v2109
      %2111 = vmatmul.bf16.gmra.mxu0 %v1598
      %v2112 = vpop.f32.mrf.mxu0
      %v2113 = vadd.f32 0.0, %v2112
      %v2114 = vpop.f32.mrf.mxu0
      %v2115 = vadd.f32 0.0, %v2114
      %2116 = vmatmul.bf16.gmra.mxu0 %v2028
      %v2117 = vpop.f32.mrf.mxu0
      %v2118 = vadd.f32 0.0, %v2117
      %v2119 = vpop.f32.mrf.mxu0
      %v2120 = vadd.f32 0.0, %v2119
      %2121 = vdwg.mxu0
      %v2122 = vadd.f32 %v1966, %v2043
      %v2123 = vadd.f32 %v1967, %v2045
      %v2124 = vadd.f32 %v1968, %v2048
      %v2125 = vadd.f32 %v1969, %v2050
      %v2126 = vadd.f32 %v1970, %v2053
      %v2127 = vadd.f32 %v1971, %v2055
      %v2128 = vadd.f32 %v1972, %v2058
      %v2129 = vadd.f32 %v1973, %v2060
      %v2130 = vadd.f32 %v1974, %v2063
      %v2131 = vadd.f32 %v1975, %v2065
      %v2132 = vadd.f32 %v1976, %v2068
      %v2133 = vadd.f32 %v1977, %v2070
      %v2134 = vadd.f32 %v1978, %v2073
      %v2135 = vadd.f32 %v1979, %v2075
      %v2136 = vadd.f32 %v1980, %v2078
      %v2137 = vadd.f32 %v1981, %v2080
      %v2138 = vadd.f32 %v1982, %v2083
      %v2139 = vadd.f32 %v1983, %v2085
      %v2140 = vadd.f32 %v1984, %v2088
      %v2141 = vadd.f32 %v1985, %v2090
      %v2142 = vadd.f32 %v1986, %v2093
      %v2143 = vadd.f32 %v1987, %v2095
      %v2144 = vadd.f32 %v1988, %v2098
      %v2145 = vadd.f32 %v1989, %v2100
      %v2146 = vadd.f32 %v1990, %v2103
      %v2147 = vadd.f32 %v1991, %v2105
      %v2148 = vadd.f32 %v1992, %v2108
      %v2149 = vadd.f32 %v1993, %v2110
      %v2150 = vadd.f32 %v1994, %v2113
      %v2151 = vadd.f32 %v1995, %v2115
      %v2152 = vadd.f32 %v1996, %v2118
      %v2153 = vadd.f32 %v1997, %v2120
      %v2155 = vrot.slane %v278, 5
      %v2156 = vrot.slane %v2155, 4
      %v2157 = vrot.slane %v279, 5
      %v2158 = vsel %vm1099, %v2156, %v2157
      %v2159 = vrot.slane %v2157, 4
      %v2160 = vrot.slane %v280, 5
      %v2161 = vsel %vm1099, %v2159, %v2160
      %s2162 = scalar_lea.vmem %s1, 16
      %v2163 = vld [vmem:[%s2162] sm:$0x3]
      %v2164 = vunpack.c.l.b16 %v2158
      %v2165 = vunpack.c.l.b16 %v2161
      %v2166 = vpack.c.b16 %v2165, %v2164
      %v2168 = vsel %vm719, %v2166, 0
      %v2171 = vsel %vm768, %v2163, 0
      %2173 = vmatpush.bf16.msra.mxu0 0
      %2174 = vmatpush.bf16.msra.mxu0 0
      %2175 = vmatpush.bf16.msra.mxu0 0
      %2176 = vmatpush.bf16.msra.mxu0 0
      %2177 = vmatpush.bf16.msra.mxu0 0
      %2178 = vmatpush.bf16.msra.mxu0 0
      %2179 = vmatpush.bf16.msra.mxu0 0
      %2180 = vmatpush.bf16.msra.mxu0 %v2171
      %2181 = vmatmul.bf16.gmra.mxu0 %v1269
      %v2182 = vpop.f32.mrf.mxu0
      %v2183 = vadd.f32 0.0, %v2182
      %v2184 = vpop.f32.mrf.mxu0
      %v2185 = vadd.f32 0.0, %v2184
      %2186 = vmatmul.bf16.gmra.mxu0 %v1272
      %v2187 = vpop.f32.mrf.mxu0
      %v2188 = vadd.f32 0.0, %v2187
      %v2189 = vpop.f32.mrf.mxu0
      %v2190 = vadd.f32 0.0, %v2189
      %2191 = vmatmul.bf16.gmra.mxu0 %v1275
      %v2192 = vpop.f32.mrf.mxu0
      %v2193 = vadd.f32 0.0, %v2192
      %v2194 = vpop.f32.mrf.mxu0
      %v2195 = vadd.f32 0.0, %v2194
      %2196 = vmatmul.bf16.gmra.mxu0 %v1278
      %v2197 = vpop.f32.mrf.mxu0
      %v2198 = vadd.f32 0.0, %v2197
      %v2199 = vpop.f32.mrf.mxu0
      %v2200 = vadd.f32 0.0, %v2199
      %2201 = vmatmul.bf16.gmra.mxu0 %v1281
      %v2202 = vpop.f32.mrf.mxu0
      %v2203 = vadd.f32 0.0, %v2202
      %v2204 = vpop.f32.mrf.mxu0
      %v2205 = vadd.f32 0.0, %v2204
      %2206 = vmatmul.bf16.gmra.mxu0 %v1284
      %v2207 = vpop.f32.mrf.mxu0
      %v2208 = vadd.f32 0.0, %v2207
      %v2209 = vpop.f32.mrf.mxu0
      %v2210 = vadd.f32 0.0, %v2209
      %2211 = vmatmul.bf16.gmra.mxu0 %v1287
      %v2212 = vpop.f32.mrf.mxu0
      %v2213 = vadd.f32 0.0, %v2212
      %v2214 = vpop.f32.mrf.mxu0
      %v2215 = vadd.f32 0.0, %v2214
      %2216 = vmatmul.bf16.gmra.mxu0 %v1290
      %v2217 = vpop.f32.mrf.mxu0
      %v2218 = vadd.f32 0.0, %v2217
      %v2219 = vpop.f32.mrf.mxu0
      %v2220 = vadd.f32 0.0, %v2219
      %2221 = vmatmul.bf16.gmra.mxu0 %v1293
      %v2222 = vpop.f32.mrf.mxu0
      %v2223 = vadd.f32 0.0, %v2222
      %v2224 = vpop.f32.mrf.mxu0
      %v2225 = vadd.f32 0.0, %v2224
      %2226 = vmatmul.bf16.gmra.mxu0 %v1296
      %v2227 = vpop.f32.mrf.mxu0
      %v2228 = vadd.f32 0.0, %v2227
      %v2229 = vpop.f32.mrf.mxu0
      %v2230 = vadd.f32 0.0, %v2229
      %2231 = vmatmul.bf16.gmra.mxu0 %v1299
      %v2232 = vpop.f32.mrf.mxu0
      %v2233 = vadd.f32 0.0, %v2232
      %v2234 = vpop.f32.mrf.mxu0
      %v2235 = vadd.f32 0.0, %v2234
      %2236 = vmatmul.bf16.gmra.mxu0 %v1302
      %v2237 = vpop.f32.mrf.mxu0
      %v2238 = vadd.f32 0.0, %v2237
      %v2239 = vpop.f32.mrf.mxu0
      %v2240 = vadd.f32 0.0, %v2239
      %2241 = vmatmul.bf16.gmra.mxu0 %v1305
      %v2242 = vpop.f32.mrf.mxu0
      %v2243 = vadd.f32 0.0, %v2242
      %v2244 = vpop.f32.mrf.mxu0
      %v2245 = vadd.f32 0.0, %v2244
      %2246 = vmatmul.bf16.gmra.mxu0 %v1308
      %v2247 = vpop.f32.mrf.mxu0
      %v2248 = vadd.f32 0.0, %v2247
      %v2249 = vpop.f32.mrf.mxu0
      %v2250 = vadd.f32 0.0, %v2249
      %2251 = vmatmul.bf16.gmra.mxu0 %v1738
      %v2252 = vpop.f32.mrf.mxu0
      %v2253 = vadd.f32 0.0, %v2252
      %v2254 = vpop.f32.mrf.mxu0
      %v2255 = vadd.f32 0.0, %v2254
      %2256 = vmatmul.bf16.gmra.mxu0 %v2168
      %v2257 = vpop.f32.mrf.mxu0
      %v2258 = vadd.f32 0.0, %v2257
      %v2259 = vpop.f32.mrf.mxu0
      %v2260 = vadd.f32 0.0, %v2259
      %2261 = vdwg.mxu0
      %v2262 = vadd.f32 %v2122, %v2183
      %v2263 = vadd.f32 %v2123, %v2185
      %v2264 = vadd.f32 %v2124, %v2188
      %v2265 = vadd.f32 %v2125, %v2190
      %v2266 = vadd.f32 %v2126, %v2193
      %v2267 = vadd.f32 %v2127, %v2195
      %v2268 = vadd.f32 %v2128, %v2198
      %v2269 = vadd.f32 %v2129, %v2200
      %v2270 = vadd.f32 %v2130, %v2203
      %v2271 = vadd.f32 %v2131, %v2205
      %v2272 = vadd.f32 %v2132, %v2208
      %v2273 = vadd.f32 %v2133, %v2210
      %v2274 = vadd.f32 %v2134, %v2213
      %v2275 = vadd.f32 %v2135, %v2215
      %v2276 = vadd.f32 %v2136, %v2218
      %v2277 = vadd.f32 %v2137, %v2220
      %v2278 = vadd.f32 %v2138, %v2223
      %v2279 = vadd.f32 %v2139, %v2225
      %v2280 = vadd.f32 %v2140, %v2228
      %v2281 = vadd.f32 %v2141, %v2230
      %v2282 = vadd.f32 %v2142, %v2233
      %v2283 = vadd.f32 %v2143, %v2235
      %v2284 = vadd.f32 %v2144, %v2238
      %v2285 = vadd.f32 %v2145, %v2240
      %v2286 = vadd.f32 %v2146, %v2243
      %v2287 = vadd.f32 %v2147, %v2245
      %v2288 = vadd.f32 %v2148, %v2248
      %v2289 = vadd.f32 %v2149, %v2250
      %v2290 = vadd.f32 %v2150, %v2253
      %v2291 = vadd.f32 %v2151, %v2255
      %v2292 = vadd.f32 %v2152, %v2258
      %v2293 = vadd.f32 %v2153, %v2260
      %v2294 = vpack.c.bf16 %v2262, %v2262
      %v2295 = vpack.c.bf16 %v2263, %v2263
      %v2296 = vpack.c.bf16 %v2264, %v2264
      %v2297 = vpack.c.bf16 %v2265, %v2265
      %v2298 = vpack.c.bf16 %v2266, %v2266
      %v2299 = vpack.c.bf16 %v2267, %v2267
      %v2300 = vpack.c.bf16 %v2268, %v2268
      %v2301 = vpack.c.bf16 %v2269, %v2269
      %v2302 = vpack.c.bf16 %v2270, %v2270
      %v2303 = vpack.c.bf16 %v2271, %v2271
      %v2304 = vpack.c.bf16 %v2272, %v2272
      %v2305 = vpack.c.bf16 %v2273, %v2273
      %v2306 = vpack.c.bf16 %v2274, %v2274
      %v2307 = vpack.c.bf16 %v2275, %v2275
      %v2308 = vpack.c.bf16 %v2276, %v2276
      %v2309 = vpack.c.bf16 %v2277, %v2277
      %v2310 = vpack.c.bf16 %v2278, %v2278
      %v2311 = vpack.c.bf16 %v2279, %v2279
      %v2312 = vpack.c.bf16 %v2280, %v2280
      %v2313 = vpack.c.bf16 %v2281, %v2281
      %v2314 = vpack.c.bf16 %v2282, %v2282
      %v2315 = vpack.c.bf16 %v2283, %v2283
      %v2316 = vpack.c.bf16 %v2284, %v2284
      %v2317 = vpack.c.bf16 %v2285, %v2285
      %v2318 = vpack.c.bf16 %v2286, %v2286
      %v2319 = vpack.c.bf16 %v2287, %v2287
      %v2320 = vpack.c.bf16 %v2288, %v2288
      %v2321 = vpack.c.bf16 %v2289, %v2289
      %v2322 = vpack.c.bf16 %v2290, %v2290
      %v2323 = vpack.c.bf16 %v2291, %v2291
      %v2324 = vpack.c.bf16 %v2292, %v2292
      %v2325 = vpack.c.bf16 %v2293, %v2293
      %2326 = vst [vmem:[%s218] sm:$0xf] %v2294
      %2327 = vst [vmem:[%s218 + $0x4] sm:$0xf] %v2295
      %2328 = vst [vmem:[%s218 + $0x8] sm:$0xf] %v2296
      %2329 = vst [vmem:[%s218 + $0xc] sm:$0xf] %v2297
      %2330 = vst [vmem:[%s218 + $0x10] sm:$0xf] %v2298
      %2331 = vst [vmem:[%s218 + $0x14] sm:$0xf] %v2299
      %2332 = vst [vmem:[%s218 + $0x18] sm:$0xf] %v2300
      %2333 = vst [vmem:[%s218 + $0x1c] sm:$0xf] %v2301
      %2334 = vst [vmem:[%s218 + $0x20] sm:$0xf] %v2302
      %2335 = vst [vmem:[%s218 + $0x24] sm:$0xf] %v2303
      %2336 = vst [vmem:[%s218 + $0x28] sm:$0xf] %v2304
      %2337 = vst [vmem:[%s218 + $0x2c] sm:$0xf] %v2305
      %2338 = vst [vmem:[%s218 + $0x30] sm:$0xf] %v2306
      %2339 = vst [vmem:[%s218 + $0x34] sm:$0xf] %v2307
      %2340 = vst [vmem:[%s218 + $0x38] sm:$0xf] %v2308
      %2341 = vst [vmem:[%s218 + $0x3c] sm:$0xf] %v2309
      %2342 = vst [vmem:[%s218 + $0x40] sm:$0xf] %v2310
      %2343 = vst [vmem:[%s218 + $0x44] sm:$0xf] %v2311
      %2344 = vst [vmem:[%s218 + $0x48] sm:$0xf] %v2312
      %2345 = vst [vmem:[%s218 + $0x4c] sm:$0xf] %v2313
      %2346 = vst [vmem:[%s218 + $0x50] sm:$0xf] %v2314
      %2347 = vst [vmem:[%s218 + $0x54] sm:$0xf] %v2315
      %2348 = vst [vmem:[%s218 + $0x58] sm:$0xf] %v2316
      %2349 = vst [vmem:[%s218 + $0x5c] sm:$0xf] %v2317
      %2350 = vst [vmem:[%s218 + $0x60] sm:$0xf] %v2318
      %2351 = vst [vmem:[%s218 + $0x64] sm:$0xf] %v2319
      %2352 = vst [vmem:[%s218 + $0x68] sm:$0xf] %v2320
      %2353 = vst [vmem:[%s218 + $0x6c] sm:$0xf] %v2321
      %2354 = vst [vmem:[%s218 + $0x70] sm:$0xf] %v2322
      %2355 = vst [vmem:[%s218 + $0x74] sm:$0xf] %v2323
      %2356 = vst [vmem:[%s218 + $0x78] sm:$0xf] %v2324
      %2357 = vst [vmem:[%s218 + $0x7c] sm:$0xf] %v2325
      %s2358 = smul.u32 %s20, 16
      %s2359 = ssub.s32 16, %s2358
      %p2360 = scmp.lt.s32.totalorder %s2359, 16
      %s2361 = scalar_select %p2360, %s2359, 16
      %s2362 = smul.u32 %s2361, 16
      %v2363 = vlaneseq
      %v2364 = vshrl.u32 %v2363, 7
      %v2365 = vadd.s32 %v2364, 8
      %v2366 = vadd.s32 %v2364, 16
      %v2367 = vadd.s32 %v2364, 24
      %v2368 = vadd.s32 %v2364, 32
      %v2369 = vadd.s32 %v2364, 40
      %v2370 = vadd.s32 %v2364, 48
      %v2371 = vadd.s32 %v2364, 56
      %v2372 = vadd.s32 %v2364, 64
      %v2373 = vadd.s32 %v2364, 72
      %v2374 = vadd.s32 %v2364, 80
      %v2375 = vadd.s32 %v2364, 88
      %v2376 = vadd.s32 %v2364, 96
      %v2377 = vadd.s32 %v2364, 104
      %v2378 = vadd.s32 %v2364, 112
      %v2379 = vadd.s32 %v2364, 120
      %v2380 = vadd.s32 %v2364, 128
      %v2381 = vadd.s32 %v2364, 136
      %v2382 = vadd.s32 %v2364, 144
      %v2383 = vadd.s32 %v2364, 152
      %v2384 = vadd.s32 %v2364, 160
      %v2385 = vadd.s32 %v2364, 168
      %v2386 = vadd.s32 %v2364, 176
      %v2387 = vadd.s32 %v2364, 184
      %v2388 = vadd.s32 %v2364, 192
      %v2389 = vadd.s32 %v2364, 200
      %v2390 = vadd.s32 %v2364, 208
      %v2391 = vadd.s32 %v2364, 216
      %v2392 = vadd.s32 %v2364, 224
      %v2393 = vadd.s32 %v2364, 232
      %v2394 = vadd.s32 %v2364, 240
      %v2395 = vadd.s32 %v2364, 248
      %v2396 = vstv %s2362
      %vm2397 = vcmp.lt.s32.totalorder %v2364, %v2396
      %vm2398 = vcmp.lt.s32.totalorder %v2365, %v2396
      %vm2399 = vcmp.lt.s32.totalorder %v2366, %v2396
      %vm2400 = vcmp.lt.s32.totalorder %v2367, %v2396
      %vm2401 = vcmp.lt.s32.totalorder %v2368, %v2396
      %vm2402 = vcmp.lt.s32.totalorder %v2369, %v2396
      %vm2403 = vcmp.lt.s32.totalorder %v2370, %v2396
      %vm2404 = vcmp.lt.s32.totalorder %v2371, %v2396
      %vm2405 = vcmp.lt.s32.totalorder %v2372, %v2396
      %vm2406 = vcmp.lt.s32.totalorder %v2373, %v2396
      %vm2407 = vcmp.lt.s32.totalorder %v2374, %v2396
      %vm2408 = vcmp.lt.s32.totalorder %v2375, %v2396
      %vm2409 = vcmp.lt.s32.totalorder %v2376, %v2396
      %vm2410 = vcmp.lt.s32.totalorder %v2377, %v2396
      %vm2411 = vcmp.lt.s32.totalorder %v2378, %v2396
      %vm2412 = vcmp.lt.s32.totalorder %v2379, %v2396
      %vm2413 = vcmp.lt.s32.totalorder %v2380, %v2396
      %vm2414 = vcmp.lt.s32.totalorder %v2381, %v2396
      %vm2415 = vcmp.lt.s32.totalorder %v2382, %v2396
      %vm2416 = vcmp.lt.s32.totalorder %v2383, %v2396
      %vm2417 = vcmp.lt.s32.totalorder %v2384, %v2396
      %vm2418 = vcmp.lt.s32.totalorder %v2385, %v2396
      %vm2419 = vcmp.lt.s32.totalorder %v2386, %v2396
      %vm2420 = vcmp.lt.s32.totalorder %v2387, %v2396
      %vm2421 = vcmp.lt.s32.totalorder %v2388, %v2396
      %vm2422 = vcmp.lt.s32.totalorder %v2389, %v2396
      %vm2423 = vcmp.lt.s32.totalorder %v2390, %v2396
      %vm2424 = vcmp.lt.s32.totalorder %v2391, %v2396
      %vm2425 = vcmp.lt.s32.totalorder %v2392, %v2396
      %vm2426 = vcmp.lt.s32.totalorder %v2393, %v2396
      %vm2427 = vcmp.lt.s32.totalorder %v2394, %v2396
      %vm2428 = vcmp.lt.s32.totalorder %v2395, %v2396
      %v2429 = vsel %vm2397, 1, 0
      %v2430 = vsel %vm2398, 1, 0
      %v2431 = vsel %vm2399, 1, 0
      %v2432 = vsel %vm2400, 1, 0
      %v2433 = vsel %vm2401, 1, 0
      %v2434 = vsel %vm2402, 1, 0
      %v2435 = vsel %vm2403, 1, 0
      %v2436 = vsel %vm2404, 1, 0
      %v2437 = vsel %vm2405, 1, 0
      %v2438 = vsel %vm2406, 1, 0
      %v2439 = vsel %vm2407, 1, 0
      %v2440 = vsel %vm2408, 1, 0
      %v2441 = vsel %vm2409, 1, 0
      %v2442 = vsel %vm2410, 1, 0
      %v2443 = vsel %vm2411, 1, 0
      %v2444 = vsel %vm2412, 1, 0
      %v2445 = vsel %vm2413, 1, 0
      %v2446 = vsel %vm2414, 1, 0
      %v2447 = vsel %vm2415, 1, 0
      %v2448 = vsel %vm2416, 1, 0
      %v2449 = vsel %vm2417, 1, 0
      %v2450 = vsel %vm2418, 1, 0
      %v2451 = vsel %vm2419, 1, 0
      %v2452 = vsel %vm2420, 1, 0
      %v2453 = vsel %vm2421, 1, 0
      %v2454 = vsel %vm2422, 1, 0
      %v2455 = vsel %vm2423, 1, 0
      %v2456 = vsel %vm2424, 1, 0
      %v2457 = vsel %vm2425, 1, 0
      %v2458 = vsel %vm2426, 1, 0
      %v2459 = vsel %vm2427, 1, 0
      %v2460 = vsel %vm2428, 1, 0
      %vm2461 = vcmp.eq.s32.totalorder %v2429, 1
      %vm2462 = vcmp.eq.s32.totalorder %v2430, 1
      %vm2463 = vcmp.eq.s32.totalorder %v2431, 1
      %vm2464 = vcmp.eq.s32.totalorder %v2432, 1
      %vm2465 = vcmp.eq.s32.totalorder %v2433, 1
      %vm2466 = vcmp.eq.s32.totalorder %v2434, 1
      %vm2467 = vcmp.eq.s32.totalorder %v2435, 1
      %vm2468 = vcmp.eq.s32.totalorder %v2436, 1
      %vm2469 = vcmp.eq.s32.totalorder %v2437, 1
      %vm2470 = vcmp.eq.s32.totalorder %v2438, 1
      %vm2471 = vcmp.eq.s32.totalorder %v2439, 1
      %vm2472 = vcmp.eq.s32.totalorder %v2440, 1
      %vm2473 = vcmp.eq.s32.totalorder %v2441, 1
      %vm2474 = vcmp.eq.s32.totalorder %v2442, 1
      %vm2475 = vcmp.eq.s32.totalorder %v2443, 1
      %vm2476 = vcmp.eq.s32.totalorder %v2444, 1
      %vm2477 = vcmp.eq.s32.totalorder %v2445, 1
      %vm2478 = vcmp.eq.s32.totalorder %v2446, 1
      %vm2479 = vcmp.eq.s32.totalorder %v2447, 1
      %vm2480 = vcmp.eq.s32.totalorder %v2448, 1
      %vm2481 = vcmp.eq.s32.totalorder %v2449, 1
      %vm2482 = vcmp.eq.s32.totalorder %v2450, 1
      %vm2483 = vcmp.eq.s32.totalorder %v2451, 1
      %vm2484 = vcmp.eq.s32.totalorder %v2452, 1
      %vm2485 = vcmp.eq.s32.totalorder %v2453, 1
      %vm2486 = vcmp.eq.s32.totalorder %v2454, 1
      %vm2487 = vcmp.eq.s32.totalorder %v2455, 1
      %vm2488 = vcmp.eq.s32.totalorder %v2456, 1
      %vm2489 = vcmp.eq.s32.totalorder %v2457, 1
      %vm2490 = vcmp.eq.s32.totalorder %v2458, 1
      %vm2491 = vcmp.eq.s32.totalorder %v2459, 1
      %vm2492 = vcmp.eq.s32.totalorder %v2460, 1
      %v2493 = vsel %vm2461, %v2262, 0.0
      %v2494 = vsel %vm2462, %v2263, 0.0
      %v2495 = vsel %vm2463, %v2264, 0.0
      %v2496 = vsel %vm2464, %v2265, 0.0
      %v2497 = vsel %vm2465, %v2266, 0.0
      %v2498 = vsel %vm2466, %v2267, 0.0
      %v2499 = vsel %vm2467, %v2268, 0.0
      %v2500 = vsel %vm2468, %v2269, 0.0
      %v2501 = vsel %vm2469, %v2270, 0.0
      %v2502 = vsel %vm2470, %v2271, 0.0
      %v2503 = vsel %vm2471, %v2272, 0.0
      %v2504 = vsel %vm2472, %v2273, 0.0
      %v2505 = vsel %vm2473, %v2274, 0.0
      %v2506 = vsel %vm2474, %v2275, 0.0
      %v2507 = vsel %vm2475, %v2276, 0.0
      %v2508 = vsel %vm2476, %v2277, 0.0
      %v2509 = vsel %vm2477, %v2278, 0.0
      %v2510 = vsel %vm2478, %v2279, 0.0
      %v2511 = vsel %vm2479, %v2280, 0.0
      %v2512 = vsel %vm2480, %v2281, 0.0
      %v2513 = vsel %vm2481, %v2282, 0.0
      %v2514 = vsel %vm2482, %v2283, 0.0
      %v2515 = vsel %vm2483, %v2284, 0.0
      %v2516 = vsel %vm2484, %v2285, 0.0
      %v2517 = vsel %vm2485, %v2286, 0.0
      %v2518 = vsel %vm2486, %v2287, 0.0
      %v2519 = vsel %vm2487, %v2288, 0.0
      %v2520 = vsel %vm2488, %v2289, 0.0
      %v2521 = vsel %vm2489, %v2290, 0.0
      %v2522 = vsel %vm2490, %v2291, 0.0
      %v2523 = vsel %vm2491, %v2292, 0.0
      %v2524 = vsel %vm2492, %v2293, 0.0
      %v2525 = vadd.f32 %v2493, %v2494
      %v2526 = vadd.f32 %v2525, %v2495
      %v2527 = vadd.f32 %v2526, %v2496
      %v2528 = vadd.f32 %v2527, %v2497
      %v2529 = vadd.f32 %v2528, %v2498
      %v2530 = vadd.f32 %v2529, %v2499
      %v2531 = vadd.f32 %v2530, %v2500
      %v2532 = vadd.f32 %v2531, %v2501
      %v2533 = vadd.f32 %v2532, %v2502
      %v2534 = vadd.f32 %v2533, %v2503
      %v2535 = vadd.f32 %v2534, %v2504
      %v2536 = vadd.f32 %v2535, %v2505
      %v2537 = vadd.f32 %v2536, %v2506
      %v2538 = vadd.f32 %v2537, %v2507
      %v2539 = vadd.f32 %v2538, %v2508
      %v2540 = vadd.f32 %v2539, %v2509
      %v2541 = vadd.f32 %v2540, %v2510
      %v2542 = vadd.f32 %v2541, %v2511
      %v2543 = vadd.f32 %v2542, %v2512
      %v2544 = vadd.f32 %v2543, %v2513
      %v2545 = vadd.f32 %v2544, %v2514
      %v2546 = vadd.f32 %v2545, %v2515
      %v2547 = vadd.f32 %v2546, %v2516
      %v2548 = vadd.f32 %v2547, %v2517
      %v2549 = vadd.f32 %v2548, %v2518
      %v2550 = vadd.f32 %v2549, %v2519
      %v2551 = vadd.f32 %v2550, %v2520
      %v2552 = vadd.f32 %v2551, %v2521
      %v2553 = vadd.f32 %v2552, %v2522
      %v2554 = vadd.f32 %v2553, %v2523
      %v2555 = vadd.f32 %v2554, %v2524
      %v2556 = vrot.slane %v2555, 4
      %v2557 = vadd.f32 %v2555, %v2556
      %v2558 = vrot.slane %v2557, 2
      %v2559 = vadd.f32 %v2557, %v2558
      %v2560 = vrot.slane %v2559, 1
      %v2561 = vadd.f32 %v2559, %v2560
      %v2562 = vmul.f32 %v2493, %v2493
      %v2563 = vmul.f32 %v2494, %v2494
      %v2564 = vmul.f32 %v2495, %v2495
      %v2565 = vmul.f32 %v2496, %v2496
      %v2566 = vmul.f32 %v2497, %v2497
      %v2567 = vmul.f32 %v2498, %v2498
      %v2568 = vmul.f32 %v2499, %v2499
      %v2569 = vmul.f32 %v2500, %v2500
      %v2570 = vmul.f32 %v2501, %v2501
      %v2571 = vmul.f32 %v2502, %v2502
      %v2572 = vmul.f32 %v2503, %v2503
      %v2573 = vmul.f32 %v2504, %v2504
      %v2574 = vmul.f32 %v2505, %v2505
      %v2575 = vmul.f32 %v2506, %v2506
      %v2576 = vmul.f32 %v2507, %v2507
      %v2577 = vmul.f32 %v2508, %v2508
      %v2578 = vmul.f32 %v2509, %v2509
      %v2579 = vmul.f32 %v2510, %v2510
      %v2580 = vmul.f32 %v2511, %v2511
      %v2581 = vmul.f32 %v2512, %v2512
      %v2582 = vmul.f32 %v2513, %v2513
      %v2583 = vmul.f32 %v2514, %v2514
      %v2584 = vmul.f32 %v2515, %v2515
      %v2585 = vmul.f32 %v2516, %v2516
      %v2586 = vmul.f32 %v2517, %v2517
      %v2587 = vmul.f32 %v2518, %v2518
      %v2588 = vmul.f32 %v2519, %v2519
      %v2589 = vmul.f32 %v2520, %v2520
      %v2590 = vmul.f32 %v2521, %v2521
      %v2591 = vmul.f32 %v2522, %v2522
      %v2592 = vmul.f32 %v2523, %v2523
      %v2593 = vmul.f32 %v2524, %v2524
      %v2594 = vadd.f32 %v2562, %v2563
      %v2595 = vadd.f32 %v2594, %v2564
      %v2596 = vadd.f32 %v2595, %v2565
      %v2597 = vadd.f32 %v2596, %v2566
      %v2598 = vadd.f32 %v2597, %v2567
      %v2599 = vadd.f32 %v2598, %v2568
      %v2600 = vadd.f32 %v2599, %v2569
      %v2601 = vadd.f32 %v2600, %v2570
      %v2602 = vadd.f32 %v2601, %v2571
      %v2603 = vadd.f32 %v2602, %v2572
      %v2604 = vadd.f32 %v2603, %v2573
      %v2605 = vadd.f32 %v2604, %v2574
      %v2606 = vadd.f32 %v2605, %v2575
      %v2607 = vadd.f32 %v2606, %v2576
      %v2608 = vadd.f32 %v2607, %v2577
      %v2609 = vadd.f32 %v2608, %v2578
      %v2610 = vadd.f32 %v2609, %v2579
      %v2611 = vadd.f32 %v2610, %v2580
      %v2612 = vadd.f32 %v2611, %v2581
      %v2613 = vadd.f32 %v2612, %v2582
      %v2614 = vadd.f32 %v2613, %v2583
      %v2615 = vadd.f32 %v2614, %v2584
      %v2616 = vadd.f32 %v2615, %v2585
      %v2617 = vadd.f32 %v2616, %v2586
      %v2618 = vadd.f32 %v2617, %v2587
      %v2619 = vadd.f32 %v2618, %v2588
      %v2620 = vadd.f32 %v2619, %v2589
      %v2621 = vadd.f32 %v2620, %v2590
      %v2622 = vadd.f32 %v2621, %v2591
      %v2623 = vadd.f32 %v2622, %v2592
      %v2624 = vadd.f32 %v2623, %v2593
      %v2625 = vrot.slane %v2624, 4
      %v2626 = vadd.f32 %v2624, %v2625
      %v2627 = vrot.slane %v2626, 2
      %v2628 = vadd.f32 %v2626, %v2627
      %v2629 = vrot.slane %v2628, 1
      %v2630 = vadd.f32 %v2628, %v2629
      %vm2631 = vcmp.eq.s32.totalorder %v2364, 0
      %vm2632 = vcmp.eq.s32.totalorder %v2364, 1
      %v2633 = vsel %vm2632, %v2630, 0.0
      %v2634 = vsel %vm2631, %v2561, %v2633
      %2635 = vst [vmem:[%s225] sm:$0xff] %v2634
      %p2636 = scmp.lt.s32.totalorder %s19, 1
      %s2637 = scalar_select %p2636, %s19, 1
      %p2638 = scmp.lt.s32.totalorder %s20, 0
      %s2639 = scalar_select %p2638, %s20, 0
      %s2640 = smul.addr %s2639, 32
      %s2641 = smul.addr %s2637, 32
      %s2642 = sadd.s32 %s2640, %s2641
      %s2643 = smul.addr %s2642, 4
      %s2644 = scalar_lea.vmem %s2, %s2643
      %p2645 = scmp.lt.s32.totalorder %s19, 1
      %s2646 = scalar_select %p2645, %s19, 1
      %p2647 = scmp.lt.s32.totalorder %s20, 0
      %s2648 = scalar_select %p2647, %s20, 0
      %s2649 = sadd.s32 %s2648, %s2646
      %s2650 = smul.addr %s2649, 8
      %s2651 = scalar_lea.vmem %s3, %s2650
      // Predicated region
      $region29: #{base_conv_forward.2} parent=27 // pred_check
        %p2652 = pneg %p96
      $region30: #{base_conv_forward.2} parent=27 // pred_check_branch
        %2654 = sbr.rel (%p2652) target = $region32
      $region31: #{base_conv_forward.2} parent=27 // pred_region
        _
      $region32: #{base_conv_forward.2} parent=27 // pred_fallthru
        _
      // Predicated region
      $region33: #{base_conv_forward.2} parent=27 // pred_check
        %p2655 = pneg %p124
      $region34: #{base_conv_forward.2} parent=27 // pred_check_branch
        %2657 = sbr.rel (%p2655) target = $region36
      $region35: #{base_conv_forward.2} parent=27 // pred_region
        _
      $region36: #{base_conv_forward.2} parent=27 // pred_fallthru
        _
    $region28: #{base_conv_forward.2} parent=5 // pred_fallthru
      _
    %p2658 = scmp.le.s32.totalorder 2, %s10
    // Predicated region
    $region37: #{base_conv_forward.2} parent=5 // pred_check
      %p2659 = pneg %p2658
    $region38: #{base_conv_forward.2} parent=5 // pred_check_branch
      %2661 = sbr.rel (%p2659) target = $region40
    $region39: #{base_conv_forward.2} parent=5 // pred_region
      %s2662 = ssub.s32 %s10, 2
      // Predicated region
      $region41: #{base_conv_forward.2} parent=39 // pred_check
        %p2663 = pneg %p102
      $region42: #{base_conv_forward.2} parent=39 // pred_check_branch
        %2665 = sbr.rel (%p2663) target = $region44
      $region43: #{base_conv_forward.2} parent=39 // pred_region
        %p2666 = scmp.lt.s32.totalorder %s21, 1
        %s2667 = scalar_select %p2666, %s21, 1
        %p2668 = scmp.lt.s32.totalorder %s22, 0
        %s2669 = scalar_select %p2668, %s22, 0
        %s2670 = smul.addr %s2669, 32
        %s2671 = smul.addr %s2667, 32
        %s2672 = sadd.s32 %s2670, %s2671
        %s2673 = smul.addr %s2672, 4
        %s2674 = scalar_lea.vmem %s2, %s2673
      $region44: #{base_conv_forward.2} parent=39 // pred_fallthru
        _
      // Predicated region
      $region45: #{base_conv_forward.2} parent=39 // pred_check
        %p2675 = pneg %p130
      $region46: #{base_conv_forward.2} parent=39 // pred_check_branch
        %2677 = sbr.rel (%p2675) target = $region48
      $region47: #{base_conv_forward.2} parent=39 // pred_region
        %p2678 = scmp.lt.s32.totalorder %s21, 1
        %s2679 = scalar_select %p2678, %s21, 1
        %p2680 = scmp.lt.s32.totalorder %s22, 0
        %s2681 = scalar_select %p2680, %s22, 0
        %s2682 = sadd.s32 %s2681, %s2679
        %s2683 = smul.addr %s2682, 8
        %s2684 = scalar_lea.vmem %s3, %s2683
      $region48: #{base_conv_forward.2} parent=39 // pred_fallthru
        _
    $region40: #{base_conv_forward.2} parent=5 // pred_fallthru
      _
  $region6: #{base_conv_forward.2} parent=0 // loop_footer
    %s14 = sadd.s32 1, %s10
  $region7: #{base_conv_forward.2} parent=0 // loop_footer_branch
    %9 = sbr.rel target = $region3
  $region8: #{base_conv_forward.2} parent=0 // loop_exit
    _

</llo_original>
